<compile_context>
chip_gen: v6e
topology: v6e:2x2x1
jax: 0.10.0
libtpu: 0.0.40
codegen_flags: <defaults>
</compile_context>

<pallas_src>
import numpy as np
import jax
import jax.numpy as jnp
from jax.experimental import pallas as pl
from jax.experimental.pallas import tpu as pltpu

# ---------------- configuration (small, consistent with the module) ----------
EVENT_NUM = 10
METRIC_NUM = 6
NODE_NUM = 4
BATCH = 2
T_WIN = 8                      # time window length
TRACE_HIDDENS = [20, 50]
TRACE_KS = [3, 3]
METRIC_HIDDENS = [64, 128]
METRIC_KS = [3, 3]
LOG_DIM = 64
FUSE_DIM = 64                  # even -> no +1
GRAPH_HIDDENS = [64, 128]
ATTN_HEAD = 4
NEG_SLOPE = 0.2
DETECT_HIDDENS = [64]
LOCATE_HIDDENS = [64]
ALPHA = 0.5
DILATION = 2
HEAD_PAD = 128                 # lane-dense padded width of the fused head output

VMEM = pl.BlockSpec(memory_space=pltpu.MemorySpace.VMEM)


# ====================== in-kernel building blocks (traced) ===================
def _tcn_layer(x, w2d, b2, ksize, dil):
    """Causal dilated Conv1d + BatchNorm1d (training-mode batch stats,
    gamma=1 / beta=0 default init) + ReLU + Chomp1d, entirely in VMEM.

    x   : [N, T, C_in]      -> returns [N, T, C_out]
    w2d : [K*C_in, C_out]   (row index = k*C_in + c_in)
    b2  : [1, C_out]
    """
    n, t_in, c_in = x.shape
    c_out = w2d.shape[1]
    pad = (ksize - 1) * dil                 # PyTorch Conv1d `padding`
    t_out = t_in + pad                      # real pre-chomp conv length
    t_conv = ((t_out + 7) // 8) * 8         # tile-aligned conv length we compute
    lpad = 8                                # tile-aligned left zero block
    assert pad <= lpad
    rpad = t_conv - t_in                    # enough zeros for every tap window
    zl = jnp.zeros((n, lpad, c_in), jnp.float32)
    zr = jnp.zeros((n, rpad, c_in), jnp.float32)
    xp = jnp.concatenate([zl, x, zr], axis=1)           # [N, lpad+T+rpad, C_in]

    rows = n * t_conv
    acc = jnp.zeros((rows, c_out), jnp.float32)
    for k in range(ksize):                              # unrolled taps -> 2-D MXU dots
        start = lpad - pad + k * dil
        xk = xp[:, start:start + t_conv, :].reshape(rows, c_in)
        wk = w2d[k * c_in:(k + 1) * c_in, :]
        if c_in == 1:
            acc = acc + xk * wk                         # degenerate contraction
        else:
            acc = acc + jnp.dot(xk, wk, preferred_element_type=jnp.float32)
    acc = acc + b2

    # BatchNorm1d (training mode): masked one-pass stats over the real (N, t_out)
    # positions; padded tail rows are excluded here and chomped afterwards.
    t_iota = jax.lax.broadcasted_iota(jnp.int32, (n, t_conv, 1), 1)
    vmask = (t_iota < t_out).astype(jnp.float32).reshape(rows, 1)
    cnt = float(n * t_out)
    accm = acc * vmask
    mean = jnp.sum(accm, axis=0, keepdims=True) / cnt
    var = jnp.maximum(jnp.sum(accm * acc, axis=0, keepdims=True) / cnt - mean * mean, 0.0)
    y = (acc - mean) * jax.lax.rsqrt(var + 1e-5)
    y = jnp.maximum(y, 0.0)                             # ReLU
    return y.reshape(n, t_conv, c_out)[:, :t_in, :]     # Chomp1d


def _last_step(x):
    """x: [N, T, C] -> [N, C] (select t = T-1 via a masked sublane reduction)."""
    _, t, _ = x.shape
    sel = (jax.lax.broadcasted_iota(jnp.int32, (1, t, 1), 1) == (t - 1))
    return jnp.sum(x * sel.astype(jnp.float32), axis=1)


def _gatv2_layer(h, w_cat, b_cat, attn, adj_mask, heads, f):
    """GATv2Conv (src/dst projections folded into one matmul) + edge softmax
    + per-head aggregation + MaxPool1d over heads.   h: [N, Fin] -> [N, f]."""
    hf = heads * f
    proj = jnp.dot(h, w_cat, preferred_element_type=jnp.float32) + b_cat   # [N, 2*H*F]
    fs = proj[:, :hf]
    fd = proj[:, hf:]
    out = None
    for hh in range(heads):                                                # unrolled heads
        fs_h = fs[:, hh * f:(hh + 1) * f]                                  # [Ns, F]
        fd_h = fd[:, hh * f:(hh + 1) * f]                                  # [Nd, F]
        a_h = attn[hh:hh + 1, :]                                           # [1, F]
        s = fs_h[None, :, :] + fd_h[:, None, :]                            # [Nd, Ns, F]
        s = jnp.where(s >= 0, s, NEG_SLOPE * s)                            # LeakyReLU
        e = jnp.sum(s * a_h[None, :, :], axis=-1)                          # [Nd, Ns]
        e = jnp.where(adj_mask, e, -1e30)
        m = jnp.max(e, axis=1, keepdims=True)
        p = jnp.where(adj_mask, jnp.exp(e - m), 0.0)
        denom = jnp.maximum(jnp.sum(p, axis=1, keepdims=True), 1e-20)      # 0-in-degree guard
        alpha = p * pl.reciprocal(denom, approx=True)                      # edge softmax
        o_h = jnp.dot(alpha, fs_h, preferred_element_type=jnp.float32)     # [Nd, F]
        out = o_h if out is None else jnp.maximum(out, o_h)                # max over heads
    return out


# ============================ fused forward kernel ===========================
def fused_forward_kernel(
    traces_ref, metrics_ref, logs_ref, adj_ref,
    tw0_ref, tb0_ref, tw1_ref, tb1_ref,
    mw0_ref, mb0_ref, mw1_ref, mb1_ref,
    logw_ref, logb_ref,
    fwt_ref, fwl_ref, fwm_ref, fb_ref,
    g1w_ref, g1b_ref, g1a_ref,
    g2w_ref, g2b_ref, g2a_ref,
    gatew_ref, gateb_ref,
    h1w_ref, h1b_ref, h2w_ref, h2b_ref,
    out_ref,
):
    # ---- TraceModel / MetricModel: 2-layer dilated causal TCN, last timestep ----
    tr = _tcn_layer(traces_ref[...], tw0_ref[...], tb0_ref[...], TRACE_KS[0], 1)
    tr = _tcn_layer(tr, tw1_ref[...], tb1_ref[...], TRACE_KS[1], DILATION)
    trace_emb = _last_step(tr)                                             # [N, 50]

    mt = _tcn_layer(metrics_ref[...], mw0_ref[...], mb0_ref[...], METRIC_KS[0], 1)
    mt = _tcn_layer(mt, mw1_ref[...], mb1_ref[...], METRIC_KS[1], DILATION)
    metric_emb = _last_step(mt)                                            # [N, 128]

    # ---- LogModel ----
    log_emb = (jnp.dot(logs_ref[...], logw_ref[...],
                       preferred_element_type=jnp.float32) + logb_ref[...])  # [N, 64]

    # ---- fuse Linear + GLU (concat avoided: split fuse weight, sum 3 matmuls) ----
    pre = (jnp.dot(trace_emb, fwt_ref[...], preferred_element_type=jnp.float32)
           + jnp.dot(log_emb, fwl_ref[...], preferred_element_type=jnp.float32)
           + jnp.dot(metric_emb, fwm_ref[...], preferred_element_type=jnp.float32)
           + fb_ref[...])                                                  # [N, 64]
    half = FUSE_DIM // 2
    feat = pre[:, :half] * jax.nn.sigmoid(pre[:, half:])                   # GLU -> [N, 32]

    # ---- GraphModel: 2 x (GATv2 + max over heads) ----
    adj_mask = adj_ref[...] > 0
    feat = _gatv2_layer(feat, g1w_ref[...], g1b_ref[...], g1a_ref[...],
                        adj_mask, ATTN_HEAD, GRAPH_HIDDENS[0])             # [N, 64]
    feat = _gatv2_layer(feat, g2w_ref[...], g2b_ref[...], g2a_ref[...],
                        adj_mask, ATTN_HEAD, GRAPH_HIDDENS[1])             # [N, 128]

    # ---- GlobalAttentionPooling + fused locate/detect heads (per graph) ----
    gw = gatew_ref[...]                                                    # [1, D]
    gb = gateb_ref[...]                                                    # [1, 1]
    h1w = h1w_ref[...]
    h1b = h1b_ref[...]
    h2w = h2w_ref[...]
    h2b = h2b_ref[...]
    for b in range(BATCH):                                                 # unrolled graphs
        hb = feat[b * NODE_NUM:(b + 1) * NODE_NUM, :]                      # [Nn, D]
        gsc = jnp.sum(hb * gw, axis=-1, keepdims=True) + gb                # [Nn, 1]
        m = jnp.max(gsc, axis=0, keepdims=True)
        p = jnp.exp(gsc - m)
        alpha = p * pl.reciprocal(jnp.sum(p, axis=0, keepdims=True), approx=True)
        emb = jnp.sum(alpha * hb, axis=0, keepdims=True)                   # [1, D]
        hid = jnp.maximum(
            jnp.dot(emb, h1w, preferred_element_type=jnp.float32) + h1b, 0.0)
        logits = jnp.dot(hid, h2w, preferred_element_type=jnp.float32) + h2b   # [1, 128]
        out_ref[b:b + 1, :] = logits.astype(out_ref.dtype)


# ============================ wrapper / XLA glue =============================
def _cross_entropy(logits, targets, ignore_index=None):
    logp = jax.nn.log_softmax(logits, axis=-1)
    safe_t = jnp.clip(targets, 0, logits.shape[-1] - 1)
    nll = -jnp.take_along_axis(logp, safe_t[:, None], axis=-1)[:, 0]
    if ignore_index is not None:
        valid = (targets != ignore_index).astype(jnp.float32)
        return jnp.sum(nll * valid) / jnp.maximum(jnp.sum(valid), 1.0)
    return jnp.mean(nll)


def pack_params(params):
    """Repack the module's parameters into the fused kernel's layouts (done once)."""
    def conv_pack(w, b):
        k, c_in, c_out = w.shape
        return w.reshape(k * c_in, c_out), b.reshape(1, c_out)

    tw0, tb0 = conv_pack(*params['trace_convs'][0])
    tw1, tb1 = conv_pack(*params['trace_convs'][1])
    mw0, mb0 = conv_pack(*params['metric_convs'][0])
    mw1, mb1 = conv_pack(*params['metric_convs'][1])

    logw = params['log_w']
    logb = params['log_b'].reshape(1, -1)

    t_dim, l_dim = TRACE_HIDDENS[-1], LOG_DIM
    fuse_w = params['fuse_w']
    fwt = fuse_w[:t_dim]
    fwl = fuse_w[t_dim:t_dim + l_dim]
    fwm = fuse_w[t_dim + l_dim:]
    fb = params['fuse_b'].reshape(1, -1)

    gat_packed = []
    for gp in params['gat_layers']:
        w_cat = jnp.concatenate([gp['w_src'], gp['w_dst']], axis=1)        # [fi, 2*H*F]
        b_cat = jnp.concatenate([gp['b_src'], gp['b_dst']]).reshape(1, -1)
        gat_packed += [w_cat, b_cat, gp['attn']]

    gatew = params['gate_w'].reshape(1, -1)                                # [1, D]
    gateb = params['gate_b'].reshape(1, 1)

    (lw0, lb0), (lw1, lb1) = params['loc']
    (dw0, db0), (dw1, db1) = params['det']
    lh, dh = lw0.shape[1], dw0.shape[1]
    n_loc, n_det = lw1.shape[1], dw1.shape[1]
    h1w = jnp.concatenate([lw0, dw0], axis=1)                              # [D, lh+dh]
    h1b = jnp.concatenate([lb0, db0]).reshape(1, -1)
    h2w = jnp.zeros((lh + dh, HEAD_PAD), jnp.float32)
    h2w = h2w.at[:lh, :n_loc].set(lw1)
    h2w = h2w.at[lh:, n_loc:n_loc + n_det].set(dw1)
    h2b = jnp.zeros((1, HEAD_PAD), jnp.float32)
    h2b = h2b.at[0, :n_loc].set(lb1)
    h2b = h2b.at[0, n_loc:n_loc + n_det].set(db1)

    return (tw0, tb0, tw1, tb1, mw0, mb0, mw1, mb1,
            logw, logb, fwt, fwl, fwm, fb,
            *gat_packed, gatew, gateb, h1w, h1b, h2w, h2b)


@jax.jit
def forward_device(packed, traces, logs, metrics, adj, fault_indexs):
    """One fused pallas_call + tiny XLA glue for losses / probabilities."""
    out = pl.pallas_call(
        fused_forward_kernel,
        out_shape=jax.ShapeDtypeStruct((BATCH, HEAD_PAD), jnp.float32),
        in_specs=[VMEM] * (4 + len(packed)),
        out_specs=VMEM,
    )(traces, metrics, logs, adj, *packed)

    locate_logits = out[:, :NODE_NUM]                    # [B, node_num]
    detect_logits = out[:, NODE_NUM:NODE_NUM + 2]        # [B, 2]

    y_anomaly = (fault_indexs > -1).astype(jnp.int32)
    locate_loss = _cross_entropy(locate_logits, fault_indexs, ignore_index=-1)
    detect_loss = _cross_entropy(detect_logits, y_anomaly)
    loss = ALPHA * detect_loss + (1.0 - ALPHA) * locate_loss
    node_probs = jax.nn.softmax(locate_logits, axis=-1)
    return loss, node_probs, detect_logits


def main_model_forward(packed_params, graph, fault_indexs):
    batch_size, node_num = graph['batch_size'], graph['node_num']
    loss, node_probs, detect_logits = forward_device(
        packed_params, graph['traces'], graph['logs'], graph['metrics'],
        graph['adj'], fault_indexs)

    # ---- host-side bookkeeping identical to MainModel (single coalesced transfer) ----
    node_probs_np, detect_np, fault_np = jax.device_get(
        (node_probs, detect_logits, fault_indexs))
    node_probs_np = np.asarray(node_probs_np)
    detect_np = np.asarray(detect_np)
    fault_np = np.asarray(fault_np)

    y_prob = np.zeros((batch_size, node_num), dtype=np.float32)
    for i in range(batch_size):
        if fault_np[i] > -1:
            y_prob[i, fault_np[i]] = 1.0
    node_list = np.flip(node_probs_np.argsort(axis=1), axis=1)
    detect_pred = np.atleast_1d(detect_np.argmax(axis=1).squeeze())
    y_pred = []
    for i in range(batch_size):
        if detect_pred[i] < 1:
            y_pred.append([-1])
        else:
            y_pred.append(list(node_list[i]))
    return {'loss': loss, 'y_pred': y_pred, 'y_prob': y_prob,
            'pred_prob': node_probs_np}


# ============================ parameter init =================================
def init_params(key):
    keys = iter(jax.random.split(key, 64))

    def w(shape, scale=0.1):
        return (scale * jax.random.normal(next(keys), shape)).astype(jnp.float32)

    params = {}
    # TraceModel ConvNet: 1 -> 20 -> 50, k=3
    params['trace_convs'] = [(w((3, 1, TRACE_HIDDENS[0])), w((TRACE_HIDDENS[0],), 0.01)),
                             (w((3, TRACE_HIDDENS[0], TRACE_HIDDENS[1])), w((TRACE_HIDDENS[1],), 0.01))]
    # MetricModel ConvNet: metric_num -> 64 -> 128, k=3
    params['metric_convs'] = [(w((3, METRIC_NUM, METRIC_HIDDENS[0])), w((METRIC_HIDDENS[0],), 0.01)),
                              (w((3, METRIC_HIDDENS[0], METRIC_HIDDENS[1])), w((METRIC_HIDDENS[1],), 0.01))]
    # LogModel
    params['log_w'] = w((EVENT_NUM, LOG_DIM))
    params['log_b'] = w((LOG_DIM,), 0.01)
    # fuse Linear (trace 50 + log 64 + metric 128 -> 64), GLU applied in-kernel
    fuse_in = TRACE_HIDDENS[-1] + LOG_DIM + METRIC_HIDDENS[-1]
    params['fuse_w'] = w((fuse_in, FUSE_DIM))
    params['fuse_b'] = w((FUSE_DIM,), 0.01)
    # GraphModel: GATv2Conv layers (in_dim = FUSE_DIM//2)
    params['gat_layers'] = []
    fi = FUSE_DIM // 2
    for fo in GRAPH_HIDDENS:
        params['gat_layers'].append(dict(
            w_src=w((fi, ATTN_HEAD * fo)), b_src=w((ATTN_HEAD * fo,), 0.01),
            w_dst=w((fi, ATTN_HEAD * fo)), b_dst=w((ATTN_HEAD * fo,), 0.01),
            attn=w((ATTN_HEAD, fo)),
        ))
        fi = fo
    # GlobalAttentionPooling gate nn.Linear(128, 1)
    params['gate_w'] = w((GRAPH_HIDDENS[-1], 1))
    params['gate_b'] = w((1,), 0.01)
    # detecter / localizer FullyConnected heads
    params['loc'] = [(w((GRAPH_HIDDENS[-1], LOCATE_HIDDENS[0])), w((LOCATE_HIDDENS[0],), 0.01)),
                     (w((LOCATE_HIDDENS[0], NODE_NUM)), w((NODE_NUM,), 0.01))]
    params['det'] = [(w((GRAPH_HIDDENS[-1], DETECT_HIDDENS[0])), w((DETECT_HIDDENS[0],), 0.01)),
                     (w((DETECT_HIDDENS[0], 2)), w((2,), 0.01))]
    return params


# ================================== main =====================================
if __name__ == "__main__":
    n_total = BATCH * NODE_NUM
    key = jax.random.PRNGKey(0)
    k_tr, k_lg, k_mt, k_p = jax.random.split(key, 4)

    traces = jax.random.normal(k_tr, (n_total, T_WIN, 1), dtype=jnp.float32)
    logs = jax.random.normal(k_lg, (n_total, EVENT_NUM), dtype=jnp.float32)
    metrics = jax.random.normal(k_mt, (n_total, T_WIN, METRIC_NUM), dtype=jnp.float32)

    # batched graph: each of the BATCH graphs is fully connected (no self-loops)
    block = jnp.ones((NODE_NUM, NODE_NUM), jnp.float32) - jnp.eye(NODE_NUM, dtype=jnp.float32)
    adj = jnp.kron(jnp.eye(BATCH, dtype=jnp.float32), block)        # adj[dst, src]

    graph = {'traces': traces, 'logs': logs, 'metrics': metrics, 'adj': adj,
             'batch_size': BATCH, 'node_num': NODE_NUM}
    fault_indexs = jnp.array([2, -1], dtype=jnp.int32)

    params = init_params(k_p)
    packed = pack_params(params)          # packed once, reused every forward

    out = main_model_forward(packed, graph, fault_indexs)
    jax.block_until_ready(out['loss'])
    assert np.isfinite(float(out['loss']))
    assert out['pred_prob'].shape == (BATCH, NODE_NUM)
    assert out['y_prob'].shape == (BATCH, NODE_NUM)
    assert len(out['y_pred']) == BATCH
    print("KERNEL_OK")
</pallas_src>

<mosaic_0001>
module attributes {stable_mosaic.version = 11 : i64} {
  func.func @fused_forward_kernel(%arg0: memref<8x8x1xf32, #tpu.memory_space<vmem>>, %arg1: memref<8x8x6xf32, #tpu.memory_space<vmem>>, %arg2: memref<8x10xf32, #tpu.memory_space<vmem>>, %arg3: memref<8x8xf32, #tpu.memory_space<vmem>>, %arg4: memref<3x20xf32, #tpu.memory_space<vmem>>, %arg5: memref<1x20xf32, #tpu.memory_space<vmem>>, %arg6: memref<60x50xf32, #tpu.memory_space<vmem>>, %arg7: memref<1x50xf32, #tpu.memory_space<vmem>>, %arg8: memref<18x64xf32, #tpu.memory_space<vmem>>, %arg9: memref<1x64xf32, #tpu.memory_space<vmem>>, %arg10: memref<192x128xf32, #tpu.memory_space<vmem>>, %arg11: memref<1x128xf32, #tpu.memory_space<vmem>>, %arg12: memref<10x64xf32, #tpu.memory_space<vmem>>, %arg13: memref<1x64xf32, #tpu.memory_space<vmem>>, %arg14: memref<50x64xf32, #tpu.memory_space<vmem>>, %arg15: memref<64x64xf32, #tpu.memory_space<vmem>>, %arg16: memref<128x64xf32, #tpu.memory_space<vmem>>, %arg17: memref<1x64xf32, #tpu.memory_space<vmem>>, %arg18: memref<32x512xf32, #tpu.memory_space<vmem>>, %arg19: memref<1x512xf32, #tpu.memory_space<vmem>>, %arg20: memref<4x64xf32, #tpu.memory_space<vmem>>, %arg21: memref<64x1024xf32, #tpu.memory_space<vmem>>, %arg22: memref<1x1024xf32, #tpu.memory_space<vmem>>, %arg23: memref<4x128xf32, #tpu.memory_space<vmem>>, %arg24: memref<1x128xf32, #tpu.memory_space<vmem>>, %arg25: memref<1x1xf32, #tpu.memory_space<vmem>>, %arg26: memref<128x128xf32, #tpu.memory_space<vmem>>, %arg27: memref<1x128xf32, #tpu.memory_space<vmem>>, %arg28: memref<128x128xf32, #tpu.memory_space<vmem>>, %arg29: memref<1x128xf32, #tpu.memory_space<vmem>>, %arg30: memref<2x128xf32, #tpu.memory_space<vmem>>) attributes {dimension_semantics = [], scalar_prefetch = 0 : i64, scratch_operands = 0 : i64, tpu.core_type = #tpu.core_type<tc>} {
    %c0 = arith.constant 0 : index
    %c0_0 = arith.constant 0 : index
    %c0_1 = arith.constant 0 : index
    %0 = vector.load %arg0[%c0, %c0_0, %c0_1] : memref<8x8x1xf32, #tpu.memory_space<vmem>>, vector<8x8x1xf32>
    %c0_2 = arith.constant 0 : index
    %c0_3 = arith.constant 0 : index
    %1 = vector.load %arg4[%c0_2, %c0_3] : memref<3x20xf32, #tpu.memory_space<vmem>>, vector<3x20xf32>
    %c0_4 = arith.constant 0 : index
    %c0_5 = arith.constant 0 : index
    %2 = vector.load %arg5[%c0_4, %c0_5] : memref<1x20xf32, #tpu.memory_space<vmem>>, vector<1x20xf32>
    %cst = arith.constant 0.000000e+00 : f32
    %3 = vector.broadcast %cst : f32 to vector<8x8x1xf32>
    %cst_6 = arith.constant 0.000000e+00 : f32
    %4 = vector.broadcast %cst_6 : f32 to vector<8x8x1xf32>
    %5 = tpu.concatenate %3, %0, %4 in 1 : vector<8x8x1xf32>, vector<8x8x1xf32>, vector<8x8x1xf32> -> vector<8x24x1xf32>
    %cst_7 = arith.constant 0.000000e+00 : f32
    %6 = vector.broadcast %cst_7 : f32 to vector<128x20xf32>
    %7 = vector.extract_strided_slice %5 {offsets = [0, 6, 0], sizes = [8, 16, 1], strides = [1, 1, 1]} : vector<8x24x1xf32> to vector<8x16x1xf32>
    %8 = vector.shape_cast %7 : vector<8x16x1xf32> to vector<128x1xf32>
    %9 = vector.extract_strided_slice %1 {offsets = [0, 0], sizes = [1, 20], strides = [1, 1]} : vector<3x20xf32> to vector<1x20xf32>
    %10 = vector.broadcast %8 : vector<128x1xf32> to vector<128x20xf32>
    %11 = vector.broadcast %9 : vector<1x20xf32> to vector<128x20xf32>
    %12 = arith.mulf %10, %11 : vector<128x20xf32>
    %13 = arith.addf %6, %12 : vector<128x20xf32>
    %14 = vector.extract_strided_slice %5 {offsets = [0, 7, 0], sizes = [8, 16, 1], strides = [1, 1, 1]} : vector<8x24x1xf32> to vector<8x16x1xf32>
    %15 = vector.shape_cast %14 : vector<8x16x1xf32> to vector<128x1xf32>
    %16 = vector.extract_strided_slice %1 {offsets = [1, 0], sizes = [1, 20], strides = [1, 1]} : vector<3x20xf32> to vector<1x20xf32>
    %17 = vector.broadcast %15 : vector<128x1xf32> to vector<128x20xf32>
    %18 = vector.broadcast %16 : vector<1x20xf32> to vector<128x20xf32>
    %19 = arith.mulf %17, %18 : vector<128x20xf32>
    %20 = arith.addf %13, %19 : vector<128x20xf32>
    %21 = vector.extract_strided_slice %5 {offsets = [0, 8, 0], sizes = [8, 16, 1], strides = [1, 1, 1]} : vector<8x24x1xf32> to vector<8x16x1xf32>
    %22 = vector.shape_cast %21 : vector<8x16x1xf32> to vector<128x1xf32>
    %23 = vector.extract_strided_slice %1 {offsets = [2, 0], sizes = [1, 20], strides = [1, 1]} : vector<3x20xf32> to vector<1x20xf32>
    %24 = vector.broadcast %22 : vector<128x1xf32> to vector<128x20xf32>
    %25 = vector.broadcast %23 : vector<1x20xf32> to vector<128x20xf32>
    %26 = arith.mulf %24, %25 : vector<128x20xf32>
    %27 = arith.addf %20, %26 : vector<128x20xf32>
    %28 = vector.broadcast %2 : vector<1x20xf32> to vector<128x20xf32>
    %29 = arith.addf %27, %28 : vector<128x20xf32>
    %30 = tpu.iota {dimensions = array<i32: 1>} : vector<8x16x1xi32>
    %c10_i32 = arith.constant 10 : i32
    %31 = vector.broadcast %c10_i32 : i32 to vector<8x16x1xi32>
    %32 = arith.cmpi slt, %30, %31 : vector<8x16x1xi32>
    %33 = arith.extui %32 : vector<8x16x1xi1> to vector<8x16x1xi32>
    %34 = arith.sitofp %33 : vector<8x16x1xi32> to vector<8x16x1xf32>
    %35 = vector.shape_cast %34 : vector<8x16x1xf32> to vector<128x1xf32>
    %36 = vector.broadcast %35 : vector<128x1xf32> to vector<128x20xf32>
    %37 = arith.mulf %29, %36 : vector<128x20xf32>
    %cst_8 = arith.constant dense<0.000000e+00> : vector<20xf32>
    %38 = vector.multi_reduction <add>, %37, %cst_8 [0] : vector<128x20xf32> to vector<20xf32>
    %39 = vector.shape_cast %38 : vector<20xf32> to vector<1x20xf32>
    %cst_9 = arith.constant 8.000000e+01 : f32
    %40 = vector.broadcast %cst_9 : f32 to vector<1x20xf32>
    %41 = arith.divf %39, %40 : vector<1x20xf32>
    %42 = arith.mulf %37, %29 : vector<128x20xf32>
    %cst_10 = arith.constant dense<0.000000e+00> : vector<20xf32>
    %43 = vector.multi_reduction <add>, %42, %cst_10 [0] : vector<128x20xf32> to vector<20xf32>
    %44 = vector.shape_cast %43 : vector<20xf32> to vector<1x20xf32>
    %cst_11 = arith.constant 8.000000e+01 : f32
    %45 = vector.broadcast %cst_11 : f32 to vector<1x20xf32>
    %46 = arith.divf %44, %45 : vector<1x20xf32>
    %47 = arith.mulf %41, %41 : vector<1x20xf32>
    %48 = arith.subf %46, %47 : vector<1x20xf32>
    %cst_12 = arith.constant 0.000000e+00 : f32
    %49 = vector.broadcast %cst_12 : f32 to vector<1x20xf32>
    %50 = arith.maximumf %48, %49 : vector<1x20xf32>
    %51 = vector.broadcast %41 : vector<1x20xf32> to vector<128x20xf32>
    %52 = arith.subf %29, %51 : vector<128x20xf32>
    %cst_13 = arith.constant 9.99999974E-6 : f32
    %53 = vector.broadcast %cst_13 : f32 to vector<1x20xf32>
    %54 = arith.addf %50, %53 : vector<1x20xf32>
    %55 = math.rsqrt %54 : vector<1x20xf32>
    %56 = vector.broadcast %55 : vector<1x20xf32> to vector<128x20xf32>
    %57 = arith.mulf %52, %56 : vector<128x20xf32>
    %cst_14 = arith.constant 0.000000e+00 : f32
    %58 = vector.broadcast %cst_14 : f32 to vector<128x20xf32>
    %59 = arith.maximumf %57, %58 : vector<128x20xf32>
    %60 = vector.shape_cast %59 : vector<128x20xf32> to vector<8x16x20xf32>
    %61 = vector.extract_strided_slice %60 {offsets = [0, 0, 0], sizes = [8, 8, 20], strides = [1, 1, 1]} : vector<8x16x20xf32> to vector<8x8x20xf32>
    %c0_15 = arith.constant 0 : index
    %c0_16 = arith.constant 0 : index
    %62 = vector.load %arg6[%c0_15, %c0_16] : memref<60x50xf32, #tpu.memory_space<vmem>>, vector<60x50xf32>
    %c0_17 = arith.constant 0 : index
    %c0_18 = arith.constant 0 : index
    %63 = vector.load %arg7[%c0_17, %c0_18] : memref<1x50xf32, #tpu.memory_space<vmem>>, vector<1x50xf32>
    %cst_19 = arith.constant 0.000000e+00 : f32
    %64 = vector.broadcast %cst_19 : f32 to vector<8x8x20xf32>
    %cst_20 = arith.constant 0.000000e+00 : f32
    %65 = vector.broadcast %cst_20 : f32 to vector<8x8x20xf32>
    %66 = tpu.concatenate %64, %61, %65 in 1 : vector<8x8x20xf32>, vector<8x8x20xf32>, vector<8x8x20xf32> -> vector<8x24x20xf32>
    %cst_21 = arith.constant 0.000000e+00 : f32
    %67 = vector.broadcast %cst_21 : f32 to vector<128x50xf32>
    %68 = vector.extract_strided_slice %66 {offsets = [0, 4, 0], sizes = [8, 16, 20], strides = [1, 1, 1]} : vector<8x24x20xf32> to vector<8x16x20xf32>
    %69 = vector.shape_cast %68 : vector<8x16x20xf32> to vector<128x20xf32>
    %70 = vector.extract_strided_slice %62 {offsets = [0, 0], sizes = [20, 50], strides = [1, 1]} : vector<60x50xf32> to vector<20x50xf32>
    %cst_22 = arith.constant dense<0.000000e+00> : vector<128x50xf32>
    %71 = tpu.matmul %69, %70, %cst_22 {dimension_numbers = #tpu.dot_dimension_numbers<[1], [0], [0], [1], [0, 0, 1, 1], [], []>} : vector<128x20xf32>, vector<20x50xf32>, vector<128x50xf32> -> vector<128x50xf32>
    %72 = arith.addf %67, %71 : vector<128x50xf32>
    %73 = vector.extract_strided_slice %66 {offsets = [0, 6, 0], sizes = [8, 16, 20], strides = [1, 1, 1]} : vector<8x24x20xf32> to vector<8x16x20xf32>
    %74 = vector.shape_cast %73 : vector<8x16x20xf32> to vector<128x20xf32>
    %75 = vector.extract_strided_slice %62 {offsets = [20, 0], sizes = [20, 50], strides = [1, 1]} : vector<60x50xf32> to vector<20x50xf32>
    %cst_23 = arith.constant dense<0.000000e+00> : vector<128x50xf32>
    %76 = tpu.matmul %74, %75, %cst_23 {dimension_numbers = #tpu.dot_dimension_numbers<[1], [0], [0], [1], [0, 0, 1, 1], [], []>} : vector<128x20xf32>, vector<20x50xf32>, vector<128x50xf32> -> vector<128x50xf32>
    %77 = arith.addf %72, %76 : vector<128x50xf32>
    %78 = vector.extract_strided_slice %66 {offsets = [0, 8, 0], sizes = [8, 16, 20], strides = [1, 1, 1]} : vector<8x24x20xf32> to vector<8x16x20xf32>
    %79 = vector.shape_cast %78 : vector<8x16x20xf32> to vector<128x20xf32>
    %80 = vector.extract_strided_slice %62 {offsets = [40, 0], sizes = [20, 50], strides = [1, 1]} : vector<60x50xf32> to vector<20x50xf32>
    %cst_24 = arith.constant dense<0.000000e+00> : vector<128x50xf32>
    %81 = tpu.matmul %79, %80, %cst_24 {dimension_numbers = #tpu.dot_dimension_numbers<[1], [0], [0], [1], [0, 0, 1, 1], [], []>} : vector<128x20xf32>, vector<20x50xf32>, vector<128x50xf32> -> vector<128x50xf32>
    %82 = arith.addf %77, %81 : vector<128x50xf32>
    %83 = vector.broadcast %63 : vector<1x50xf32> to vector<128x50xf32>
    %84 = arith.addf %82, %83 : vector<128x50xf32>
    %85 = tpu.iota {dimensions = array<i32: 1>} : vector<8x16x1xi32>
    %c12_i32 = arith.constant 12 : i32
    %86 = vector.broadcast %c12_i32 : i32 to vector<8x16x1xi32>
    %87 = arith.cmpi slt, %85, %86 : vector<8x16x1xi32>
    %88 = arith.extui %87 : vector<8x16x1xi1> to vector<8x16x1xi32>
    %89 = arith.sitofp %88 : vector<8x16x1xi32> to vector<8x16x1xf32>
    %90 = vector.shape_cast %89 : vector<8x16x1xf32> to vector<128x1xf32>
    %91 = vector.broadcast %90 : vector<128x1xf32> to vector<128x50xf32>
    %92 = arith.mulf %84, %91 : vector<128x50xf32>
    %cst_25 = arith.constant dense<0.000000e+00> : vector<50xf32>
    %93 = vector.multi_reduction <add>, %92, %cst_25 [0] : vector<128x50xf32> to vector<50xf32>
    %94 = vector.shape_cast %93 : vector<50xf32> to vector<1x50xf32>
    %cst_26 = arith.constant 9.600000e+01 : f32
    %95 = vector.broadcast %cst_26 : f32 to vector<1x50xf32>
    %96 = arith.divf %94, %95 : vector<1x50xf32>
    %97 = arith.mulf %92, %84 : vector<128x50xf32>
    %cst_27 = arith.constant dense<0.000000e+00> : vector<50xf32>
    %98 = vector.multi_reduction <add>, %97, %cst_27 [0] : vector<128x50xf32> to vector<50xf32>
    %99 = vector.shape_cast %98 : vector<50xf32> to vector<1x50xf32>
    %cst_28 = arith.constant 9.600000e+01 : f32
    %100 = vector.broadcast %cst_28 : f32 to vector<1x50xf32>
    %101 = arith.divf %99, %100 : vector<1x50xf32>
    %102 = arith.mulf %96, %96 : vector<1x50xf32>
    %103 = arith.subf %101, %102 : vector<1x50xf32>
    %cst_29 = arith.constant 0.000000e+00 : f32
    %104 = vector.broadcast %cst_29 : f32 to vector<1x50xf32>
    %105 = arith.maximumf %103, %104 : vector<1x50xf32>
    %106 = vector.broadcast %96 : vector<1x50xf32> to vector<128x50xf32>
    %107 = arith.subf %84, %106 : vector<128x50xf32>
    %cst_30 = arith.constant 9.99999974E-6 : f32
    %108 = vector.broadcast %cst_30 : f32 to vector<1x50xf32>
    %109 = arith.addf %105, %108 : vector<1x50xf32>
    %110 = math.rsqrt %109 : vector<1x50xf32>
    %111 = vector.broadcast %110 : vector<1x50xf32> to vector<128x50xf32>
    %112 = arith.mulf %107, %111 : vector<128x50xf32>
    %cst_31 = arith.constant 0.000000e+00 : f32
    %113 = vector.broadcast %cst_31 : f32 to vector<128x50xf32>
    %114 = arith.maximumf %112, %113 : vector<128x50xf32>
    %115 = vector.shape_cast %114 : vector<128x50xf32> to vector<8x16x50xf32>
    %116 = vector.extract_strided_slice %115 {offsets = [0, 0, 0], sizes = [8, 8, 50], strides = [1, 1, 1]} : vector<8x16x50xf32> to vector<8x8x50xf32>
    %117 = tpu.iota {dimensions = array<i32: 1>} : vector<1x8x1xi32>
    %c7_i32 = arith.constant 7 : i32
    %118 = vector.broadcast %c7_i32 : i32 to vector<1x8x1xi32>
    %119 = arith.cmpi eq, %117, %118 : vector<1x8x1xi32>
    %120 = arith.extui %119 : vector<1x8x1xi1> to vector<1x8x1xi32>
    %121 = arith.sitofp %120 : vector<1x8x1xi32> to vector<1x8x1xf32>
    %122 = vector.broadcast %121 : vector<1x8x1xf32> to vector<8x8x50xf32>
    %123 = arith.mulf %116, %122 : vector<8x8x50xf32>
    %cst_32 = arith.constant dense<0.000000e+00> : vector<8x50xf32>
    %124 = vector.multi_reduction <add>, %123, %cst_32 [1] : vector<8x8x50xf32> to vector<8x50xf32>
    %c0_33 = arith.constant 0 : index
    %c0_34 = arith.constant 0 : index
    %c0_35 = arith.constant 0 : index
    %125 = vector.load %arg1[%c0_33, %c0_34, %c0_35] : memref<8x8x6xf32, #tpu.memory_space<vmem>>, vector<8x8x6xf32>
    %c0_36 = arith.constant 0 : index
    %c0_37 = arith.constant 0 : index
    %126 = vector.load %arg8[%c0_36, %c0_37] : memref<18x64xf32, #tpu.memory_space<vmem>>, vector<18x64xf32>
    %c0_38 = arith.constant 0 : index
    %c0_39 = arith.constant 0 : index
    %127 = vector.load %arg9[%c0_38, %c0_39] : memref<1x64xf32, #tpu.memory_space<vmem>>, vector<1x64xf32>
    %cst_40 = arith.constant 0.000000e+00 : f32
    %128 = vector.broadcast %cst_40 : f32 to vector<8x8x6xf32>
    %cst_41 = arith.constant 0.000000e+00 : f32
    %129 = vector.broadcast %cst_41 : f32 to vector<8x8x6xf32>
    %130 = tpu.concatenate %128, %125, %129 in 1 : vector<8x8x6xf32>, vector<8x8x6xf32>, vector<8x8x6xf32> -> vector<8x24x6xf32>
    %cst_42 = arith.constant 0.000000e+00 : f32
    %131 = vector.broadcast %cst_42 : f32 to vector<128x64xf32>
    %132 = vector.extract_strided_slice %130 {offsets = [0, 6, 0], sizes = [8, 16, 6], strides = [1, 1, 1]} : vector<8x24x6xf32> to vector<8x16x6xf32>
    %133 = vector.shape_cast %132 : vector<8x16x6xf32> to vector<128x6xf32>
    %134 = vector.extract_strided_slice %126 {offsets = [0, 0], sizes = [6, 64], strides = [1, 1]} : vector<18x64xf32> to vector<6x64xf32>
    %cst_43 = arith.constant dense<0.000000e+00> : vector<128x64xf32>
    %135 = tpu.matmul %133, %134, %cst_43 {dimension_numbers = #tpu.dot_dimension_numbers<[1], [0], [0], [1], [0, 0, 1, 1], [], []>} : vector<128x6xf32>, vector<6x64xf32>, vector<128x64xf32> -> vector<128x64xf32>
    %136 = arith.addf %131, %135 : vector<128x64xf32>
    %137 = vector.extract_strided_slice %130 {offsets = [0, 7, 0], sizes = [8, 16, 6], strides = [1, 1, 1]} : vector<8x24x6xf32> to vector<8x16x6xf32>
    %138 = vector.shape_cast %137 : vector<8x16x6xf32> to vector<128x6xf32>
    %139 = vector.extract_strided_slice %126 {offsets = [6, 0], sizes = [6, 64], strides = [1, 1]} : vector<18x64xf32> to vector<6x64xf32>
    %cst_44 = arith.constant dense<0.000000e+00> : vector<128x64xf32>
    %140 = tpu.matmul %138, %139, %cst_44 {dimension_numbers = #tpu.dot_dimension_numbers<[1], [0], [0], [1], [0, 0, 1, 1], [], []>} : vector<128x6xf32>, vector<6x64xf32>, vector<128x64xf32> -> vector<128x64xf32>
    %141 = arith.addf %136, %140 : vector<128x64xf32>
    %142 = vector.extract_strided_slice %130 {offsets = [0, 8, 0], sizes = [8, 16, 6], strides = [1, 1, 1]} : vector<8x24x6xf32> to vector<8x16x6xf32>
    %143 = vector.shape_cast %142 : vector<8x16x6xf32> to vector<128x6xf32>
    %144 = vector.extract_strided_slice %126 {offsets = [12, 0], sizes = [6, 64], strides = [1, 1]} : vector<18x64xf32> to vector<6x64xf32>
    %cst_45 = arith.constant dense<0.000000e+00> : vector<128x64xf32>
    %145 = tpu.matmul %143, %144, %cst_45 {dimension_numbers = #tpu.dot_dimension_numbers<[1], [0], [0], [1], [0, 0, 1, 1], [], []>} : vector<128x6xf32>, vector<6x64xf32>, vector<128x64xf32> -> vector<128x64xf32>
    %146 = arith.addf %141, %145 : vector<128x64xf32>
    %147 = vector.broadcast %127 : vector<1x64xf32> to vector<128x64xf32>
    %148 = arith.addf %146, %147 : vector<128x64xf32>
    %149 = tpu.iota {dimensions = array<i32: 1>} : vector<8x16x1xi32>
    %c10_i32_46 = arith.constant 10 : i32
    %150 = vector.broadcast %c10_i32_46 : i32 to vector<8x16x1xi32>
    %151 = arith.cmpi slt, %149, %150 : vector<8x16x1xi32>
    %152 = arith.extui %151 : vector<8x16x1xi1> to vector<8x16x1xi32>
    %153 = arith.sitofp %152 : vector<8x16x1xi32> to vector<8x16x1xf32>
    %154 = vector.shape_cast %153 : vector<8x16x1xf32> to vector<128x1xf32>
    %155 = vector.broadcast %154 : vector<128x1xf32> to vector<128x64xf32>
    %156 = arith.mulf %148, %155 : vector<128x64xf32>
    %cst_47 = arith.constant dense<0.000000e+00> : vector<64xf32>
    %157 = vector.multi_reduction <add>, %156, %cst_47 [0] : vector<128x64xf32> to vector<64xf32>
    %158 = vector.shape_cast %157 : vector<64xf32> to vector<1x64xf32>
    %cst_48 = arith.constant 8.000000e+01 : f32
    %159 = vector.broadcast %cst_48 : f32 to vector<1x64xf32>
    %160 = arith.divf %158, %159 : vector<1x64xf32>
    %161 = arith.mulf %156, %148 : vector<128x64xf32>
    %cst_49 = arith.constant dense<0.000000e+00> : vector<64xf32>
    %162 = vector.multi_reduction <add>, %161, %cst_49 [0] : vector<128x64xf32> to vector<64xf32>
    %163 = vector.shape_cast %162 : vector<64xf32> to vector<1x64xf32>
    %cst_50 = arith.constant 8.000000e+01 : f32
    %164 = vector.broadcast %cst_50 : f32 to vector<1x64xf32>
    %165 = arith.divf %163, %164 : vector<1x64xf32>
    %166 = arith.mulf %160, %160 : vector<1x64xf32>
    %167 = arith.subf %165, %166 : vector<1x64xf32>
    %cst_51 = arith.constant 0.000000e+00 : f32
    %168 = vector.broadcast %cst_51 : f32 to vector<1x64xf32>
    %169 = arith.maximumf %167, %168 : vector<1x64xf32>
    %170 = vector.broadcast %160 : vector<1x64xf32> to vector<128x64xf32>
    %171 = arith.subf %148, %170 : vector<128x64xf32>
    %cst_52 = arith.constant 9.99999974E-6 : f32
    %172 = vector.broadcast %cst_52 : f32 to vector<1x64xf32>
    %173 = arith.addf %169, %172 : vector<1x64xf32>
    %174 = math.rsqrt %173 : vector<1x64xf32>
    %175 = vector.broadcast %174 : vector<1x64xf32> to vector<128x64xf32>
    %176 = arith.mulf %171, %175 : vector<128x64xf32>
    %cst_53 = arith.constant 0.000000e+00 : f32
    %177 = vector.broadcast %cst_53 : f32 to vector<128x64xf32>
    %178 = arith.maximumf %176, %177 : vector<128x64xf32>
    %179 = vector.shape_cast %178 : vector<128x64xf32> to vector<8x16x64xf32>
    %180 = vector.extract_strided_slice %179 {offsets = [0, 0, 0], sizes = [8, 8, 64], strides = [1, 1, 1]} : vector<8x16x64xf32> to vector<8x8x64xf32>
    %c0_54 = arith.constant 0 : index
    %c0_55 = arith.constant 0 : index
    %181 = vector.load %arg10[%c0_54, %c0_55] : memref<192x128xf32, #tpu.memory_space<vmem>>, vector<192x128xf32>
    %c0_56 = arith.constant 0 : index
    %c0_57 = arith.constant 0 : index
    %182 = vector.load %arg11[%c0_56, %c0_57] : memref<1x128xf32, #tpu.memory_space<vmem>>, vector<1x128xf32>
    %cst_58 = arith.constant 0.000000e+00 : f32
    %183 = vector.broadcast %cst_58 : f32 to vector<8x8x64xf32>
    %cst_59 = arith.constant 0.000000e+00 : f32
    %184 = vector.broadcast %cst_59 : f32 to vector<8x8x64xf32>
    %185 = tpu.concatenate %183, %180, %184 in 1 : vector<8x8x64xf32>, vector<8x8x64xf32>, vector<8x8x64xf32> -> vector<8x24x64xf32>
    %cst_60 = arith.constant 0.000000e+00 : f32
    %186 = vector.broadcast %cst_60 : f32 to vector<128x128xf32>
    %187 = vector.extract_strided_slice %185 {offsets = [0, 4, 0], sizes = [8, 16, 64], strides = [1, 1, 1]} : vector<8x24x64xf32> to vector<8x16x64xf32>
    %188 = vector.shape_cast %187 : vector<8x16x64xf32> to vector<128x64xf32>
    %189 = vector.extract_strided_slice %181 {offsets = [0, 0], sizes = [64, 128], strides = [1, 1]} : vector<192x128xf32> to vector<64x128xf32>
    %cst_61 = arith.constant dense<0.000000e+00> : vector<128x128xf32>
    %190 = tpu.matmul %188, %189, %cst_61 {dimension_numbers = #tpu.dot_dimension_numbers<[1], [0], [0], [1], [0, 0, 1, 1], [], []>} : vector<128x64xf32>, vector<64x128xf32>, vector<128x128xf32> -> vector<128x128xf32>
    %191 = arith.addf %186, %190 : vector<128x128xf32>
    %192 = vector.extract_strided_slice %185 {offsets = [0, 6, 0], sizes = [8, 16, 64], strides = [1, 1, 1]} : vector<8x24x64xf32> to vector<8x16x64xf32>
    %193 = vector.shape_cast %192 : vector<8x16x64xf32> to vector<128x64xf32>
    %194 = vector.extract_strided_slice %181 {offsets = [64, 0], sizes = [64, 128], strides = [1, 1]} : vector<192x128xf32> to vector<64x128xf32>
    %cst_62 = arith.constant dense<0.000000e+00> : vector<128x128xf32>
    %195 = tpu.matmul %193, %194, %cst_62 {dimension_numbers = #tpu.dot_dimension_numbers<[1], [0], [0], [1], [0, 0, 1, 1], [], []>} : vector<128x64xf32>, vector<64x128xf32>, vector<128x128xf32> -> vector<128x128xf32>
    %196 = arith.addf %191, %195 : vector<128x128xf32>
    %197 = vector.extract_strided_slice %185 {offsets = [0, 8, 0], sizes = [8, 16, 64], strides = [1, 1, 1]} : vector<8x24x64xf32> to vector<8x16x64xf32>
    %198 = vector.shape_cast %197 : vector<8x16x64xf32> to vector<128x64xf32>
    %199 = vector.extract_strided_slice %181 {offsets = [128, 0], sizes = [64, 128], strides = [1, 1]} : vector<192x128xf32> to vector<64x128xf32>
    %cst_63 = arith.constant dense<0.000000e+00> : vector<128x128xf32>
    %200 = tpu.matmul %198, %199, %cst_63 {dimension_numbers = #tpu.dot_dimension_numbers<[1], [0], [0], [1], [0, 0, 1, 1], [], []>} : vector<128x64xf32>, vector<64x128xf32>, vector<128x128xf32> -> vector<128x128xf32>
    %201 = arith.addf %196, %200 : vector<128x128xf32>
    %202 = vector.broadcast %182 : vector<1x128xf32> to vector<128x128xf32>
    %203 = arith.addf %201, %202 : vector<128x128xf32>
    %204 = tpu.iota {dimensions = array<i32: 1>} : vector<8x16x1xi32>
    %c12_i32_64 = arith.constant 12 : i32
    %205 = vector.broadcast %c12_i32_64 : i32 to vector<8x16x1xi32>
    %206 = arith.cmpi slt, %204, %205 : vector<8x16x1xi32>
    %207 = arith.extui %206 : vector<8x16x1xi1> to vector<8x16x1xi32>
    %208 = arith.sitofp %207 : vector<8x16x1xi32> to vector<8x16x1xf32>
    %209 = vector.shape_cast %208 : vector<8x16x1xf32> to vector<128x1xf32>
    %210 = vector.broadcast %209 : vector<128x1xf32> to vector<128x128xf32>
    %211 = arith.mulf %203, %210 : vector<128x128xf32>
    %cst_65 = arith.constant dense<0.000000e+00> : vector<128xf32>
    %212 = vector.multi_reduction <add>, %211, %cst_65 [0] : vector<128x128xf32> to vector<128xf32>
    %213 = vector.shape_cast %212 : vector<128xf32> to vector<1x128xf32>
    %cst_66 = arith.constant 9.600000e+01 : f32
    %214 = vector.broadcast %cst_66 : f32 to vector<1x128xf32>
    %215 = arith.divf %213, %214 : vector<1x128xf32>
    %216 = arith.mulf %211, %203 : vector<128x128xf32>
    %cst_67 = arith.constant dense<0.000000e+00> : vector<128xf32>
    %217 = vector.multi_reduction <add>, %216, %cst_67 [0] : vector<128x128xf32> to vector<128xf32>
    %218 = vector.shape_cast %217 : vector<128xf32> to vector<1x128xf32>
    %cst_68 = arith.constant 9.600000e+01 : f32
    %219 = vector.broadcast %cst_68 : f32 to vector<1x128xf32>
    %220 = arith.divf %218, %219 : vector<1x128xf32>
    %221 = arith.mulf %215, %215 : vector<1x128xf32>
    %222 = arith.subf %220, %221 : vector<1x128xf32>
    %cst_69 = arith.constant 0.000000e+00 : f32
    %223 = vector.broadcast %cst_69 : f32 to vector<1x128xf32>
    %224 = arith.maximumf %222, %223 : vector<1x128xf32>
    %225 = vector.broadcast %215 : vector<1x128xf32> to vector<128x128xf32>
    %226 = arith.subf %203, %225 : vector<128x128xf32>
    %cst_70 = arith.constant 9.99999974E-6 : f32
    %227 = vector.broadcast %cst_70 : f32 to vector<1x128xf32>
    %228 = arith.addf %224, %227 : vector<1x128xf32>
    %229 = math.rsqrt %228 : vector<1x128xf32>
    %230 = vector.broadcast %229 : vector<1x128xf32> to vector<128x128xf32>
    %231 = arith.mulf %226, %230 : vector<128x128xf32>
    %cst_71 = arith.constant 0.000000e+00 : f32
    %232 = vector.broadcast %cst_71 : f32 to vector<128x128xf32>
    %233 = arith.maximumf %231, %232 : vector<128x128xf32>
    %234 = vector.shape_cast %233 : vector<128x128xf32> to vector<8x16x128xf32>
    %235 = vector.extract_strided_slice %234 {offsets = [0, 0, 0], sizes = [8, 8, 128], strides = [1, 1, 1]} : vector<8x16x128xf32> to vector<8x8x128xf32>
    %236 = tpu.iota {dimensions = array<i32: 1>} : vector<1x8x1xi32>
    %c7_i32_72 = arith.constant 7 : i32
    %237 = vector.broadcast %c7_i32_72 : i32 to vector<1x8x1xi32>
    %238 = arith.cmpi eq, %236, %237 : vector<1x8x1xi32>
    %239 = arith.extui %238 : vector<1x8x1xi1> to vector<1x8x1xi32>
    %240 = arith.sitofp %239 : vector<1x8x1xi32> to vector<1x8x1xf32>
    %241 = vector.broadcast %240 : vector<1x8x1xf32> to vector<8x8x128xf32>
    %242 = arith.mulf %235, %241 : vector<8x8x128xf32>
    %cst_73 = arith.constant dense<0.000000e+00> : vector<8x128xf32>
    %243 = vector.multi_reduction <add>, %242, %cst_73 [1] : vector<8x8x128xf32> to vector<8x128xf32>
    %c0_74 = arith.constant 0 : index
    %c0_75 = arith.constant 0 : index
    %244 = vector.load %arg2[%c0_74, %c0_75] : memref<8x10xf32, #tpu.memory_space<vmem>>, vector<8x10xf32>
    %c0_76 = arith.constant 0 : index
    %c0_77 = arith.constant 0 : index
    %245 = vector.load %arg12[%c0_76, %c0_77] : memref<10x64xf32, #tpu.memory_space<vmem>>, vector<10x64xf32>
    %cst_78 = arith.constant dense<0.000000e+00> : vector<8x64xf32>
    %246 = tpu.matmul %244, %245, %cst_78 {dimension_numbers = #tpu.dot_dimension_numbers<[1], [0], [0], [1], [0, 0, 1, 1], [], []>} : vector<8x10xf32>, vector<10x64xf32>, vector<8x64xf32> -> vector<8x64xf32>
    %c0_79 = arith.constant 0 : index
    %c0_80 = arith.constant 0 : index
    %247 = vector.load %arg13[%c0_79, %c0_80] : memref<1x64xf32, #tpu.memory_space<vmem>>, vector<1x64xf32>
    %248 = vector.broadcast %247 : vector<1x64xf32> to vector<8x64xf32>
    %249 = arith.addf %246, %248 : vector<8x64xf32>
    %c0_81 = arith.constant 0 : index
    %c0_82 = arith.constant 0 : index
    %250 = vector.load %arg14[%c0_81, %c0_82] : memref<50x64xf32, #tpu.memory_space<vmem>>, vector<50x64xf32>
    %cst_83 = arith.constant dense<0.000000e+00> : vector<8x64xf32>
    %251 = tpu.matmul %124, %250, %cst_83 {dimension_numbers = #tpu.dot_dimension_numbers<[1], [0], [0], [1], [0, 0, 1, 1], [], []>} : vector<8x50xf32>, vector<50x64xf32>, vector<8x64xf32> -> vector<8x64xf32>
    %c0_84 = arith.constant 0 : index
    %c0_85 = arith.constant 0 : index
    %252 = vector.load %arg15[%c0_84, %c0_85] : memref<64x64xf32, #tpu.memory_space<vmem>>, vector<64x64xf32>
    %cst_86 = arith.constant dense<0.000000e+00> : vector<8x64xf32>
    %253 = tpu.matmul %249, %252, %cst_86 {dimension_numbers = #tpu.dot_dimension_numbers<[1], [0], [0], [1], [0, 0, 1, 1], [], []>} : vector<8x64xf32>, vector<64x64xf32>, vector<8x64xf32> -> vector<8x64xf32>
    %254 = arith.addf %251, %253 : vector<8x64xf32>
    %c0_87 = arith.constant 0 : index
    %c0_88 = arith.constant 0 : index
    %255 = vector.load %arg16[%c0_87, %c0_88] : memref<128x64xf32, #tpu.memory_space<vmem>>, vector<128x64xf32>
    %cst_89 = arith.constant dense<0.000000e+00> : vector<8x64xf32>
    %256 = tpu.matmul %243, %255, %cst_89 {dimension_numbers = #tpu.dot_dimension_numbers<[1], [0], [0], [1], [0, 0, 1, 1], [], []>} : vector<8x128xf32>, vector<128x64xf32>, vector<8x64xf32> -> vector<8x64xf32>
    %257 = arith.addf %254, %256 : vector<8x64xf32>
    %c0_90 = arith.constant 0 : index
    %c0_91 = arith.constant 0 : index
    %258 = vector.load %arg17[%c0_90, %c0_91] : memref<1x64xf32, #tpu.memory_space<vmem>>, vector<1x64xf32>
    %259 = vector.broadcast %258 : vector<1x64xf32> to vector<8x64xf32>
    %260 = arith.addf %257, %259 : vector<8x64xf32>
    %261 = vector.extract_strided_slice %260 {offsets = [0, 0], sizes = [8, 32], strides = [1, 1]} : vector<8x64xf32> to vector<8x32xf32>
    %262 = vector.extract_strided_slice %260 {offsets = [0, 32], sizes = [8, 32], strides = [1, 1]} : vector<8x64xf32> to vector<8x32xf32>
    %263 = arith.negf %262 : vector<8x32xf32>
    %264 = math.exp %263 : vector<8x32xf32>
    %cst_92 = arith.constant 1.000000e+00 : f32
    %265 = vector.broadcast %cst_92 : f32 to vector<8x32xf32>
    %266 = arith.addf %265, %264 : vector<8x32xf32>
    %267 = arith.divf %265, %266 : vector<8x32xf32>
    %268 = arith.mulf %261, %267 : vector<8x32xf32>
    %c0_93 = arith.constant 0 : index
    %c0_94 = arith.constant 0 : index
    %269 = vector.load %arg3[%c0_93, %c0_94] : memref<8x8xf32, #tpu.memory_space<vmem>>, vector<8x8xf32>
    %cst_95 = arith.constant 0.000000e+00 : f32
    %270 = vector.broadcast %cst_95 : f32 to vector<8x8xf32>
    %271 = arith.cmpf ogt, %269, %270 : vector<8x8xf32>
    %c0_96 = arith.constant 0 : index
    %c0_97 = arith.constant 0 : index
    %272 = vector.load %arg18[%c0_96, %c0_97] : memref<32x512xf32, #tpu.memory_space<vmem>>, vector<32x512xf32>
    %c0_98 = arith.constant 0 : index
    %c0_99 = arith.constant 0 : index
    %273 = vector.load %arg19[%c0_98, %c0_99] : memref<1x512xf32, #tpu.memory_space<vmem>>, vector<1x512xf32>
    %c0_100 = arith.constant 0 : index
    %c0_101 = arith.constant 0 : index
    %274 = vector.load %arg20[%c0_100, %c0_101] : memref<4x64xf32, #tpu.memory_space<vmem>>, vector<4x64xf32>
    %cst_102 = arith.constant dense<0.000000e+00> : vector<8x512xf32>
    %275 = tpu.matmul %268, %272, %cst_102 {dimension_numbers = #tpu.dot_dimension_numbers<[1], [0], [0], [1], [0, 0, 1, 1], [], []>} : vector<8x32xf32>, vector<32x512xf32>, vector<8x512xf32> -> vector<8x512xf32>
    %276 = vector.broadcast %273 : vector<1x512xf32> to vector<8x512xf32>
    %277 = arith.addf %275, %276 : vector<8x512xf32>
    %278 = vector.extract_strided_slice %277 {offsets = [0, 0], sizes = [8, 256], strides = [1, 1]} : vector<8x512xf32> to vector<8x256xf32>
    %279 = vector.extract_strided_slice %277 {offsets = [0, 256], sizes = [8, 256], strides = [1, 1]} : vector<8x512xf32> to vector<8x256xf32>
    %280 = vector.extract_strided_slice %278 {offsets = [0, 0], sizes = [8, 64], strides = [1, 1]} : vector<8x256xf32> to vector<8x64xf32>
    %281 = vector.extract_strided_slice %279 {offsets = [0, 0], sizes = [8, 64], strides = [1, 1]} : vector<8x256xf32> to vector<8x64xf32>
    %282 = vector.extract_strided_slice %274 {offsets = [0, 0], sizes = [1, 64], strides = [1, 1]} : vector<4x64xf32> to vector<1x64xf32>
    %283 = vector.shape_cast %280 : vector<8x64xf32> to vector<1x8x64xf32>
    %284 = vector.shape_cast %281 : vector<8x64xf32> to vector<8x1x64xf32>
    %285 = vector.broadcast %283 : vector<1x8x64xf32> to vector<8x8x64xf32>
    %286 = vector.broadcast %284 : vector<8x1x64xf32> to vector<8x8x64xf32>
    %287 = arith.addf %285, %286 : vector<8x8x64xf32>
    %cst_103 = arith.constant 0.000000e+00 : f32
    %288 = vector.broadcast %cst_103 : f32 to vector<8x8x64xf32>
    %289 = arith.cmpf oge, %287, %288 : vector<8x8x64xf32>
    %cst_104 = arith.constant 2.000000e-01 : f32
    %290 = vector.broadcast %cst_104 : f32 to vector<8x8x64xf32>
    %291 = arith.mulf %290, %287 : vector<8x8x64xf32>
    %292 = arith.select %289, %287, %291 : vector<8x8x64xi1>, vector<8x8x64xf32>
    %293 = vector.shape_cast %282 : vector<1x64xf32> to vector<1x1x64xf32>
    %294 = vector.broadcast %293 : vector<1x1x64xf32> to vector<8x8x64xf32>
    %295 = arith.mulf %292, %294 : vector<8x8x64xf32>
    %cst_105 = arith.constant dense<0.000000e+00> : vector<8x8xf32>
    %296 = vector.multi_reduction <add>, %295, %cst_105 [2] : vector<8x8x64xf32> to vector<8x8xf32>
    %cst_106 = arith.constant -1.000000e+30 : f32
    %297 = vector.broadcast %cst_106 : f32 to vector<8x8xf32>
    %298 = arith.select %271, %296, %297 : vector<8x8xi1>, vector<8x8xf32>
    %cst_107 = arith.constant dense<0xFF800000> : vector<8xf32>
    %299 = vector.multi_reduction <maximumf>, %298, %cst_107 [1] : vector<8x8xf32> to vector<8xf32>
    %300 = vector.shape_cast %299 : vector<8xf32> to vector<8x1xf32>
    %301 = vector.broadcast %300 : vector<8x1xf32> to vector<8x8xf32>
    %302 = arith.subf %298, %301 : vector<8x8xf32>
    %303 = math.exp %302 : vector<8x8xf32>
    %cst_108 = arith.constant 0.000000e+00 : f32
    %304 = vector.broadcast %cst_108 : f32 to vector<8x8xf32>
    %305 = arith.select %271, %303, %304 : vector<8x8xi1>, vector<8x8xf32>
    %cst_109 = arith.constant dense<0.000000e+00> : vector<8xf32>
    %306 = vector.multi_reduction <add>, %305, %cst_109 [1] : vector<8x8xf32> to vector<8xf32>
    %307 = vector.shape_cast %306 : vector<8xf32> to vector<8x1xf32>
    %cst_110 = arith.constant 9.99999968E-21 : f32
    %308 = vector.broadcast %cst_110 : f32 to vector<8x1xf32>
    %309 = arith.maximumf %307, %308 : vector<8x1xf32>
    %310 = tpu.reciprocal %309 {approx = true} : vector<8x1xf32> -> vector<8x1xf32>
    %311 = vector.broadcast %310 : vector<8x1xf32> to vector<8x8xf32>
    %312 = arith.mulf %305, %311 : vector<8x8xf32>
    %cst_111 = arith.constant dense<0.000000e+00> : vector<8x64xf32>
    %313 = tpu.matmul %312, %280, %cst_111 {dimension_numbers = #tpu.dot_dimension_numbers<[1], [0], [0], [1], [0, 0, 1, 1], [], []>} : vector<8x8xf32>, vector<8x64xf32>, vector<8x64xf32> -> vector<8x64xf32>
    %314 = vector.extract_strided_slice %278 {offsets = [0, 64], sizes = [8, 64], strides = [1, 1]} : vector<8x256xf32> to vector<8x64xf32>
    %315 = vector.extract_strided_slice %279 {offsets = [0, 64], sizes = [8, 64], strides = [1, 1]} : vector<8x256xf32> to vector<8x64xf32>
    %316 = vector.extract_strided_slice %274 {offsets = [1, 0], sizes = [1, 64], strides = [1, 1]} : vector<4x64xf32> to vector<1x64xf32>
    %317 = vector.shape_cast %314 : vector<8x64xf32> to vector<1x8x64xf32>
    %318 = vector.shape_cast %315 : vector<8x64xf32> to vector<8x1x64xf32>
    %319 = vector.broadcast %317 : vector<1x8x64xf32> to vector<8x8x64xf32>
    %320 = vector.broadcast %318 : vector<8x1x64xf32> to vector<8x8x64xf32>
    %321 = arith.addf %319, %320 : vector<8x8x64xf32>
    %cst_112 = arith.constant 0.000000e+00 : f32
    %322 = vector.broadcast %cst_112 : f32 to vector<8x8x64xf32>
    %323 = arith.cmpf oge, %321, %322 : vector<8x8x64xf32>
    %cst_113 = arith.constant 2.000000e-01 : f32
    %324 = vector.broadcast %cst_113 : f32 to vector<8x8x64xf32>
    %325 = arith.mulf %324, %321 : vector<8x8x64xf32>
    %326 = arith.select %323, %321, %325 : vector<8x8x64xi1>, vector<8x8x64xf32>
    %327 = vector.shape_cast %316 : vector<1x64xf32> to vector<1x1x64xf32>
    %328 = vector.broadcast %327 : vector<1x1x64xf32> to vector<8x8x64xf32>
    %329 = arith.mulf %326, %328 : vector<8x8x64xf32>
    %cst_114 = arith.constant dense<0.000000e+00> : vector<8x8xf32>
    %330 = vector.multi_reduction <add>, %329, %cst_114 [2] : vector<8x8x64xf32> to vector<8x8xf32>
    %cst_115 = arith.constant -1.000000e+30 : f32
    %331 = vector.broadcast %cst_115 : f32 to vector<8x8xf32>
    %332 = arith.select %271, %330, %331 : vector<8x8xi1>, vector<8x8xf32>
    %cst_116 = arith.constant dense<0xFF800000> : vector<8xf32>
    %333 = vector.multi_reduction <maximumf>, %332, %cst_116 [1] : vector<8x8xf32> to vector<8xf32>
    %334 = vector.shape_cast %333 : vector<8xf32> to vector<8x1xf32>
    %335 = vector.broadcast %334 : vector<8x1xf32> to vector<8x8xf32>
    %336 = arith.subf %332, %335 : vector<8x8xf32>
    %337 = math.exp %336 : vector<8x8xf32>
    %cst_117 = arith.constant 0.000000e+00 : f32
    %338 = vector.broadcast %cst_117 : f32 to vector<8x8xf32>
    %339 = arith.select %271, %337, %338 : vector<8x8xi1>, vector<8x8xf32>
    %cst_118 = arith.constant dense<0.000000e+00> : vector<8xf32>
    %340 = vector.multi_reduction <add>, %339, %cst_118 [1] : vector<8x8xf32> to vector<8xf32>
    %341 = vector.shape_cast %340 : vector<8xf32> to vector<8x1xf32>
    %cst_119 = arith.constant 9.99999968E-21 : f32
    %342 = vector.broadcast %cst_119 : f32 to vector<8x1xf32>
    %343 = arith.maximumf %341, %342 : vector<8x1xf32>
    %344 = tpu.reciprocal %343 {approx = true} : vector<8x1xf32> -> vector<8x1xf32>
    %345 = vector.broadcast %344 : vector<8x1xf32> to vector<8x8xf32>
    %346 = arith.mulf %339, %345 : vector<8x8xf32>
    %cst_120 = arith.constant dense<0.000000e+00> : vector<8x64xf32>
    %347 = tpu.matmul %346, %314, %cst_120 {dimension_numbers = #tpu.dot_dimension_numbers<[1], [0], [0], [1], [0, 0, 1, 1], [], []>} : vector<8x8xf32>, vector<8x64xf32>, vector<8x64xf32> -> vector<8x64xf32>
    %348 = arith.maximumf %313, %347 : vector<8x64xf32>
    %349 = vector.extract_strided_slice %278 {offsets = [0, 128], sizes = [8, 64], strides = [1, 1]} : vector<8x256xf32> to vector<8x64xf32>
    %350 = vector.extract_strided_slice %279 {offsets = [0, 128], sizes = [8, 64], strides = [1, 1]} : vector<8x256xf32> to vector<8x64xf32>
    %351 = vector.extract_strided_slice %274 {offsets = [2, 0], sizes = [1, 64], strides = [1, 1]} : vector<4x64xf32> to vector<1x64xf32>
    %352 = vector.shape_cast %349 : vector<8x64xf32> to vector<1x8x64xf32>
    %353 = vector.shape_cast %350 : vector<8x64xf32> to vector<8x1x64xf32>
    %354 = vector.broadcast %352 : vector<1x8x64xf32> to vector<8x8x64xf32>
    %355 = vector.broadcast %353 : vector<8x1x64xf32> to vector<8x8x64xf32>
    %356 = arith.addf %354, %355 : vector<8x8x64xf32>
    %cst_121 = arith.constant 0.000000e+00 : f32
    %357 = vector.broadcast %cst_121 : f32 to vector<8x8x64xf32>
    %358 = arith.cmpf oge, %356, %357 : vector<8x8x64xf32>
    %cst_122 = arith.constant 2.000000e-01 : f32
    %359 = vector.broadcast %cst_122 : f32 to vector<8x8x64xf32>
    %360 = arith.mulf %359, %356 : vector<8x8x64xf32>
    %361 = arith.select %358, %356, %360 : vector<8x8x64xi1>, vector<8x8x64xf32>
    %362 = vector.shape_cast %351 : vector<1x64xf32> to vector<1x1x64xf32>
    %363 = vector.broadcast %362 : vector<1x1x64xf32> to vector<8x8x64xf32>
    %364 = arith.mulf %361, %363 : vector<8x8x64xf32>
    %cst_123 = arith.constant dense<0.000000e+00> : vector<8x8xf32>
    %365 = vector.multi_reduction <add>, %364, %cst_123 [2] : vector<8x8x64xf32> to vector<8x8xf32>
    %cst_124 = arith.constant -1.000000e+30 : f32
    %366 = vector.broadcast %cst_124 : f32 to vector<8x8xf32>
    %367 = arith.select %271, %365, %366 : vector<8x8xi1>, vector<8x8xf32>
    %cst_125 = arith.constant dense<0xFF800000> : vector<8xf32>
    %368 = vector.multi_reduction <maximumf>, %367, %cst_125 [1] : vector<8x8xf32> to vector<8xf32>
    %369 = vector.shape_cast %368 : vector<8xf32> to vector<8x1xf32>
    %370 = vector.broadcast %369 : vector<8x1xf32> to vector<8x8xf32>
    %371 = arith.subf %367, %370 : vector<8x8xf32>
    %372 = math.exp %371 : vector<8x8xf32>
    %cst_126 = arith.constant 0.000000e+00 : f32
    %373 = vector.broadcast %cst_126 : f32 to vector<8x8xf32>
    %374 = arith.select %271, %372, %373 : vector<8x8xi1>, vector<8x8xf32>
    %cst_127 = arith.constant dense<0.000000e+00> : vector<8xf32>
    %375 = vector.multi_reduction <add>, %374, %cst_127 [1] : vector<8x8xf32> to vector<8xf32>
    %376 = vector.shape_cast %375 : vector<8xf32> to vector<8x1xf32>
    %cst_128 = arith.constant 9.99999968E-21 : f32
    %377 = vector.broadcast %cst_128 : f32 to vector<8x1xf32>
    %378 = arith.maximumf %376, %377 : vector<8x1xf32>
    %379 = tpu.reciprocal %378 {approx = true} : vector<8x1xf32> -> vector<8x1xf32>
    %380 = vector.broadcast %379 : vector<8x1xf32> to vector<8x8xf32>
    %381 = arith.mulf %374, %380 : vector<8x8xf32>
    %cst_129 = arith.constant dense<0.000000e+00> : vector<8x64xf32>
    %382 = tpu.matmul %381, %349, %cst_129 {dimension_numbers = #tpu.dot_dimension_numbers<[1], [0], [0], [1], [0, 0, 1, 1], [], []>} : vector<8x8xf32>, vector<8x64xf32>, vector<8x64xf32> -> vector<8x64xf32>
    %383 = arith.maximumf %348, %382 : vector<8x64xf32>
    %384 = vector.extract_strided_slice %278 {offsets = [0, 192], sizes = [8, 64], strides = [1, 1]} : vector<8x256xf32> to vector<8x64xf32>
    %385 = vector.extract_strided_slice %279 {offsets = [0, 192], sizes = [8, 64], strides = [1, 1]} : vector<8x256xf32> to vector<8x64xf32>
    %386 = vector.extract_strided_slice %274 {offsets = [3, 0], sizes = [1, 64], strides = [1, 1]} : vector<4x64xf32> to vector<1x64xf32>
    %387 = vector.shape_cast %384 : vector<8x64xf32> to vector<1x8x64xf32>
    %388 = vector.shape_cast %385 : vector<8x64xf32> to vector<8x1x64xf32>
    %389 = vector.broadcast %387 : vector<1x8x64xf32> to vector<8x8x64xf32>
    %390 = vector.broadcast %388 : vector<8x1x64xf32> to vector<8x8x64xf32>
    %391 = arith.addf %389, %390 : vector<8x8x64xf32>
    %cst_130 = arith.constant 0.000000e+00 : f32
    %392 = vector.broadcast %cst_130 : f32 to vector<8x8x64xf32>
    %393 = arith.cmpf oge, %391, %392 : vector<8x8x64xf32>
    %cst_131 = arith.constant 2.000000e-01 : f32
    %394 = vector.broadcast %cst_131 : f32 to vector<8x8x64xf32>
    %395 = arith.mulf %394, %391 : vector<8x8x64xf32>
    %396 = arith.select %393, %391, %395 : vector<8x8x64xi1>, vector<8x8x64xf32>
    %397 = vector.shape_cast %386 : vector<1x64xf32> to vector<1x1x64xf32>
    %398 = vector.broadcast %397 : vector<1x1x64xf32> to vector<8x8x64xf32>
    %399 = arith.mulf %396, %398 : vector<8x8x64xf32>
    %cst_132 = arith.constant dense<0.000000e+00> : vector<8x8xf32>
    %400 = vector.multi_reduction <add>, %399, %cst_132 [2] : vector<8x8x64xf32> to vector<8x8xf32>
    %cst_133 = arith.constant -1.000000e+30 : f32
    %401 = vector.broadcast %cst_133 : f32 to vector<8x8xf32>
    %402 = arith.select %271, %400, %401 : vector<8x8xi1>, vector<8x8xf32>
    %cst_134 = arith.constant dense<0xFF800000> : vector<8xf32>
    %403 = vector.multi_reduction <maximumf>, %402, %cst_134 [1] : vector<8x8xf32> to vector<8xf32>
    %404 = vector.shape_cast %403 : vector<8xf32> to vector<8x1xf32>
    %405 = vector.broadcast %404 : vector<8x1xf32> to vector<8x8xf32>
    %406 = arith.subf %402, %405 : vector<8x8xf32>
    %407 = math.exp %406 : vector<8x8xf32>
    %cst_135 = arith.constant 0.000000e+00 : f32
    %408 = vector.broadcast %cst_135 : f32 to vector<8x8xf32>
    %409 = arith.select %271, %407, %408 : vector<8x8xi1>, vector<8x8xf32>
    %cst_136 = arith.constant dense<0.000000e+00> : vector<8xf32>
    %410 = vector.multi_reduction <add>, %409, %cst_136 [1] : vector<8x8xf32> to vector<8xf32>
    %411 = vector.shape_cast %410 : vector<8xf32> to vector<8x1xf32>
    %cst_137 = arith.constant 9.99999968E-21 : f32
    %412 = vector.broadcast %cst_137 : f32 to vector<8x1xf32>
    %413 = arith.maximumf %411, %412 : vector<8x1xf32>
    %414 = tpu.reciprocal %413 {approx = true} : vector<8x1xf32> -> vector<8x1xf32>
    %415 = vector.broadcast %414 : vector<8x1xf32> to vector<8x8xf32>
    %416 = arith.mulf %409, %415 : vector<8x8xf32>
    %cst_138 = arith.constant dense<0.000000e+00> : vector<8x64xf32>
    %417 = tpu.matmul %416, %384, %cst_138 {dimension_numbers = #tpu.dot_dimension_numbers<[1], [0], [0], [1], [0, 0, 1, 1], [], []>} : vector<8x8xf32>, vector<8x64xf32>, vector<8x64xf32> -> vector<8x64xf32>
    %418 = arith.maximumf %383, %417 : vector<8x64xf32>
    %c0_139 = arith.constant 0 : index
    %c0_140 = arith.constant 0 : index
    %419 = vector.load %arg21[%c0_139, %c0_140] : memref<64x1024xf32, #tpu.memory_space<vmem>>, vector<64x1024xf32>
    %c0_141 = arith.constant 0 : index
    %c0_142 = arith.constant 0 : index
    %420 = vector.load %arg22[%c0_141, %c0_142] : memref<1x1024xf32, #tpu.memory_space<vmem>>, vector<1x1024xf32>
    %c0_143 = arith.constant 0 : index
    %c0_144 = arith.constant 0 : index
    %421 = vector.load %arg23[%c0_143, %c0_144] : memref<4x128xf32, #tpu.memory_space<vmem>>, vector<4x128xf32>
    %cst_145 = arith.constant dense<0.000000e+00> : vector<8x1024xf32>
    %422 = tpu.matmul %418, %419, %cst_145 {dimension_numbers = #tpu.dot_dimension_numbers<[1], [0], [0], [1], [0, 0, 1, 1], [], []>} : vector<8x64xf32>, vector<64x1024xf32>, vector<8x1024xf32> -> vector<8x1024xf32>
    %423 = vector.broadcast %420 : vector<1x1024xf32> to vector<8x1024xf32>
    %424 = arith.addf %422, %423 : vector<8x1024xf32>
    %425 = vector.extract_strided_slice %424 {offsets = [0, 0], sizes = [8, 512], strides = [1, 1]} : vector<8x1024xf32> to vector<8x512xf32>
    %426 = vector.extract_strided_slice %424 {offsets = [0, 512], sizes = [8, 512], strides = [1, 1]} : vector<8x1024xf32> to vector<8x512xf32>
    %427 = vector.extract_strided_slice %425 {offsets = [0, 0], sizes = [8, 128], strides = [1, 1]} : vector<8x512xf32> to vector<8x128xf32>
    %428 = vector.extract_strided_slice %426 {offsets = [0, 0], sizes = [8, 128], strides = [1, 1]} : vector<8x512xf32> to vector<8x128xf32>
    %429 = vector.extract_strided_slice %421 {offsets = [0, 0], sizes = [1, 128], strides = [1, 1]} : vector<4x128xf32> to vector<1x128xf32>
    %430 = vector.shape_cast %427 : vector<8x128xf32> to vector<1x8x128xf32>
    %431 = vector.shape_cast %428 : vector<8x128xf32> to vector<8x1x128xf32>
    %432 = vector.broadcast %430 : vector<1x8x128xf32> to vector<8x8x128xf32>
    %433 = vector.broadcast %431 : vector<8x1x128xf32> to vector<8x8x128xf32>
    %434 = arith.addf %432, %433 : vector<8x8x128xf32>
    %cst_146 = arith.constant 0.000000e+00 : f32
    %435 = vector.broadcast %cst_146 : f32 to vector<8x8x128xf32>
    %436 = arith.cmpf oge, %434, %435 : vector<8x8x128xf32>
    %cst_147 = arith.constant 2.000000e-01 : f32
    %437 = vector.broadcast %cst_147 : f32 to vector<8x8x128xf32>
    %438 = arith.mulf %437, %434 : vector<8x8x128xf32>
    %439 = arith.select %436, %434, %438 : vector<8x8x128xi1>, vector<8x8x128xf32>
    %440 = vector.shape_cast %429 : vector<1x128xf32> to vector<1x1x128xf32>
    %441 = vector.broadcast %440 : vector<1x1x128xf32> to vector<8x8x128xf32>
    %442 = arith.mulf %439, %441 : vector<8x8x128xf32>
    %cst_148 = arith.constant dense<0.000000e+00> : vector<8x8xf32>
    %443 = vector.multi_reduction <add>, %442, %cst_148 [2] : vector<8x8x128xf32> to vector<8x8xf32>
    %cst_149 = arith.constant -1.000000e+30 : f32
    %444 = vector.broadcast %cst_149 : f32 to vector<8x8xf32>
    %445 = arith.select %271, %443, %444 : vector<8x8xi1>, vector<8x8xf32>
    %cst_150 = arith.constant dense<0xFF800000> : vector<8xf32>
    %446 = vector.multi_reduction <maximumf>, %445, %cst_150 [1] : vector<8x8xf32> to vector<8xf32>
    %447 = vector.shape_cast %446 : vector<8xf32> to vector<8x1xf32>
    %448 = vector.broadcast %447 : vector<8x1xf32> to vector<8x8xf32>
    %449 = arith.subf %445, %448 : vector<8x8xf32>
    %450 = math.exp %449 : vector<8x8xf32>
    %cst_151 = arith.constant 0.000000e+00 : f32
    %451 = vector.broadcast %cst_151 : f32 to vector<8x8xf32>
    %452 = arith.select %271, %450, %451 : vector<8x8xi1>, vector<8x8xf32>
    %cst_152 = arith.constant dense<0.000000e+00> : vector<8xf32>
    %453 = vector.multi_reduction <add>, %452, %cst_152 [1] : vector<8x8xf32> to vector<8xf32>
    %454 = vector.shape_cast %453 : vector<8xf32> to vector<8x1xf32>
    %cst_153 = arith.constant 9.99999968E-21 : f32
    %455 = vector.broadcast %cst_153 : f32 to vector<8x1xf32>
    %456 = arith.maximumf %454, %455 : vector<8x1xf32>
    %457 = tpu.reciprocal %456 {approx = true} : vector<8x1xf32> -> vector<8x1xf32>
    %458 = vector.broadcast %457 : vector<8x1xf32> to vector<8x8xf32>
    %459 = arith.mulf %452, %458 : vector<8x8xf32>
    %cst_154 = arith.constant dense<0.000000e+00> : vector<8x128xf32>
    %460 = tpu.matmul %459, %427, %cst_154 {dimension_numbers = #tpu.dot_dimension_numbers<[1], [0], [0], [1], [0, 0, 1, 1], [], []>} : vector<8x8xf32>, vector<8x128xf32>, vector<8x128xf32> -> vector<8x128xf32>
    %461 = vector.extract_strided_slice %425 {offsets = [0, 128], sizes = [8, 128], strides = [1, 1]} : vector<8x512xf32> to vector<8x128xf32>
    %462 = vector.extract_strided_slice %426 {offsets = [0, 128], sizes = [8, 128], strides = [1, 1]} : vector<8x512xf32> to vector<8x128xf32>
    %463 = vector.extract_strided_slice %421 {offsets = [1, 0], sizes = [1, 128], strides = [1, 1]} : vector<4x128xf32> to vector<1x128xf32>
    %464 = vector.shape_cast %461 : vector<8x128xf32> to vector<1x8x128xf32>
    %465 = vector.shape_cast %462 : vector<8x128xf32> to vector<8x1x128xf32>
    %466 = vector.broadcast %464 : vector<1x8x128xf32> to vector<8x8x128xf32>
    %467 = vector.broadcast %465 : vector<8x1x128xf32> to vector<8x8x128xf32>
    %468 = arith.addf %466, %467 : vector<8x8x128xf32>
    %cst_155 = arith.constant 0.000000e+00 : f32
    %469 = vector.broadcast %cst_155 : f32 to vector<8x8x128xf32>
    %470 = arith.cmpf oge, %468, %469 : vector<8x8x128xf32>
    %cst_156 = arith.constant 2.000000e-01 : f32
    %471 = vector.broadcast %cst_156 : f32 to vector<8x8x128xf32>
    %472 = arith.mulf %471, %468 : vector<8x8x128xf32>
    %473 = arith.select %470, %468, %472 : vector<8x8x128xi1>, vector<8x8x128xf32>
    %474 = vector.shape_cast %463 : vector<1x128xf32> to vector<1x1x128xf32>
    %475 = vector.broadcast %474 : vector<1x1x128xf32> to vector<8x8x128xf32>
    %476 = arith.mulf %473, %475 : vector<8x8x128xf32>
    %cst_157 = arith.constant dense<0.000000e+00> : vector<8x8xf32>
    %477 = vector.multi_reduction <add>, %476, %cst_157 [2] : vector<8x8x128xf32> to vector<8x8xf32>
    %cst_158 = arith.constant -1.000000e+30 : f32
    %478 = vector.broadcast %cst_158 : f32 to vector<8x8xf32>
    %479 = arith.select %271, %477, %478 : vector<8x8xi1>, vector<8x8xf32>
    %cst_159 = arith.constant dense<0xFF800000> : vector<8xf32>
    %480 = vector.multi_reduction <maximumf>, %479, %cst_159 [1] : vector<8x8xf32> to vector<8xf32>
    %481 = vector.shape_cast %480 : vector<8xf32> to vector<8x1xf32>
    %482 = vector.broadcast %481 : vector<8x1xf32> to vector<8x8xf32>
    %483 = arith.subf %479, %482 : vector<8x8xf32>
    %484 = math.exp %483 : vector<8x8xf32>
    %cst_160 = arith.constant 0.000000e+00 : f32
    %485 = vector.broadcast %cst_160 : f32 to vector<8x8xf32>
    %486 = arith.select %271, %484, %485 : vector<8x8xi1>, vector<8x8xf32>
    %cst_161 = arith.constant dense<0.000000e+00> : vector<8xf32>
    %487 = vector.multi_reduction <add>, %486, %cst_161 [1] : vector<8x8xf32> to vector<8xf32>
    %488 = vector.shape_cast %487 : vector<8xf32> to vector<8x1xf32>
    %cst_162 = arith.constant 9.99999968E-21 : f32
    %489 = vector.broadcast %cst_162 : f32 to vector<8x1xf32>
    %490 = arith.maximumf %488, %489 : vector<8x1xf32>
    %491 = tpu.reciprocal %490 {approx = true} : vector<8x1xf32> -> vector<8x1xf32>
    %492 = vector.broadcast %491 : vector<8x1xf32> to vector<8x8xf32>
    %493 = arith.mulf %486, %492 : vector<8x8xf32>
    %cst_163 = arith.constant dense<0.000000e+00> : vector<8x128xf32>
    %494 = tpu.matmul %493, %461, %cst_163 {dimension_numbers = #tpu.dot_dimension_numbers<[1], [0], [0], [1], [0, 0, 1, 1], [], []>} : vector<8x8xf32>, vector<8x128xf32>, vector<8x128xf32> -> vector<8x128xf32>
    %495 = arith.maximumf %460, %494 : vector<8x128xf32>
    %496 = vector.extract_strided_slice %425 {offsets = [0, 256], sizes = [8, 128], strides = [1, 1]} : vector<8x512xf32> to vector<8x128xf32>
    %497 = vector.extract_strided_slice %426 {offsets = [0, 256], sizes = [8, 128], strides = [1, 1]} : vector<8x512xf32> to vector<8x128xf32>
    %498 = vector.extract_strided_slice %421 {offsets = [2, 0], sizes = [1, 128], strides = [1, 1]} : vector<4x128xf32> to vector<1x128xf32>
    %499 = vector.shape_cast %496 : vector<8x128xf32> to vector<1x8x128xf32>
    %500 = vector.shape_cast %497 : vector<8x128xf32> to vector<8x1x128xf32>
    %501 = vector.broadcast %499 : vector<1x8x128xf32> to vector<8x8x128xf32>
    %502 = vector.broadcast %500 : vector<8x1x128xf32> to vector<8x8x128xf32>
    %503 = arith.addf %501, %502 : vector<8x8x128xf32>
    %cst_164 = arith.constant 0.000000e+00 : f32
    %504 = vector.broadcast %cst_164 : f32 to vector<8x8x128xf32>
    %505 = arith.cmpf oge, %503, %504 : vector<8x8x128xf32>
    %cst_165 = arith.constant 2.000000e-01 : f32
    %506 = vector.broadcast %cst_165 : f32 to vector<8x8x128xf32>
    %507 = arith.mulf %506, %503 : vector<8x8x128xf32>
    %508 = arith.select %505, %503, %507 : vector<8x8x128xi1>, vector<8x8x128xf32>
    %509 = vector.shape_cast %498 : vector<1x128xf32> to vector<1x1x128xf32>
    %510 = vector.broadcast %509 : vector<1x1x128xf32> to vector<8x8x128xf32>
    %511 = arith.mulf %508, %510 : vector<8x8x128xf32>
    %cst_166 = arith.constant dense<0.000000e+00> : vector<8x8xf32>
    %512 = vector.multi_reduction <add>, %511, %cst_166 [2] : vector<8x8x128xf32> to vector<8x8xf32>
    %cst_167 = arith.constant -1.000000e+30 : f32
    %513 = vector.broadcast %cst_167 : f32 to vector<8x8xf32>
    %514 = arith.select %271, %512, %513 : vector<8x8xi1>, vector<8x8xf32>
    %cst_168 = arith.constant dense<0xFF800000> : vector<8xf32>
    %515 = vector.multi_reduction <maximumf>, %514, %cst_168 [1] : vector<8x8xf32> to vector<8xf32>
    %516 = vector.shape_cast %515 : vector<8xf32> to vector<8x1xf32>
    %517 = vector.broadcast %516 : vector<8x1xf32> to vector<8x8xf32>
    %518 = arith.subf %514, %517 : vector<8x8xf32>
    %519 = math.exp %518 : vector<8x8xf32>
    %cst_169 = arith.constant 0.000000e+00 : f32
    %520 = vector.broadcast %cst_169 : f32 to vector<8x8xf32>
    %521 = arith.select %271, %519, %520 : vector<8x8xi1>, vector<8x8xf32>
    %cst_170 = arith.constant dense<0.000000e+00> : vector<8xf32>
    %522 = vector.multi_reduction <add>, %521, %cst_170 [1] : vector<8x8xf32> to vector<8xf32>
    %523 = vector.shape_cast %522 : vector<8xf32> to vector<8x1xf32>
    %cst_171 = arith.constant 9.99999968E-21 : f32
    %524 = vector.broadcast %cst_171 : f32 to vector<8x1xf32>
    %525 = arith.maximumf %523, %524 : vector<8x1xf32>
    %526 = tpu.reciprocal %525 {approx = true} : vector<8x1xf32> -> vector<8x1xf32>
    %527 = vector.broadcast %526 : vector<8x1xf32> to vector<8x8xf32>
    %528 = arith.mulf %521, %527 : vector<8x8xf32>
    %cst_172 = arith.constant dense<0.000000e+00> : vector<8x128xf32>
    %529 = tpu.matmul %528, %496, %cst_172 {dimension_numbers = #tpu.dot_dimension_numbers<[1], [0], [0], [1], [0, 0, 1, 1], [], []>} : vector<8x8xf32>, vector<8x128xf32>, vector<8x128xf32> -> vector<8x128xf32>
    %530 = arith.maximumf %495, %529 : vector<8x128xf32>
    %531 = vector.extract_strided_slice %425 {offsets = [0, 384], sizes = [8, 128], strides = [1, 1]} : vector<8x512xf32> to vector<8x128xf32>
    %532 = vector.extract_strided_slice %426 {offsets = [0, 384], sizes = [8, 128], strides = [1, 1]} : vector<8x512xf32> to vector<8x128xf32>
    %533 = vector.extract_strided_slice %421 {offsets = [3, 0], sizes = [1, 128], strides = [1, 1]} : vector<4x128xf32> to vector<1x128xf32>
    %534 = vector.shape_cast %531 : vector<8x128xf32> to vector<1x8x128xf32>
    %535 = vector.shape_cast %532 : vector<8x128xf32> to vector<8x1x128xf32>
    %536 = vector.broadcast %534 : vector<1x8x128xf32> to vector<8x8x128xf32>
    %537 = vector.broadcast %535 : vector<8x1x128xf32> to vector<8x8x128xf32>
    %538 = arith.addf %536, %537 : vector<8x8x128xf32>
    %cst_173 = arith.constant 0.000000e+00 : f32
    %539 = vector.broadcast %cst_173 : f32 to vector<8x8x128xf32>
    %540 = arith.cmpf oge, %538, %539 : vector<8x8x128xf32>
    %cst_174 = arith.constant 2.000000e-01 : f32
    %541 = vector.broadcast %cst_174 : f32 to vector<8x8x128xf32>
    %542 = arith.mulf %541, %538 : vector<8x8x128xf32>
    %543 = arith.select %540, %538, %542 : vector<8x8x128xi1>, vector<8x8x128xf32>
    %544 = vector.shape_cast %533 : vector<1x128xf32> to vector<1x1x128xf32>
    %545 = vector.broadcast %544 : vector<1x1x128xf32> to vector<8x8x128xf32>
    %546 = arith.mulf %543, %545 : vector<8x8x128xf32>
    %cst_175 = arith.constant dense<0.000000e+00> : vector<8x8xf32>
    %547 = vector.multi_reduction <add>, %546, %cst_175 [2] : vector<8x8x128xf32> to vector<8x8xf32>
    %cst_176 = arith.constant -1.000000e+30 : f32
    %548 = vector.broadcast %cst_176 : f32 to vector<8x8xf32>
    %549 = arith.select %271, %547, %548 : vector<8x8xi1>, vector<8x8xf32>
    %cst_177 = arith.constant dense<0xFF800000> : vector<8xf32>
    %550 = vector.multi_reduction <maximumf>, %549, %cst_177 [1] : vector<8x8xf32> to vector<8xf32>
    %551 = vector.shape_cast %550 : vector<8xf32> to vector<8x1xf32>
    %552 = vector.broadcast %551 : vector<8x1xf32> to vector<8x8xf32>
    %553 = arith.subf %549, %552 : vector<8x8xf32>
    %554 = math.exp %553 : vector<8x8xf32>
    %cst_178 = arith.constant 0.000000e+00 : f32
    %555 = vector.broadcast %cst_178 : f32 to vector<8x8xf32>
    %556 = arith.select %271, %554, %555 : vector<8x8xi1>, vector<8x8xf32>
    %cst_179 = arith.constant dense<0.000000e+00> : vector<8xf32>
    %557 = vector.multi_reduction <add>, %556, %cst_179 [1] : vector<8x8xf32> to vector<8xf32>
    %558 = vector.shape_cast %557 : vector<8xf32> to vector<8x1xf32>
    %cst_180 = arith.constant 9.99999968E-21 : f32
    %559 = vector.broadcast %cst_180 : f32 to vector<8x1xf32>
    %560 = arith.maximumf %558, %559 : vector<8x1xf32>
    %561 = tpu.reciprocal %560 {approx = true} : vector<8x1xf32> -> vector<8x1xf32>
    %562 = vector.broadcast %561 : vector<8x1xf32> to vector<8x8xf32>
    %563 = arith.mulf %556, %562 : vector<8x8xf32>
    %cst_181 = arith.constant dense<0.000000e+00> : vector<8x128xf32>
    %564 = tpu.matmul %563, %531, %cst_181 {dimension_numbers = #tpu.dot_dimension_numbers<[1], [0], [0], [1], [0, 0, 1, 1], [], []>} : vector<8x8xf32>, vector<8x128xf32>, vector<8x128xf32> -> vector<8x128xf32>
    %565 = arith.maximumf %530, %564 : vector<8x128xf32>
    %c0_182 = arith.constant 0 : index
    %c0_183 = arith.constant 0 : index
    %566 = vector.load %arg24[%c0_182, %c0_183] : memref<1x128xf32, #tpu.memory_space<vmem>>, vector<1x128xf32>
    %c0_184 = arith.constant 0 : index
    %c0_185 = arith.constant 0 : index
    %567 = vector.load %arg25[%c0_184, %c0_185] : memref<1x1xf32, #tpu.memory_space<vmem>>, vector<1x1xf32>
    %c0_186 = arith.constant 0 : index
    %c0_187 = arith.constant 0 : index
    %568 = vector.load %arg26[%c0_186, %c0_187] : memref<128x128xf32, #tpu.memory_space<vmem>>, vector<128x128xf32>
    %c0_188 = arith.constant 0 : index
    %c0_189 = arith.constant 0 : index
    %569 = vector.load %arg27[%c0_188, %c0_189] : memref<1x128xf32, #tpu.memory_space<vmem>>, vector<1x128xf32>
    %c0_190 = arith.constant 0 : index
    %c0_191 = arith.constant 0 : index
    %570 = vector.load %arg28[%c0_190, %c0_191] : memref<128x128xf32, #tpu.memory_space<vmem>>, vector<128x128xf32>
    %c0_192 = arith.constant 0 : index
    %c0_193 = arith.constant 0 : index
    %571 = vector.load %arg29[%c0_192, %c0_193] : memref<1x128xf32, #tpu.memory_space<vmem>>, vector<1x128xf32>
    %572 = vector.extract_strided_slice %565 {offsets = [0, 0], sizes = [4, 128], strides = [1, 1]} : vector<8x128xf32> to vector<4x128xf32>
    %573 = vector.broadcast %566 : vector<1x128xf32> to vector<4x128xf32>
    %574 = arith.mulf %572, %573 : vector<4x128xf32>
    %cst_194 = arith.constant dense<0.000000e+00> : vector<4xf32>
    %575 = vector.multi_reduction <add>, %574, %cst_194 [1] : vector<4x128xf32> to vector<4xf32>
    %576 = vector.shape_cast %575 : vector<4xf32> to vector<4x1xf32>
    %577 = vector.broadcast %567 : vector<1x1xf32> to vector<4x1xf32>
    %578 = arith.addf %576, %577 : vector<4x1xf32>
    %cst_195 = arith.constant dense<0xFF800000> : vector<1xf32>
    %579 = vector.multi_reduction <maximumf>, %578, %cst_195 [0] : vector<4x1xf32> to vector<1xf32>
    %580 = vector.shape_cast %579 : vector<1xf32> to vector<1x1xf32>
    %581 = vector.broadcast %580 : vector<1x1xf32> to vector<4x1xf32>
    %582 = arith.subf %578, %581 : vector<4x1xf32>
    %583 = math.exp %582 : vector<4x1xf32>
    %cst_196 = arith.constant dense<0.000000e+00> : vector<1xf32>
    %584 = vector.multi_reduction <add>, %583, %cst_196 [0] : vector<4x1xf32> to vector<1xf32>
    %585 = vector.shape_cast %584 : vector<1xf32> to vector<1x1xf32>
    %586 = tpu.reciprocal %585 {approx = true} : vector<1x1xf32> -> vector<1x1xf32>
    %587 = vector.broadcast %586 : vector<1x1xf32> to vector<4x1xf32>
    %588 = arith.mulf %583, %587 : vector<4x1xf32>
    %589 = vector.broadcast %588 : vector<4x1xf32> to vector<4x128xf32>
    %590 = arith.mulf %589, %572 : vector<4x128xf32>
    %cst_197 = arith.constant dense<0.000000e+00> : vector<128xf32>
    %591 = vector.multi_reduction <add>, %590, %cst_197 [0] : vector<4x128xf32> to vector<128xf32>
    %592 = vector.shape_cast %591 : vector<128xf32> to vector<1x128xf32>
    %cst_198 = arith.constant dense<0.000000e+00> : vector<1x128xf32>
    %593 = tpu.matmul %592, %568, %cst_198 {dimension_numbers = #tpu.dot_dimension_numbers<[1], [0], [0], [1], [0, 0, 1, 1], [], []>} : vector<1x128xf32>, vector<128x128xf32>, vector<1x128xf32> -> vector<1x128xf32>
    %594 = arith.addf %593, %569 : vector<1x128xf32>
    %cst_199 = arith.constant 0.000000e+00 : f32
    %595 = vector.broadcast %cst_199 : f32 to vector<1x128xf32>
    %596 = arith.maximumf %594, %595 : vector<1x128xf32>
    %cst_200 = arith.constant dense<0.000000e+00> : vector<1x128xf32>
    %597 = tpu.matmul %596, %570, %cst_200 {dimension_numbers = #tpu.dot_dimension_numbers<[1], [0], [0], [1], [0, 0, 1, 1], [], []>} : vector<1x128xf32>, vector<128x128xf32>, vector<1x128xf32> -> vector<1x128xf32>
    %598 = arith.addf %597, %571 : vector<1x128xf32>
    %c0_201 = arith.constant 0 : index
    %c0_202 = arith.constant 0 : index
    %599 = vector.load %arg30[%c0_201, %c0_202] : memref<2x128xf32, #tpu.memory_space<vmem>>, vector<1x128xf32>
    tpu.vector_store %arg30[%c0_201, %c0_202], %598 {strides = array<i32>} : memref<2x128xf32, #tpu.memory_space<vmem>>, vector<1x128xf32>,
    %600 = vector.extract_strided_slice %565 {offsets = [4, 0], sizes = [4, 128], strides = [1, 1]} : vector<8x128xf32> to vector<4x128xf32>
    %601 = vector.broadcast %566 : vector<1x128xf32> to vector<4x128xf32>
    %602 = arith.mulf %600, %601 : vector<4x128xf32>
    %cst_203 = arith.constant dense<0.000000e+00> : vector<4xf32>
    %603 = vector.multi_reduction <add>, %602, %cst_203 [1] : vector<4x128xf32> to vector<4xf32>
    %604 = vector.shape_cast %603 : vector<4xf32> to vector<4x1xf32>
    %605 = vector.broadcast %567 : vector<1x1xf32> to vector<4x1xf32>
    %606 = arith.addf %604, %605 : vector<4x1xf32>
    %cst_204 = arith.constant dense<0xFF800000> : vector<1xf32>
    %607 = vector.multi_reduction <maximumf>, %606, %cst_204 [0] : vector<4x1xf32> to vector<1xf32>
    %608 = vector.shape_cast %607 : vector<1xf32> to vector<1x1xf32>
    %609 = vector.broadcast %608 : vector<1x1xf32> to vector<4x1xf32>
    %610 = arith.subf %606, %609 : vector<4x1xf32>
    %611 = math.exp %610 : vector<4x1xf32>
    %cst_205 = arith.constant dense<0.000000e+00> : vector<1xf32>
    %612 = vector.multi_reduction <add>, %611, %cst_205 [0] : vector<4x1xf32> to vector<1xf32>
    %613 = vector.shape_cast %612 : vector<1xf32> to vector<1x1xf32>
    %614 = tpu.reciprocal %613 {approx = true} : vector<1x1xf32> -> vector<1x1xf32>
    %615 = vector.broadcast %614 : vector<1x1xf32> to vector<4x1xf32>
    %616 = arith.mulf %611, %615 : vector<4x1xf32>
    %617 = vector.broadcast %616 : vector<4x1xf32> to vector<4x128xf32>
    %618 = arith.mulf %617, %600 : vector<4x128xf32>
    %cst_206 = arith.constant dense<0.000000e+00> : vector<128xf32>
    %619 = vector.multi_reduction <add>, %618, %cst_206 [0] : vector<4x128xf32> to vector<128xf32>
    %620 = vector.shape_cast %619 : vector<128xf32> to vector<1x128xf32>
    %cst_207 = arith.constant dense<0.000000e+00> : vector<1x128xf32>
    %621 = tpu.matmul %620, %568, %cst_207 {dimension_numbers = #tpu.dot_dimension_numbers<[1], [0], [0], [1], [0, 0, 1, 1], [], []>} : vector<1x128xf32>, vector<128x128xf32>, vector<1x128xf32> -> vector<1x128xf32>
    %622 = arith.addf %621, %569 : vector<1x128xf32>
    %cst_208 = arith.constant 0.000000e+00 : f32
    %623 = vector.broadcast %cst_208 : f32 to vector<1x128xf32>
    %624 = arith.maximumf %622, %623 : vector<1x128xf32>
    %cst_209 = arith.constant dense<0.000000e+00> : vector<1x128xf32>
    %625 = tpu.matmul %624, %570, %cst_209 {dimension_numbers = #tpu.dot_dimension_numbers<[1], [0], [0], [1], [0, 0, 1, 1], [], []>} : vector<1x128xf32>, vector<128x128xf32>, vector<1x128xf32> -> vector<1x128xf32>
    %626 = arith.addf %625, %571 : vector<1x128xf32>
    %c1 = arith.constant 1 : index
    %c0_210 = arith.constant 0 : index
    %627 = vector.load %arg30[%c1, %c0_210] : memref<2x128xf32, #tpu.memory_space<vmem>>, vector<1x128xf32>
    tpu.vector_store %arg30[%c1, %c0_210], %626 {strides = array<i32>} : memref<2x128xf32, #tpu.memory_space<vmem>>, vector<1x128xf32>,
    return
  }
}

</mosaic_0001>

<llo_original>
// kernel: forward_device.1
$region0: #{forward_device.1}
  #allocation0 [shape = 'u32[]', space=smem, size = 0x4, offset = 0x4, fixed_abs, tag = 'smem constant byte address 0x4 - core index']
  #allocation1 [shape = 'u32[144,128]{1,0:T(1,128)}', space=vmem, size = 0x12000, scoped, tag = 'internal scratch']
  #allocation2 [shape = 'f32[1,1]{1,0:T(1,128)S(1)}', space=vmem, size = 0x200, scoped, tag = 'scoped memory for forward_device.1']
  %s0 = inlined_call_operand.smem [shape: u32[31], index: -1, kind: input, shape index: {}]
  %s1 = sld [smem:[%s0]]
  %s2 = scalar_lea.smem %s0, 1
  %s3 = sld [smem:[%s2]]
  %s4 = scalar_lea.smem %s0, 2
  %s5 = sld [smem:[%s4]]
  %s6 = scalar_lea.smem %s0, 3
  %s7 = sld [smem:[%s6]]
  %s8 = scalar_lea.smem %s0, 4
  %s9 = sld [smem:[%s8]]
  %s10 = scalar_lea.smem %s0, 5
  %s11 = sld [smem:[%s10]]
  %s12 = scalar_lea.smem %s0, 6
  %s13 = sld [smem:[%s12]]
  %s14 = scalar_lea.smem %s0, 7
  %s15 = sld [smem:[%s14]]
  %s16 = scalar_lea.smem %s0, 8
  %s17 = sld [smem:[%s16]]
  %s18 = scalar_lea.smem %s0, 9
  %s19 = sld [smem:[%s18]]
  %s20 = scalar_lea.smem %s0, 10
  %s21 = sld [smem:[%s20]]
  %s22 = scalar_lea.smem %s0, 11
  %s23 = sld [smem:[%s22]]
  %s24 = scalar_lea.smem %s0, 12
  %s25 = sld [smem:[%s24]]
  %s26 = scalar_lea.smem %s0, 13
  %s27 = sld [smem:[%s26]]
  %s28 = scalar_lea.smem %s0, 14
  %s29 = sld [smem:[%s28]]
  %s30 = scalar_lea.smem %s0, 15
  %s31 = sld [smem:[%s30]]
  %s32 = scalar_lea.smem %s0, 16
  %s33 = sld [smem:[%s32]]
  %s34 = scalar_lea.smem %s0, 17
  %s35 = sld [smem:[%s34]]
  %s36 = scalar_lea.smem %s0, 18
  %s37 = sld [smem:[%s36]]
  %s38 = scalar_lea.smem %s0, 19
  %s39 = sld [smem:[%s38]]
  %s40 = scalar_lea.smem %s0, 20
  %s41 = sld [smem:[%s40]]
  %s42 = scalar_lea.smem %s0, 21
  %s43 = sld [smem:[%s42]]
  %s44 = scalar_lea.smem %s0, 22
  %s45 = sld [smem:[%s44]]
  %s46 = scalar_lea.smem %s0, 23
  %s47 = sld [smem:[%s46]]
  %s48 = scalar_lea.smem %s0, 24
  %s49 = sld [smem:[%s48]]
  %s50 = scalar_lea.smem %s0, 25
  %s51 = sld [smem:[%s50]]
  %s52 = scalar_lea.smem %s0, 26
  %s53 = sld [smem:[%s52]]
  %s54 = scalar_lea.smem %s0, 27
  %s55 = sld [smem:[%s54]]
  %s56 = scalar_lea.smem %s0, 28
  %s57 = sld [smem:[%s56]]
  %s58 = scalar_lea.smem %s0, 29
  %s59 = sld [smem:[%s58]]
  %s60 = scalar_lea.smem %s0, 30
  %s61 = sld [smem:[%s60]]
  %s62 = sld [smem:[#allocation0]]
  $region218: #{forward_device.1} parent=0
    _
  %s64 = ssub.s32 1, %s62
  %s65 = scalar_select 0, %s64, %s62
  %v66 = vstv %s51
  %67 = vst [vmem:[#allocation2] sm:$0x1] %v66
  $region1: #{forward_device.1} parent=0
    #allocation3 [shape = 'u8[2048]{0}', space=vmem, size = 0x800, scoped, tag = 'input window, operand 4, single buffered']
    #allocation4 [shape = 's32[1]{0}', space=sflag, size = 0x4, scoped, tag = 'scoped memory for forward_device.1']
    #allocation5 [shape = 'u8[512]{0}', space=vmem, size = 0x400, scoped, tag = 'input window, operand 5, single buffered']
    #allocation6 [shape = 's32[1]{0}', space=sflag, size = 0x4, scoped, tag = 'scoped memory for forward_device.1']
    #allocation7 [shape = 'u8[512]{0}', space=vmem, size = 0x400, scoped, tag = 'input window, operand 7, single buffered']
    #allocation8 [shape = 'u8[12288]{0}', space=vmem, size = 0x3000, scoped, tag = 'input window, operand 8, single buffered']
    #allocation9 [shape = 's32[1]{0}', space=sflag, size = 0x4, scoped, tag = 'scoped memory for forward_device.1']
    #allocation10 [shape = 'u8[512]{0}', space=vmem, size = 0x400, scoped, tag = 'input window, operand 9, single buffered']
    #allocation11 [shape = 'u8[98304]{0}', space=vmem, size = 0x18000, scoped, tag = 'input window, operand 10, single buffered']
    #allocation12 [shape = 's32[1]{0}', space=sflag, size = 0x4, scoped, tag = 'scoped memory for forward_device.1']
    #allocation13 [shape = 'u8[512]{0}', space=vmem, size = 0x400, scoped, tag = 'input window, operand 11, single buffered']
    #allocation14 [shape = 'u8[8192]{0}', space=vmem, size = 0x2000, scoped, tag = 'input window, operand 12, single buffered']
    #allocation15 [shape = 's32[1]{0}', space=sflag, size = 0x4, scoped, tag = 'scoped memory for forward_device.1']
    #allocation16 [shape = 'u8[512]{0}', space=vmem, size = 0x400, scoped, tag = 'input window, operand 13, single buffered']
    #allocation17 [shape = 'u8[28672]{0}', space=vmem, size = 0x7000, scoped, tag = 'input window, operand 14, single buffered']
    #allocation18 [shape = 's32[1]{0}', space=sflag, size = 0x4, scoped, tag = 'scoped memory for forward_device.1']
    #allocation19 [shape = 'u8[32768]{0}', space=vmem, size = 0x8000, scoped, tag = 'input window, operand 15, single buffered']
    #allocation20 [shape = 'u8[512]{0}', space=vmem, size = 0x400, scoped, tag = 'input window, operand 17, single buffered']
    #allocation21 [shape = 's32[1]{0}', space=sflag, size = 0x4, scoped, tag = 'scoped memory for forward_device.1']
    #allocation22 [shape = 'u8[65536]{0}', space=vmem, size = 0x10000, scoped, tag = 'input window, operand 18, single buffered']
    #allocation23 [shape = 'u8[2048]{0}', space=vmem, size = 0x800, scoped, tag = 'input window, operand 19, single buffered']
    #allocation24 [shape = 's32[1]{0}', space=sflag, size = 0x4, scoped, tag = 'scoped memory for forward_device.1']
    #allocation25 [shape = 'u8[2048]{0}', space=vmem, size = 0x800, scoped, tag = 'input window, operand 20, single buffered']
    #allocation26 [shape = 'u8[4096]{0}', space=vmem, size = 0x1000, scoped, tag = 'input window, operand 22, single buffered']
    #allocation27 [shape = 's32[1]{0}', space=sflag, size = 0x4, scoped, tag = 'scoped memory for forward_device.1']
    #allocation28 [shape = 'u8[2048]{0}', space=vmem, size = 0x800, scoped, tag = 'input window, operand 23, single buffered']
    #allocation29 [shape = 'u8[512]{0}', space=vmem, size = 0x400, scoped, tag = 'input window, operand 24, single buffered']
    #allocation30 [shape = 's32[1]{0}', space=sflag, size = 0x4, scoped, tag = 'scoped memory for forward_device.1']
    #allocation31 [shape = 'u8[65536]{0}', space=vmem, size = 0x10000, scoped, tag = 'input window, operand 26, single buffered']
    #allocation32 [shape = 'u8[512]{0}', space=vmem, size = 0x400, scoped, tag = 'input window, operand 27, single buffered']
    #allocation33 [shape = 's32[1]{0}', space=sflag, size = 0x4, scoped, tag = 'scoped memory for forward_device.1']
    #allocation34 [shape = 'u8[65536]{0}', space=vmem, size = 0x10000, scoped, tag = 'input window, operand 28, single buffered']
    #allocation35 [shape = 'u8[512]{0}', space=vmem, size = 0x400, scoped, tag = 'input window, operand 29, single buffered']
    #allocation36 [shape = 's32[1]{0}', space=sflag, size = 0x4, scoped, tag = 'scoped memory for forward_device.1']
    %68 = vsyncpa [#allocation4], 0
    %69 = vsyncpa [#allocation6], 0
    %70 = vsyncpa [#allocation9], 0
    %71 = vsyncpa [#allocation12], 0
    %72 = vsyncpa [#allocation15], 0
    %73 = vsyncpa [#allocation18], 0
    %74 = vsyncpa [#allocation21], 0
    %75 = vsyncpa [#allocation24], 0
    %76 = vsyncpa [#allocation27], 0
    %77 = vsyncpa [#allocation30], 0
    %78 = vsyncpa [#allocation33], 0
    %79 = vsyncpa [#allocation36], 0
    // Predicated region
    $region2: #{forward_device.1} parent=1 // pred_check
      _
    $region3: #{forward_device.1} parent=1 // pred_check_branch
      %81 = sbr.rel (0) target = $region5
    $region4: #{forward_device.1} parent=1 // pred_region
      _
    $region5: #{forward_device.1} parent=1 // pred_fallthru
      _
    // Predicated region
    $region6: #{forward_device.1} parent=1 // pred_check
      _
    $region7: #{forward_device.1} parent=1 // pred_check_branch
      %83 = sbr.rel (0) target = $region9
    $region8: #{forward_device.1} parent=1 // pred_region
      _
    $region9: #{forward_device.1} parent=1 // pred_fallthru
      _
    // Predicated region
    $region10: #{forward_device.1} parent=1 // pred_check
      _
    $region11: #{forward_device.1} parent=1 // pred_check_branch
      %85 = sbr.rel (0) target = $region13
    $region12: #{forward_device.1} parent=1 // pred_region
      _
    $region13: #{forward_device.1} parent=1 // pred_fallthru
      _
    // Predicated region
    $region14: #{forward_device.1} parent=1 // pred_check
      _
    $region15: #{forward_device.1} parent=1 // pred_check_branch
      %87 = sbr.rel (0) target = $region17
    $region16: #{forward_device.1} parent=1 // pred_region
      _
    $region17: #{forward_device.1} parent=1 // pred_fallthru
      _
    // Predicated region
    $region18: #{forward_device.1} parent=1 // pred_check
      _
    $region19: #{forward_device.1} parent=1 // pred_check_branch
      %89 = sbr.rel (0) target = $region21
    $region20: #{forward_device.1} parent=1 // pred_region
      %s91 = ssub.s32 64, 64
      %92 = vsyncadd [#allocation4], %s91
      %s94 = sshll.u32 [#allocation3], 4
      %s95 = int_to_ptr.vmem [resolvable:$true] %s94
      %97 = dma.hbm_to_vmem [thread:$0]  %s9, 64, %s95, [#allocation4]
    $region21: #{forward_device.1} parent=1 // pred_fallthru
      _
    // Predicated region
    $region22: #{forward_device.1} parent=1 // pred_check
      _
    $region23: #{forward_device.1} parent=1 // pred_check_branch
      %99 = sbr.rel (0) target = $region25
    $region24: #{forward_device.1} parent=1 // pred_region
      %s101 = ssub.s32 16, 16
      %102 = vsyncadd [#allocation6], %s101
      %s104 = sshll.u32 [#allocation5], 4
      %s105 = int_to_ptr.vmem [resolvable:$true] %s104
      %107 = dma.hbm_to_vmem [thread:$0]  %s11, 16, %s105, [#allocation6]
    $region25: #{forward_device.1} parent=1 // pred_fallthru
      _
    // Predicated region
    $region26: #{forward_device.1} parent=1 // pred_check
      _
    $region27: #{forward_device.1} parent=1 // pred_check_branch
      %109 = sbr.rel (0) target = $region29
    $region28: #{forward_device.1} parent=1 // pred_region
      _
    $region29: #{forward_device.1} parent=1 // pred_fallthru
      _
    // Predicated region
    $region30: #{forward_device.1} parent=1 // pred_check
      _
    $region31: #{forward_device.1} parent=1 // pred_check_branch
      %111 = sbr.rel (0) target = $region33
    $region32: #{forward_device.1} parent=1 // pred_region
      %s113 = ssub.s32 16, 16
      %114 = vsyncadd [#allocation6], %s113
      %s116 = sshll.u32 [#allocation7], 4
      %s117 = int_to_ptr.vmem [resolvable:$true] %s116
      %119 = dma.hbm_to_vmem [thread:$0]  %s15, 16, %s117, [#allocation6]
    $region33: #{forward_device.1} parent=1 // pred_fallthru
      _
    // Predicated region
    $region34: #{forward_device.1} parent=1 // pred_check
      _
    $region35: #{forward_device.1} parent=1 // pred_check_branch
      %121 = sbr.rel (0) target = $region37
    $region36: #{forward_device.1} parent=1 // pred_region
      %s123 = ssub.s32 384, 384
      %124 = vsyncadd [#allocation9], %s123
      %s125 = sshll.u32 [#allocation8], 4
      %s126 = int_to_ptr.vmem [resolvable:$true] %s125
      %131 = dma.hbm_to_vmem [thread:$0]  %s17, 384, %s126, [#allocation9], 128, 128, 8
    $region37: #{forward_device.1} parent=1 // pred_fallthru
      _
    // Predicated region
    $region38: #{forward_device.1} parent=1 // pred_check
      _
    $region39: #{forward_device.1} parent=1 // pred_check_branch
      %133 = sbr.rel (0) target = $region41
    $region40: #{forward_device.1} parent=1 // pred_region
      %s135 = ssub.s32 16, 16
      %136 = vsyncadd [#allocation9], %s135
      %s138 = sshll.u32 [#allocation10], 4
      %s139 = int_to_ptr.vmem [resolvable:$true] %s138
      %141 = dma.hbm_to_vmem [thread:$0]  %s19, 16, %s139, [#allocation9]
    $region41: #{forward_device.1} parent=1 // pred_fallthru
      _
    // Predicated region
    $region42: #{forward_device.1} parent=1 // pred_check
      _
    $region43: #{forward_device.1} parent=1 // pred_check_branch
      %143 = sbr.rel (0) target = $region45
    $region44: #{forward_device.1} parent=1 // pred_region
      %s145 = ssub.s32 3072, 3072
      %146 = vsyncadd [#allocation12], %s145
      %s147 = sshll.u32 [#allocation11], 4
      %s148 = int_to_ptr.vmem [resolvable:$true] %s147
      %153 = dma.hbm_to_vmem [thread:$0]  %s21, 3072, %s148, [#allocation12], 128, 128, 8
    $region45: #{forward_device.1} parent=1 // pred_fallthru
      _
    // Predicated region
    $region46: #{forward_device.1} parent=1 // pred_check
      _
    $region47: #{forward_device.1} parent=1 // pred_check_branch
      %155 = sbr.rel (0) target = $region49
    $region48: #{forward_device.1} parent=1 // pred_region
      %s157 = ssub.s32 16, 16
      %158 = vsyncadd [#allocation12], %s157
      %s160 = sshll.u32 [#allocation13], 4
      %s161 = int_to_ptr.vmem [resolvable:$true] %s160
      %163 = dma.hbm_to_vmem [thread:$0]  %s23, 16, %s161, [#allocation12]
    $region49: #{forward_device.1} parent=1 // pred_fallthru
      _
    // Predicated region
    $region50: #{forward_device.1} parent=1 // pred_check
      _
    $region51: #{forward_device.1} parent=1 // pred_check_branch
      %165 = sbr.rel (0) target = $region53
    $region52: #{forward_device.1} parent=1 // pred_region
      %s167 = ssub.s32 256, 256
      %168 = vsyncadd [#allocation15], %s167
      %s169 = sshll.u32 [#allocation14], 4
      %s170 = int_to_ptr.vmem [resolvable:$true] %s169
      %175 = dma.hbm_to_vmem [thread:$0]  %s25, 256, %s170, [#allocation15], 128, 128, 8
    $region53: #{forward_device.1} parent=1 // pred_fallthru
      _
    // Predicated region
    $region54: #{forward_device.1} parent=1 // pred_check
      _
    $region55: #{forward_device.1} parent=1 // pred_check_branch
      %177 = sbr.rel (0) target = $region57
    $region56: #{forward_device.1} parent=1 // pred_region
      %s179 = ssub.s32 16, 16
      %180 = vsyncadd [#allocation15], %s179
      %s182 = sshll.u32 [#allocation16], 4
      %s183 = int_to_ptr.vmem [resolvable:$true] %s182
      %185 = dma.hbm_to_vmem [thread:$0]  %s27, 16, %s183, [#allocation15]
    $region57: #{forward_device.1} parent=1 // pred_fallthru
      _
    // Predicated region
    $region58: #{forward_device.1} parent=1 // pred_check
      _
    $region59: #{forward_device.1} parent=1 // pred_check_branch
      %187 = sbr.rel (0) target = $region61
    $region60: #{forward_device.1} parent=1 // pred_region
      %s189 = ssub.s32 896, 896
      %190 = vsyncadd [#allocation18], %s189
      %s191 = sshll.u32 [#allocation17], 4
      %s192 = int_to_ptr.vmem [resolvable:$true] %s191
      %197 = dma.hbm_to_vmem [thread:$0]  %s29, 896, %s192, [#allocation18], 128, 128, 8
    $region61: #{forward_device.1} parent=1 // pred_fallthru
      _
    // Predicated region
    $region62: #{forward_device.1} parent=1 // pred_check
      _
    $region63: #{forward_device.1} parent=1 // pred_check_branch
      %199 = sbr.rel (0) target = $region65
    $region64: #{forward_device.1} parent=1 // pred_region
      %s201 = ssub.s32 1024, 1024
      %202 = vsyncadd [#allocation18], %s201
      %s203 = sshll.u32 [#allocation19], 4
      %s204 = int_to_ptr.vmem [resolvable:$true] %s203
      %209 = dma.hbm_to_vmem [thread:$0]  %s31, 1024, %s204, [#allocation18], 128, 128, 8
    $region65: #{forward_device.1} parent=1 // pred_fallthru
      _
    // Predicated region
    $region66: #{forward_device.1} parent=1 // pred_check
      _
    $region67: #{forward_device.1} parent=1 // pred_check_branch
      %211 = sbr.rel (0) target = $region69
    $region68: #{forward_device.1} parent=1 // pred_region
      _
    $region69: #{forward_device.1} parent=1 // pred_fallthru
      _
    // Predicated region
    $region70: #{forward_device.1} parent=1 // pred_check
      _
    $region71: #{forward_device.1} parent=1 // pred_check_branch
      %213 = sbr.rel (0) target = $region73
    $region72: #{forward_device.1} parent=1 // pred_region
      %s215 = ssub.s32 16, 16
      %216 = vsyncadd [#allocation21], %s215
      %s218 = sshll.u32 [#allocation20], 4
      %s219 = int_to_ptr.vmem [resolvable:$true] %s218
      %221 = dma.hbm_to_vmem [thread:$0]  %s35, 16, %s219, [#allocation21]
    $region73: #{forward_device.1} parent=1 // pred_fallthru
      _
    // Predicated region
    $region74: #{forward_device.1} parent=1 // pred_check
      _
    $region75: #{forward_device.1} parent=1 // pred_check_branch
      %223 = sbr.rel (0) target = $region77
    $region76: #{forward_device.1} parent=1 // pred_region
      %s225 = ssub.s32 2048, 2048
      %226 = vsyncadd [#allocation21], %s225
      %s227 = sshll.u32 [#allocation22], 4
      %s228 = int_to_ptr.vmem [resolvable:$true] %s227
      %233 = dma.hbm_to_vmem [thread:$0]  %s37, 2048, %s228, [#allocation21], 512, 512, 32
    $region77: #{forward_device.1} parent=1 // pred_fallthru
      _
    // Predicated region
    $region78: #{forward_device.1} parent=1 // pred_check
      _
    $region79: #{forward_device.1} parent=1 // pred_check_branch
      %235 = sbr.rel (0) target = $region81
    $region80: #{forward_device.1} parent=1 // pred_region
      %s237 = ssub.s32 64, 64
      %238 = vsyncadd [#allocation24], %s237
      %s240 = sshll.u32 [#allocation23], 4
      %s241 = int_to_ptr.vmem [resolvable:$true] %s240
      %243 = dma.hbm_to_vmem [thread:$0]  %s39, 64, %s241, [#allocation24]
    $region81: #{forward_device.1} parent=1 // pred_fallthru
      _
    // Predicated region
    $region82: #{forward_device.1} parent=1 // pred_check
      _
    $region83: #{forward_device.1} parent=1 // pred_check_branch
      %245 = sbr.rel (0) target = $region85
    $region84: #{forward_device.1} parent=1 // pred_region
      %s247 = ssub.s32 64, 64
      %248 = vsyncadd [#allocation24], %s247
      %s250 = sshll.u32 [#allocation25], 4
      %s251 = int_to_ptr.vmem [resolvable:$true] %s250
      %253 = dma.hbm_to_vmem [thread:$0]  %s41, 64, %s251, [#allocation24]
    $region85: #{forward_device.1} parent=1 // pred_fallthru
      _
    // Predicated region
    $region86: #{forward_device.1} parent=1 // pred_check
      _
    $region87: #{forward_device.1} parent=1 // pred_check_branch
      %255 = sbr.rel (0) target = $region89
    $region88: #{forward_device.1} parent=1 // pred_region
      _
    $region89: #{forward_device.1} parent=1 // pred_fallthru
      _
    // Predicated region
    $region90: #{forward_device.1} parent=1 // pred_check
      _
    $region91: #{forward_device.1} parent=1 // pred_check_branch
      %257 = sbr.rel (0) target = $region93
    $region92: #{forward_device.1} parent=1 // pred_region
      %s259 = ssub.s32 128, 128
      %260 = vsyncadd [#allocation27], %s259
      %s262 = sshll.u32 [#allocation26], 4
      %s263 = int_to_ptr.vmem [resolvable:$true] %s262
      %265 = dma.hbm_to_vmem [thread:$0]  %s45, 128, %s263, [#allocation27]
    $region93: #{forward_device.1} parent=1 // pred_fallthru
      _
    // Predicated region
    $region94: #{forward_device.1} parent=1 // pred_check
      _
    $region95: #{forward_device.1} parent=1 // pred_check_branch
      %267 = sbr.rel (0) target = $region97
    $region96: #{forward_device.1} parent=1 // pred_region
      %s269 = ssub.s32 64, 64
      %270 = vsyncadd [#allocation27], %s269
      %s272 = sshll.u32 [#allocation28], 4
      %s273 = int_to_ptr.vmem [resolvable:$true] %s272
      %275 = dma.hbm_to_vmem [thread:$0]  %s47, 64, %s273, [#allocation27]
    $region97: #{forward_device.1} parent=1 // pred_fallthru
      _
    // Predicated region
    $region98: #{forward_device.1} parent=1 // pred_check
      _
    $region99: #{forward_device.1} parent=1 // pred_check_branch
      %277 = sbr.rel (0) target = $region101
    $region100: #{forward_device.1} parent=1 // pred_region
      %s279 = ssub.s32 16, 16
      %280 = vsyncadd [#allocation30], %s279
      %s282 = sshll.u32 [#allocation29], 4
      %s283 = int_to_ptr.vmem [resolvable:$true] %s282
      %285 = dma.hbm_to_vmem [thread:$0]  %s49, 16, %s283, [#allocation30]
    $region101: #{forward_device.1} parent=1 // pred_fallthru
      _
    // Predicated region
    $region102: #{forward_device.1} parent=1 // pred_check
      _
    $region103: #{forward_device.1} parent=1 // pred_check_branch
      %287 = sbr.rel (0) target = $region105
    $region104: #{forward_device.1} parent=1 // pred_region
      _
    $region105: #{forward_device.1} parent=1 // pred_fallthru
      _
    // Predicated region
    $region106: #{forward_device.1} parent=1 // pred_check
      _
    $region107: #{forward_device.1} parent=1 // pred_check_branch
      %289 = sbr.rel (0) target = $region109
    $region108: #{forward_device.1} parent=1 // pred_region
      %s291 = ssub.s32 2048, 2048
      %292 = vsyncadd [#allocation30], %s291
      %s293 = sshll.u32 [#allocation31], 4
      %s294 = int_to_ptr.vmem [resolvable:$true] %s293
      %299 = dma.hbm_to_vmem [thread:$0]  %s53, 2048, %s294, [#allocation30], 128, 128, 8
    $region109: #{forward_device.1} parent=1 // pred_fallthru
      _
    // Predicated region
    $region110: #{forward_device.1} parent=1 // pred_check
      _
    $region111: #{forward_device.1} parent=1 // pred_check_branch
      %301 = sbr.rel (0) target = $region113
    $region112: #{forward_device.1} parent=1 // pred_region
      %s303 = ssub.s32 16, 16
      %304 = vsyncadd [#allocation33], %s303
      %s306 = sshll.u32 [#allocation32], 4
      %s307 = int_to_ptr.vmem [resolvable:$true] %s306
      %309 = dma.hbm_to_vmem [thread:$0]  %s55, 16, %s307, [#allocation33]
    $region113: #{forward_device.1} parent=1 // pred_fallthru
      _
    // Predicated region
    $region114: #{forward_device.1} parent=1 // pred_check
      _
    $region115: #{forward_device.1} parent=1 // pred_check_branch
      %311 = sbr.rel (0) target = $region117
    $region116: #{forward_device.1} parent=1 // pred_region
      %s313 = ssub.s32 2048, 2048
      %314 = vsyncadd [#allocation33], %s313
      %s315 = sshll.u32 [#allocation34], 4
      %s316 = int_to_ptr.vmem [resolvable:$true] %s315
      %321 = dma.hbm_to_vmem [thread:$0]  %s57, 2048, %s316, [#allocation33], 128, 128, 8
    $region117: #{forward_device.1} parent=1 // pred_fallthru
      _
    // Predicated region
    $region118: #{forward_device.1} parent=1 // pred_check
      _
    $region119: #{forward_device.1} parent=1 // pred_check_branch
      %323 = sbr.rel (0) target = $region121
    $region120: #{forward_device.1} parent=1 // pred_region
      %s325 = ssub.s32 16, 16
      %326 = vsyncadd [#allocation36], %s325
      %s328 = sshll.u32 [#allocation35], 4
      %s329 = int_to_ptr.vmem [resolvable:$true] %s328
      %331 = dma.hbm_to_vmem [thread:$0]  %s59, 16, %s329, [#allocation36]
    $region121: #{forward_device.1} parent=1 // pred_fallthru
      _
    // Predicated region
    $region122: #{forward_device.1} parent=1 // pred_check
      _
    $region123: #{forward_device.1} parent=1 // pred_check_branch
      %333 = sbr.rel (0) target = $region125
    $region124: #{forward_device.1} parent=1 // pred_region
      %334 = dma.done [#allocation4], 64
    $region125: #{forward_device.1} parent=1 // pred_fallthru
      _
    // Predicated region
    $region126: #{forward_device.1} parent=1 // pred_check
      _
    $region127: #{forward_device.1} parent=1 // pred_check_branch
      %336 = sbr.rel (0) target = $region129
    $region128: #{forward_device.1} parent=1 // pred_region
      %337 = dma.done [#allocation6], 16
    $region129: #{forward_device.1} parent=1 // pred_fallthru
      _
    // Predicated region
    $region130: #{forward_device.1} parent=1 // pred_check
      _
    $region131: #{forward_device.1} parent=1 // pred_check_branch
      %339 = sbr.rel (0) target = $region133
    $region132: #{forward_device.1} parent=1 // pred_region
      %340 = dma.done [#allocation6], 16
    $region133: #{forward_device.1} parent=1 // pred_fallthru
      _
    // Predicated region
    $region134: #{forward_device.1} parent=1 // pred_check
      _
    $region135: #{forward_device.1} parent=1 // pred_check_branch
      %342 = sbr.rel (0) target = $region137
    $region136: #{forward_device.1} parent=1 // pred_region
      %343 = dma.done [#allocation9], 384
    $region137: #{forward_device.1} parent=1 // pred_fallthru
      _
    // Predicated region
    $region138: #{forward_device.1} parent=1 // pred_check
      _
    $region139: #{forward_device.1} parent=1 // pred_check_branch
      %345 = sbr.rel (0) target = $region141
    $region140: #{forward_device.1} parent=1 // pred_region
      %346 = dma.done [#allocation9], 16
    $region141: #{forward_device.1} parent=1 // pred_fallthru
      _
    // Predicated region
    $region142: #{forward_device.1} parent=1 // pred_check
      _
    $region143: #{forward_device.1} parent=1 // pred_check_branch
      %348 = sbr.rel (0) target = $region145
    $region144: #{forward_device.1} parent=1 // pred_region
      %349 = dma.done [#allocation12], 3072
    $region145: #{forward_device.1} parent=1 // pred_fallthru
      _
    // Predicated region
    $region146: #{forward_device.1} parent=1 // pred_check
      _
    $region147: #{forward_device.1} parent=1 // pred_check_branch
      %351 = sbr.rel (0) target = $region149
    $region148: #{forward_device.1} parent=1 // pred_region
      %352 = dma.done [#allocation12], 16
    $region149: #{forward_device.1} parent=1 // pred_fallthru
      _
    // Predicated region
    $region150: #{forward_device.1} parent=1 // pred_check
      _
    $region151: #{forward_device.1} parent=1 // pred_check_branch
      %354 = sbr.rel (0) target = $region153
    $region152: #{forward_device.1} parent=1 // pred_region
      %355 = dma.done [#allocation15], 256
    $region153: #{forward_device.1} parent=1 // pred_fallthru
      _
    // Predicated region
    $region154: #{forward_device.1} parent=1 // pred_check
      _
    $region155: #{forward_device.1} parent=1 // pred_check_branch
      %357 = sbr.rel (0) target = $region157
    $region156: #{forward_device.1} parent=1 // pred_region
      %358 = dma.done [#allocation15], 16
    $region157: #{forward_device.1} parent=1 // pred_fallthru
      _
    // Predicated region
    $region158: #{forward_device.1} parent=1 // pred_check
      _
    $region159: #{forward_device.1} parent=1 // pred_check_branch
      %360 = sbr.rel (0) target = $region161
    $region160: #{forward_device.1} parent=1 // pred_region
      %361 = dma.done [#allocation18], 896
    $region161: #{forward_device.1} parent=1 // pred_fallthru
      _
    // Predicated region
    $region162: #{forward_device.1} parent=1 // pred_check
      _
    $region163: #{forward_device.1} parent=1 // pred_check_branch
      %363 = sbr.rel (0) target = $region165
    $region164: #{forward_device.1} parent=1 // pred_region
      %364 = dma.done [#allocation18], 1024
    $region165: #{forward_device.1} parent=1 // pred_fallthru
      _
    // Predicated region
    $region166: #{forward_device.1} parent=1 // pred_check
      _
    $region167: #{forward_device.1} parent=1 // pred_check_branch
      %366 = sbr.rel (0) target = $region169
    $region168: #{forward_device.1} parent=1 // pred_region
      %367 = dma.done [#allocation21], 16
    $region169: #{forward_device.1} parent=1 // pred_fallthru
      _
    // Predicated region
    $region170: #{forward_device.1} parent=1 // pred_check
      _
    $region171: #{forward_device.1} parent=1 // pred_check_branch
      %369 = sbr.rel (0) target = $region173
    $region172: #{forward_device.1} parent=1 // pred_region
      %370 = dma.done [#allocation21], 2048
    $region173: #{forward_device.1} parent=1 // pred_fallthru
      _
    // Predicated region
    $region174: #{forward_device.1} parent=1 // pred_check
      _
    $region175: #{forward_device.1} parent=1 // pred_check_branch
      %372 = sbr.rel (0) target = $region177
    $region176: #{forward_device.1} parent=1 // pred_region
      %373 = dma.done [#allocation24], 64
    $region177: #{forward_device.1} parent=1 // pred_fallthru
      _
    // Predicated region
    $region178: #{forward_device.1} parent=1 // pred_check
      _
    $region179: #{forward_device.1} parent=1 // pred_check_branch
      %375 = sbr.rel (0) target = $region181
    $region180: #{forward_device.1} parent=1 // pred_region
      %376 = dma.done [#allocation24], 64
    $region181: #{forward_device.1} parent=1 // pred_fallthru
      _
    // Predicated region
    $region182: #{forward_device.1} parent=1 // pred_check
      _
    $region183: #{forward_device.1} parent=1 // pred_check_branch
      %378 = sbr.rel (0) target = $region185
    $region184: #{forward_device.1} parent=1 // pred_region
      %379 = dma.done [#allocation27], 128
    $region185: #{forward_device.1} parent=1 // pred_fallthru
      _
    // Predicated region
    $region186: #{forward_device.1} parent=1 // pred_check
      _
    $region187: #{forward_device.1} parent=1 // pred_check_branch
      %381 = sbr.rel (0) target = $region189
    $region188: #{forward_device.1} parent=1 // pred_region
      %382 = dma.done [#allocation27], 64
    $region189: #{forward_device.1} parent=1 // pred_fallthru
      _
    // Predicated region
    $region190: #{forward_device.1} parent=1 // pred_check
      _
    $region191: #{forward_device.1} parent=1 // pred_check_branch
      %384 = sbr.rel (0) target = $region193
    $region192: #{forward_device.1} parent=1 // pred_region
      %385 = dma.done [#allocation30], 16
    $region193: #{forward_device.1} parent=1 // pred_fallthru
      _
    // Predicated region
    $region194: #{forward_device.1} parent=1 // pred_check
      _
    $region195: #{forward_device.1} parent=1 // pred_check_branch
      %387 = sbr.rel (0) target = $region197
    $region196: #{forward_device.1} parent=1 // pred_region
      %388 = dma.done [#allocation30], 2048
    $region197: #{forward_device.1} parent=1 // pred_fallthru
      _
    // Predicated region
    $region198: #{forward_device.1} parent=1 // pred_check
      _
    $region199: #{forward_device.1} parent=1 // pred_check_branch
      %390 = sbr.rel (0) target = $region201
    $region200: #{forward_device.1} parent=1 // pred_region
      %391 = dma.done [#allocation33], 16
    $region201: #{forward_device.1} parent=1 // pred_fallthru
      _
    // Predicated region
    $region202: #{forward_device.1} parent=1 // pred_check
      _
    $region203: #{forward_device.1} parent=1 // pred_check_branch
      %393 = sbr.rel (0) target = $region205
    $region204: #{forward_device.1} parent=1 // pred_region
      %394 = dma.done [#allocation33], 2048
    $region205: #{forward_device.1} parent=1 // pred_fallthru
      _
    // Predicated region
    $region206: #{forward_device.1} parent=1 // pred_check
      _
    $region207: #{forward_device.1} parent=1 // pred_check_branch
      %396 = sbr.rel (0) target = $region209
    $region208: #{forward_device.1} parent=1 // pred_region
      %397 = dma.done [#allocation36], 16
    $region209: #{forward_device.1} parent=1 // pred_fallthru
      _
    %v398 = vld [vmem:[%s1] sm:$0xff]
    %v399 = vld [vmem:[%s1 + $0x8] sm:$0xff]
    %v400 = vld [vmem:[%s1 + $0x10] sm:$0xff]
    %v401 = vld [vmem:[%s1 + $0x18] sm:$0xff]
    %v402 = vld [vmem:[%s1 + $0x20] sm:$0xff]
    %v403 = vld [vmem:[%s1 + $0x28] sm:$0xff]
    %v404 = vld [vmem:[%s1 + $0x30] sm:$0xff]
    %v405 = vld [vmem:[%s1 + $0x38] sm:$0xff]
    %v406 = vld [vmem:[#allocation3] sm:$0x7]
    %v407 = vld [vmem:[#allocation5] sm:$0x1]
    %vm417 = vcmask 1041408
    %v418 = vrot.slane 0.0, 6
    %v419 = vrot.slane %v398, 6
    %v420 = vsel %vm417, %v418, %v419
    %v421 = vsel %vm417, %v419, %v418
    %v422 = vrot.slane %v399, 6
    %v423 = vsel %vm417, %v418, %v422
    %v424 = vsel %vm417, %v422, %v418
    %v425 = vrot.slane %v400, 6
    %v426 = vsel %vm417, %v418, %v425
    %v427 = vsel %vm417, %v425, %v418
    %v428 = vrot.slane %v401, 6
    %v429 = vsel %vm417, %v418, %v428
    %v430 = vsel %vm417, %v428, %v418
    %v431 = vrot.slane %v402, 6
    %v432 = vsel %vm417, %v418, %v431
    %v433 = vsel %vm417, %v431, %v418
    %v434 = vrot.slane %v403, 6
    %v435 = vsel %vm417, %v418, %v434
    %v436 = vsel %vm417, %v434, %v418
    %v437 = vrot.slane %v404, 6
    %v438 = vsel %vm417, %v418, %v437
    %v439 = vsel %vm417, %v437, %v418
    %v440 = vrot.slane %v405, 6
    %v441 = vsel %vm417, %v418, %v440
    %v442 = vsel %vm417, %v440, %v418
    %443 = vset.pattern.permute.xlu0 0
    %444 = vperm.xlu0 %443, %v420
    %v445 = vpop.permute.xlu0 %444
    %447 = vset.pattern.permute.xlu0 0
    %448 = vperm.xlu0 %447, %v421
    %v449 = vpop.permute.xlu0 %448
    %451 = vset.pattern.permute.xlu0 0
    %452 = vperm.xlu0 %451, %v423
    %v453 = vpop.permute.xlu0 %452
    %455 = vset.pattern.permute.xlu0 0
    %456 = vperm.xlu0 %455, %v424
    %v457 = vpop.permute.xlu0 %456
    %459 = vset.pattern.permute.xlu0 0
    %460 = vperm.xlu0 %459, %v426
    %v461 = vpop.permute.xlu0 %460
    %463 = vset.pattern.permute.xlu0 0
    %464 = vperm.xlu0 %463, %v427
    %v465 = vpop.permute.xlu0 %464
    %467 = vset.pattern.permute.xlu0 0
    %468 = vperm.xlu0 %467, %v429
    %v469 = vpop.permute.xlu0 %468
    %471 = vset.pattern.permute.xlu0 0
    %472 = vperm.xlu0 %471, %v430
    %v473 = vpop.permute.xlu0 %472
    %475 = vset.pattern.permute.xlu0 0
    %476 = vperm.xlu0 %475, %v432
    %v477 = vpop.permute.xlu0 %476
    %479 = vset.pattern.permute.xlu0 0
    %480 = vperm.xlu0 %479, %v433
    %v481 = vpop.permute.xlu0 %480
    %483 = vset.pattern.permute.xlu0 0
    %484 = vperm.xlu0 %483, %v435
    %v485 = vpop.permute.xlu0 %484
    %487 = vset.pattern.permute.xlu0 0
    %488 = vperm.xlu0 %487, %v436
    %v489 = vpop.permute.xlu0 %488
    %491 = vset.pattern.permute.xlu0 0
    %492 = vperm.xlu0 %491, %v438
    %v493 = vpop.permute.xlu0 %492
    %495 = vset.pattern.permute.xlu0 0
    %496 = vperm.xlu0 %495, %v439
    %v497 = vpop.permute.xlu0 %496
    %499 = vset.pattern.permute.xlu0 0
    %500 = vperm.xlu0 %499, %v441
    %v501 = vpop.permute.xlu0 %500
    %503 = vset.pattern.permute.xlu0 0
    %504 = vperm.xlu0 %503, %v442
    %v505 = vpop.permute.xlu0 %504
    %v507 = vlaneseq
    %v508 = vshrl.u32 %v507, 7
    %v509 = vsub.s32 0, %v508
    %v510 = vrot.slane %v406, %v509
    %v511 = vmul.f32 %v445, %v510
    %v512 = vmul.f32 %v449, %v510
    %v513 = vmul.f32 %v453, %v510
    %v514 = vmul.f32 %v457, %v510
    %v515 = vmul.f32 %v461, %v510
    %v516 = vmul.f32 %v465, %v510
    %v517 = vmul.f32 %v469, %v510
    %v518 = vmul.f32 %v473, %v510
    %v519 = vmul.f32 %v477, %v510
    %v520 = vmul.f32 %v481, %v510
    %v521 = vmul.f32 %v485, %v510
    %v522 = vmul.f32 %v489, %v510
    %v523 = vmul.f32 %v493, %v510
    %v524 = vmul.f32 %v497, %v510
    %v525 = vmul.f32 %v501, %v510
    %v526 = vmul.f32 %v505, %v510
    %v527 = vadd.f32 %v511, 0.0
    %v528 = vadd.f32 %v512, 0.0
    %v529 = vadd.f32 %v513, 0.0
    %v530 = vadd.f32 %v514, 0.0
    %v531 = vadd.f32 %v515, 0.0
    %v532 = vadd.f32 %v516, 0.0
    %v533 = vadd.f32 %v517, 0.0
    %v534 = vadd.f32 %v518, 0.0
    %v535 = vadd.f32 %v519, 0.0
    %v536 = vadd.f32 %v520, 0.0
    %v537 = vadd.f32 %v521, 0.0
    %v538 = vadd.f32 %v522, 0.0
    %v539 = vadd.f32 %v523, 0.0
    %v540 = vadd.f32 %v524, 0.0
    %v541 = vadd.f32 %v525, 0.0
    %v542 = vadd.f32 %v526, 0.0
    %vm543 = vcmask 1040384
    %v544 = vrot.slane 0.0, 7
    %v545 = vrot.slane %v398, 7
    %v546 = vsel %vm543, %v544, %v545
    %v547 = vsel %vm543, %v545, %v544
    %v548 = vrot.slane %v399, 7
    %v549 = vsel %vm543, %v544, %v548
    %v550 = vsel %vm543, %v548, %v544
    %v551 = vrot.slane %v400, 7
    %v552 = vsel %vm543, %v544, %v551
    %v553 = vsel %vm543, %v551, %v544
    %v554 = vrot.slane %v401, 7
    %v555 = vsel %vm543, %v544, %v554
    %v556 = vsel %vm543, %v554, %v544
    %v557 = vrot.slane %v402, 7
    %v558 = vsel %vm543, %v544, %v557
    %v559 = vsel %vm543, %v557, %v544
    %v560 = vrot.slane %v403, 7
    %v561 = vsel %vm543, %v544, %v560
    %v562 = vsel %vm543, %v560, %v544
    %v563 = vrot.slane %v404, 7
    %v564 = vsel %vm543, %v544, %v563
    %v565 = vsel %vm543, %v563, %v544
    %v566 = vrot.slane %v405, 7
    %v567 = vsel %vm543, %v544, %v566
    %v568 = vsel %vm543, %v566, %v544
    %569 = vset.pattern.permute.xlu0 0
    %570 = vperm.xlu0 %569, %v546
    %v571 = vpop.permute.xlu0 %570
    %573 = vset.pattern.permute.xlu0 0
    %574 = vperm.xlu0 %573, %v547
    %v575 = vpop.permute.xlu0 %574
    %577 = vset.pattern.permute.xlu0 0
    %578 = vperm.xlu0 %577, %v549
    %v579 = vpop.permute.xlu0 %578
    %581 = vset.pattern.permute.xlu0 0
    %582 = vperm.xlu0 %581, %v550
    %v583 = vpop.permute.xlu0 %582
    %585 = vset.pattern.permute.xlu0 0
    %586 = vperm.xlu0 %585, %v552
    %v587 = vpop.permute.xlu0 %586
    %589 = vset.pattern.permute.xlu0 0
    %590 = vperm.xlu0 %589, %v553
    %v591 = vpop.permute.xlu0 %590
    %593 = vset.pattern.permute.xlu0 0
    %594 = vperm.xlu0 %593, %v555
    %v595 = vpop.permute.xlu0 %594
    %597 = vset.pattern.permute.xlu0 0
    %598 = vperm.xlu0 %597, %v556
    %v599 = vpop.permute.xlu0 %598
    %601 = vset.pattern.permute.xlu0 0
    %602 = vperm.xlu0 %601, %v558
    %v603 = vpop.permute.xlu0 %602
    %605 = vset.pattern.permute.xlu0 0
    %606 = vperm.xlu0 %605, %v559
    %v607 = vpop.permute.xlu0 %606
    %609 = vset.pattern.permute.xlu0 0
    %610 = vperm.xlu0 %609, %v561
    %v611 = vpop.permute.xlu0 %610
    %613 = vset.pattern.permute.xlu0 0
    %614 = vperm.xlu0 %613, %v562
    %v615 = vpop.permute.xlu0 %614
    %617 = vset.pattern.permute.xlu0 0
    %618 = vperm.xlu0 %617, %v564
    %v619 = vpop.permute.xlu0 %618
    %621 = vset.pattern.permute.xlu0 0
    %622 = vperm.xlu0 %621, %v565
    %v623 = vpop.permute.xlu0 %622
    %625 = vset.pattern.permute.xlu0 0
    %626 = vperm.xlu0 %625, %v567
    %v627 = vpop.permute.xlu0 %626
    %629 = vset.pattern.permute.xlu0 0
    %630 = vperm.xlu0 %629, %v568
    %v631 = vpop.permute.xlu0 %630
    %v633 = vlaneseq
    %v634 = vshrl.u32 %v633, 7
    %v635 = vsub.s32 1, %v634
    %v636 = vrot.slane %v406, %v635
    %v637 = vmul.f32 %v571, %v636
    %v638 = vmul.f32 %v575, %v636
    %v639 = vmul.f32 %v579, %v636
    %v640 = vmul.f32 %v583, %v636
    %v641 = vmul.f32 %v587, %v636
    %v642 = vmul.f32 %v591, %v636
    %v643 = vmul.f32 %v595, %v636
    %v644 = vmul.f32 %v599, %v636
    %v645 = vmul.f32 %v603, %v636
    %v646 = vmul.f32 %v607, %v636
    %v647 = vmul.f32 %v611, %v636
    %v648 = vmul.f32 %v615, %v636
    %v649 = vmul.f32 %v619, %v636
    %v650 = vmul.f32 %v623, %v636
    %v651 = vmul.f32 %v627, %v636
    %v652 = vmul.f32 %v631, %v636
    %v653 = vadd.f32 %v527, %v637
    %v654 = vadd.f32 %v528, %v638
    %v655 = vadd.f32 %v529, %v639
    %v656 = vadd.f32 %v530, %v640
    %v657 = vadd.f32 %v531, %v641
    %v658 = vadd.f32 %v532, %v642
    %v659 = vadd.f32 %v533, %v643
    %v660 = vadd.f32 %v534, %v644
    %v661 = vadd.f32 %v535, %v645
    %v662 = vadd.f32 %v536, %v646
    %v663 = vadd.f32 %v537, %v647
    %v664 = vadd.f32 %v538, %v648
    %v665 = vadd.f32 %v539, %v649
    %v666 = vadd.f32 %v540, %v650
    %v667 = vadd.f32 %v541, %v651
    %v668 = vadd.f32 %v542, %v652
    %669 = vset.pattern.permute.xlu0 0
    %670 = vperm.xlu0 %669, %v398
    %v671 = vpop.permute.xlu0 %670
    %673 = vset.pattern.permute.xlu0 0
    %674 = vperm.xlu0 %673, 0.0
    %v675 = vpop.permute.xlu0 %674
    %677 = vset.pattern.permute.xlu0 0
    %678 = vperm.xlu0 %677, %v399
    %v679 = vpop.permute.xlu0 %678
    %681 = vset.pattern.permute.xlu0 0
    %682 = vperm.xlu0 %681, %v400
    %v683 = vpop.permute.xlu0 %682
    %685 = vset.pattern.permute.xlu0 0
    %686 = vperm.xlu0 %685, %v401
    %v687 = vpop.permute.xlu0 %686
    %689 = vset.pattern.permute.xlu0 0
    %690 = vperm.xlu0 %689, %v402
    %v691 = vpop.permute.xlu0 %690
    %693 = vset.pattern.permute.xlu0 0
    %694 = vperm.xlu0 %693, %v403
    %v695 = vpop.permute.xlu0 %694
    %697 = vset.pattern.permute.xlu0 0
    %698 = vperm.xlu0 %697, %v404
    %v699 = vpop.permute.xlu0 %698
    %701 = vset.pattern.permute.xlu0 0
    %702 = vperm.xlu0 %701, %v405
    %v703 = vpop.permute.xlu0 %702
    %v705 = vlaneseq
    %v706 = vshrl.u32 %v705, 7
    %v707 = vsub.s32 2, %v706
    %v708 = vrot.slane %v406, %v707
    %v709 = vmul.f32 %v671, %v708
    %v710 = vmul.f32 %v675, %v708
    %v711 = vmul.f32 %v679, %v708
    %v712 = vmul.f32 %v683, %v708
    %v713 = vmul.f32 %v687, %v708
    %v714 = vmul.f32 %v691, %v708
    %v715 = vmul.f32 %v695, %v708
    %v716 = vmul.f32 %v699, %v708
    %v717 = vmul.f32 %v703, %v708
    %v718 = vadd.f32 %v653, %v709
    %v719 = vadd.f32 %v654, %v710
    %v720 = vadd.f32 %v655, %v711
    %v721 = vadd.f32 %v656, %v710
    %v722 = vadd.f32 %v657, %v712
    %v723 = vadd.f32 %v658, %v710
    %v724 = vadd.f32 %v659, %v713
    %v725 = vadd.f32 %v660, %v710
    %v726 = vadd.f32 %v661, %v714
    %v727 = vadd.f32 %v662, %v710
    %v728 = vadd.f32 %v663, %v715
    %v729 = vadd.f32 %v664, %v710
    %v730 = vadd.f32 %v665, %v716
    %v731 = vadd.f32 %v666, %v710
    %v732 = vadd.f32 %v667, %v717
    %v733 = vadd.f32 %v668, %v710
    %v735 = vlaneseq
    %v736 = vshrl.u32 %v735, 7
    %v737 = vsub.s32 0, %v736
    %v738 = vrot.slane %v407, %v737
    %v740 = vadd.f32 %v718, %v738
    %v741 = vadd.f32 %v719, %v738
    %v742 = vadd.f32 %v720, %v738
    %v743 = vadd.f32 %v721, %v738
    %v744 = vadd.f32 %v722, %v738
    %v745 = vadd.f32 %v723, %v738
    %v746 = vadd.f32 %v724, %v738
    %v747 = vadd.f32 %v725, %v738
    %v748 = vadd.f32 %v726, %v738
    %v749 = vadd.f32 %v727, %v738
    %v750 = vadd.f32 %v728, %v738
    %v751 = vadd.f32 %v729, %v738
    %v752 = vadd.f32 %v730, %v738
    %v753 = vadd.f32 %v731, %v738
    %v754 = vadd.f32 %v732, %v738
    %v755 = vadd.f32 %v733, %v738
    %v756 = vlaneseq
    %v757 = vshrl.u32 %v756, 7
    %v758 = vadd.s32 %v757, 8
    %vm759 = vcmp.lt.s32.totalorder %v757, 10
    %vm760 = vcmp.lt.s32.totalorder %v758, 10
    %v761 = vsel %vm759, 1, 0
    %v762 = vsel %vm760, 1, 0
    %v763 = vcvt.s32.f32 %v761
    %v764 = vcvt.s32.f32 %v762
    %v765 = vmul.f32 %v740, %v763
    %v766 = vmul.f32 %v741, %v764
    %v767 = vmul.f32 %v742, %v763
    %v768 = vmul.f32 %v743, %v764
    %v769 = vmul.f32 %v744, %v763
    %v770 = vmul.f32 %v745, %v764
    %v771 = vmul.f32 %v746, %v763
    %v772 = vmul.f32 %v747, %v764
    %v773 = vmul.f32 %v748, %v763
    %v774 = vmul.f32 %v749, %v764
    %v775 = vmul.f32 %v750, %v763
    %v776 = vmul.f32 %v751, %v764
    %v777 = vmul.f32 %v752, %v763
    %v778 = vmul.f32 %v753, %v764
    %v779 = vmul.f32 %v754, %v763
    %v780 = vmul.f32 %v755, %v764
    %vm781 = vcmask 162816
    %v782 = vsel %vm781, %v765, 0.0
    %v783 = vsel %vm781, %v766, 0.0
    %v784 = vadd.f32 %v782, %v783
    %v785 = vsel %vm781, %v767, 0.0
    %v786 = vadd.f32 %v784, %v785
    %v787 = vsel %vm781, %v768, 0.0
    %v788 = vadd.f32 %v786, %v787
    %v789 = vsel %vm781, %v769, 0.0
    %v790 = vadd.f32 %v788, %v789
    %v791 = vsel %vm781, %v770, 0.0
    %v792 = vadd.f32 %v790, %v791
    %v793 = vsel %vm781, %v771, 0.0
    %v794 = vadd.f32 %v792, %v793
    %v795 = vsel %vm781, %v772, 0.0
    %v796 = vadd.f32 %v794, %v795
    %v797 = vsel %vm781, %v773, 0.0
    %v798 = vadd.f32 %v796, %v797
    %v799 = vsel %vm781, %v774, 0.0
    %v800 = vadd.f32 %v798, %v799
    %v801 = vsel %vm781, %v775, 0.0
    %v802 = vadd.f32 %v800, %v801
    %v803 = vsel %vm781, %v776, 0.0
    %v804 = vadd.f32 %v802, %v803
    %v805 = vsel %vm781, %v777, 0.0
    %v806 = vadd.f32 %v804, %v805
    %v807 = vsel %vm781, %v778, 0.0
    %v808 = vadd.f32 %v806, %v807
    %v809 = vsel %vm781, %v779, 0.0
    %v810 = vadd.f32 %v808, %v809
    %v811 = vsel %vm781, %v780, 0.0
    %v812 = vadd.f32 %v810, %v811
    %v813 = vrot.slane %v812, 4
    %v814 = vadd.f32 %v812, %v813
    %v815 = vrot.slane %v814, 2
    %v816 = vadd.f32 %v814, %v815
    %v817 = vrot.slane %v816, 1
    %v818 = vadd.f32 %v816, %v817
    %v819 = vrcp.pop 80.0
    %v820 = vmul.f32 %v818, %v819
    %v821 = vmul.f32 %v765, %v740
    %v822 = vmul.f32 %v766, %v741
    %v823 = vmul.f32 %v767, %v742
    %v824 = vmul.f32 %v768, %v743
    %v825 = vmul.f32 %v769, %v744
    %v826 = vmul.f32 %v770, %v745
    %v827 = vmul.f32 %v771, %v746
    %v828 = vmul.f32 %v772, %v747
    %v829 = vmul.f32 %v773, %v748
    %v830 = vmul.f32 %v774, %v749
    %v831 = vmul.f32 %v775, %v750
    %v832 = vmul.f32 %v776, %v751
    %v833 = vmul.f32 %v777, %v752
    %v834 = vmul.f32 %v778, %v753
    %v835 = vmul.f32 %v779, %v754
    %v836 = vmul.f32 %v780, %v755
    %v837 = vsel %vm781, %v821, 0.0
    %v838 = vsel %vm781, %v822, 0.0
    %v839 = vadd.f32 %v837, %v838
    %v840 = vsel %vm781, %v823, 0.0
    %v841 = vadd.f32 %v839, %v840
    %v842 = vsel %vm781, %v824, 0.0
    %v843 = vadd.f32 %v841, %v842
    %v844 = vsel %vm781, %v825, 0.0
    %v845 = vadd.f32 %v843, %v844
    %v846 = vsel %vm781, %v826, 0.0
    %v847 = vadd.f32 %v845, %v846
    %v848 = vsel %vm781, %v827, 0.0
    %v849 = vadd.f32 %v847, %v848
    %v850 = vsel %vm781, %v828, 0.0
    %v851 = vadd.f32 %v849, %v850
    %v852 = vsel %vm781, %v829, 0.0
    %v853 = vadd.f32 %v851, %v852
    %v854 = vsel %vm781, %v830, 0.0
    %v855 = vadd.f32 %v853, %v854
    %v856 = vsel %vm781, %v831, 0.0
    %v857 = vadd.f32 %v855, %v856
    %v858 = vsel %vm781, %v832, 0.0
    %v859 = vadd.f32 %v857, %v858
    %v860 = vsel %vm781, %v833, 0.0
    %v861 = vadd.f32 %v859, %v860
    %v862 = vsel %vm781, %v834, 0.0
    %v863 = vadd.f32 %v861, %v862
    %v864 = vsel %vm781, %v835, 0.0
    %v865 = vadd.f32 %v863, %v864
    %v866 = vsel %vm781, %v836, 0.0
    %v867 = vadd.f32 %v865, %v866
    %v868 = vrot.slane %v867, 4
    %v869 = vadd.f32 %v867, %v868
    %v870 = vrot.slane %v869, 2
    %v871 = vadd.f32 %v869, %v870
    %v872 = vrot.slane %v871, 1
    %v873 = vadd.f32 %v871, %v872
    %v874 = vmul.f32 %v873, %v819
    %v875 = vmul.f32 %v820, %v820
    %v876 = vsub.f32 %v874, %v875
    %v877 = vmax.f32 %v876, 0.0
    %v878 = vsub.f32 %v740, %v820
    %v879 = vsub.f32 %v742, %v820
    %v880 = vsub.f32 %v744, %v820
    %v881 = vsub.f32 %v746, %v820
    %v882 = vsub.f32 %v748, %v820
    %v883 = vsub.f32 %v750, %v820
    %v884 = vsub.f32 %v752, %v820
    %v885 = vsub.f32 %v754, %v820
    %v886 = vadd.f32 %v877, 1e-05
    %v887 = vrsqrt.pop %v886
    %v888 = vmul.f32 %v878, %v887
    %v889 = vmul.f32 %v879, %v887
    %v890 = vmul.f32 %v880, %v887
    %v891 = vmul.f32 %v881, %v887
    %v892 = vmul.f32 %v882, %v887
    %v893 = vmul.f32 %v883, %v887
    %v894 = vmul.f32 %v884, %v887
    %v895 = vmul.f32 %v885, %v887
    %v896 = vmax.f32 %v888, 0.0
    %v897 = vmax.f32 %v889, 0.0
    %v898 = vmax.f32 %v890, 0.0
    %v899 = vmax.f32 %v891, 0.0
    %v900 = vmax.f32 %v892, 0.0
    %v901 = vmax.f32 %v893, 0.0
    %v902 = vmax.f32 %v894, 0.0
    %v903 = vmax.f32 %v895, 0.0
    %v904 = vld [vmem:[%s13] sm:$0xff]
    %v905 = vld [vmem:[%s13 + $0x8] sm:$0xff]
    %v906 = vld [vmem:[%s13 + $0x10] sm:$0xff]
    %v907 = vld [vmem:[%s13 + $0x18] sm:$0xff]
    %v908 = vld [vmem:[%s13 + $0x20] sm:$0xff]
    %v909 = vld [vmem:[%s13 + $0x28] sm:$0xff]
    %v910 = vld [vmem:[%s13 + $0x30] sm:$0xff]
    %v911 = vld [vmem:[%s13 + $0x38] sm:$0xf]
    %v912 = vld [vmem:[#allocation7] sm:$0x1]
    %vm921 = vcmask 1043456
    %v922 = vrot.slane 0.0, 4
    %v923 = vrot.slane %v896, 4
    %v924 = vsel %vm921, %v922, %v923
    %v925 = vsel %vm921, %v923, %v922
    %v926 = vrot.slane %v897, 4
    %v927 = vsel %vm921, %v922, %v926
    %v928 = vsel %vm921, %v926, %v922
    %v929 = vrot.slane %v898, 4
    %v930 = vsel %vm921, %v922, %v929
    %v931 = vsel %vm921, %v929, %v922
    %v932 = vrot.slane %v899, 4
    %v933 = vsel %vm921, %v922, %v932
    %v934 = vsel %vm921, %v932, %v922
    %v935 = vrot.slane %v900, 4
    %v936 = vsel %vm921, %v922, %v935
    %v937 = vsel %vm921, %v935, %v922
    %v938 = vrot.slane %v901, 4
    %v939 = vsel %vm921, %v922, %v938
    %v940 = vsel %vm921, %v938, %v922
    %v941 = vrot.slane %v902, 4
    %v942 = vsel %vm921, %v922, %v941
    %v943 = vsel %vm921, %v941, %v922
    %v944 = vrot.slane %v903, 4
    %v945 = vsel %vm921, %v922, %v944
    %v946 = vsel %vm921, %v944, %v922
    %v947 = vrot.slane %v896, 6
    %v948 = vsel %vm417, %v418, %v947
    %v949 = vsel %vm417, %v947, %v418
    %v950 = vrot.slane %v897, 6
    %v951 = vsel %vm417, %v418, %v950
    %v952 = vsel %vm417, %v950, %v418
    %v953 = vrot.slane %v898, 6
    %v954 = vsel %vm417, %v418, %v953
    %v955 = vsel %vm417, %v953, %v418
    %v956 = vrot.slane %v899, 6
    %v957 = vsel %vm417, %v418, %v956
    %v958 = vsel %vm417, %v956, %v418
    %v959 = vrot.slane %v900, 6
    %v960 = vsel %vm417, %v418, %v959
    %v961 = vsel %vm417, %v959, %v418
    %v962 = vrot.slane %v901, 6
    %v963 = vsel %vm417, %v418, %v962
    %v964 = vsel %vm417, %v962, %v418
    %v965 = vrot.slane %v902, 6
    %v966 = vsel %vm417, %v418, %v965
    %v967 = vsel %vm417, %v965, %v418
    %v968 = vrot.slane %v903, 6
    %v969 = vsel %vm417, %v418, %v968
    %v970 = vsel %vm417, %v968, %v418
    %v974 = vrot.slane %v906, 4
    %v975 = vrot.slane %v907, 4
    %v976 = vsel %vm921, %v974, %v975
    %v977 = vrot.slane %v908, 4
    %v978 = vsel %vm921, %v975, %v977
    %v981 = vsel %vm781, %v948, 0
    %v983 = vsel %vm781, %v949, 0
    %v985 = vsel %vm781, %v951, 0
    %v987 = vsel %vm781, %v952, 0
    %v989 = vsel %vm781, %v954, 0
    %v991 = vsel %vm781, %v955, 0
    %v993 = vsel %vm781, %v957, 0
    %v995 = vsel %vm781, %v958, 0
    %v997 = vsel %vm781, %v960, 0
    %v999 = vsel %vm781, %v961, 0
    %v1001 = vsel %vm781, %v963, 0
    %v1003 = vsel %vm781, %v964, 0
    %v1005 = vsel %vm781, %v966, 0
    %v1007 = vsel %vm781, %v967, 0
    %v1009 = vsel %vm781, %v969, 0
    %v1011 = vsel %vm781, %v970, 0
    %v1013 = vsel %vm921, %v977, 0
    %1015 = vmatprep.subr.mxu0 0.0
    %1016 = vmatpush1.msra.mxu0 0.0
    %1017 = vmatprep.subr.mxu0 0.0
    %1018 = vmatpush1.msra.mxu0 0.0
    %1019 = vmatprep.subr.mxu0 0.0
    %1020 = vmatpush1.msra.mxu0 0.0
    %1021 = vmatprep.subr.mxu0 0.0
    %1022 = vmatpush1.msra.mxu0 0.0
    %1023 = vmatprep.subr.mxu0 0.0
    %1024 = vmatpush1.msra.mxu0 0.0
    %1025 = vmatprep.subr.mxu0 0.0
    %1026 = vmatpush1.msra.mxu0 0.0
    %1027 = vmatprep.subr.mxu0 0.0
    %1028 = vmatpush1.msra.mxu0 0.0
    %1029 = vmatprep.subr.mxu0 0.0
    %1030 = vmatpush1.msra.mxu0 0.0
    %1031 = vmatprep.subr.mxu0 0.0
    %1032 = vmatpush1.msra.mxu0 0.0
    %1033 = vmatprep.subr.mxu0 0.0
    %1034 = vmatpush1.msra.mxu0 0.0
    %1035 = vmatprep.subr.mxu0 0.0
    %1036 = vmatpush1.msra.mxu0 0.0
    %1037 = vmatprep.subr.mxu0 0.0
    %1038 = vmatpush1.msra.mxu0 0.0
    %1039 = vmatprep.subr.mxu0 0.0
    %1040 = vmatpush1.msra.mxu0 0.0
    %1041 = vmatprep.subr.mxu0 0.0
    %1042 = vmatpush1.msra.mxu0 %v1013
    %1043 = vmatprep.subr.mxu0 0.0
    %1044 = vmatpush1.msra.mxu0 %v978
    %1045 = vmatprep.subr.mxu0 0.0
    %1046 = vmatpush1.msra.mxu0 %v976
    %1047 = vmatprep.subr.mxu0 0.0
    %1048 = vmatpush2.msra.mxu0 0.0
    %1049 = vmatprep.subr.mxu0 0.0
    %1050 = vmatpush2.msra.mxu0 0.0
    %1051 = vmatprep.subr.mxu0 0.0
    %1052 = vmatpush2.msra.mxu0 0.0
    %1053 = vmatprep.subr.mxu0 0.0
    %1054 = vmatpush2.msra.mxu0 0.0
    %1055 = vmatprep.subr.mxu0 0.0
    %1056 = vmatpush2.msra.mxu0 0.0
    %1057 = vmatprep.subr.mxu0 0.0
    %1058 = vmatpush2.msra.mxu0 0.0
    %1059 = vmatprep.subr.mxu0 0.0
    %1060 = vmatpush2.msra.mxu0 0.0
    %1061 = vmatprep.subr.mxu0 0.0
    %1062 = vmatpush2.msra.mxu0 0.0
    %1063 = vmatprep.subr.mxu0 0.0
    %1064 = vmatpush2.msra.mxu0 0.0
    %1065 = vmatprep.subr.mxu0 0.0
    %1066 = vmatpush2.msra.mxu0 0.0
    %1067 = vmatprep.subr.mxu0 0.0
    %1068 = vmatpush2.msra.mxu0 0.0
    %1069 = vmatprep.subr.mxu0 0.0
    %1070 = vmatpush2.msra.mxu0 0.0
    %1071 = vmatprep.subr.mxu0 0.0
    %1072 = vmatpush2.msra.mxu0 0.0
    %1073 = vmatprep.subr.mxu0 0.0
    %1074 = vmatpush2.msra.mxu0 0.0
    %1075 = vmatprep.subr.mxu0 0.0
    %1076 = vmatpush2.msra.mxu0 0.0
    %1077 = vmatprep.subr.mxu0 0.0
    %1078 = vmatpush2.msra.mxu0 0.0
    %1079 = vmatprep.mubr.f32.mxu0 0.0
    %1080 = vmatmul.mubr.f32.gmra.mxu0 %v981
    %v1081 = vpop.f32.mrf.mxu0
    %v1082 = vadd.f32 0.0, %v1081
    %v1083 = vpop.f32.mrf.mxu0
    %1084 = vmatprep.mubr.f32.mxu0 0.0
    %1085 = vmatmul.mubr.f32.gmra.mxu0 %v983
    %v1086 = vpop.f32.mrf.mxu0
    %v1087 = vadd.f32 0.0, %v1086
    %v1088 = vpop.f32.mrf.mxu0
    %1089 = vmatprep.mubr.f32.mxu0 0.0
    %1090 = vmatmul.mubr.f32.gmra.mxu0 %v985
    %v1091 = vpop.f32.mrf.mxu0
    %v1092 = vadd.f32 0.0, %v1091
    %v1093 = vpop.f32.mrf.mxu0
    %1094 = vmatprep.mubr.f32.mxu0 0.0
    %1095 = vmatmul.mubr.f32.gmra.mxu0 %v987
    %v1096 = vpop.f32.mrf.mxu0
    %v1097 = vadd.f32 0.0, %v1096
    %v1098 = vpop.f32.mrf.mxu0
    %1099 = vmatprep.mubr.f32.mxu0 0.0
    %1100 = vmatmul.mubr.f32.gmra.mxu0 %v989
    %v1101 = vpop.f32.mrf.mxu0
    %v1102 = vadd.f32 0.0, %v1101
    %v1103 = vpop.f32.mrf.mxu0
    %1104 = vmatprep.mubr.f32.mxu0 0.0
    %1105 = vmatmul.mubr.f32.gmra.mxu0 %v991
    %v1106 = vpop.f32.mrf.mxu0
    %v1107 = vadd.f32 0.0, %v1106
    %v1108 = vpop.f32.mrf.mxu0
    %1109 = vmatprep.mubr.f32.mxu0 0.0
    %1110 = vmatmul.mubr.f32.gmra.mxu0 %v993
    %v1111 = vpop.f32.mrf.mxu0
    %v1112 = vadd.f32 0.0, %v1111
    %v1113 = vpop.f32.mrf.mxu0
    %1114 = vmatprep.mubr.f32.mxu0 0.0
    %1115 = vmatmul.mubr.f32.gmra.mxu0 %v995
    %v1116 = vpop.f32.mrf.mxu0
    %v1117 = vadd.f32 0.0, %v1116
    %v1118 = vpop.f32.mrf.mxu0
    %1119 = vmatprep.mubr.f32.mxu0 0.0
    %1120 = vmatmul.mubr.f32.gmra.mxu0 %v997
    %v1121 = vpop.f32.mrf.mxu0
    %v1122 = vadd.f32 0.0, %v1121
    %v1123 = vpop.f32.mrf.mxu0
    %1124 = vmatprep.mubr.f32.mxu0 0.0
    %1125 = vmatmul.mubr.f32.gmra.mxu0 %v999
    %v1126 = vpop.f32.mrf.mxu0
    %v1127 = vadd.f32 0.0, %v1126
    %v1128 = vpop.f32.mrf.mxu0
    %1129 = vmatprep.mubr.f32.mxu0 0.0
    %1130 = vmatmul.mubr.f32.gmra.mxu0 %v1001
    %v1131 = vpop.f32.mrf.mxu0
    %v1132 = vadd.f32 0.0, %v1131
    %v1133 = vpop.f32.mrf.mxu0
    %1134 = vmatprep.mubr.f32.mxu0 0.0
    %1135 = vmatmul.mubr.f32.gmra.mxu0 %v1003
    %v1136 = vpop.f32.mrf.mxu0
    %v1137 = vadd.f32 0.0, %v1136
    %v1138 = vpop.f32.mrf.mxu0
    %1139 = vmatprep.mubr.f32.mxu0 0.0
    %1140 = vmatmul.mubr.f32.gmra.mxu0 %v1005
    %v1141 = vpop.f32.mrf.mxu0
    %v1142 = vadd.f32 0.0, %v1141
    %v1143 = vpop.f32.mrf.mxu0
    %1144 = vmatprep.mubr.f32.mxu0 0.0
    %1145 = vmatmul.mubr.f32.gmra.mxu0 %v1007
    %v1146 = vpop.f32.mrf.mxu0
    %v1147 = vadd.f32 0.0, %v1146
    %v1148 = vpop.f32.mrf.mxu0
    %1149 = vmatprep.mubr.f32.mxu0 0.0
    %1150 = vmatmul.mubr.f32.gmra.mxu0 %v1009
    %v1151 = vpop.f32.mrf.mxu0
    %v1152 = vadd.f32 0.0, %v1151
    %v1153 = vpop.f32.mrf.mxu0
    %1154 = vmatprep.mubr.f32.mxu0 0.0
    %1155 = vmatmul.mubr.f32.gmra.mxu0 %v1011
    %v1156 = vpop.f32.mrf.mxu0
    %v1157 = vadd.f32 0.0, %v1156
    %v1158 = vpop.f32.mrf.mxu0
    %1159 = vdwg.mxu0
    %v1160 = vsel %vm781, %v924, 0
    %v1162 = vsel %vm781, %v925, 0
    %v1164 = vsel %vm781, %v927, 0
    %v1166 = vsel %vm781, %v928, 0
    %v1168 = vsel %vm781, %v930, 0
    %v1170 = vsel %vm781, %v931, 0
    %v1172 = vsel %vm781, %v933, 0
    %v1174 = vsel %vm781, %v934, 0
    %v1176 = vsel %vm781, %v936, 0
    %v1178 = vsel %vm781, %v937, 0
    %v1180 = vsel %vm781, %v939, 0
    %v1182 = vsel %vm781, %v940, 0
    %v1184 = vsel %vm781, %v942, 0
    %v1186 = vsel %vm781, %v943, 0
    %v1188 = vsel %vm781, %v945, 0
    %v1190 = vsel %vm781, %v946, 0
    %v1192 = vsel %vm921, %v906, 0
    %1194 = vmatprep.subr.mxu0 0.0
    %1195 = vmatpush1.msra.mxu0 0.0
    %1196 = vmatprep.subr.mxu0 0.0
    %1197 = vmatpush1.msra.mxu0 0.0
    %1198 = vmatprep.subr.mxu0 0.0
    %1199 = vmatpush1.msra.mxu0 0.0
    %1200 = vmatprep.subr.mxu0 0.0
    %1201 = vmatpush1.msra.mxu0 0.0
    %1202 = vmatprep.subr.mxu0 0.0
    %1203 = vmatpush1.msra.mxu0 0.0
    %1204 = vmatprep.subr.mxu0 0.0
    %1205 = vmatpush1.msra.mxu0 0.0
    %1206 = vmatprep.subr.mxu0 0.0
    %1207 = vmatpush1.msra.mxu0 0.0
    %1208 = vmatprep.subr.mxu0 0.0
    %1209 = vmatpush1.msra.mxu0 0.0
    %1210 = vmatprep.subr.mxu0 0.0
    %1211 = vmatpush1.msra.mxu0 0.0
    %1212 = vmatprep.subr.mxu0 0.0
    %1213 = vmatpush1.msra.mxu0 0.0
    %1214 = vmatprep.subr.mxu0 0.0
    %1215 = vmatpush1.msra.mxu0 0.0
    %1216 = vmatprep.subr.mxu0 0.0
    %1217 = vmatpush1.msra.mxu0 0.0
    %1218 = vmatprep.subr.mxu0 0.0
    %1219 = vmatpush1.msra.mxu0 0.0
    %1220 = vmatprep.subr.mxu0 0.0
    %1221 = vmatpush1.msra.mxu0 %v1192
    %1222 = vmatprep.subr.mxu0 0.0
    %1223 = vmatpush1.msra.mxu0 %v905
    %1224 = vmatprep.subr.mxu0 0.0
    %1225 = vmatpush1.msra.mxu0 %v904
    %1226 = vmatprep.subr.mxu0 0.0
    %1227 = vmatpush2.msra.mxu0 0.0
    %1228 = vmatprep.subr.mxu0 0.0
    %1229 = vmatpush2.msra.mxu0 0.0
    %1230 = vmatprep.subr.mxu0 0.0
    %1231 = vmatpush2.msra.mxu0 0.0
    %1232 = vmatprep.subr.mxu0 0.0
    %1233 = vmatpush2.msra.mxu0 0.0
    %1234 = vmatprep.subr.mxu0 0.0
    %1235 = vmatpush2.msra.mxu0 0.0
    %1236 = vmatprep.subr.mxu0 0.0
    %1237 = vmatpush2.msra.mxu0 0.0
    %1238 = vmatprep.subr.mxu0 0.0
    %1239 = vmatpush2.msra.mxu0 0.0
    %1240 = vmatprep.subr.mxu0 0.0
    %1241 = vmatpush2.msra.mxu0 0.0
    %1242 = vmatprep.subr.mxu0 0.0
    %1243 = vmatpush2.msra.mxu0 0.0
    %1244 = vmatprep.subr.mxu0 0.0
    %1245 = vmatpush2.msra.mxu0 0.0
    %1246 = vmatprep.subr.mxu0 0.0
    %1247 = vmatpush2.msra.mxu0 0.0
    %1248 = vmatprep.subr.mxu0 0.0
    %1249 = vmatpush2.msra.mxu0 0.0
    %1250 = vmatprep.subr.mxu0 0.0
    %1251 = vmatpush2.msra.mxu0 0.0
    %1252 = vmatprep.subr.mxu0 0.0
    %1253 = vmatpush2.msra.mxu0 0.0
    %1254 = vmatprep.subr.mxu0 0.0
    %1255 = vmatpush2.msra.mxu0 0.0
    %1256 = vmatprep.subr.mxu0 0.0
    %1257 = vmatpush2.msra.mxu0 0.0
    %1258 = vmatprep.mubr.f32.mxu0 0.0
    %1259 = vmatmul.mubr.f32.gmra.mxu0 %v1160
    %v1260 = vpop.f32.mrf.mxu0
    %v1261 = vadd.f32 %v1082, %v1260
    %v1262 = vpop.f32.mrf.mxu0
    %1263 = vmatprep.mubr.f32.mxu0 0.0
    %1264 = vmatmul.mubr.f32.gmra.mxu0 %v1162
    %v1265 = vpop.f32.mrf.mxu0
    %v1266 = vadd.f32 %v1087, %v1265
    %v1267 = vpop.f32.mrf.mxu0
    %1268 = vmatprep.mubr.f32.mxu0 0.0
    %1269 = vmatmul.mubr.f32.gmra.mxu0 %v1164
    %v1270 = vpop.f32.mrf.mxu0
    %v1271 = vadd.f32 %v1092, %v1270
    %v1272 = vpop.f32.mrf.mxu0
    %1273 = vmatprep.mubr.f32.mxu0 0.0
    %1274 = vmatmul.mubr.f32.gmra.mxu0 %v1166
    %v1275 = vpop.f32.mrf.mxu0
    %v1276 = vadd.f32 %v1097, %v1275
    %v1277 = vpop.f32.mrf.mxu0
    %1278 = vmatprep.mubr.f32.mxu0 0.0
    %1279 = vmatmul.mubr.f32.gmra.mxu0 %v1168
    %v1280 = vpop.f32.mrf.mxu0
    %v1281 = vadd.f32 %v1102, %v1280
    %v1282 = vpop.f32.mrf.mxu0
    %1283 = vmatprep.mubr.f32.mxu0 0.0
    %1284 = vmatmul.mubr.f32.gmra.mxu0 %v1170
    %v1285 = vpop.f32.mrf.mxu0
    %v1286 = vadd.f32 %v1107, %v1285
    %v1287 = vpop.f32.mrf.mxu0
    %1288 = vmatprep.mubr.f32.mxu0 0.0
    %1289 = vmatmul.mubr.f32.gmra.mxu0 %v1172
    %v1290 = vpop.f32.mrf.mxu0
    %v1291 = vadd.f32 %v1112, %v1290
    %v1292 = vpop.f32.mrf.mxu0
    %1293 = vmatprep.mubr.f32.mxu0 0.0
    %1294 = vmatmul.mubr.f32.gmra.mxu0 %v1174
    %v1295 = vpop.f32.mrf.mxu0
    %v1296 = vadd.f32 %v1117, %v1295
    %v1297 = vpop.f32.mrf.mxu0
    %1298 = vmatprep.mubr.f32.mxu0 0.0
    %1299 = vmatmul.mubr.f32.gmra.mxu0 %v1176
    %v1300 = vpop.f32.mrf.mxu0
    %v1301 = vadd.f32 %v1122, %v1300
    %v1302 = vpop.f32.mrf.mxu0
    %1303 = vmatprep.mubr.f32.mxu0 0.0
    %1304 = vmatmul.mubr.f32.gmra.mxu0 %v1178
    %v1305 = vpop.f32.mrf.mxu0
    %v1306 = vadd.f32 %v1127, %v1305
    %v1307 = vpop.f32.mrf.mxu0
    %1308 = vmatprep.mubr.f32.mxu0 0.0
    %1309 = vmatmul.mubr.f32.gmra.mxu0 %v1180
    %v1310 = vpop.f32.mrf.mxu0
    %v1311 = vadd.f32 %v1132, %v1310
    %v1312 = vpop.f32.mrf.mxu0
    %1313 = vmatprep.mubr.f32.mxu0 0.0
    %1314 = vmatmul.mubr.f32.gmra.mxu0 %v1182
    %v1315 = vpop.f32.mrf.mxu0
    %v1316 = vadd.f32 %v1137, %v1315
    %v1317 = vpop.f32.mrf.mxu0
    %1318 = vmatprep.mubr.f32.mxu0 0.0
    %1319 = vmatmul.mubr.f32.gmra.mxu0 %v1184
    %v1320 = vpop.f32.mrf.mxu0
    %v1321 = vadd.f32 %v1142, %v1320
    %v1322 = vpop.f32.mrf.mxu0
    %1323 = vmatprep.mubr.f32.mxu0 0.0
    %1324 = vmatmul.mubr.f32.gmra.mxu0 %v1186
    %v1325 = vpop.f32.mrf.mxu0
    %v1326 = vadd.f32 %v1147, %v1325
    %v1327 = vpop.f32.mrf.mxu0
    %1328 = vmatprep.mubr.f32.mxu0 0.0
    %1329 = vmatmul.mubr.f32.gmra.mxu0 %v1188
    %v1330 = vpop.f32.mrf.mxu0
    %v1331 = vadd.f32 %v1152, %v1330
    %v1332 = vpop.f32.mrf.mxu0
    %1333 = vmatprep.mubr.f32.mxu0 0.0
    %1334 = vmatmul.mubr.f32.gmra.mxu0 %v1190
    %v1335 = vpop.f32.mrf.mxu0
    %v1336 = vadd.f32 %v1157, %v1335
    %v1337 = vpop.f32.mrf.mxu0
    %1338 = vdwg.mxu0
    %v1339 = vsel %vm781, %v896, 0
    %v1341 = vsel %vm781, 0.0, 0
    %v1343 = vsel %vm781, %v897, 0
    %v1345 = vsel %vm781, %v898, 0
    %v1347 = vsel %vm781, %v899, 0
    %v1349 = vsel %vm781, %v900, 0
    %v1351 = vsel %vm781, %v901, 0
    %v1353 = vsel %vm781, %v902, 0
    %v1355 = vsel %vm781, %v903, 0
    %v1358 = vsel %vm921, %v911, 0
    %1360 = vmatprep.subr.mxu0 0.0
    %1361 = vmatpush1.msra.mxu0 0.0
    %1362 = vmatprep.subr.mxu0 0.0
    %1363 = vmatpush1.msra.mxu0 0.0
    %1364 = vmatprep.subr.mxu0 0.0
    %1365 = vmatpush1.msra.mxu0 0.0
    %1366 = vmatprep.subr.mxu0 0.0
    %1367 = vmatpush1.msra.mxu0 0.0
    %1368 = vmatprep.subr.mxu0 0.0
    %1369 = vmatpush1.msra.mxu0 0.0
    %1370 = vmatprep.subr.mxu0 0.0
    %1371 = vmatpush1.msra.mxu0 0.0
    %1372 = vmatprep.subr.mxu0 0.0
    %1373 = vmatpush1.msra.mxu0 0.0
    %1374 = vmatprep.subr.mxu0 0.0
    %1375 = vmatpush1.msra.mxu0 0.0
    %1376 = vmatprep.subr.mxu0 0.0
    %1377 = vmatpush1.msra.mxu0 0.0
    %1378 = vmatprep.subr.mxu0 0.0
    %1379 = vmatpush1.msra.mxu0 0.0
    %1380 = vmatprep.subr.mxu0 0.0
    %1381 = vmatpush1.msra.mxu0 0.0
    %1382 = vmatprep.subr.mxu0 0.0
    %1383 = vmatpush1.msra.mxu0 0.0
    %1384 = vmatprep.subr.mxu0 0.0
    %1385 = vmatpush1.msra.mxu0 0.0
    %1386 = vmatprep.subr.mxu0 0.0
    %1387 = vmatpush1.msra.mxu0 %v1358
    %1388 = vmatprep.subr.mxu0 0.0
    %1389 = vmatpush1.msra.mxu0 %v910
    %1390 = vmatprep.subr.mxu0 0.0
    %1391 = vmatpush1.msra.mxu0 %v909
    %1392 = vmatprep.subr.mxu0 0.0
    %1393 = vmatpush2.msra.mxu0 0.0
    %1394 = vmatprep.subr.mxu0 0.0
    %1395 = vmatpush2.msra.mxu0 0.0
    %1396 = vmatprep.subr.mxu0 0.0
    %1397 = vmatpush2.msra.mxu0 0.0
    %1398 = vmatprep.subr.mxu0 0.0
    %1399 = vmatpush2.msra.mxu0 0.0
    %1400 = vmatprep.subr.mxu0 0.0
    %1401 = vmatpush2.msra.mxu0 0.0
    %1402 = vmatprep.subr.mxu0 0.0
    %1403 = vmatpush2.msra.mxu0 0.0
    %1404 = vmatprep.subr.mxu0 0.0
    %1405 = vmatpush2.msra.mxu0 0.0
    %1406 = vmatprep.subr.mxu0 0.0
    %1407 = vmatpush2.msra.mxu0 0.0
    %1408 = vmatprep.subr.mxu0 0.0
    %1409 = vmatpush2.msra.mxu0 0.0
    %1410 = vmatprep.subr.mxu0 0.0
    %1411 = vmatpush2.msra.mxu0 0.0
    %1412 = vmatprep.subr.mxu0 0.0
    %1413 = vmatpush2.msra.mxu0 0.0
    %1414 = vmatprep.subr.mxu0 0.0
    %1415 = vmatpush2.msra.mxu0 0.0
    %1416 = vmatprep.subr.mxu0 0.0
    %1417 = vmatpush2.msra.mxu0 0.0
    %1418 = vmatprep.subr.mxu0 0.0
    %1419 = vmatpush2.msra.mxu0 0.0
    %1420 = vmatprep.subr.mxu0 0.0
    %1421 = vmatpush2.msra.mxu0 0.0
    %1422 = vmatprep.subr.mxu0 0.0
    %1423 = vmatpush2.msra.mxu0 0.0
    %1424 = vmatprep.mubr.f32.mxu0 0.0
    %1425 = vmatmul.mubr.f32.gmra.mxu0 %v1339
    %v1426 = vpop.f32.mrf.mxu0
    %v1427 = vadd.f32 0.0, %v1426
    %v1428 = vpop.f32.mrf.mxu0
    %1429 = vmatprep.mubr.f32.mxu0 0.0
    %1430 = vmatmul.mubr.f32.gmra.mxu0 %v1341
    %v1431 = vpop.f32.mrf.mxu0
    %v1432 = vadd.f32 0.0, %v1431
    %v1433 = vpop.f32.mrf.mxu0
    %1434 = vmatprep.mubr.f32.mxu0 0.0
    %1435 = vmatmul.mubr.f32.gmra.mxu0 %v1343
    %v1436 = vpop.f32.mrf.mxu0
    %v1437 = vadd.f32 0.0, %v1436
    %v1438 = vpop.f32.mrf.mxu0
    %1439 = vmatprep.mubr.f32.mxu0 0.0
    %1440 = vmatmul.mubr.f32.gmra.mxu0 %v1341
    %v1441 = vpop.f32.mrf.mxu0
    %v1442 = vadd.f32 0.0, %v1441
    %v1443 = vpop.f32.mrf.mxu0
    %1444 = vmatprep.mubr.f32.mxu0 0.0
    %1445 = vmatmul.mubr.f32.gmra.mxu0 %v1345
    %v1446 = vpop.f32.mrf.mxu0
    %v1447 = vadd.f32 0.0, %v1446
    %v1448 = vpop.f32.mrf.mxu0
    %1449 = vmatprep.mubr.f32.mxu0 0.0
    %1450 = vmatmul.mubr.f32.gmra.mxu0 %v1341
    %v1451 = vpop.f32.mrf.mxu0
    %v1452 = vadd.f32 0.0, %v1451
    %v1453 = vpop.f32.mrf.mxu0
    %1454 = vmatprep.mubr.f32.mxu0 0.0
    %1455 = vmatmul.mubr.f32.gmra.mxu0 %v1347
    %v1456 = vpop.f32.mrf.mxu0
    %v1457 = vadd.f32 0.0, %v1456
    %v1458 = vpop.f32.mrf.mxu0
    %1459 = vmatprep.mubr.f32.mxu0 0.0
    %1460 = vmatmul.mubr.f32.gmra.mxu0 %v1341
    %v1461 = vpop.f32.mrf.mxu0
    %v1462 = vadd.f32 0.0, %v1461
    %v1463 = vpop.f32.mrf.mxu0
    %1464 = vmatprep.mubr.f32.mxu0 0.0
    %1465 = vmatmul.mubr.f32.gmra.mxu0 %v1349
    %v1466 = vpop.f32.mrf.mxu0
    %v1467 = vadd.f32 0.0, %v1466
    %v1468 = vpop.f32.mrf.mxu0
    %1469 = vmatprep.mubr.f32.mxu0 0.0
    %1470 = vmatmul.mubr.f32.gmra.mxu0 %v1341
    %v1471 = vpop.f32.mrf.mxu0
    %v1472 = vadd.f32 0.0, %v1471
    %v1473 = vpop.f32.mrf.mxu0
    %1474 = vmatprep.mubr.f32.mxu0 0.0
    %1475 = vmatmul.mubr.f32.gmra.mxu0 %v1351
    %v1476 = vpop.f32.mrf.mxu0
    %v1477 = vadd.f32 0.0, %v1476
    %v1478 = vpop.f32.mrf.mxu0
    %1479 = vmatprep.mubr.f32.mxu0 0.0
    %1480 = vmatmul.mubr.f32.gmra.mxu0 %v1341
    %v1481 = vpop.f32.mrf.mxu0
    %v1482 = vadd.f32 0.0, %v1481
    %v1483 = vpop.f32.mrf.mxu0
    %1484 = vmatprep.mubr.f32.mxu0 0.0
    %1485 = vmatmul.mubr.f32.gmra.mxu0 %v1353
    %v1486 = vpop.f32.mrf.mxu0
    %v1487 = vadd.f32 0.0, %v1486
    %v1488 = vpop.f32.mrf.mxu0
    %1489 = vmatprep.mubr.f32.mxu0 0.0
    %1490 = vmatmul.mubr.f32.gmra.mxu0 %v1341
    %v1491 = vpop.f32.mrf.mxu0
    %v1492 = vadd.f32 0.0, %v1491
    %v1493 = vpop.f32.mrf.mxu0
    %1494 = vmatprep.mubr.f32.mxu0 0.0
    %1495 = vmatmul.mubr.f32.gmra.mxu0 %v1355
    %v1496 = vpop.f32.mrf.mxu0
    %v1497 = vadd.f32 0.0, %v1496
    %v1498 = vpop.f32.mrf.mxu0
    %1499 = vmatprep.mubr.f32.mxu0 0.0
    %1500 = vmatmul.mubr.f32.gmra.mxu0 %v1341
    %v1501 = vpop.f32.mrf.mxu0
    %v1502 = vadd.f32 0.0, %v1501
    %v1503 = vpop.f32.mrf.mxu0
    %1504 = vdwg.mxu0
    %v1505 = vadd.f32 %v1261, %v1427
    %v1506 = vadd.f32 %v1266, %v1432
    %v1507 = vadd.f32 %v1271, %v1437
    %v1508 = vadd.f32 %v1276, %v1442
    %v1509 = vadd.f32 %v1281, %v1447
    %v1510 = vadd.f32 %v1286, %v1452
    %v1511 = vadd.f32 %v1291, %v1457
    %v1512 = vadd.f32 %v1296, %v1462
    %v1513 = vadd.f32 %v1301, %v1467
    %v1514 = vadd.f32 %v1306, %v1472
    %v1515 = vadd.f32 %v1311, %v1477
    %v1516 = vadd.f32 %v1316, %v1482
    %v1517 = vadd.f32 %v1321, %v1487
    %v1518 = vadd.f32 %v1326, %v1492
    %v1519 = vadd.f32 %v1331, %v1497
    %v1520 = vadd.f32 %v1336, %v1502
    %v1522 = vlaneseq
    %v1523 = vshrl.u32 %v1522, 7
    %v1524 = vsub.s32 0, %v1523
    %v1525 = vrot.slane %v912, %v1524
    %v1527 = vadd.f32 %v1505, %v1525
    %v1528 = vadd.f32 %v1506, %v1525
    %v1529 = vadd.f32 %v1507, %v1525
    %v1530 = vadd.f32 %v1508, %v1525
    %v1531 = vadd.f32 %v1509, %v1525
    %v1532 = vadd.f32 %v1510, %v1525
    %v1533 = vadd.f32 %v1511, %v1525
    %v1534 = vadd.f32 %v1512, %v1525
    %v1535 = vadd.f32 %v1513, %v1525
    %v1536 = vadd.f32 %v1514, %v1525
    %v1537 = vadd.f32 %v1515, %v1525
    %v1538 = vadd.f32 %v1516, %v1525
    %v1539 = vadd.f32 %v1517, %v1525
    %v1540 = vadd.f32 %v1518, %v1525
    %v1541 = vadd.f32 %v1519, %v1525
    %v1542 = vadd.f32 %v1520, %v1525
    %vm1543 = vcmp.lt.s32.totalorder %v757, 12
    %vm1544 = vcmp.lt.s32.totalorder %v758, 12
    %v1545 = vsel %vm1543, 1, 0
    %v1546 = vsel %vm1544, 1, 0
    %v1547 = vcvt.s32.f32 %v1545
    %v1548 = vcvt.s32.f32 %v1546
    %v1549 = vmul.f32 %v1527, %v1547
    %v1550 = vmul.f32 %v1528, %v1548
    %v1551 = vmul.f32 %v1529, %v1547
    %v1552 = vmul.f32 %v1530, %v1548
    %v1553 = vmul.f32 %v1531, %v1547
    %v1554 = vmul.f32 %v1532, %v1548
    %v1555 = vmul.f32 %v1533, %v1547
    %v1556 = vmul.f32 %v1534, %v1548
    %v1557 = vmul.f32 %v1535, %v1547
    %v1558 = vmul.f32 %v1536, %v1548
    %v1559 = vmul.f32 %v1537, %v1547
    %v1560 = vmul.f32 %v1538, %v1548
    %v1561 = vmul.f32 %v1539, %v1547
    %v1562 = vmul.f32 %v1540, %v1548
    %v1563 = vmul.f32 %v1541, %v1547
    %v1564 = vmul.f32 %v1542, %v1548
    %vm1565 = vcmask 408576
    %v1566 = vsel %vm1565, %v1549, 0.0
    %v1567 = vsel %vm1565, %v1550, 0.0
    %v1568 = vadd.f32 %v1566, %v1567
    %v1569 = vsel %vm1565, %v1551, 0.0
    %v1570 = vadd.f32 %v1568, %v1569
    %v1571 = vsel %vm1565, %v1552, 0.0
    %v1572 = vadd.f32 %v1570, %v1571
    %v1573 = vsel %vm1565, %v1553, 0.0
    %v1574 = vadd.f32 %v1572, %v1573
    %v1575 = vsel %vm1565, %v1554, 0.0
    %v1576 = vadd.f32 %v1574, %v1575
    %v1577 = vsel %vm1565, %v1555, 0.0
    %v1578 = vadd.f32 %v1576, %v1577
    %v1579 = vsel %vm1565, %v1556, 0.0
    %v1580 = vadd.f32 %v1578, %v1579
    %v1581 = vsel %vm1565, %v1557, 0.0
    %v1582 = vadd.f32 %v1580, %v1581
    %v1583 = vsel %vm1565, %v1558, 0.0
    %v1584 = vadd.f32 %v1582, %v1583
    %v1585 = vsel %vm1565, %v1559, 0.0
    %v1586 = vadd.f32 %v1584, %v1585
    %v1587 = vsel %vm1565, %v1560, 0.0
    %v1588 = vadd.f32 %v1586, %v1587
    %v1589 = vsel %vm1565, %v1561, 0.0
    %v1590 = vadd.f32 %v1588, %v1589
    %v1591 = vsel %vm1565, %v1562, 0.0
    %v1592 = vadd.f32 %v1590, %v1591
    %v1593 = vsel %vm1565, %v1563, 0.0
    %v1594 = vadd.f32 %v1592, %v1593
    %v1595 = vsel %vm1565, %v1564, 0.0
    %v1596 = vadd.f32 %v1594, %v1595
    %v1597 = vrot.slane %v1596, 4
    %v1598 = vadd.f32 %v1596, %v1597
    %v1599 = vrot.slane %v1598, 2
    %v1600 = vadd.f32 %v1598, %v1599
    %v1601 = vrot.slane %v1600, 1
    %v1602 = vadd.f32 %v1600, %v1601
    %v1603 = vrcp.pop 96.0
    %v1604 = vmul.f32 %v1602, %v1603
    %v1605 = vmul.f32 %v1549, %v1527
    %v1606 = vmul.f32 %v1550, %v1528
    %v1607 = vmul.f32 %v1551, %v1529
    %v1608 = vmul.f32 %v1552, %v1530
    %v1609 = vmul.f32 %v1553, %v1531
    %v1610 = vmul.f32 %v1554, %v1532
    %v1611 = vmul.f32 %v1555, %v1533
    %v1612 = vmul.f32 %v1556, %v1534
    %v1613 = vmul.f32 %v1557, %v1535
    %v1614 = vmul.f32 %v1558, %v1536
    %v1615 = vmul.f32 %v1559, %v1537
    %v1616 = vmul.f32 %v1560, %v1538
    %v1617 = vmul.f32 %v1561, %v1539
    %v1618 = vmul.f32 %v1562, %v1540
    %v1619 = vmul.f32 %v1563, %v1541
    %v1620 = vmul.f32 %v1564, %v1542
    %v1621 = vsel %vm1565, %v1605, 0.0
    %v1622 = vsel %vm1565, %v1606, 0.0
    %v1623 = vadd.f32 %v1621, %v1622
    %v1624 = vsel %vm1565, %v1607, 0.0
    %v1625 = vadd.f32 %v1623, %v1624
    %v1626 = vsel %vm1565, %v1608, 0.0
    %v1627 = vadd.f32 %v1625, %v1626
    %v1628 = vsel %vm1565, %v1609, 0.0
    %v1629 = vadd.f32 %v1627, %v1628
    %v1630 = vsel %vm1565, %v1610, 0.0
    %v1631 = vadd.f32 %v1629, %v1630
    %v1632 = vsel %vm1565, %v1611, 0.0
    %v1633 = vadd.f32 %v1631, %v1632
    %v1634 = vsel %vm1565, %v1612, 0.0
    %v1635 = vadd.f32 %v1633, %v1634
    %v1636 = vsel %vm1565, %v1613, 0.0
    %v1637 = vadd.f32 %v1635, %v1636
    %v1638 = vsel %vm1565, %v1614, 0.0
    %v1639 = vadd.f32 %v1637, %v1638
    %v1640 = vsel %vm1565, %v1615, 0.0
    %v1641 = vadd.f32 %v1639, %v1640
    %v1642 = vsel %vm1565, %v1616, 0.0
    %v1643 = vadd.f32 %v1641, %v1642
    %v1644 = vsel %vm1565, %v1617, 0.0
    %v1645 = vadd.f32 %v1643, %v1644
    %v1646 = vsel %vm1565, %v1618, 0.0
    %v1647 = vadd.f32 %v1645, %v1646
    %v1648 = vsel %vm1565, %v1619, 0.0
    %v1649 = vadd.f32 %v1647, %v1648
    %v1650 = vsel %vm1565, %v1620, 0.0
    %v1651 = vadd.f32 %v1649, %v1650
    %v1652 = vrot.slane %v1651, 4
    %v1653 = vadd.f32 %v1651, %v1652
    %v1654 = vrot.slane %v1653, 2
    %v1655 = vadd.f32 %v1653, %v1654
    %v1656 = vrot.slane %v1655, 1
    %v1657 = vadd.f32 %v1655, %v1656
    %v1658 = vmul.f32 %v1657, %v1603
    %v1659 = vmul.f32 %v1604, %v1604
    %v1660 = vsub.f32 %v1658, %v1659
    %v1661 = vmax.f32 %v1660, 0.0
    %v1662 = vsub.f32 %v1527, %v1604
    %v1663 = vsub.f32 %v1529, %v1604
    %v1664 = vsub.f32 %v1531, %v1604
    %v1665 = vsub.f32 %v1533, %v1604
    %v1666 = vsub.f32 %v1535, %v1604
    %v1667 = vsub.f32 %v1537, %v1604
    %v1668 = vsub.f32 %v1539, %v1604
    %v1669 = vsub.f32 %v1541, %v1604
    %v1670 = vadd.f32 %v1661, 1e-05
    %v1671 = vrsqrt.pop %v1670
    %v1672 = vmul.f32 %v1662, %v1671
    %v1673 = vmul.f32 %v1663, %v1671
    %v1674 = vmul.f32 %v1664, %v1671
    %v1675 = vmul.f32 %v1665, %v1671
    %v1676 = vmul.f32 %v1666, %v1671
    %v1677 = vmul.f32 %v1667, %v1671
    %v1678 = vmul.f32 %v1668, %v1671
    %v1679 = vmul.f32 %v1669, %v1671
    %v1680 = vmax.f32 %v1672, 0.0
    %v1681 = vmax.f32 %v1673, 0.0
    %v1682 = vmax.f32 %v1674, 0.0
    %v1683 = vmax.f32 %v1675, 0.0
    %v1684 = vmax.f32 %v1676, 0.0
    %v1685 = vmax.f32 %v1677, 0.0
    %v1686 = vmax.f32 %v1678, 0.0
    %v1687 = vmax.f32 %v1679, 0.0
    %vm1688 = vcmp.eq.s32.totalorder %v757, 7
    %v1689 = vsel %vm1688, 1, 0
    %v1690 = vcvt.s32.f32 %v1689
    %v1691 = vmul.f32 %v1680, %v1690
    %v1692 = vmul.f32 %v1681, %v1690
    %v1693 = vmul.f32 %v1682, %v1690
    %v1694 = vmul.f32 %v1683, %v1690
    %v1695 = vmul.f32 %v1684, %v1690
    %v1696 = vmul.f32 %v1685, %v1690
    %v1697 = vmul.f32 %v1686, %v1690
    %v1698 = vmul.f32 %v1687, %v1690
    %v1699 = vsel %vm1565, %v1691, 0.0
    %v1700 = vrot.slane %v1699, 4
    %v1701 = vadd.f32 %v1699, %v1700
    %v1702 = vrot.slane %v1701, 2
    %v1703 = vadd.f32 %v1701, %v1702
    %v1704 = vrot.slane %v1703, 1
    %v1705 = vadd.f32 %v1703, %v1704
    %v1706 = vsel %vm1565, %v1692, 0.0
    %v1707 = vrot.slane %v1706, 4
    %v1708 = vadd.f32 %v1706, %v1707
    %v1709 = vrot.slane %v1708, 2
    %v1710 = vadd.f32 %v1708, %v1709
    %v1711 = vrot.slane %v1710, 1
    %v1712 = vadd.f32 %v1710, %v1711
    %v1713 = vsel %vm1565, %v1693, 0.0
    %v1714 = vrot.slane %v1713, 4
    %v1715 = vadd.f32 %v1713, %v1714
    %v1716 = vrot.slane %v1715, 2
    %v1717 = vadd.f32 %v1715, %v1716
    %v1718 = vrot.slane %v1717, 1
    %v1719 = vadd.f32 %v1717, %v1718
    %v1720 = vsel %vm1565, %v1694, 0.0
    %v1721 = vrot.slane %v1720, 4
    %v1722 = vadd.f32 %v1720, %v1721
    %v1723 = vrot.slane %v1722, 2
    %v1724 = vadd.f32 %v1722, %v1723
    %v1725 = vrot.slane %v1724, 1
    %v1726 = vadd.f32 %v1724, %v1725
    %v1727 = vsel %vm1565, %v1695, 0.0
    %v1728 = vrot.slane %v1727, 4
    %v1729 = vadd.f32 %v1727, %v1728
    %v1730 = vrot.slane %v1729, 2
    %v1731 = vadd.f32 %v1729, %v1730
    %v1732 = vrot.slane %v1731, 1
    %v1733 = vadd.f32 %v1731, %v1732
    %v1734 = vsel %vm1565, %v1696, 0.0
    %v1735 = vrot.slane %v1734, 4
    %v1736 = vadd.f32 %v1734, %v1735
    %v1737 = vrot.slane %v1736, 2
    %v1738 = vadd.f32 %v1736, %v1737
    %v1739 = vrot.slane %v1738, 1
    %v1740 = vadd.f32 %v1738, %v1739
    %v1741 = vsel %vm1565, %v1697, 0.0
    %v1742 = vrot.slane %v1741, 4
    %v1743 = vadd.f32 %v1741, %v1742
    %v1744 = vrot.slane %v1743, 2
    %v1745 = vadd.f32 %v1743, %v1744
    %v1746 = vrot.slane %v1745, 1
    %v1747 = vadd.f32 %v1745, %v1746
    %v1748 = vsel %vm1565, %v1698, 0.0
    %v1749 = vrot.slane %v1748, 4
    %v1750 = vadd.f32 %v1748, %v1749
    %v1751 = vrot.slane %v1750, 2
    %v1752 = vadd.f32 %v1750, %v1751
    %v1753 = vrot.slane %v1752, 1
    %v1754 = vadd.f32 %v1752, %v1753
    %v1755 = vld [vmem:[%s3] sm:$0xff]
    %v1756 = vld [vmem:[%s3 + $0x8] sm:$0xff]
    %v1757 = vld [vmem:[%s3 + $0x10] sm:$0xff]
    %v1758 = vld [vmem:[%s3 + $0x18] sm:$0xff]
    %v1759 = vld [vmem:[%s3 + $0x20] sm:$0xff]
    %v1760 = vld [vmem:[%s3 + $0x28] sm:$0xff]
    %v1761 = vld [vmem:[%s3 + $0x30] sm:$0xff]
    %v1762 = vld [vmem:[%s3 + $0x38] sm:$0xff]
    %v1763 = vld [vmem:[#allocation8] sm:$0xff]
    %v1764 = vld [vmem:[#allocation8 + $0x8] sm:$0xff]
    %v1765 = vld [vmem:[#allocation8 + $0x10] sm:$0x3]
    %v1766 = vld [vmem:[#allocation10] sm:$0x1]
    %v1775 = vrot.slane %v1755, 6
    %v1776 = vsel %vm417, %v418, %v1775
    %v1777 = vsel %vm417, %v1775, %v418
    %v1778 = vrot.slane %v1756, 6
    %v1779 = vsel %vm417, %v418, %v1778
    %v1780 = vsel %vm417, %v1778, %v418
    %v1781 = vrot.slane %v1757, 6
    %v1782 = vsel %vm417, %v418, %v1781
    %v1783 = vsel %vm417, %v1781, %v418
    %v1784 = vrot.slane %v1758, 6
    %v1785 = vsel %vm417, %v418, %v1784
    %v1786 = vsel %vm417, %v1784, %v418
    %v1787 = vrot.slane %v1759, 6
    %v1788 = vsel %vm417, %v418, %v1787
    %v1789 = vsel %vm417, %v1787, %v418
    %v1790 = vrot.slane %v1760, 6
    %v1791 = vsel %vm417, %v418, %v1790
    %v1792 = vsel %vm417, %v1790, %v418
    %v1793 = vrot.slane %v1761, 6
    %v1794 = vsel %vm417, %v418, %v1793
    %v1795 = vsel %vm417, %v1793, %v418
    %v1796 = vrot.slane %v1762, 6
    %v1797 = vsel %vm417, %v418, %v1796
    %v1798 = vsel %vm417, %v1796, %v418
    %v1799 = vrot.slane %v1755, 7
    %v1800 = vsel %vm543, %v544, %v1799
    %v1801 = vsel %vm543, %v1799, %v544
    %v1802 = vrot.slane %v1756, 7
    %v1803 = vsel %vm543, %v544, %v1802
    %v1804 = vsel %vm543, %v1802, %v544
    %v1805 = vrot.slane %v1757, 7
    %v1806 = vsel %vm543, %v544, %v1805
    %v1807 = vsel %vm543, %v1805, %v544
    %v1808 = vrot.slane %v1758, 7
    %v1809 = vsel %vm543, %v544, %v1808
    %v1810 = vsel %vm543, %v1808, %v544
    %v1811 = vrot.slane %v1759, 7
    %v1812 = vsel %vm543, %v544, %v1811
    %v1813 = vsel %vm543, %v1811, %v544
    %v1814 = vrot.slane %v1760, 7
    %v1815 = vsel %vm543, %v544, %v1814
    %v1816 = vsel %vm543, %v1814, %v544
    %v1817 = vrot.slane %v1761, 7
    %v1818 = vsel %vm543, %v544, %v1817
    %v1819 = vsel %vm543, %v1817, %v544
    %v1820 = vrot.slane %v1762, 7
    %v1821 = vsel %vm543, %v544, %v1820
    %v1822 = vsel %vm543, %v1820, %v544
    %v1825 = vrot.slane %v1763, 6
    %v1826 = vrot.slane %v1764, 6
    %v1827 = vsel %vm417, %v1825, %v1826
    %vm1828 = vcmask 48128
    %v1829 = vsel %vm1828, %v1800, 0
    %v1831 = vsel %vm1828, %v1801, 0
    %v1833 = vsel %vm1828, %v1803, 0
    %v1835 = vsel %vm1828, %v1804, 0
    %v1837 = vsel %vm1828, %v1806, 0
    %v1839 = vsel %vm1828, %v1807, 0
    %v1841 = vsel %vm1828, %v1809, 0
    %v1843 = vsel %vm1828, %v1810, 0
    %v1845 = vsel %vm1828, %v1812, 0
    %v1847 = vsel %vm1828, %v1813, 0
    %v1849 = vsel %vm1828, %v1815, 0
    %v1851 = vsel %vm1828, %v1816, 0
    %v1853 = vsel %vm1828, %v1818, 0
    %v1855 = vsel %vm1828, %v1819, 0
    %v1857 = vsel %vm1828, %v1821, 0
    %v1859 = vsel %vm1828, %v1822, 0
    %vm1861 = vcmask 1045504
    %v1862 = vsel %vm1861, %v1827, 0
    %1864 = vmatprep.subr.mxu0 0.0
    %1865 = vmatpush1.msra.mxu0 0.0
    %1866 = vmatprep.subr.mxu0 0.0
    %1867 = vmatpush1.msra.mxu0 0.0
    %1868 = vmatprep.subr.mxu0 0.0
    %1869 = vmatpush1.msra.mxu0 0.0
    %1870 = vmatprep.subr.mxu0 0.0
    %1871 = vmatpush1.msra.mxu0 0.0
    %1872 = vmatprep.subr.mxu0 0.0
    %1873 = vmatpush1.msra.mxu0 0.0
    %1874 = vmatprep.subr.mxu0 0.0
    %1875 = vmatpush1.msra.mxu0 0.0
    %1876 = vmatprep.subr.mxu0 0.0
    %1877 = vmatpush1.msra.mxu0 0.0
    %1878 = vmatprep.subr.mxu0 0.0
    %1879 = vmatpush1.msra.mxu0 0.0
    %1880 = vmatprep.subr.mxu0 0.0
    %1881 = vmatpush1.msra.mxu0 0.0
    %1882 = vmatprep.subr.mxu0 0.0
    %1883 = vmatpush1.msra.mxu0 0.0
    %1884 = vmatprep.subr.mxu0 0.0
    %1885 = vmatpush1.msra.mxu0 0.0
    %1886 = vmatprep.subr.mxu0 0.0
    %1887 = vmatpush1.msra.mxu0 0.0
    %1888 = vmatprep.subr.mxu0 0.0
    %1889 = vmatpush1.msra.mxu0 0.0
    %1890 = vmatprep.subr.mxu0 0.0
    %1891 = vmatpush1.msra.mxu0 0.0
    %1892 = vmatprep.subr.mxu0 0.0
    %1893 = vmatpush1.msra.mxu0 0.0
    %1894 = vmatprep.subr.mxu0 0.0
    %1895 = vmatpush1.msra.mxu0 %v1862
    %1896 = vmatprep.subr.mxu0 0.0
    %1897 = vmatpush2.msra.mxu0 0.0
    %1898 = vmatprep.subr.mxu0 0.0
    %1899 = vmatpush2.msra.mxu0 0.0
    %1900 = vmatprep.subr.mxu0 0.0
    %1901 = vmatpush2.msra.mxu0 0.0
    %1902 = vmatprep.subr.mxu0 0.0
    %1903 = vmatpush2.msra.mxu0 0.0
    %1904 = vmatprep.subr.mxu0 0.0
    %1905 = vmatpush2.msra.mxu0 0.0
    %1906 = vmatprep.subr.mxu0 0.0
    %1907 = vmatpush2.msra.mxu0 0.0
    %1908 = vmatprep.subr.mxu0 0.0
    %1909 = vmatpush2.msra.mxu0 0.0
    %1910 = vmatprep.subr.mxu0 0.0
    %1911 = vmatpush2.msra.mxu0 0.0
    %1912 = vmatprep.subr.mxu0 0.0
    %1913 = vmatpush2.msra.mxu0 0.0
    %1914 = vmatprep.subr.mxu0 0.0
    %1915 = vmatpush2.msra.mxu0 0.0
    %1916 = vmatprep.subr.mxu0 0.0
    %1917 = vmatpush2.msra.mxu0 0.0
    %1918 = vmatprep.subr.mxu0 0.0
    %1919 = vmatpush2.msra.mxu0 0.0
    %1920 = vmatprep.subr.mxu0 0.0
    %1921 = vmatpush2.msra.mxu0 0.0
    %1922 = vmatprep.subr.mxu0 0.0
    %1923 = vmatpush2.msra.mxu0 0.0
    %1924 = vmatprep.subr.mxu0 0.0
    %1925 = vmatpush2.msra.mxu0 0.0
    %1926 = vmatprep.subr.mxu0 0.0
    %1927 = vmatpush2.msra.mxu0 0.0
    %1928 = vmatprep.mubr.f32.mxu0 0.0
    %1929 = vmatmul.mubr.f32.gmra.mxu0 %v1829
    %v1930 = vpop.f32.mrf.mxu0
    %v1931 = vadd.f32 0.0, %v1930
    %v1932 = vpop.f32.mrf.mxu0
    %1933 = vmatprep.mubr.f32.mxu0 0.0
    %1934 = vmatmul.mubr.f32.gmra.mxu0 %v1831
    %v1935 = vpop.f32.mrf.mxu0
    %v1936 = vadd.f32 0.0, %v1935
    %v1937 = vpop.f32.mrf.mxu0
    %1938 = vmatprep.mubr.f32.mxu0 0.0
    %1939 = vmatmul.mubr.f32.gmra.mxu0 %v1833
    %v1940 = vpop.f32.mrf.mxu0
    %v1941 = vadd.f32 0.0, %v1940
    %v1942 = vpop.f32.mrf.mxu0
    %1943 = vmatprep.mubr.f32.mxu0 0.0
    %1944 = vmatmul.mubr.f32.gmra.mxu0 %v1835
    %v1945 = vpop.f32.mrf.mxu0
    %v1946 = vadd.f32 0.0, %v1945
    %v1947 = vpop.f32.mrf.mxu0
    %1948 = vmatprep.mubr.f32.mxu0 0.0
    %1949 = vmatmul.mubr.f32.gmra.mxu0 %v1837
    %v1950 = vpop.f32.mrf.mxu0
    %v1951 = vadd.f32 0.0, %v1950
    %v1952 = vpop.f32.mrf.mxu0
    %1953 = vmatprep.mubr.f32.mxu0 0.0
    %1954 = vmatmul.mubr.f32.gmra.mxu0 %v1839
    %v1955 = vpop.f32.mrf.mxu0
    %v1956 = vadd.f32 0.0, %v1955
    %v1957 = vpop.f32.mrf.mxu0
    %1958 = vmatprep.mubr.f32.mxu0 0.0
    %1959 = vmatmul.mubr.f32.gmra.mxu0 %v1841
    %v1960 = vpop.f32.mrf.mxu0
    %v1961 = vadd.f32 0.0, %v1960
    %v1962 = vpop.f32.mrf.mxu0
    %1963 = vmatprep.mubr.f32.mxu0 0.0
    %1964 = vmatmul.mubr.f32.gmra.mxu0 %v1843
    %v1965 = vpop.f32.mrf.mxu0
    %v1966 = vadd.f32 0.0, %v1965
    %v1967 = vpop.f32.mrf.mxu0
    %1968 = vmatprep.mubr.f32.mxu0 0.0
    %1969 = vmatmul.mubr.f32.gmra.mxu0 %v1845
    %v1970 = vpop.f32.mrf.mxu0
    %v1971 = vadd.f32 0.0, %v1970
    %v1972 = vpop.f32.mrf.mxu0
    %1973 = vmatprep.mubr.f32.mxu0 0.0
    %1974 = vmatmul.mubr.f32.gmra.mxu0 %v1847
    %v1975 = vpop.f32.mrf.mxu0
    %v1976 = vadd.f32 0.0, %v1975
    %v1977 = vpop.f32.mrf.mxu0
    %1978 = vmatprep.mubr.f32.mxu0 0.0
    %1979 = vmatmul.mubr.f32.gmra.mxu0 %v1849
    %v1980 = vpop.f32.mrf.mxu0
    %v1981 = vadd.f32 0.0, %v1980
    %v1982 = vpop.f32.mrf.mxu0
    %1983 = vmatprep.mubr.f32.mxu0 0.0
    %1984 = vmatmul.mubr.f32.gmra.mxu0 %v1851
    %v1985 = vpop.f32.mrf.mxu0
    %v1986 = vadd.f32 0.0, %v1985
    %v1987 = vpop.f32.mrf.mxu0
    %1988 = vmatprep.mubr.f32.mxu0 0.0
    %1989 = vmatmul.mubr.f32.gmra.mxu0 %v1853
    %v1990 = vpop.f32.mrf.mxu0
    %v1991 = vadd.f32 0.0, %v1990
    %v1992 = vpop.f32.mrf.mxu0
    %1993 = vmatprep.mubr.f32.mxu0 0.0
    %1994 = vmatmul.mubr.f32.gmra.mxu0 %v1855
    %v1995 = vpop.f32.mrf.mxu0
    %v1996 = vadd.f32 0.0, %v1995
    %v1997 = vpop.f32.mrf.mxu0
    %1998 = vmatprep.mubr.f32.mxu0 0.0
    %1999 = vmatmul.mubr.f32.gmra.mxu0 %v1857
    %v2000 = vpop.f32.mrf.mxu0
    %v2001 = vadd.f32 0.0, %v2000
    %v2002 = vpop.f32.mrf.mxu0
    %2003 = vmatprep.mubr.f32.mxu0 0.0
    %2004 = vmatmul.mubr.f32.gmra.mxu0 %v1859
    %v2005 = vpop.f32.mrf.mxu0
    %v2006 = vadd.f32 0.0, %v2005
    %v2007 = vpop.f32.mrf.mxu0
    %2008 = vdwg.mxu0
    %v2009 = vsel %vm1828, %v1776, 0
    %v2011 = vsel %vm1828, %v1777, 0
    %v2013 = vsel %vm1828, %v1779, 0
    %v2015 = vsel %vm1828, %v1780, 0
    %v2017 = vsel %vm1828, %v1782, 0
    %v2019 = vsel %vm1828, %v1783, 0
    %v2021 = vsel %vm1828, %v1785, 0
    %v2023 = vsel %vm1828, %v1786, 0
    %v2025 = vsel %vm1828, %v1788, 0
    %v2027 = vsel %vm1828, %v1789, 0
    %v2029 = vsel %vm1828, %v1791, 0
    %v2031 = vsel %vm1828, %v1792, 0
    %v2033 = vsel %vm1828, %v1794, 0
    %v2035 = vsel %vm1828, %v1795, 0
    %v2037 = vsel %vm1828, %v1797, 0
    %v2039 = vsel %vm1828, %v1798, 0
    %v2041 = vsel %vm1861, %v1763, 0
    %2043 = vmatprep.subr.mxu0 0.0
    %2044 = vmatpush1.msra.mxu0 0.0
    %2045 = vmatprep.subr.mxu0 0.0
    %2046 = vmatpush1.msra.mxu0 0.0
    %2047 = vmatprep.subr.mxu0 0.0
    %2048 = vmatpush1.msra.mxu0 0.0
    %2049 = vmatprep.subr.mxu0 0.0
    %2050 = vmatpush1.msra.mxu0 0.0
    %2051 = vmatprep.subr.mxu0 0.0
    %2052 = vmatpush1.msra.mxu0 0.0
    %2053 = vmatprep.subr.mxu0 0.0
    %2054 = vmatpush1.msra.mxu0 0.0
    %2055 = vmatprep.subr.mxu0 0.0
    %2056 = vmatpush1.msra.mxu0 0.0
    %2057 = vmatprep.subr.mxu0 0.0
    %2058 = vmatpush1.msra.mxu0 0.0
    %2059 = vmatprep.subr.mxu0 0.0
    %2060 = vmatpush1.msra.mxu0 0.0
    %2061 = vmatprep.subr.mxu0 0.0
    %2062 = vmatpush1.msra.mxu0 0.0
    %2063 = vmatprep.subr.mxu0 0.0
    %2064 = vmatpush1.msra.mxu0 0.0
    %2065 = vmatprep.subr.mxu0 0.0
    %2066 = vmatpush1.msra.mxu0 0.0
    %2067 = vmatprep.subr.mxu0 0.0
    %2068 = vmatpush1.msra.mxu0 0.0
    %2069 = vmatprep.subr.mxu0 0.0
    %2070 = vmatpush1.msra.mxu0 0.0
    %2071 = vmatprep.subr.mxu0 0.0
    %2072 = vmatpush1.msra.mxu0 0.0
    %2073 = vmatprep.subr.mxu0 0.0
    %2074 = vmatpush1.msra.mxu0 %v2041
    %2075 = vmatprep.subr.mxu0 0.0
    %2076 = vmatpush2.msra.mxu0 0.0
    %2077 = vmatprep.subr.mxu0 0.0
    %2078 = vmatpush2.msra.mxu0 0.0
    %2079 = vmatprep.subr.mxu0 0.0
    %2080 = vmatpush2.msra.mxu0 0.0
    %2081 = vmatprep.subr.mxu0 0.0
    %2082 = vmatpush2.msra.mxu0 0.0
    %2083 = vmatprep.subr.mxu0 0.0
    %2084 = vmatpush2.msra.mxu0 0.0
    %2085 = vmatprep.subr.mxu0 0.0
    %2086 = vmatpush2.msra.mxu0 0.0
    %2087 = vmatprep.subr.mxu0 0.0
    %2088 = vmatpush2.msra.mxu0 0.0
    %2089 = vmatprep.subr.mxu0 0.0
    %2090 = vmatpush2.msra.mxu0 0.0
    %2091 = vmatprep.subr.mxu0 0.0
    %2092 = vmatpush2.msra.mxu0 0.0
    %2093 = vmatprep.subr.mxu0 0.0
    %2094 = vmatpush2.msra.mxu0 0.0
    %2095 = vmatprep.subr.mxu0 0.0
    %2096 = vmatpush2.msra.mxu0 0.0
    %2097 = vmatprep.subr.mxu0 0.0
    %2098 = vmatpush2.msra.mxu0 0.0
    %2099 = vmatprep.subr.mxu0 0.0
    %2100 = vmatpush2.msra.mxu0 0.0
    %2101 = vmatprep.subr.mxu0 0.0
    %2102 = vmatpush2.msra.mxu0 0.0
    %2103 = vmatprep.subr.mxu0 0.0
    %2104 = vmatpush2.msra.mxu0 0.0
    %2105 = vmatprep.subr.mxu0 0.0
    %2106 = vmatpush2.msra.mxu0 0.0
    %2107 = vmatprep.mubr.f32.mxu0 0.0
    %2108 = vmatmul.mubr.f32.gmra.mxu0 %v2009
    %v2109 = vpop.f32.mrf.mxu0
    %v2110 = vadd.f32 %v1931, %v2109
    %v2111 = vpop.f32.mrf.mxu0
    %2112 = vmatprep.mubr.f32.mxu0 0.0
    %2113 = vmatmul.mubr.f32.gmra.mxu0 %v2011
    %v2114 = vpop.f32.mrf.mxu0
    %v2115 = vadd.f32 %v1936, %v2114
    %v2116 = vpop.f32.mrf.mxu0
    %2117 = vmatprep.mubr.f32.mxu0 0.0
    %2118 = vmatmul.mubr.f32.gmra.mxu0 %v2013
    %v2119 = vpop.f32.mrf.mxu0
    %v2120 = vadd.f32 %v1941, %v2119
    %v2121 = vpop.f32.mrf.mxu0
    %2122 = vmatprep.mubr.f32.mxu0 0.0
    %2123 = vmatmul.mubr.f32.gmra.mxu0 %v2015
    %v2124 = vpop.f32.mrf.mxu0
    %v2125 = vadd.f32 %v1946, %v2124
    %v2126 = vpop.f32.mrf.mxu0
    %2127 = vmatprep.mubr.f32.mxu0 0.0
    %2128 = vmatmul.mubr.f32.gmra.mxu0 %v2017
    %v2129 = vpop.f32.mrf.mxu0
    %v2130 = vadd.f32 %v1951, %v2129
    %v2131 = vpop.f32.mrf.mxu0
    %2132 = vmatprep.mubr.f32.mxu0 0.0
    %2133 = vmatmul.mubr.f32.gmra.mxu0 %v2019
    %v2134 = vpop.f32.mrf.mxu0
    %v2135 = vadd.f32 %v1956, %v2134
    %v2136 = vpop.f32.mrf.mxu0
    %2137 = vmatprep.mubr.f32.mxu0 0.0
    %2138 = vmatmul.mubr.f32.gmra.mxu0 %v2021
    %v2139 = vpop.f32.mrf.mxu0
    %v2140 = vadd.f32 %v1961, %v2139
    %v2141 = vpop.f32.mrf.mxu0
    %2142 = vmatprep.mubr.f32.mxu0 0.0
    %2143 = vmatmul.mubr.f32.gmra.mxu0 %v2023
    %v2144 = vpop.f32.mrf.mxu0
    %v2145 = vadd.f32 %v1966, %v2144
    %v2146 = vpop.f32.mrf.mxu0
    %2147 = vmatprep.mubr.f32.mxu0 0.0
    %2148 = vmatmul.mubr.f32.gmra.mxu0 %v2025
    %v2149 = vpop.f32.mrf.mxu0
    %v2150 = vadd.f32 %v1971, %v2149
    %v2151 = vpop.f32.mrf.mxu0
    %2152 = vmatprep.mubr.f32.mxu0 0.0
    %2153 = vmatmul.mubr.f32.gmra.mxu0 %v2027
    %v2154 = vpop.f32.mrf.mxu0
    %v2155 = vadd.f32 %v1976, %v2154
    %v2156 = vpop.f32.mrf.mxu0
    %2157 = vmatprep.mubr.f32.mxu0 0.0
    %2158 = vmatmul.mubr.f32.gmra.mxu0 %v2029
    %v2159 = vpop.f32.mrf.mxu0
    %v2160 = vadd.f32 %v1981, %v2159
    %v2161 = vpop.f32.mrf.mxu0
    %2162 = vmatprep.mubr.f32.mxu0 0.0
    %2163 = vmatmul.mubr.f32.gmra.mxu0 %v2031
    %v2164 = vpop.f32.mrf.mxu0
    %v2165 = vadd.f32 %v1986, %v2164
    %v2166 = vpop.f32.mrf.mxu0
    %2167 = vmatprep.mubr.f32.mxu0 0.0
    %2168 = vmatmul.mubr.f32.gmra.mxu0 %v2033
    %v2169 = vpop.f32.mrf.mxu0
    %v2170 = vadd.f32 %v1991, %v2169
    %v2171 = vpop.f32.mrf.mxu0
    %2172 = vmatprep.mubr.f32.mxu0 0.0
    %2173 = vmatmul.mubr.f32.gmra.mxu0 %v2035
    %v2174 = vpop.f32.mrf.mxu0
    %v2175 = vadd.f32 %v1996, %v2174
    %v2176 = vpop.f32.mrf.mxu0
    %2177 = vmatprep.mubr.f32.mxu0 0.0
    %2178 = vmatmul.mubr.f32.gmra.mxu0 %v2037
    %v2179 = vpop.f32.mrf.mxu0
    %v2180 = vadd.f32 %v2001, %v2179
    %v2181 = vpop.f32.mrf.mxu0
    %2182 = vmatprep.mubr.f32.mxu0 0.0
    %2183 = vmatmul.mubr.f32.gmra.mxu0 %v2039
    %v2184 = vpop.f32.mrf.mxu0
    %v2185 = vadd.f32 %v2006, %v2184
    %v2186 = vpop.f32.mrf.mxu0
    %2187 = vdwg.mxu0
    %v2189 = vrot.slane %v1764, 4
    %v2190 = vrot.slane %v1765, 4
    %v2191 = vsel %vm921, %v2189, %v2190
    %v2192 = vsel %vm1828, %v1755, 0
    %v2194 = vsel %vm1828, 0.0, 0
    %v2196 = vsel %vm1828, %v1756, 0
    %v2198 = vsel %vm1828, %v1757, 0
    %v2200 = vsel %vm1828, %v1758, 0
    %v2202 = vsel %vm1828, %v1759, 0
    %v2204 = vsel %vm1828, %v1760, 0
    %v2206 = vsel %vm1828, %v1761, 0
    %v2208 = vsel %vm1828, %v1762, 0
    %v2210 = vsel %vm1861, %v2191, 0
    %2212 = vmatprep.subr.mxu0 0.0
    %2213 = vmatpush1.msra.mxu0 0.0
    %2214 = vmatprep.subr.mxu0 0.0
    %2215 = vmatpush1.msra.mxu0 0.0
    %2216 = vmatprep.subr.mxu0 0.0
    %2217 = vmatpush1.msra.mxu0 0.0
    %2218 = vmatprep.subr.mxu0 0.0
    %2219 = vmatpush1.msra.mxu0 0.0
    %2220 = vmatprep.subr.mxu0 0.0
    %2221 = vmatpush1.msra.mxu0 0.0
    %2222 = vmatprep.subr.mxu0 0.0
    %2223 = vmatpush1.msra.mxu0 0.0
    %2224 = vmatprep.subr.mxu0 0.0
    %2225 = vmatpush1.msra.mxu0 0.0
    %2226 = vmatprep.subr.mxu0 0.0
    %2227 = vmatpush1.msra.mxu0 0.0
    %2228 = vmatprep.subr.mxu0 0.0
    %2229 = vmatpush1.msra.mxu0 0.0
    %2230 = vmatprep.subr.mxu0 0.0
    %2231 = vmatpush1.msra.mxu0 0.0
    %2232 = vmatprep.subr.mxu0 0.0
    %2233 = vmatpush1.msra.mxu0 0.0
    %2234 = vmatprep.subr.mxu0 0.0
    %2235 = vmatpush1.msra.mxu0 0.0
    %2236 = vmatprep.subr.mxu0 0.0
    %2237 = vmatpush1.msra.mxu0 0.0
    %2238 = vmatprep.subr.mxu0 0.0
    %2239 = vmatpush1.msra.mxu0 0.0
    %2240 = vmatprep.subr.mxu0 0.0
    %2241 = vmatpush1.msra.mxu0 0.0
    %2242 = vmatprep.subr.mxu0 0.0
    %2243 = vmatpush1.msra.mxu0 %v2210
    %2244 = vmatprep.subr.mxu0 0.0
    %2245 = vmatpush2.msra.mxu0 0.0
    %2246 = vmatprep.subr.mxu0 0.0
    %2247 = vmatpush2.msra.mxu0 0.0
    %2248 = vmatprep.subr.mxu0 0.0
    %2249 = vmatpush2.msra.mxu0 0.0
    %2250 = vmatprep.subr.mxu0 0.0
    %2251 = vmatpush2.msra.mxu0 0.0
    %2252 = vmatprep.subr.mxu0 0.0
    %2253 = vmatpush2.msra.mxu0 0.0
    %2254 = vmatprep.subr.mxu0 0.0
    %2255 = vmatpush2.msra.mxu0 0.0
    %2256 = vmatprep.subr.mxu0 0.0
    %2257 = vmatpush2.msra.mxu0 0.0
    %2258 = vmatprep.subr.mxu0 0.0
    %2259 = vmatpush2.msra.mxu0 0.0
    %2260 = vmatprep.subr.mxu0 0.0
    %2261 = vmatpush2.msra.mxu0 0.0
    %2262 = vmatprep.subr.mxu0 0.0
    %2263 = vmatpush2.msra.mxu0 0.0
    %2264 = vmatprep.subr.mxu0 0.0
    %2265 = vmatpush2.msra.mxu0 0.0
    %2266 = vmatprep.subr.mxu0 0.0
    %2267 = vmatpush2.msra.mxu0 0.0
    %2268 = vmatprep.subr.mxu0 0.0
    %2269 = vmatpush2.msra.mxu0 0.0
    %2270 = vmatprep.subr.mxu0 0.0
    %2271 = vmatpush2.msra.mxu0 0.0
    %2272 = vmatprep.subr.mxu0 0.0
    %2273 = vmatpush2.msra.mxu0 0.0
    %2274 = vmatprep.subr.mxu0 0.0
    %2275 = vmatpush2.msra.mxu0 0.0
    %2276 = vmatprep.mubr.f32.mxu0 0.0
    %2277 = vmatmul.mubr.f32.gmra.mxu0 %v2192
    %v2278 = vpop.f32.mrf.mxu0
    %v2279 = vadd.f32 0.0, %v2278
    %v2280 = vpop.f32.mrf.mxu0
    %2281 = vmatprep.mubr.f32.mxu0 0.0
    %2282 = vmatmul.mubr.f32.gmra.mxu0 %v2194
    %v2283 = vpop.f32.mrf.mxu0
    %v2284 = vadd.f32 0.0, %v2283
    %v2285 = vpop.f32.mrf.mxu0
    %2286 = vmatprep.mubr.f32.mxu0 0.0
    %2287 = vmatmul.mubr.f32.gmra.mxu0 %v2196
    %v2288 = vpop.f32.mrf.mxu0
    %v2289 = vadd.f32 0.0, %v2288
    %v2290 = vpop.f32.mrf.mxu0
    %2291 = vmatprep.mubr.f32.mxu0 0.0
    %2292 = vmatmul.mubr.f32.gmra.mxu0 %v2194
    %v2293 = vpop.f32.mrf.mxu0
    %v2294 = vadd.f32 0.0, %v2293
    %v2295 = vpop.f32.mrf.mxu0
    %2296 = vmatprep.mubr.f32.mxu0 0.0
    %2297 = vmatmul.mubr.f32.gmra.mxu0 %v2198
    %v2298 = vpop.f32.mrf.mxu0
    %v2299 = vadd.f32 0.0, %v2298
    %v2300 = vpop.f32.mrf.mxu0
    %2301 = vmatprep.mubr.f32.mxu0 0.0
    %2302 = vmatmul.mubr.f32.gmra.mxu0 %v2194
    %v2303 = vpop.f32.mrf.mxu0
    %v2304 = vadd.f32 0.0, %v2303
    %v2305 = vpop.f32.mrf.mxu0
    %2306 = vmatprep.mubr.f32.mxu0 0.0
    %2307 = vmatmul.mubr.f32.gmra.mxu0 %v2200
    %v2308 = vpop.f32.mrf.mxu0
    %v2309 = vadd.f32 0.0, %v2308
    %v2310 = vpop.f32.mrf.mxu0
    %2311 = vmatprep.mubr.f32.mxu0 0.0
    %2312 = vmatmul.mubr.f32.gmra.mxu0 %v2194
    %v2313 = vpop.f32.mrf.mxu0
    %v2314 = vadd.f32 0.0, %v2313
    %v2315 = vpop.f32.mrf.mxu0
    %2316 = vmatprep.mubr.f32.mxu0 0.0
    %2317 = vmatmul.mubr.f32.gmra.mxu0 %v2202
    %v2318 = vpop.f32.mrf.mxu0
    %v2319 = vadd.f32 0.0, %v2318
    %v2320 = vpop.f32.mrf.mxu0
    %2321 = vmatprep.mubr.f32.mxu0 0.0
    %2322 = vmatmul.mubr.f32.gmra.mxu0 %v2194
    %v2323 = vpop.f32.mrf.mxu0
    %v2324 = vadd.f32 0.0, %v2323
    %v2325 = vpop.f32.mrf.mxu0
    %2326 = vmatprep.mubr.f32.mxu0 0.0
    %2327 = vmatmul.mubr.f32.gmra.mxu0 %v2204
    %v2328 = vpop.f32.mrf.mxu0
    %v2329 = vadd.f32 0.0, %v2328
    %v2330 = vpop.f32.mrf.mxu0
    %2331 = vmatprep.mubr.f32.mxu0 0.0
    %2332 = vmatmul.mubr.f32.gmra.mxu0 %v2194
    %v2333 = vpop.f32.mrf.mxu0
    %v2334 = vadd.f32 0.0, %v2333
    %v2335 = vpop.f32.mrf.mxu0
    %2336 = vmatprep.mubr.f32.mxu0 0.0
    %2337 = vmatmul.mubr.f32.gmra.mxu0 %v2206
    %v2338 = vpop.f32.mrf.mxu0
    %v2339 = vadd.f32 0.0, %v2338
    %v2340 = vpop.f32.mrf.mxu0
    %2341 = vmatprep.mubr.f32.mxu0 0.0
    %2342 = vmatmul.mubr.f32.gmra.mxu0 %v2194
    %v2343 = vpop.f32.mrf.mxu0
    %v2344 = vadd.f32 0.0, %v2343
    %v2345 = vpop.f32.mrf.mxu0
    %2346 = vmatprep.mubr.f32.mxu0 0.0
    %2347 = vmatmul.mubr.f32.gmra.mxu0 %v2208
    %v2348 = vpop.f32.mrf.mxu0
    %v2349 = vadd.f32 0.0, %v2348
    %v2350 = vpop.f32.mrf.mxu0
    %2351 = vmatprep.mubr.f32.mxu0 0.0
    %2352 = vmatmul.mubr.f32.gmra.mxu0 %v2194
    %v2353 = vpop.f32.mrf.mxu0
    %v2354 = vadd.f32 0.0, %v2353
    %v2355 = vpop.f32.mrf.mxu0
    %2356 = vdwg.mxu0
    %v2357 = vadd.f32 %v2110, %v2279
    %v2358 = vadd.f32 %v2115, %v2284
    %v2359 = vadd.f32 %v2120, %v2289
    %v2360 = vadd.f32 %v2125, %v2294
    %v2361 = vadd.f32 %v2130, %v2299
    %v2362 = vadd.f32 %v2135, %v2304
    %v2363 = vadd.f32 %v2140, %v2309
    %v2364 = vadd.f32 %v2145, %v2314
    %v2365 = vadd.f32 %v2150, %v2319
    %v2366 = vadd.f32 %v2155, %v2324
    %v2367 = vadd.f32 %v2160, %v2329
    %v2368 = vadd.f32 %v2165, %v2334
    %v2369 = vadd.f32 %v2170, %v2339
    %v2370 = vadd.f32 %v2175, %v2344
    %v2371 = vadd.f32 %v2180, %v2349
    %v2372 = vadd.f32 %v2185, %v2354
    %v2374 = vlaneseq
    %v2375 = vshrl.u32 %v2374, 7
    %v2376 = vsub.s32 0, %v2375
    %v2377 = vrot.slane %v1766, %v2376
    %v2379 = vadd.f32 %v2357, %v2377
    %v2380 = vadd.f32 %v2358, %v2377
    %v2381 = vadd.f32 %v2359, %v2377
    %v2382 = vadd.f32 %v2360, %v2377
    %v2383 = vadd.f32 %v2361, %v2377
    %v2384 = vadd.f32 %v2362, %v2377
    %v2385 = vadd.f32 %v2363, %v2377
    %v2386 = vadd.f32 %v2364, %v2377
    %v2387 = vadd.f32 %v2365, %v2377
    %v2388 = vadd.f32 %v2366, %v2377
    %v2389 = vadd.f32 %v2367, %v2377
    %v2390 = vadd.f32 %v2368, %v2377
    %v2391 = vadd.f32 %v2369, %v2377
    %v2392 = vadd.f32 %v2370, %v2377
    %v2393 = vadd.f32 %v2371, %v2377
    %v2394 = vadd.f32 %v2372, %v2377
    %v2395 = vmul.f32 %v2379, %v763
    %v2396 = vmul.f32 %v2380, %v764
    %v2397 = vmul.f32 %v2381, %v763
    %v2398 = vmul.f32 %v2382, %v764
    %v2399 = vmul.f32 %v2383, %v763
    %v2400 = vmul.f32 %v2384, %v764
    %v2401 = vmul.f32 %v2385, %v763
    %v2402 = vmul.f32 %v2386, %v764
    %v2403 = vmul.f32 %v2387, %v763
    %v2404 = vmul.f32 %v2388, %v764
    %v2405 = vmul.f32 %v2389, %v763
    %v2406 = vmul.f32 %v2390, %v764
    %v2407 = vmul.f32 %v2391, %v763
    %v2408 = vmul.f32 %v2392, %v764
    %v2409 = vmul.f32 %v2393, %v763
    %v2410 = vmul.f32 %v2394, %v764
    %vm2411 = vcmask 523264
    %v2412 = vsel %vm2411, %v2395, 0.0
    %v2413 = vsel %vm2411, %v2396, 0.0
    %v2414 = vadd.f32 %v2412, %v2413
    %v2415 = vsel %vm2411, %v2397, 0.0
    %v2416 = vadd.f32 %v2414, %v2415
    %v2417 = vsel %vm2411, %v2398, 0.0
    %v2418 = vadd.f32 %v2416, %v2417
    %v2419 = vsel %vm2411, %v2399, 0.0
    %v2420 = vadd.f32 %v2418, %v2419
    %v2421 = vsel %vm2411, %v2400, 0.0
    %v2422 = vadd.f32 %v2420, %v2421
    %v2423 = vsel %vm2411, %v2401, 0.0
    %v2424 = vadd.f32 %v2422, %v2423
    %v2425 = vsel %vm2411, %v2402, 0.0
    %v2426 = vadd.f32 %v2424, %v2425
    %v2427 = vsel %vm2411, %v2403, 0.0
    %v2428 = vadd.f32 %v2426, %v2427
    %v2429 = vsel %vm2411, %v2404, 0.0
    %v2430 = vadd.f32 %v2428, %v2429
    %v2431 = vsel %vm2411, %v2405, 0.0
    %v2432 = vadd.f32 %v2430, %v2431
    %v2433 = vsel %vm2411, %v2406, 0.0
    %v2434 = vadd.f32 %v2432, %v2433
    %v2435 = vsel %vm2411, %v2407, 0.0
    %v2436 = vadd.f32 %v2434, %v2435
    %v2437 = vsel %vm2411, %v2408, 0.0
    %v2438 = vadd.f32 %v2436, %v2437
    %v2439 = vsel %vm2411, %v2409, 0.0
    %v2440 = vadd.f32 %v2438, %v2439
    %v2441 = vsel %vm2411, %v2410, 0.0
    %v2442 = vadd.f32 %v2440, %v2441
    %v2443 = vrot.slane %v2442, 4
    %v2444 = vadd.f32 %v2442, %v2443
    %v2445 = vrot.slane %v2444, 2
    %v2446 = vadd.f32 %v2444, %v2445
    %v2447 = vrot.slane %v2446, 1
    %v2448 = vadd.f32 %v2446, %v2447
    %v2449 = vmul.f32 %v2448, %v819
    %v2450 = vmul.f32 %v2395, %v2379
    %v2451 = vmul.f32 %v2396, %v2380
    %v2452 = vmul.f32 %v2397, %v2381
    %v2453 = vmul.f32 %v2398, %v2382
    %v2454 = vmul.f32 %v2399, %v2383
    %v2455 = vmul.f32 %v2400, %v2384
    %v2456 = vmul.f32 %v2401, %v2385
    %v2457 = vmul.f32 %v2402, %v2386
    %v2458 = vmul.f32 %v2403, %v2387
    %v2459 = vmul.f32 %v2404, %v2388
    %v2460 = vmul.f32 %v2405, %v2389
    %v2461 = vmul.f32 %v2406, %v2390
    %v2462 = vmul.f32 %v2407, %v2391
    %v2463 = vmul.f32 %v2408, %v2392
    %v2464 = vmul.f32 %v2409, %v2393
    %v2465 = vmul.f32 %v2410, %v2394
    %v2466 = vsel %vm2411, %v2450, 0.0
    %v2467 = vsel %vm2411, %v2451, 0.0
    %v2468 = vadd.f32 %v2466, %v2467
    %v2469 = vsel %vm2411, %v2452, 0.0
    %v2470 = vadd.f32 %v2468, %v2469
    %v2471 = vsel %vm2411, %v2453, 0.0
    %v2472 = vadd.f32 %v2470, %v2471
    %v2473 = vsel %vm2411, %v2454, 0.0
    %v2474 = vadd.f32 %v2472, %v2473
    %v2475 = vsel %vm2411, %v2455, 0.0
    %v2476 = vadd.f32 %v2474, %v2475
    %v2477 = vsel %vm2411, %v2456, 0.0
    %v2478 = vadd.f32 %v2476, %v2477
    %v2479 = vsel %vm2411, %v2457, 0.0
    %v2480 = vadd.f32 %v2478, %v2479
    %v2481 = vsel %vm2411, %v2458, 0.0
    %v2482 = vadd.f32 %v2480, %v2481
    %v2483 = vsel %vm2411, %v2459, 0.0
    %v2484 = vadd.f32 %v2482, %v2483
    %v2485 = vsel %vm2411, %v2460, 0.0
    %v2486 = vadd.f32 %v2484, %v2485
    %v2487 = vsel %vm2411, %v2461, 0.0
    %v2488 = vadd.f32 %v2486, %v2487
    %v2489 = vsel %vm2411, %v2462, 0.0
    %v2490 = vadd.f32 %v2488, %v2489
    %v2491 = vsel %vm2411, %v2463, 0.0
    %v2492 = vadd.f32 %v2490, %v2491
    %v2493 = vsel %vm2411, %v2464, 0.0
    %v2494 = vadd.f32 %v2492, %v2493
    %v2495 = vsel %vm2411, %v2465, 0.0
    %v2496 = vadd.f32 %v2494, %v2495
    %v2497 = vrot.slane %v2496, 4
    %v2498 = vadd.f32 %v2496, %v2497
    %v2499 = vrot.slane %v2498, 2
    %v2500 = vadd.f32 %v2498, %v2499
    %v2501 = vrot.slane %v2500, 1
    %v2502 = vadd.f32 %v2500, %v2501
    %v2503 = vmul.f32 %v2502, %v819
    %v2504 = vmul.f32 %v2449, %v2449
    %v2505 = vsub.f32 %v2503, %v2504
    %v2506 = vmax.f32 %v2505, 0.0
    %v2507 = vsub.f32 %v2379, %v2449
    %v2508 = vsub.f32 %v2381, %v2449
    %v2509 = vsub.f32 %v2383, %v2449
    %v2510 = vsub.f32 %v2385, %v2449
    %v2511 = vsub.f32 %v2387, %v2449
    %v2512 = vsub.f32 %v2389, %v2449
    %v2513 = vsub.f32 %v2391, %v2449
    %v2514 = vsub.f32 %v2393, %v2449
    %v2515 = vadd.f32 %v2506, 1e-05
    %v2516 = vrsqrt.pop %v2515
    %v2517 = vmul.f32 %v2507, %v2516
    %v2518 = vmul.f32 %v2508, %v2516
    %v2519 = vmul.f32 %v2509, %v2516
    %v2520 = vmul.f32 %v2510, %v2516
    %v2521 = vmul.f32 %v2511, %v2516
    %v2522 = vmul.f32 %v2512, %v2516
    %v2523 = vmul.f32 %v2513, %v2516
    %v2524 = vmul.f32 %v2514, %v2516
    %v2525 = vmax.f32 %v2517, 0.0
    %v2526 = vmax.f32 %v2518, 0.0
    %v2527 = vmax.f32 %v2519, 0.0
    %v2528 = vmax.f32 %v2520, 0.0
    %v2529 = vmax.f32 %v2521, 0.0
    %v2530 = vmax.f32 %v2522, 0.0
    %v2531 = vmax.f32 %v2523, 0.0
    %v2532 = vmax.f32 %v2524, 0.0
    %v2533 = vld [vmem:[#allocation11] sm:$0xff]
    %v2534 = vld [vmem:[#allocation11 + $0x8] sm:$0xff]
    %v2535 = vld [vmem:[#allocation11 + $0x10] sm:$0xff]
    %v2536 = vld [vmem:[#allocation11 + $0x18] sm:$0xff]
    %v2537 = vld [vmem:[#allocation11 + $0x20] sm:$0xff]
    %v2538 = vld [vmem:[#allocation11 + $0x28] sm:$0xff]
    %v2539 = vld [vmem:[#allocation11 + $0x30] sm:$0xff]
    %v2540 = vld [vmem:[#allocation11 + $0x38] sm:$0xff]
    %v2541 = vld [vmem:[#allocation11 + $0x40] sm:$0xff]
    %v2542 = vld [vmem:[#allocation11 + $0x48] sm:$0xff]
    %v2543 = vld [vmem:[#allocation11 + $0x50] sm:$0xff]
    %v2544 = vld [vmem:[#allocation11 + $0x58] sm:$0xff]
    %v2545 = vld [vmem:[#allocation11 + $0x60] sm:$0xff]
    %v2546 = vld [vmem:[#allocation11 + $0x68] sm:$0xff]
    %v2547 = vld [vmem:[#allocation11 + $0x70] sm:$0xff]
    %v2548 = vld [vmem:[#allocation11 + $0x78] sm:$0xff]
    %v2549 = vld [vmem:[#allocation11 + $0x80] sm:$0xff]
    %v2550 = vld [vmem:[#allocation11 + $0x88] sm:$0xff]
    %v2551 = vld [vmem:[#allocation11 + $0x90] sm:$0xff]
    %v2552 = vld [vmem:[#allocation11 + $0x98] sm:$0xff]
    %v2553 = vld [vmem:[#allocation11 + $0xa0] sm:$0xff]
    %v2554 = vld [vmem:[#allocation11 + $0xa8] sm:$0xff]
    %v2555 = vld [vmem:[#allocation11 + $0xb0] sm:$0xff]
    %v2556 = vld [vmem:[#allocation11 + $0xb8] sm:$0xff]
    %v2557 = vld [vmem:[#allocation13] sm:$0x1]
    %v2566 = vrot.slane %v2525, 4
    %v2567 = vsel %vm921, %v922, %v2566
    %v2568 = vsel %vm921, %v2566, %v922
    %v2569 = vrot.slane %v2526, 4
    %v2570 = vsel %vm921, %v922, %v2569
    %v2571 = vsel %vm921, %v2569, %v922
    %v2572 = vrot.slane %v2527, 4
    %v2573 = vsel %vm921, %v922, %v2572
    %v2574 = vsel %vm921, %v2572, %v922
    %v2575 = vrot.slane %v2528, 4
    %v2576 = vsel %vm921, %v922, %v2575
    %v2577 = vsel %vm921, %v2575, %v922
    %v2578 = vrot.slane %v2529, 4
    %v2579 = vsel %vm921, %v922, %v2578
    %v2580 = vsel %vm921, %v2578, %v922
    %v2581 = vrot.slane %v2530, 4
    %v2582 = vsel %vm921, %v922, %v2581
    %v2583 = vsel %vm921, %v2581, %v922
    %v2584 = vrot.slane %v2531, 4
    %v2585 = vsel %vm921, %v922, %v2584
    %v2586 = vsel %vm921, %v2584, %v922
    %v2587 = vrot.slane %v2532, 4
    %v2588 = vsel %vm921, %v922, %v2587
    %v2589 = vsel %vm921, %v2587, %v922
    %v2590 = vrot.slane %v2525, 6
    %v2591 = vsel %vm417, %v418, %v2590
    %v2592 = vsel %vm417, %v2590, %v418
    %v2593 = vrot.slane %v2526, 6
    %v2594 = vsel %vm417, %v418, %v2593
    %v2595 = vsel %vm417, %v2593, %v418
    %v2596 = vrot.slane %v2527, 6
    %v2597 = vsel %vm417, %v418, %v2596
    %v2598 = vsel %vm417, %v2596, %v418
    %v2599 = vrot.slane %v2528, 6
    %v2600 = vsel %vm417, %v418, %v2599
    %v2601 = vsel %vm417, %v2599, %v418
    %v2602 = vrot.slane %v2529, 6
    %v2603 = vsel %vm417, %v418, %v2602
    %v2604 = vsel %vm417, %v2602, %v418
    %v2605 = vrot.slane %v2530, 6
    %v2606 = vsel %vm417, %v418, %v2605
    %v2607 = vsel %vm417, %v2605, %v418
    %v2608 = vrot.slane %v2531, 6
    %v2609 = vsel %vm417, %v418, %v2608
    %v2610 = vsel %vm417, %v2608, %v418
    %v2611 = vrot.slane %v2532, 6
    %v2612 = vsel %vm417, %v418, %v2611
    %v2613 = vsel %vm417, %v2611, %v418
    %v2614 = vsel %vm2411, %v2591, 0
    %v2616 = vsel %vm2411, %v2592, 0
    %v2618 = vsel %vm2411, %v2594, 0
    %v2620 = vsel %vm2411, %v2595, 0
    %v2622 = vsel %vm2411, %v2597, 0
    %v2624 = vsel %vm2411, %v2598, 0
    %v2626 = vsel %vm2411, %v2600, 0
    %v2628 = vsel %vm2411, %v2601, 0
    %v2630 = vsel %vm2411, %v2603, 0
    %v2632 = vsel %vm2411, %v2604, 0
    %v2634 = vsel %vm2411, %v2606, 0
    %v2636 = vsel %vm2411, %v2607, 0
    %v2638 = vsel %vm2411, %v2609, 0
    %v2640 = vsel %vm2411, %v2610, 0
    %v2642 = vsel %vm2411, %v2612, 0
    %v2644 = vsel %vm2411, %v2613, 0
    %2646 = vmatprep.subr.mxu0 0.0
    %2647 = vmatpush1.msra.mxu0 0.0
    %2648 = vmatprep.subr.mxu0 0.0
    %2649 = vmatpush1.msra.mxu0 0.0
    %2650 = vmatprep.subr.mxu0 0.0
    %2651 = vmatpush1.msra.mxu0 0.0
    %2652 = vmatprep.subr.mxu0 0.0
    %2653 = vmatpush1.msra.mxu0 0.0
    %2654 = vmatprep.subr.mxu0 0.0
    %2655 = vmatpush1.msra.mxu0 0.0
    %2656 = vmatprep.subr.mxu0 0.0
    %2657 = vmatpush1.msra.mxu0 0.0
    %2658 = vmatprep.subr.mxu0 0.0
    %2659 = vmatpush1.msra.mxu0 0.0
    %2660 = vmatprep.subr.mxu0 0.0
    %2661 = vmatpush1.msra.mxu0 0.0
    %2662 = vmatprep.subr.mxu0 0.0
    %2663 = vmatpush1.msra.mxu0 %v2548
    %2664 = vmatprep.subr.mxu0 0.0
    %2665 = vmatpush1.msra.mxu0 %v2547
    %2666 = vmatprep.subr.mxu0 0.0
    %2667 = vmatpush1.msra.mxu0 %v2546
    %2668 = vmatprep.subr.mxu0 0.0
    %2669 = vmatpush1.msra.mxu0 %v2545
    %2670 = vmatprep.subr.mxu0 0.0
    %2671 = vmatpush1.msra.mxu0 %v2544
    %2672 = vmatprep.subr.mxu0 0.0
    %2673 = vmatpush1.msra.mxu0 %v2543
    %2674 = vmatprep.subr.mxu0 0.0
    %2675 = vmatpush1.msra.mxu0 %v2542
    %2676 = vmatprep.subr.mxu0 0.0
    %2677 = vmatpush1.msra.mxu0 %v2541
    %2678 = vmatprep.subr.mxu0 0.0
    %2679 = vmatpush2.msra.mxu0 0.0
    %2680 = vmatprep.subr.mxu0 0.0
    %2681 = vmatpush2.msra.mxu0 0.0
    %2682 = vmatprep.subr.mxu0 0.0
    %2683 = vmatpush2.msra.mxu0 0.0
    %2684 = vmatprep.subr.mxu0 0.0
    %2685 = vmatpush2.msra.mxu0 0.0
    %2686 = vmatprep.subr.mxu0 0.0
    %2687 = vmatpush2.msra.mxu0 0.0
    %2688 = vmatprep.subr.mxu0 0.0
    %2689 = vmatpush2.msra.mxu0 0.0
    %2690 = vmatprep.subr.mxu0 0.0
    %2691 = vmatpush2.msra.mxu0 0.0
    %2692 = vmatprep.subr.mxu0 0.0
    %2693 = vmatpush2.msra.mxu0 0.0
    %2694 = vmatprep.subr.mxu0 0.0
    %2695 = vmatpush2.msra.mxu0 0.0
    %2696 = vmatprep.subr.mxu0 0.0
    %2697 = vmatpush2.msra.mxu0 0.0
    %2698 = vmatprep.subr.mxu0 0.0
    %2699 = vmatpush2.msra.mxu0 0.0
    %2700 = vmatprep.subr.mxu0 0.0
    %2701 = vmatpush2.msra.mxu0 0.0
    %2702 = vmatprep.subr.mxu0 0.0
    %2703 = vmatpush2.msra.mxu0 0.0
    %2704 = vmatprep.subr.mxu0 0.0
    %2705 = vmatpush2.msra.mxu0 0.0
    %2706 = vmatprep.subr.mxu0 0.0
    %2707 = vmatpush2.msra.mxu0 0.0
    %2708 = vmatprep.subr.mxu0 0.0
    %2709 = vmatpush2.msra.mxu0 0.0
    %2710 = vmatprep.mubr.f32.mxu0 0.0
    %2711 = vmatmul.mubr.f32.gmra.mxu0 %v2614
    %v2712 = vpop.f32.mrf.mxu0
    %v2713 = vadd.f32 0.0, %v2712
    %v2714 = vpop.f32.mrf.mxu0
    %2715 = vmatprep.mubr.f32.mxu0 0.0
    %2716 = vmatmul.mubr.f32.gmra.mxu0 %v2616
    %v2717 = vpop.f32.mrf.mxu0
    %v2718 = vadd.f32 0.0, %v2717
    %v2719 = vpop.f32.mrf.mxu0
    %2720 = vmatprep.mubr.f32.mxu0 0.0
    %2721 = vmatmul.mubr.f32.gmra.mxu0 %v2618
    %v2722 = vpop.f32.mrf.mxu0
    %v2723 = vadd.f32 0.0, %v2722
    %v2724 = vpop.f32.mrf.mxu0
    %2725 = vmatprep.mubr.f32.mxu0 0.0
    %2726 = vmatmul.mubr.f32.gmra.mxu0 %v2620
    %v2727 = vpop.f32.mrf.mxu0
    %v2728 = vadd.f32 0.0, %v2727
    %v2729 = vpop.f32.mrf.mxu0
    %2730 = vmatprep.mubr.f32.mxu0 0.0
    %2731 = vmatmul.mubr.f32.gmra.mxu0 %v2622
    %v2732 = vpop.f32.mrf.mxu0
    %v2733 = vadd.f32 0.0, %v2732
    %v2734 = vpop.f32.mrf.mxu0
    %2735 = vmatprep.mubr.f32.mxu0 0.0
    %2736 = vmatmul.mubr.f32.gmra.mxu0 %v2624
    %v2737 = vpop.f32.mrf.mxu0
    %v2738 = vadd.f32 0.0, %v2737
    %v2739 = vpop.f32.mrf.mxu0
    %2740 = vmatprep.mubr.f32.mxu0 0.0
    %2741 = vmatmul.mubr.f32.gmra.mxu0 %v2626
    %v2742 = vpop.f32.mrf.mxu0
    %v2743 = vadd.f32 0.0, %v2742
    %v2744 = vpop.f32.mrf.mxu0
    %2745 = vmatprep.mubr.f32.mxu0 0.0
    %2746 = vmatmul.mubr.f32.gmra.mxu0 %v2628
    %v2747 = vpop.f32.mrf.mxu0
    %v2748 = vadd.f32 0.0, %v2747
    %v2749 = vpop.f32.mrf.mxu0
    %2750 = vmatprep.mubr.f32.mxu0 0.0
    %2751 = vmatmul.mubr.f32.gmra.mxu0 %v2630
    %v2752 = vpop.f32.mrf.mxu0
    %v2753 = vadd.f32 0.0, %v2752
    %v2754 = vpop.f32.mrf.mxu0
    %2755 = vmatprep.mubr.f32.mxu0 0.0
    %2756 = vmatmul.mubr.f32.gmra.mxu0 %v2632
    %v2757 = vpop.f32.mrf.mxu0
    %v2758 = vadd.f32 0.0, %v2757
    %v2759 = vpop.f32.mrf.mxu0
    %2760 = vmatprep.mubr.f32.mxu0 0.0
    %2761 = vmatmul.mubr.f32.gmra.mxu0 %v2634
    %v2762 = vpop.f32.mrf.mxu0
    %v2763 = vadd.f32 0.0, %v2762
    %v2764 = vpop.f32.mrf.mxu0
    %2765 = vmatprep.mubr.f32.mxu0 0.0
    %2766 = vmatmul.mubr.f32.gmra.mxu0 %v2636
    %v2767 = vpop.f32.mrf.mxu0
    %v2768 = vadd.f32 0.0, %v2767
    %v2769 = vpop.f32.mrf.mxu0
    %2770 = vmatprep.mubr.f32.mxu0 0.0
    %2771 = vmatmul.mubr.f32.gmra.mxu0 %v2638
    %v2772 = vpop.f32.mrf.mxu0
    %v2773 = vadd.f32 0.0, %v2772
    %v2774 = vpop.f32.mrf.mxu0
    %2775 = vmatprep.mubr.f32.mxu0 0.0
    %2776 = vmatmul.mubr.f32.gmra.mxu0 %v2640
    %v2777 = vpop.f32.mrf.mxu0
    %v2778 = vadd.f32 0.0, %v2777
    %v2779 = vpop.f32.mrf.mxu0
    %2780 = vmatprep.mubr.f32.mxu0 0.0
    %2781 = vmatmul.mubr.f32.gmra.mxu0 %v2642
    %v2782 = vpop.f32.mrf.mxu0
    %v2783 = vadd.f32 0.0, %v2782
    %v2784 = vpop.f32.mrf.mxu0
    %2785 = vmatprep.mubr.f32.mxu0 0.0
    %2786 = vmatmul.mubr.f32.gmra.mxu0 %v2644
    %v2787 = vpop.f32.mrf.mxu0
    %v2788 = vadd.f32 0.0, %v2787
    %v2789 = vpop.f32.mrf.mxu0
    %2790 = vdwg.mxu0
    %v2791 = vsel %vm2411, %v2567, 0
    %v2793 = vsel %vm2411, %v2568, 0
    %v2795 = vsel %vm2411, %v2570, 0
    %v2797 = vsel %vm2411, %v2571, 0
    %v2799 = vsel %vm2411, %v2573, 0
    %v2801 = vsel %vm2411, %v2574, 0
    %v2803 = vsel %vm2411, %v2576, 0
    %v2805 = vsel %vm2411, %v2577, 0
    %v2807 = vsel %vm2411, %v2579, 0
    %v2809 = vsel %vm2411, %v2580, 0
    %v2811 = vsel %vm2411, %v2582, 0
    %v2813 = vsel %vm2411, %v2583, 0
    %v2815 = vsel %vm2411, %v2585, 0
    %v2817 = vsel %vm2411, %v2586, 0
    %v2819 = vsel %vm2411, %v2588, 0
    %v2821 = vsel %vm2411, %v2589, 0
    %2823 = vmatprep.subr.mxu0 0.0
    %2824 = vmatpush1.msra.mxu0 0.0
    %2825 = vmatprep.subr.mxu0 0.0
    %2826 = vmatpush1.msra.mxu0 0.0
    %2827 = vmatprep.subr.mxu0 0.0
    %2828 = vmatpush1.msra.mxu0 0.0
    %2829 = vmatprep.subr.mxu0 0.0
    %2830 = vmatpush1.msra.mxu0 0.0
    %2831 = vmatprep.subr.mxu0 0.0
    %2832 = vmatpush1.msra.mxu0 0.0
    %2833 = vmatprep.subr.mxu0 0.0
    %2834 = vmatpush1.msra.mxu0 0.0
    %2835 = vmatprep.subr.mxu0 0.0
    %2836 = vmatpush1.msra.mxu0 0.0
    %2837 = vmatprep.subr.mxu0 0.0
    %2838 = vmatpush1.msra.mxu0 0.0
    %2839 = vmatprep.subr.mxu0 0.0
    %2840 = vmatpush1.msra.mxu0 %v2540
    %2841 = vmatprep.subr.mxu0 0.0
    %2842 = vmatpush1.msra.mxu0 %v2539
    %2843 = vmatprep.subr.mxu0 0.0
    %2844 = vmatpush1.msra.mxu0 %v2538
    %2845 = vmatprep.subr.mxu0 0.0
    %2846 = vmatpush1.msra.mxu0 %v2537
    %2847 = vmatprep.subr.mxu0 0.0
    %2848 = vmatpush1.msra.mxu0 %v2536
    %2849 = vmatprep.subr.mxu0 0.0
    %2850 = vmatpush1.msra.mxu0 %v2535
    %2851 = vmatprep.subr.mxu0 0.0
    %2852 = vmatpush1.msra.mxu0 %v2534
    %2853 = vmatprep.subr.mxu0 0.0
    %2854 = vmatpush1.msra.mxu0 %v2533
    %2855 = vmatprep.subr.mxu0 0.0
    %2856 = vmatpush2.msra.mxu0 0.0
    %2857 = vmatprep.subr.mxu0 0.0
    %2858 = vmatpush2.msra.mxu0 0.0
    %2859 = vmatprep.subr.mxu0 0.0
    %2860 = vmatpush2.msra.mxu0 0.0
    %2861 = vmatprep.subr.mxu0 0.0
    %2862 = vmatpush2.msra.mxu0 0.0
    %2863 = vmatprep.subr.mxu0 0.0
    %2864 = vmatpush2.msra.mxu0 0.0
    %2865 = vmatprep.subr.mxu0 0.0
    %2866 = vmatpush2.msra.mxu0 0.0
    %2867 = vmatprep.subr.mxu0 0.0
    %2868 = vmatpush2.msra.mxu0 0.0
    %2869 = vmatprep.subr.mxu0 0.0
    %2870 = vmatpush2.msra.mxu0 0.0
    %2871 = vmatprep.subr.mxu0 0.0
    %2872 = vmatpush2.msra.mxu0 0.0
    %2873 = vmatprep.subr.mxu0 0.0
    %2874 = vmatpush2.msra.mxu0 0.0
    %2875 = vmatprep.subr.mxu0 0.0
    %2876 = vmatpush2.msra.mxu0 0.0
    %2877 = vmatprep.subr.mxu0 0.0
    %2878 = vmatpush2.msra.mxu0 0.0
    %2879 = vmatprep.subr.mxu0 0.0
    %2880 = vmatpush2.msra.mxu0 0.0
    %2881 = vmatprep.subr.mxu0 0.0
    %2882 = vmatpush2.msra.mxu0 0.0
    %2883 = vmatprep.subr.mxu0 0.0
    %2884 = vmatpush2.msra.mxu0 0.0
    %2885 = vmatprep.subr.mxu0 0.0
    %2886 = vmatpush2.msra.mxu0 0.0
    %2887 = vmatprep.mubr.f32.mxu0 0.0
    %2888 = vmatmul.mubr.f32.gmra.mxu0 %v2791
    %v2889 = vpop.f32.mrf.mxu0
    %v2890 = vadd.f32 %v2713, %v2889
    %v2891 = vpop.f32.mrf.mxu0
    %2892 = vmatprep.mubr.f32.mxu0 0.0
    %2893 = vmatmul.mubr.f32.gmra.mxu0 %v2793
    %v2894 = vpop.f32.mrf.mxu0
    %v2895 = vadd.f32 %v2718, %v2894
    %v2896 = vpop.f32.mrf.mxu0
    %2897 = vmatprep.mubr.f32.mxu0 0.0
    %2898 = vmatmul.mubr.f32.gmra.mxu0 %v2795
    %v2899 = vpop.f32.mrf.mxu0
    %v2900 = vadd.f32 %v2723, %v2899
    %v2901 = vpop.f32.mrf.mxu0
    %2902 = vmatprep.mubr.f32.mxu0 0.0
    %2903 = vmatmul.mubr.f32.gmra.mxu0 %v2797
    %v2904 = vpop.f32.mrf.mxu0
    %v2905 = vadd.f32 %v2728, %v2904
    %v2906 = vpop.f32.mrf.mxu0
    %2907 = vmatprep.mubr.f32.mxu0 0.0
    %2908 = vmatmul.mubr.f32.gmra.mxu0 %v2799
    %v2909 = vpop.f32.mrf.mxu0
    %v2910 = vadd.f32 %v2733, %v2909
    %v2911 = vpop.f32.mrf.mxu0
    %2912 = vmatprep.mubr.f32.mxu0 0.0
    %2913 = vmatmul.mubr.f32.gmra.mxu0 %v2801
    %v2914 = vpop.f32.mrf.mxu0
    %v2915 = vadd.f32 %v2738, %v2914
    %v2916 = vpop.f32.mrf.mxu0
    %2917 = vmatprep.mubr.f32.mxu0 0.0
    %2918 = vmatmul.mubr.f32.gmra.mxu0 %v2803
    %v2919 = vpop.f32.mrf.mxu0
    %v2920 = vadd.f32 %v2743, %v2919
    %v2921 = vpop.f32.mrf.mxu0
    %2922 = vmatprep.mubr.f32.mxu0 0.0
    %2923 = vmatmul.mubr.f32.gmra.mxu0 %v2805
    %v2924 = vpop.f32.mrf.mxu0
    %v2925 = vadd.f32 %v2748, %v2924
    %v2926 = vpop.f32.mrf.mxu0
    %2927 = vmatprep.mubr.f32.mxu0 0.0
    %2928 = vmatmul.mubr.f32.gmra.mxu0 %v2807
    %v2929 = vpop.f32.mrf.mxu0
    %v2930 = vadd.f32 %v2753, %v2929
    %v2931 = vpop.f32.mrf.mxu0
    %2932 = vmatprep.mubr.f32.mxu0 0.0
    %2933 = vmatmul.mubr.f32.gmra.mxu0 %v2809
    %v2934 = vpop.f32.mrf.mxu0
    %v2935 = vadd.f32 %v2758, %v2934
    %v2936 = vpop.f32.mrf.mxu0
    %2937 = vmatprep.mubr.f32.mxu0 0.0
    %2938 = vmatmul.mubr.f32.gmra.mxu0 %v2811
    %v2939 = vpop.f32.mrf.mxu0
    %v2940 = vadd.f32 %v2763, %v2939
    %v2941 = vpop.f32.mrf.mxu0
    %2942 = vmatprep.mubr.f32.mxu0 0.0
    %2943 = vmatmul.mubr.f32.gmra.mxu0 %v2813
    %v2944 = vpop.f32.mrf.mxu0
    %v2945 = vadd.f32 %v2768, %v2944
    %v2946 = vpop.f32.mrf.mxu0
    %2947 = vmatprep.mubr.f32.mxu0 0.0
    %2948 = vmatmul.mubr.f32.gmra.mxu0 %v2815
    %v2949 = vpop.f32.mrf.mxu0
    %v2950 = vadd.f32 %v2773, %v2949
    %v2951 = vpop.f32.mrf.mxu0
    %2952 = vmatprep.mubr.f32.mxu0 0.0
    %2953 = vmatmul.mubr.f32.gmra.mxu0 %v2817
    %v2954 = vpop.f32.mrf.mxu0
    %v2955 = vadd.f32 %v2778, %v2954
    %v2956 = vpop.f32.mrf.mxu0
    %2957 = vmatprep.mubr.f32.mxu0 0.0
    %2958 = vmatmul.mubr.f32.gmra.mxu0 %v2819
    %v2959 = vpop.f32.mrf.mxu0
    %v2960 = vadd.f32 %v2783, %v2959
    %v2961 = vpop.f32.mrf.mxu0
    %2962 = vmatprep.mubr.f32.mxu0 0.0
    %2963 = vmatmul.mubr.f32.gmra.mxu0 %v2821
    %v2964 = vpop.f32.mrf.mxu0
    %v2965 = vadd.f32 %v2788, %v2964
    %v2966 = vpop.f32.mrf.mxu0
    %2967 = vdwg.mxu0
    %v2968 = vsel %vm2411, %v2525, 0
    %v2970 = vsel %vm2411, 0.0, 0
    %v2972 = vsel %vm2411, %v2526, 0
    %v2974 = vsel %vm2411, %v2527, 0
    %v2976 = vsel %vm2411, %v2528, 0
    %v2978 = vsel %vm2411, %v2529, 0
    %v2980 = vsel %vm2411, %v2530, 0
    %v2982 = vsel %vm2411, %v2531, 0
    %v2984 = vsel %vm2411, %v2532, 0
    %2986 = vmatprep.subr.mxu0 0.0
    %2987 = vmatpush1.msra.mxu0 0.0
    %2988 = vmatprep.subr.mxu0 0.0
    %2989 = vmatpush1.msra.mxu0 0.0
    %2990 = vmatprep.subr.mxu0 0.0
    %2991 = vmatpush1.msra.mxu0 0.0
    %2992 = vmatprep.subr.mxu0 0.0
    %2993 = vmatpush1.msra.mxu0 0.0
    %2994 = vmatprep.subr.mxu0 0.0
    %2995 = vmatpush1.msra.mxu0 0.0
    %2996 = vmatprep.subr.mxu0 0.0
    %2997 = vmatpush1.msra.mxu0 0.0
    %2998 = vmatprep.subr.mxu0 0.0
    %2999 = vmatpush1.msra.mxu0 0.0
    %3000 = vmatprep.subr.mxu0 0.0
    %3001 = vmatpush1.msra.mxu0 0.0
    %3002 = vmatprep.subr.mxu0 0.0
    %3003 = vmatpush1.msra.mxu0 %v2556
    %3004 = vmatprep.subr.mxu0 0.0
    %3005 = vmatpush1.msra.mxu0 %v2555
    %3006 = vmatprep.subr.mxu0 0.0
    %3007 = vmatpush1.msra.mxu0 %v2554
    %3008 = vmatprep.subr.mxu0 0.0
    %3009 = vmatpush1.msra.mxu0 %v2553
    %3010 = vmatprep.subr.mxu0 0.0
    %3011 = vmatpush1.msra.mxu0 %v2552
    %3012 = vmatprep.subr.mxu0 0.0
    %3013 = vmatpush1.msra.mxu0 %v2551
    %3014 = vmatprep.subr.mxu0 0.0
    %3015 = vmatpush1.msra.mxu0 %v2550
    %3016 = vmatprep.subr.mxu0 0.0
    %3017 = vmatpush1.msra.mxu0 %v2549
    %3018 = vmatprep.subr.mxu0 0.0
    %3019 = vmatpush2.msra.mxu0 0.0
    %3020 = vmatprep.subr.mxu0 0.0
    %3021 = vmatpush2.msra.mxu0 0.0
    %3022 = vmatprep.subr.mxu0 0.0
    %3023 = vmatpush2.msra.mxu0 0.0
    %3024 = vmatprep.subr.mxu0 0.0
    %3025 = vmatpush2.msra.mxu0 0.0
    %3026 = vmatprep.subr.mxu0 0.0
    %3027 = vmatpush2.msra.mxu0 0.0
    %3028 = vmatprep.subr.mxu0 0.0
    %3029 = vmatpush2.msra.mxu0 0.0
    %3030 = vmatprep.subr.mxu0 0.0
    %3031 = vmatpush2.msra.mxu0 0.0
    %3032 = vmatprep.subr.mxu0 0.0
    %3033 = vmatpush2.msra.mxu0 0.0
    %3034 = vmatprep.subr.mxu0 0.0
    %3035 = vmatpush2.msra.mxu0 0.0
    %3036 = vmatprep.subr.mxu0 0.0
    %3037 = vmatpush2.msra.mxu0 0.0
    %3038 = vmatprep.subr.mxu0 0.0
    %3039 = vmatpush2.msra.mxu0 0.0
    %3040 = vmatprep.subr.mxu0 0.0
    %3041 = vmatpush2.msra.mxu0 0.0
    %3042 = vmatprep.subr.mxu0 0.0
    %3043 = vmatpush2.msra.mxu0 0.0
    %3044 = vmatprep.subr.mxu0 0.0
    %3045 = vmatpush2.msra.mxu0 0.0
    %3046 = vmatprep.subr.mxu0 0.0
    %3047 = vmatpush2.msra.mxu0 0.0
    %3048 = vmatprep.subr.mxu0 0.0
    %3049 = vmatpush2.msra.mxu0 0.0
    %3050 = vmatprep.mubr.f32.mxu0 0.0
    %3051 = vmatmul.mubr.f32.gmra.mxu0 %v2968
    %v3052 = vpop.f32.mrf.mxu0
    %v3053 = vadd.f32 0.0, %v3052
    %v3054 = vpop.f32.mrf.mxu0
    %3055 = vmatprep.mubr.f32.mxu0 0.0
    %3056 = vmatmul.mubr.f32.gmra.mxu0 %v2970
    %v3057 = vpop.f32.mrf.mxu0
    %v3058 = vadd.f32 0.0, %v3057
    %v3059 = vpop.f32.mrf.mxu0
    %3060 = vmatprep.mubr.f32.mxu0 0.0
    %3061 = vmatmul.mubr.f32.gmra.mxu0 %v2972
    %v3062 = vpop.f32.mrf.mxu0
    %v3063 = vadd.f32 0.0, %v3062
    %v3064 = vpop.f32.mrf.mxu0
    %3065 = vmatprep.mubr.f32.mxu0 0.0
    %3066 = vmatmul.mubr.f32.gmra.mxu0 %v2970
    %v3067 = vpop.f32.mrf.mxu0
    %v3068 = vadd.f32 0.0, %v3067
    %v3069 = vpop.f32.mrf.mxu0
    %3070 = vmatprep.mubr.f32.mxu0 0.0
    %3071 = vmatmul.mubr.f32.gmra.mxu0 %v2974
    %v3072 = vpop.f32.mrf.mxu0
    %v3073 = vadd.f32 0.0, %v3072
    %v3074 = vpop.f32.mrf.mxu0
    %3075 = vmatprep.mubr.f32.mxu0 0.0
    %3076 = vmatmul.mubr.f32.gmra.mxu0 %v2970
    %v3077 = vpop.f32.mrf.mxu0
    %v3078 = vadd.f32 0.0, %v3077
    %v3079 = vpop.f32.mrf.mxu0
    %3080 = vmatprep.mubr.f32.mxu0 0.0
    %3081 = vmatmul.mubr.f32.gmra.mxu0 %v2976
    %v3082 = vpop.f32.mrf.mxu0
    %v3083 = vadd.f32 0.0, %v3082
    %v3084 = vpop.f32.mrf.mxu0
    %3085 = vmatprep.mubr.f32.mxu0 0.0
    %3086 = vmatmul.mubr.f32.gmra.mxu0 %v2970
    %v3087 = vpop.f32.mrf.mxu0
    %v3088 = vadd.f32 0.0, %v3087
    %v3089 = vpop.f32.mrf.mxu0
    %3090 = vmatprep.mubr.f32.mxu0 0.0
    %3091 = vmatmul.mubr.f32.gmra.mxu0 %v2978
    %v3092 = vpop.f32.mrf.mxu0
    %v3093 = vadd.f32 0.0, %v3092
    %v3094 = vpop.f32.mrf.mxu0
    %3095 = vmatprep.mubr.f32.mxu0 0.0
    %3096 = vmatmul.mubr.f32.gmra.mxu0 %v2970
    %v3097 = vpop.f32.mrf.mxu0
    %v3098 = vadd.f32 0.0, %v3097
    %v3099 = vpop.f32.mrf.mxu0
    %3100 = vmatprep.mubr.f32.mxu0 0.0
    %3101 = vmatmul.mubr.f32.gmra.mxu0 %v2980
    %v3102 = vpop.f32.mrf.mxu0
    %v3103 = vadd.f32 0.0, %v3102
    %v3104 = vpop.f32.mrf.mxu0
    %3105 = vmatprep.mubr.f32.mxu0 0.0
    %3106 = vmatmul.mubr.f32.gmra.mxu0 %v2970
    %v3107 = vpop.f32.mrf.mxu0
    %v3108 = vadd.f32 0.0, %v3107
    %v3109 = vpop.f32.mrf.mxu0
    %3110 = vmatprep.mubr.f32.mxu0 0.0
    %3111 = vmatmul.mubr.f32.gmra.mxu0 %v2982
    %v3112 = vpop.f32.mrf.mxu0
    %v3113 = vadd.f32 0.0, %v3112
    %v3114 = vpop.f32.mrf.mxu0
    %3115 = vmatprep.mubr.f32.mxu0 0.0
    %3116 = vmatmul.mubr.f32.gmra.mxu0 %v2970
    %v3117 = vpop.f32.mrf.mxu0
    %v3118 = vadd.f32 0.0, %v3117
    %v3119 = vpop.f32.mrf.mxu0
    %3120 = vmatprep.mubr.f32.mxu0 0.0
    %3121 = vmatmul.mubr.f32.gmra.mxu0 %v2984
    %v3122 = vpop.f32.mrf.mxu0
    %v3123 = vadd.f32 0.0, %v3122
    %v3124 = vpop.f32.mrf.mxu0
    %3125 = vmatprep.mubr.f32.mxu0 0.0
    %3126 = vmatmul.mubr.f32.gmra.mxu0 %v2970
    %v3127 = vpop.f32.mrf.mxu0
    %v3128 = vadd.f32 0.0, %v3127
    %v3129 = vpop.f32.mrf.mxu0
    %3130 = vdwg.mxu0
    %v3131 = vadd.f32 %v2890, %v3053
    %v3132 = vadd.f32 %v2895, %v3058
    %v3133 = vadd.f32 %v2900, %v3063
    %v3134 = vadd.f32 %v2905, %v3068
    %v3135 = vadd.f32 %v2910, %v3073
    %v3136 = vadd.f32 %v2915, %v3078
    %v3137 = vadd.f32 %v2920, %v3083
    %v3138 = vadd.f32 %v2925, %v3088
    %v3139 = vadd.f32 %v2930, %v3093
    %v3140 = vadd.f32 %v2935, %v3098
    %v3141 = vadd.f32 %v2940, %v3103
    %v3142 = vadd.f32 %v2945, %v3108
    %v3143 = vadd.f32 %v2950, %v3113
    %v3144 = vadd.f32 %v2955, %v3118
    %v3145 = vadd.f32 %v2960, %v3123
    %v3146 = vadd.f32 %v2965, %v3128
    %v3148 = vlaneseq
    %v3149 = vshrl.u32 %v3148, 7
    %v3150 = vsub.s32 0, %v3149
    %v3151 = vrot.slane %v2557, %v3150
    %v3153 = vadd.f32 %v3131, %v3151
    %v3154 = vadd.f32 %v3132, %v3151
    %v3155 = vadd.f32 %v3133, %v3151
    %v3156 = vadd.f32 %v3134, %v3151
    %v3157 = vadd.f32 %v3135, %v3151
    %v3158 = vadd.f32 %v3136, %v3151
    %v3159 = vadd.f32 %v3137, %v3151
    %v3160 = vadd.f32 %v3138, %v3151
    %v3161 = vadd.f32 %v3139, %v3151
    %v3162 = vadd.f32 %v3140, %v3151
    %v3163 = vadd.f32 %v3141, %v3151
    %v3164 = vadd.f32 %v3142, %v3151
    %v3165 = vadd.f32 %v3143, %v3151
    %v3166 = vadd.f32 %v3144, %v3151
    %v3167 = vadd.f32 %v3145, %v3151
    %v3168 = vadd.f32 %v3146, %v3151
    %v3169 = vmul.f32 %v3153, %v1547
    %v3170 = vmul.f32 %v3154, %v1548
    %v3171 = vmul.f32 %v3155, %v1547
    %v3172 = vmul.f32 %v3156, %v1548
    %v3173 = vmul.f32 %v3157, %v1547
    %v3174 = vmul.f32 %v3158, %v1548
    %v3175 = vmul.f32 %v3159, %v1547
    %v3176 = vmul.f32 %v3160, %v1548
    %v3177 = vmul.f32 %v3161, %v1547
    %v3178 = vmul.f32 %v3162, %v1548
    %v3179 = vmul.f32 %v3163, %v1547
    %v3180 = vmul.f32 %v3164, %v1548
    %v3181 = vmul.f32 %v3165, %v1547
    %v3182 = vmul.f32 %v3166, %v1548
    %v3183 = vmul.f32 %v3167, %v1547
    %v3184 = vmul.f32 %v3168, %v1548
    %v3185 = vadd.f32 %v3169, %v3170
    %v3186 = vadd.f32 %v3185, %v3171
    %v3187 = vadd.f32 %v3186, %v3172
    %v3188 = vadd.f32 %v3187, %v3173
    %v3189 = vadd.f32 %v3188, %v3174
    %v3190 = vadd.f32 %v3189, %v3175
    %v3191 = vadd.f32 %v3190, %v3176
    %v3192 = vadd.f32 %v3191, %v3177
    %v3193 = vadd.f32 %v3192, %v3178
    %v3194 = vadd.f32 %v3193, %v3179
    %v3195 = vadd.f32 %v3194, %v3180
    %v3196 = vadd.f32 %v3195, %v3181
    %v3197 = vadd.f32 %v3196, %v3182
    %v3198 = vadd.f32 %v3197, %v3183
    %v3199 = vadd.f32 %v3198, %v3184
    %v3200 = vrot.slane %v3199, 4
    %v3201 = vadd.f32 %v3199, %v3200
    %v3202 = vrot.slane %v3201, 2
    %v3203 = vadd.f32 %v3201, %v3202
    %v3204 = vrot.slane %v3203, 1
    %v3205 = vadd.f32 %v3203, %v3204
    %v3206 = vmul.f32 %v3205, %v1603
    %v3207 = vmul.f32 %v3169, %v3153
    %v3208 = vmul.f32 %v3170, %v3154
    %v3209 = vmul.f32 %v3171, %v3155
    %v3210 = vmul.f32 %v3172, %v3156
    %v3211 = vmul.f32 %v3173, %v3157
    %v3212 = vmul.f32 %v3174, %v3158
    %v3213 = vmul.f32 %v3175, %v3159
    %v3214 = vmul.f32 %v3176, %v3160
    %v3215 = vmul.f32 %v3177, %v3161
    %v3216 = vmul.f32 %v3178, %v3162
    %v3217 = vmul.f32 %v3179, %v3163
    %v3218 = vmul.f32 %v3180, %v3164
    %v3219 = vmul.f32 %v3181, %v3165
    %v3220 = vmul.f32 %v3182, %v3166
    %v3221 = vmul.f32 %v3183, %v3167
    %v3222 = vmul.f32 %v3184, %v3168
    %v3223 = vadd.f32 %v3207, %v3208
    %v3224 = vadd.f32 %v3223, %v3209
    %v3225 = vadd.f32 %v3224, %v3210
    %v3226 = vadd.f32 %v3225, %v3211
    %v3227 = vadd.f32 %v3226, %v3212
    %v3228 = vadd.f32 %v3227, %v3213
    %v3229 = vadd.f32 %v3228, %v3214
    %v3230 = vadd.f32 %v3229, %v3215
    %v3231 = vadd.f32 %v3230, %v3216
    %v3232 = vadd.f32 %v3231, %v3217
    %v3233 = vadd.f32 %v3232, %v3218
    %v3234 = vadd.f32 %v3233, %v3219
    %v3235 = vadd.f32 %v3234, %v3220
    %v3236 = vadd.f32 %v3235, %v3221
    %v3237 = vadd.f32 %v3236, %v3222
    %v3238 = vrot.slane %v3237, 4
    %v3239 = vadd.f32 %v3237, %v3238
    %v3240 = vrot.slane %v3239, 2
    %v3241 = vadd.f32 %v3239, %v3240
    %v3242 = vrot.slane %v3241, 1
    %v3243 = vadd.f32 %v3241, %v3242
    %v3244 = vmul.f32 %v3243, %v1603
    %v3245 = vmul.f32 %v3206, %v3206
    %v3246 = vsub.f32 %v3244, %v3245
    %v3247 = vmax.f32 %v3246, 0.0
    %v3248 = vsub.f32 %v3153, %v3206
    %v3249 = vsub.f32 %v3155, %v3206
    %v3250 = vsub.f32 %v3157, %v3206
    %v3251 = vsub.f32 %v3159, %v3206
    %v3252 = vsub.f32 %v3161, %v3206
    %v3253 = vsub.f32 %v3163, %v3206
    %v3254 = vsub.f32 %v3165, %v3206
    %v3255 = vsub.f32 %v3167, %v3206
    %v3256 = vadd.f32 %v3247, 1e-05
    %v3257 = vrsqrt.pop %v3256
    %v3258 = vmul.f32 %v3248, %v3257
    %v3259 = vmul.f32 %v3249, %v3257
    %v3260 = vmul.f32 %v3250, %v3257
    %v3261 = vmul.f32 %v3251, %v3257
    %v3262 = vmul.f32 %v3252, %v3257
    %v3263 = vmul.f32 %v3253, %v3257
    %v3264 = vmul.f32 %v3254, %v3257
    %v3265 = vmul.f32 %v3255, %v3257
    %v3266 = vmax.f32 %v3258, 0.0
    %v3267 = vmax.f32 %v3259, 0.0
    %v3268 = vmax.f32 %v3260, 0.0
    %v3269 = vmax.f32 %v3261, 0.0
    %v3270 = vmax.f32 %v3262, 0.0
    %v3271 = vmax.f32 %v3263, 0.0
    %v3272 = vmax.f32 %v3264, 0.0
    %v3273 = vmax.f32 %v3265, 0.0
    %v3274 = vmul.f32 %v3266, %v1690
    %v3275 = vmul.f32 %v3267, %v1690
    %v3276 = vmul.f32 %v3268, %v1690
    %v3277 = vmul.f32 %v3269, %v1690
    %v3278 = vmul.f32 %v3270, %v1690
    %v3279 = vmul.f32 %v3271, %v1690
    %v3280 = vmul.f32 %v3272, %v1690
    %v3281 = vmul.f32 %v3273, %v1690
    %v3282 = vrot.slane %v3274, 4
    %v3283 = vadd.f32 %v3274, %v3282
    %v3284 = vrot.slane %v3283, 2
    %v3285 = vadd.f32 %v3283, %v3284
    %v3286 = vrot.slane %v3285, 1
    %v3287 = vadd.f32 %v3285, %v3286
    %v3288 = vrot.slane %v3275, 4
    %v3289 = vadd.f32 %v3275, %v3288
    %v3290 = vrot.slane %v3289, 2
    %v3291 = vadd.f32 %v3289, %v3290
    %v3292 = vrot.slane %v3291, 1
    %v3293 = vadd.f32 %v3291, %v3292
    %v3294 = vrot.slane %v3276, 4
    %v3295 = vadd.f32 %v3276, %v3294
    %v3296 = vrot.slane %v3295, 2
    %v3297 = vadd.f32 %v3295, %v3296
    %v3298 = vrot.slane %v3297, 1
    %v3299 = vadd.f32 %v3297, %v3298
    %v3300 = vrot.slane %v3277, 4
    %v3301 = vadd.f32 %v3277, %v3300
    %v3302 = vrot.slane %v3301, 2
    %v3303 = vadd.f32 %v3301, %v3302
    %v3304 = vrot.slane %v3303, 1
    %v3305 = vadd.f32 %v3303, %v3304
    %v3306 = vrot.slane %v3278, 4
    %v3307 = vadd.f32 %v3278, %v3306
    %v3308 = vrot.slane %v3307, 2
    %v3309 = vadd.f32 %v3307, %v3308
    %v3310 = vrot.slane %v3309, 1
    %v3311 = vadd.f32 %v3309, %v3310
    %v3312 = vrot.slane %v3279, 4
    %v3313 = vadd.f32 %v3279, %v3312
    %v3314 = vrot.slane %v3313, 2
    %v3315 = vadd.f32 %v3313, %v3314
    %v3316 = vrot.slane %v3315, 1
    %v3317 = vadd.f32 %v3315, %v3316
    %v3318 = vrot.slane %v3280, 4
    %v3319 = vadd.f32 %v3280, %v3318
    %v3320 = vrot.slane %v3319, 2
    %v3321 = vadd.f32 %v3319, %v3320
    %v3322 = vrot.slane %v3321, 1
    %v3323 = vadd.f32 %v3321, %v3322
    %v3324 = vrot.slane %v3281, 4
    %v3325 = vadd.f32 %v3281, %v3324
    %v3326 = vrot.slane %v3325, 2
    %v3327 = vadd.f32 %v3325, %v3326
    %v3328 = vrot.slane %v3327, 1
    %v3329 = vadd.f32 %v3327, %v3328
    %v3330 = vld [vmem:[%s5] sm:$0xff]
    %v3331 = vld [vmem:[#allocation14] sm:$0xff]
    %v3332 = vld [vmem:[#allocation14 + $0x8] sm:$0x3]
    %v3333 = vld [vmem:[#allocation16] sm:$0x1]
    %v3335 = vlaneseq
    %v3336 = vshrl.u32 %v3335, 7
    %v3337 = vsub.s32 0, %v3336
    %v3338 = vrot.slane %v3333, %v3337
    %vm3340 = vcmask 80896
    %v3342 = vsel %vm3340, %v3330, 0
    %v3345 = vsel %vm417, %v3332, 0
    %3347 = vmatprep.subr.mxu0 0.0
    %3348 = vmatpush1.msra.mxu0 0.0
    %3349 = vmatprep.subr.mxu0 0.0
    %3350 = vmatpush1.msra.mxu0 0.0
    %3351 = vmatprep.subr.mxu0 0.0
    %3352 = vmatpush1.msra.mxu0 0.0
    %3353 = vmatprep.subr.mxu0 0.0
    %3354 = vmatpush1.msra.mxu0 0.0
    %3355 = vmatprep.subr.mxu0 0.0
    %3356 = vmatpush1.msra.mxu0 0.0
    %3357 = vmatprep.subr.mxu0 0.0
    %3358 = vmatpush1.msra.mxu0 0.0
    %3359 = vmatprep.subr.mxu0 0.0
    %3360 = vmatpush1.msra.mxu0 0.0
    %3361 = vmatprep.subr.mxu0 0.0
    %3362 = vmatpush1.msra.mxu0 0.0
    %3363 = vmatprep.subr.mxu0 0.0
    %3364 = vmatpush1.msra.mxu0 0.0
    %3365 = vmatprep.subr.mxu0 0.0
    %3366 = vmatpush1.msra.mxu0 0.0
    %3367 = vmatprep.subr.mxu0 0.0
    %3368 = vmatpush1.msra.mxu0 0.0
    %3369 = vmatprep.subr.mxu0 0.0
    %3370 = vmatpush1.msra.mxu0 0.0
    %3371 = vmatprep.subr.mxu0 0.0
    %3372 = vmatpush1.msra.mxu0 0.0
    %3373 = vmatprep.subr.mxu0 0.0
    %3374 = vmatpush1.msra.mxu0 0.0
    %3375 = vmatprep.subr.mxu0 0.0
    %3376 = vmatpush1.msra.mxu0 %v3345
    %3377 = vmatprep.subr.mxu0 0.0
    %3378 = vmatpush1.msra.mxu0 %v3331
    %3379 = vmatprep.subr.mxu0 0.0
    %3380 = vmatpush2.msra.mxu0 0.0
    %3381 = vmatprep.subr.mxu0 0.0
    %3382 = vmatpush2.msra.mxu0 0.0
    %3383 = vmatprep.subr.mxu0 0.0
    %3384 = vmatpush2.msra.mxu0 0.0
    %3385 = vmatprep.subr.mxu0 0.0
    %3386 = vmatpush2.msra.mxu0 0.0
    %3387 = vmatprep.subr.mxu0 0.0
    %3388 = vmatpush2.msra.mxu0 0.0
    %3389 = vmatprep.subr.mxu0 0.0
    %3390 = vmatpush2.msra.mxu0 0.0
    %3391 = vmatprep.subr.mxu0 0.0
    %3392 = vmatpush2.msra.mxu0 0.0
    %3393 = vmatprep.subr.mxu0 0.0
    %3394 = vmatpush2.msra.mxu0 0.0
    %3395 = vmatprep.subr.mxu0 0.0
    %3396 = vmatpush2.msra.mxu0 0.0
    %3397 = vmatprep.subr.mxu0 0.0
    %3398 = vmatpush2.msra.mxu0 0.0
    %3399 = vmatprep.subr.mxu0 0.0
    %3400 = vmatpush2.msra.mxu0 0.0
    %3401 = vmatprep.subr.mxu0 0.0
    %3402 = vmatpush2.msra.mxu0 0.0
    %3403 = vmatprep.subr.mxu0 0.0
    %3404 = vmatpush2.msra.mxu0 0.0
    %3405 = vmatprep.subr.mxu0 0.0
    %3406 = vmatpush2.msra.mxu0 0.0
    %3407 = vmatprep.subr.mxu0 0.0
    %3408 = vmatpush2.msra.mxu0 0.0
    %3409 = vmatprep.subr.mxu0 0.0
    %3410 = vmatpush2.msra.mxu0 0.0
    %3411 = vmatprep.mubr.f32.mxu0 0.0
    %3412 = vmatmul.mubr.f32.gmra.mxu0 %v3342
    %v3413 = vpop.f32.mrf.mxu0
    %v3414 = vadd.f32 %v3338, %v3413
    %v3415 = vpop.f32.mrf.mxu0
    %3416 = vdwg.mxu0
    %v3417 = vld [vmem:[#allocation17] sm:$0xff]
    %v3418 = vld [vmem:[#allocation17 + $0x8] sm:$0xff]
    %v3419 = vld [vmem:[#allocation17 + $0x10] sm:$0xff]
    %v3420 = vld [vmem:[#allocation17 + $0x18] sm:$0xff]
    %v3421 = vld [vmem:[#allocation17 + $0x20] sm:$0xff]
    %v3422 = vld [vmem:[#allocation17 + $0x28] sm:$0xff]
    %v3423 = vld [vmem:[#allocation17 + $0x30] sm:$0x3]
    %v3424 = vld [vmem:[#allocation19] sm:$0xff]
    %v3425 = vld [vmem:[#allocation19 + $0x8] sm:$0xff]
    %v3426 = vld [vmem:[#allocation19 + $0x10] sm:$0xff]
    %v3427 = vld [vmem:[#allocation19 + $0x18] sm:$0xff]
    %v3428 = vld [vmem:[#allocation19 + $0x20] sm:$0xff]
    %v3429 = vld [vmem:[#allocation19 + $0x28] sm:$0xff]
    %v3430 = vld [vmem:[#allocation19 + $0x30] sm:$0xff]
    %v3431 = vld [vmem:[#allocation19 + $0x38] sm:$0xff]
    %v3433 = vsel %vm2411, %v3414, 0
    %3435 = vmatprep.subr.mxu0 0.0
    %3436 = vmatpush1.msra.mxu0 0.0
    %3437 = vmatprep.subr.mxu0 0.0
    %3438 = vmatpush1.msra.mxu0 0.0
    %3439 = vmatprep.subr.mxu0 0.0
    %3440 = vmatpush1.msra.mxu0 0.0
    %3441 = vmatprep.subr.mxu0 0.0
    %3442 = vmatpush1.msra.mxu0 0.0
    %3443 = vmatprep.subr.mxu0 0.0
    %3444 = vmatpush1.msra.mxu0 0.0
    %3445 = vmatprep.subr.mxu0 0.0
    %3446 = vmatpush1.msra.mxu0 0.0
    %3447 = vmatprep.subr.mxu0 0.0
    %3448 = vmatpush1.msra.mxu0 0.0
    %3449 = vmatprep.subr.mxu0 0.0
    %3450 = vmatpush1.msra.mxu0 0.0
    %3451 = vmatprep.subr.mxu0 0.0
    %3452 = vmatpush1.msra.mxu0 %v3431
    %3453 = vmatprep.subr.mxu0 0.0
    %3454 = vmatpush1.msra.mxu0 %v3430
    %3455 = vmatprep.subr.mxu0 0.0
    %3456 = vmatpush1.msra.mxu0 %v3429
    %3457 = vmatprep.subr.mxu0 0.0
    %3458 = vmatpush1.msra.mxu0 %v3428
    %3459 = vmatprep.subr.mxu0 0.0
    %3460 = vmatpush1.msra.mxu0 %v3427
    %3461 = vmatprep.subr.mxu0 0.0
    %3462 = vmatpush1.msra.mxu0 %v3426
    %3463 = vmatprep.subr.mxu0 0.0
    %3464 = vmatpush1.msra.mxu0 %v3425
    %3465 = vmatprep.subr.mxu0 0.0
    %3466 = vmatpush1.msra.mxu0 %v3424
    %3467 = vmatprep.subr.mxu0 0.0
    %3468 = vmatpush2.msra.mxu0 0.0
    %3469 = vmatprep.subr.mxu0 0.0
    %3470 = vmatpush2.msra.mxu0 0.0
    %3471 = vmatprep.subr.mxu0 0.0
    %3472 = vmatpush2.msra.mxu0 0.0
    %3473 = vmatprep.subr.mxu0 0.0
    %3474 = vmatpush2.msra.mxu0 0.0
    %3475 = vmatprep.subr.mxu0 0.0
    %3476 = vmatpush2.msra.mxu0 0.0
    %3477 = vmatprep.subr.mxu0 0.0
    %3478 = vmatpush2.msra.mxu0 0.0
    %3479 = vmatprep.subr.mxu0 0.0
    %3480 = vmatpush2.msra.mxu0 0.0
    %3481 = vmatprep.subr.mxu0 0.0
    %3482 = vmatpush2.msra.mxu0 0.0
    %3483 = vmatprep.subr.mxu0 0.0
    %3484 = vmatpush2.msra.mxu0 0.0
    %3485 = vmatprep.subr.mxu0 0.0
    %3486 = vmatpush2.msra.mxu0 0.0
    %3487 = vmatprep.subr.mxu0 0.0
    %3488 = vmatpush2.msra.mxu0 0.0
    %3489 = vmatprep.subr.mxu0 0.0
    %3490 = vmatpush2.msra.mxu0 0.0
    %3491 = vmatprep.subr.mxu0 0.0
    %3492 = vmatpush2.msra.mxu0 0.0
    %3493 = vmatprep.subr.mxu0 0.0
    %3494 = vmatpush2.msra.mxu0 0.0
    %3495 = vmatprep.subr.mxu0 0.0
    %3496 = vmatpush2.msra.mxu0 0.0
    %3497 = vmatprep.subr.mxu0 0.0
    %3498 = vmatpush2.msra.mxu0 0.0
    %3499 = vmatprep.mubr.f32.mxu0 0.0
    %3500 = vmatmul.mubr.f32.gmra.mxu0 %v3433
    %v3501 = vpop.f32.mrf.mxu0
    %v3502 = vadd.f32 0.0, %v3501
    %v3503 = vpop.f32.mrf.mxu0
    %3504 = vdwg.mxu0
    %vm3513 = vcmask 1041409
    %v3514 = vsel %vm3513, %v1712, %v1705
    %vm3515 = vcmask 1042434
    %v3516 = vsel %vm3515, %v1719, %v3514
    %vm3517 = vcmask 1043459
    %v3518 = vsel %vm3517, %v1726, %v3516
    %vm3519 = vcmask 1044484
    %v3520 = vsel %vm3519, %v1733, %v3518
    %vm3521 = vcmask 1045509
    %v3522 = vsel %vm3521, %v1740, %v3520
    %vm3523 = vcmask 1046534
    %v3524 = vsel %vm3523, %v1747, %v3522
    %vm3525 = vcmask 1047559
    %v3526 = vsel %vm3525, %v1754, %v3524
    %v3527 = vsel %vm1565, %v3526, 0
    %v3530 = vsel %vm417, %v3423, 0
    %3532 = vmatprep.subr.mxu0 0.0
    %3533 = vmatpush1.msra.mxu0 0.0
    %3534 = vmatprep.subr.mxu0 0.0
    %3535 = vmatpush1.msra.mxu0 0.0
    %3536 = vmatprep.subr.mxu0 0.0
    %3537 = vmatpush1.msra.mxu0 0.0
    %3538 = vmatprep.subr.mxu0 0.0
    %3539 = vmatpush1.msra.mxu0 0.0
    %3540 = vmatprep.subr.mxu0 0.0
    %3541 = vmatpush1.msra.mxu0 0.0
    %3542 = vmatprep.subr.mxu0 0.0
    %3543 = vmatpush1.msra.mxu0 0.0
    %3544 = vmatprep.subr.mxu0 0.0
    %3545 = vmatpush1.msra.mxu0 0.0
    %3546 = vmatprep.subr.mxu0 0.0
    %3547 = vmatpush1.msra.mxu0 0.0
    %3548 = vmatprep.subr.mxu0 0.0
    %3549 = vmatpush1.msra.mxu0 0.0
    %3550 = vmatprep.subr.mxu0 0.0
    %3551 = vmatpush1.msra.mxu0 %v3530
    %3552 = vmatprep.subr.mxu0 0.0
    %3553 = vmatpush1.msra.mxu0 %v3422
    %3554 = vmatprep.subr.mxu0 0.0
    %3555 = vmatpush1.msra.mxu0 %v3421
    %3556 = vmatprep.subr.mxu0 0.0
    %3557 = vmatpush1.msra.mxu0 %v3420
    %3558 = vmatprep.subr.mxu0 0.0
    %3559 = vmatpush1.msra.mxu0 %v3419
    %3560 = vmatprep.subr.mxu0 0.0
    %3561 = vmatpush1.msra.mxu0 %v3418
    %3562 = vmatprep.subr.mxu0 0.0
    %3563 = vmatpush1.msra.mxu0 %v3417
    %3564 = vmatprep.subr.mxu0 0.0
    %3565 = vmatpush2.msra.mxu0 0.0
    %3566 = vmatprep.subr.mxu0 0.0
    %3567 = vmatpush2.msra.mxu0 0.0
    %3568 = vmatprep.subr.mxu0 0.0
    %3569 = vmatpush2.msra.mxu0 0.0
    %3570 = vmatprep.subr.mxu0 0.0
    %3571 = vmatpush2.msra.mxu0 0.0
    %3572 = vmatprep.subr.mxu0 0.0
    %3573 = vmatpush2.msra.mxu0 0.0
    %3574 = vmatprep.subr.mxu0 0.0
    %3575 = vmatpush2.msra.mxu0 0.0
    %3576 = vmatprep.subr.mxu0 0.0
    %3577 = vmatpush2.msra.mxu0 0.0
    %3578 = vmatprep.subr.mxu0 0.0
    %3579 = vmatpush2.msra.mxu0 0.0
    %3580 = vmatprep.subr.mxu0 0.0
    %3581 = vmatpush2.msra.mxu0 0.0
    %3582 = vmatprep.subr.mxu0 0.0
    %3583 = vmatpush2.msra.mxu0 0.0
    %3584 = vmatprep.subr.mxu0 0.0
    %3585 = vmatpush2.msra.mxu0 0.0
    %3586 = vmatprep.subr.mxu0 0.0
    %3587 = vmatpush2.msra.mxu0 0.0
    %3588 = vmatprep.subr.mxu0 0.0
    %3589 = vmatpush2.msra.mxu0 0.0
    %3590 = vmatprep.subr.mxu0 0.0
    %3591 = vmatpush2.msra.mxu0 0.0
    %3592 = vmatprep.subr.mxu0 0.0
    %3593 = vmatpush2.msra.mxu0 0.0
    %3594 = vmatprep.subr.mxu0 0.0
    %3595 = vmatpush2.msra.mxu0 0.0
    %3596 = vmatprep.mubr.f32.mxu0 0.0
    %3597 = vmatmul.mubr.f32.gmra.mxu0 %v3527
    %v3598 = vpop.f32.mrf.mxu0
    %v3599 = vadd.f32 %v3502, %v3598
    %v3600 = vpop.f32.mrf.mxu0
    %3601 = vdwg.mxu0
    %v3602 = vld [vmem:[%s33] sm:$0xff]
    %v3603 = vld [vmem:[%s33 + $0x8] sm:$0xff]
    %v3604 = vld [vmem:[%s33 + $0x10] sm:$0xff]
    %v3605 = vld [vmem:[%s33 + $0x18] sm:$0xff]
    %v3606 = vld [vmem:[%s33 + $0x20] sm:$0xff]
    %v3607 = vld [vmem:[%s33 + $0x28] sm:$0xff]
    %v3608 = vld [vmem:[%s33 + $0x30] sm:$0xff]
    %v3609 = vld [vmem:[%s33 + $0x38] sm:$0xff]
    %v3610 = vld [vmem:[%s33 + $0x40] sm:$0xff]
    %v3611 = vld [vmem:[%s33 + $0x48] sm:$0xff]
    %v3612 = vld [vmem:[%s33 + $0x50] sm:$0xff]
    %v3613 = vld [vmem:[%s33 + $0x58] sm:$0xff]
    %v3614 = vld [vmem:[%s33 + $0x60] sm:$0xff]
    %v3615 = vld [vmem:[%s33 + $0x68] sm:$0xff]
    %v3616 = vld [vmem:[%s33 + $0x70] sm:$0xff]
    %v3617 = vld [vmem:[%s33 + $0x78] sm:$0xff]
    %v3626 = vsel %vm3513, %v3293, %v3287
    %v3627 = vsel %vm3515, %v3299, %v3626
    %v3628 = vsel %vm3517, %v3305, %v3627
    %v3629 = vsel %vm3519, %v3311, %v3628
    %v3630 = vsel %vm3521, %v3317, %v3629
    %v3631 = vsel %vm3523, %v3323, %v3630
    %v3632 = vsel %vm3525, %v3329, %v3631
    %3634 = vmatprep.subr.mxu0 0.0
    %3635 = vmatpush1.msra.mxu0 %v3617
    %3636 = vmatprep.subr.mxu0 0.0
    %3637 = vmatpush1.msra.mxu0 %v3616
    %3638 = vmatprep.subr.mxu0 0.0
    %3639 = vmatpush1.msra.mxu0 %v3615
    %3640 = vmatprep.subr.mxu0 0.0
    %3641 = vmatpush1.msra.mxu0 %v3614
    %3642 = vmatprep.subr.mxu0 0.0
    %3643 = vmatpush1.msra.mxu0 %v3613
    %3644 = vmatprep.subr.mxu0 0.0
    %3645 = vmatpush1.msra.mxu0 %v3612
    %3646 = vmatprep.subr.mxu0 0.0
    %3647 = vmatpush1.msra.mxu0 %v3611
    %3648 = vmatprep.subr.mxu0 0.0
    %3649 = vmatpush1.msra.mxu0 %v3610
    %3650 = vmatprep.subr.mxu0 0.0
    %3651 = vmatpush1.msra.mxu0 %v3609
    %3652 = vmatprep.subr.mxu0 0.0
    %3653 = vmatpush1.msra.mxu0 %v3608
    %3654 = vmatprep.subr.mxu0 0.0
    %3655 = vmatpush1.msra.mxu0 %v3607
    %3656 = vmatprep.subr.mxu0 0.0
    %3657 = vmatpush1.msra.mxu0 %v3606
    %3658 = vmatprep.subr.mxu0 0.0
    %3659 = vmatpush1.msra.mxu0 %v3605
    %3660 = vmatprep.subr.mxu0 0.0
    %3661 = vmatpush1.msra.mxu0 %v3604
    %3662 = vmatprep.subr.mxu0 0.0
    %3663 = vmatpush1.msra.mxu0 %v3603
    %3664 = vmatprep.subr.mxu0 0.0
    %3665 = vmatpush1.msra.mxu0 %v3602
    %3666 = vmatprep.subr.mxu0 0.0
    %3667 = vmatpush2.msra.mxu0 0.0
    %3668 = vmatprep.subr.mxu0 0.0
    %3669 = vmatpush2.msra.mxu0 0.0
    %3670 = vmatprep.subr.mxu0 0.0
    %3671 = vmatpush2.msra.mxu0 0.0
    %3672 = vmatprep.subr.mxu0 0.0
    %3673 = vmatpush2.msra.mxu0 0.0
    %3674 = vmatprep.subr.mxu0 0.0
    %3675 = vmatpush2.msra.mxu0 0.0
    %3676 = vmatprep.subr.mxu0 0.0
    %3677 = vmatpush2.msra.mxu0 0.0
    %3678 = vmatprep.subr.mxu0 0.0
    %3679 = vmatpush2.msra.mxu0 0.0
    %3680 = vmatprep.subr.mxu0 0.0
    %3681 = vmatpush2.msra.mxu0 0.0
    %3682 = vmatprep.subr.mxu0 0.0
    %3683 = vmatpush2.msra.mxu0 0.0
    %3684 = vmatprep.subr.mxu0 0.0
    %3685 = vmatpush2.msra.mxu0 0.0
    %3686 = vmatprep.subr.mxu0 0.0
    %3687 = vmatpush2.msra.mxu0 0.0
    %3688 = vmatprep.subr.mxu0 0.0
    %3689 = vmatpush2.msra.mxu0 0.0
    %3690 = vmatprep.subr.mxu0 0.0
    %3691 = vmatpush2.msra.mxu0 0.0
    %3692 = vmatprep.subr.mxu0 0.0
    %3693 = vmatpush2.msra.mxu0 0.0
    %3694 = vmatprep.subr.mxu0 0.0
    %3695 = vmatpush2.msra.mxu0 0.0
    %3696 = vmatprep.subr.mxu0 0.0
    %3697 = vmatpush2.msra.mxu0 0.0
    %3698 = vmatprep.mubr.f32.mxu0 0.0
    %3699 = vmatmul.mubr.f32.gmra.mxu0 %v3632
    %v3700 = vpop.f32.mrf.mxu0
    %v3701 = vadd.f32 0.0, %v3700
    %v3702 = vpop.f32.mrf.mxu0
    %3703 = vdwg.mxu0
    %v3704 = vadd.f32 %v3599, %v3701
    %v3705 = vld [vmem:[#allocation20] sm:$0x1]
    %v3707 = vlaneseq
    %v3708 = vshrl.u32 %v3707, 7
    %v3709 = vsub.s32 0, %v3708
    %v3710 = vrot.slane %v3705, %v3709
    %v3712 = vadd.f32 %v3704, %v3710
    %v3713 = vxor.u32 %v3712, 2147483648
    %v3714 = vmul.f32 %v3713, 1.442695
    %v3715 = vpow.pop %v3714
    %v3716 = vadd.f32 %v3715, 1.0
    %v3717 = vrcp.pop %v3716
    %v3718 = vmul.f32 1.0, %v3717
    %3720 = vrot.lane.b32.xlu0 %v3718, 96
    %v3721 = vpop.permute.xlu0 %3720
    %v3723 = vmul.f32 %v3712, %v3721
    %v3724 = vld [vmem:[%s7] sm:$0xff]
    %vm3725 = vcmp.gt.f32.partialorder %v3724, 0.0
    %v3726 = vld [vmem:[#allocation22] sm:$0xff]
    %v3727 = vld [vmem:[#allocation22 + $0x8] sm:$0xff]
    %v3728 = vld [vmem:[#allocation22 + $0x10] sm:$0xff]
    %v3729 = vld [vmem:[#allocation22 + $0x18] sm:$0xff]
    %v3730 = vld [vmem:[#allocation22 + $0x20] sm:$0xff]
    %v3731 = vld [vmem:[#allocation22 + $0x28] sm:$0xff]
    %v3732 = vld [vmem:[#allocation22 + $0x30] sm:$0xff]
    %v3733 = vld [vmem:[#allocation22 + $0x38] sm:$0xff]
    %v3734 = vld [vmem:[#allocation22 + $0x40] sm:$0xff]
    %v3735 = vld [vmem:[#allocation22 + $0x48] sm:$0xff]
    %v3736 = vld [vmem:[#allocation22 + $0x50] sm:$0xff]
    %v3737 = vld [vmem:[#allocation22 + $0x58] sm:$0xff]
    %v3738 = vld [vmem:[#allocation22 + $0x60] sm:$0xff]
    %v3739 = vld [vmem:[#allocation22 + $0x68] sm:$0xff]
    %v3740 = vld [vmem:[#allocation22 + $0x70] sm:$0xff]
    %v3741 = vld [vmem:[#allocation22 + $0x78] sm:$0xff]
    %v3742 = vld [vmem:[#allocation23] sm:$0xf]
    %v3743 = vld [vmem:[#allocation25] sm:$0xf]
    %v3745 = vlaneseq
    %v3746 = vshrl.u32 %v3745, 7
    %v3747 = vsub.s32 0, %v3746
    %v3748 = vrot.slane %v3742, %v3747
    %v3749 = vlaneseq
    %v3750 = vshrl.u32 %v3749, 7
    %v3751 = vsub.s32 1, %v3750
    %v3752 = vrot.slane %v3742, %v3751
    %v3753 = vlaneseq
    %v3754 = vshrl.u32 %v3753, 7
    %v3755 = vsub.s32 2, %v3754
    %v3756 = vrot.slane %v3742, %v3755
    %v3757 = vlaneseq
    %v3758 = vshrl.u32 %v3757, 7
    %v3759 = vsub.s32 3, %v3758
    %v3760 = vrot.slane %v3742, %v3759
    %vm3765 = vcmask 261120
    %v3767 = vsel %vm3765, %v3723, 0
    %3769 = vmatprep.subr.mxu0 0.0
    %3770 = vmatpush1.msra.mxu0 0.0
    %3771 = vmatprep.subr.mxu0 0.0
    %3772 = vmatpush1.msra.mxu0 0.0
    %3773 = vmatprep.subr.mxu0 0.0
    %3774 = vmatpush1.msra.mxu0 0.0
    %3775 = vmatprep.subr.mxu0 0.0
    %3776 = vmatpush1.msra.mxu0 0.0
    %3777 = vmatprep.subr.mxu0 0.0
    %3778 = vmatpush1.msra.mxu0 0.0
    %3779 = vmatprep.subr.mxu0 0.0
    %3780 = vmatpush1.msra.mxu0 0.0
    %3781 = vmatprep.subr.mxu0 0.0
    %3782 = vmatpush1.msra.mxu0 0.0
    %3783 = vmatprep.subr.mxu0 0.0
    %3784 = vmatpush1.msra.mxu0 0.0
    %3785 = vmatprep.subr.mxu0 0.0
    %3786 = vmatpush1.msra.mxu0 0.0
    %3787 = vmatprep.subr.mxu0 0.0
    %3788 = vmatpush1.msra.mxu0 0.0
    %3789 = vmatprep.subr.mxu0 0.0
    %3790 = vmatpush1.msra.mxu0 0.0
    %3791 = vmatprep.subr.mxu0 0.0
    %3792 = vmatpush1.msra.mxu0 0.0
    %3793 = vmatprep.subr.mxu0 %v3739
    %3794 = vmatpush1.msra.mxu0 %v3738
    %3795 = vmatprep.subr.mxu0 %v3735
    %3796 = vmatpush1.msra.mxu0 %v3734
    %3797 = vmatprep.subr.mxu0 %v3731
    %3798 = vmatpush1.msra.mxu0 %v3730
    %3799 = vmatprep.subr.mxu0 %v3727
    %3800 = vmatpush1.msra.mxu0 %v3726
    %3801 = vmatprep.subr.mxu0 0.0
    %3802 = vmatpush2.msra.mxu0 0.0
    %3803 = vmatprep.subr.mxu0 0.0
    %3804 = vmatpush2.msra.mxu0 0.0
    %3805 = vmatprep.subr.mxu0 0.0
    %3806 = vmatpush2.msra.mxu0 0.0
    %3807 = vmatprep.subr.mxu0 0.0
    %3808 = vmatpush2.msra.mxu0 0.0
    %3809 = vmatprep.subr.mxu0 0.0
    %3810 = vmatpush2.msra.mxu0 0.0
    %3811 = vmatprep.subr.mxu0 0.0
    %3812 = vmatpush2.msra.mxu0 0.0
    %3813 = vmatprep.subr.mxu0 0.0
    %3814 = vmatpush2.msra.mxu0 0.0
    %3815 = vmatprep.subr.mxu0 0.0
    %3816 = vmatpush2.msra.mxu0 0.0
    %3817 = vmatprep.subr.mxu0 0.0
    %3818 = vmatpush2.msra.mxu0 0.0
    %3819 = vmatprep.subr.mxu0 0.0
    %3820 = vmatpush2.msra.mxu0 0.0
    %3821 = vmatprep.subr.mxu0 0.0
    %3822 = vmatpush2.msra.mxu0 0.0
    %3823 = vmatprep.subr.mxu0 0.0
    %3824 = vmatpush2.msra.mxu0 0.0
    %3825 = vmatprep.subr.mxu0 0.0
    %3826 = vmatpush2.msra.mxu0 0.0
    %3827 = vmatprep.subr.mxu0 0.0
    %3828 = vmatpush2.msra.mxu0 0.0
    %3829 = vmatprep.subr.mxu0 0.0
    %3830 = vmatpush2.msra.mxu0 0.0
    %3831 = vmatprep.subr.mxu0 0.0
    %3832 = vmatpush2.msra.mxu0 0.0
    %3833 = vmatprep.mubr.f32.mxu0 0.0
    %3834 = vmatmul.mubr.f32.gmra.mxu0 %v3767
    %v3835 = vpop.f32.mrf.mxu0
    %v3836 = vadd.f32 %v3748, %v3835
    %v3837 = vpop.f32.mrf.mxu0
    %v3838 = vadd.f32 %v3752, %v3837
    %3839 = vdwg.mxu0
    %3840 = vmatprep.subr.mxu0 0.0
    %3841 = vmatpush1.msra.mxu0 0.0
    %3842 = vmatprep.subr.mxu0 0.0
    %3843 = vmatpush1.msra.mxu0 0.0
    %3844 = vmatprep.subr.mxu0 0.0
    %3845 = vmatpush1.msra.mxu0 0.0
    %3846 = vmatprep.subr.mxu0 0.0
    %3847 = vmatpush1.msra.mxu0 0.0
    %3848 = vmatprep.subr.mxu0 0.0
    %3849 = vmatpush1.msra.mxu0 0.0
    %3850 = vmatprep.subr.mxu0 0.0
    %3851 = vmatpush1.msra.mxu0 0.0
    %3852 = vmatprep.subr.mxu0 0.0
    %3853 = vmatpush1.msra.mxu0 0.0
    %3854 = vmatprep.subr.mxu0 0.0
    %3855 = vmatpush1.msra.mxu0 0.0
    %3856 = vmatprep.subr.mxu0 0.0
    %3857 = vmatpush1.msra.mxu0 0.0
    %3858 = vmatprep.subr.mxu0 0.0
    %3859 = vmatpush1.msra.mxu0 0.0
    %3860 = vmatprep.subr.mxu0 0.0
    %3861 = vmatpush1.msra.mxu0 0.0
    %3862 = vmatprep.subr.mxu0 0.0
    %3863 = vmatpush1.msra.mxu0 0.0
    %3864 = vmatprep.subr.mxu0 %v3741
    %3865 = vmatpush1.msra.mxu0 %v3740
    %3866 = vmatprep.subr.mxu0 %v3737
    %3867 = vmatpush1.msra.mxu0 %v3736
    %3868 = vmatprep.subr.mxu0 %v3733
    %3869 = vmatpush1.msra.mxu0 %v3732
    %3870 = vmatprep.subr.mxu0 %v3729
    %3871 = vmatpush1.msra.mxu0 %v3728
    %3872 = vmatprep.subr.mxu0 0.0
    %3873 = vmatpush2.msra.mxu0 0.0
    %3874 = vmatprep.subr.mxu0 0.0
    %3875 = vmatpush2.msra.mxu0 0.0
    %3876 = vmatprep.subr.mxu0 0.0
    %3877 = vmatpush2.msra.mxu0 0.0
    %3878 = vmatprep.subr.mxu0 0.0
    %3879 = vmatpush2.msra.mxu0 0.0
    %3880 = vmatprep.subr.mxu0 0.0
    %3881 = vmatpush2.msra.mxu0 0.0
    %3882 = vmatprep.subr.mxu0 0.0
    %3883 = vmatpush2.msra.mxu0 0.0
    %3884 = vmatprep.subr.mxu0 0.0
    %3885 = vmatpush2.msra.mxu0 0.0
    %3886 = vmatprep.subr.mxu0 0.0
    %3887 = vmatpush2.msra.mxu0 0.0
    %3888 = vmatprep.subr.mxu0 0.0
    %3889 = vmatpush2.msra.mxu0 0.0
    %3890 = vmatprep.subr.mxu0 0.0
    %3891 = vmatpush2.msra.mxu0 0.0
    %3892 = vmatprep.subr.mxu0 0.0
    %3893 = vmatpush2.msra.mxu0 0.0
    %3894 = vmatprep.subr.mxu0 0.0
    %3895 = vmatpush2.msra.mxu0 0.0
    %3896 = vmatprep.subr.mxu0 0.0
    %3897 = vmatpush2.msra.mxu0 0.0
    %3898 = vmatprep.subr.mxu0 0.0
    %3899 = vmatpush2.msra.mxu0 0.0
    %3900 = vmatprep.subr.mxu0 0.0
    %3901 = vmatpush2.msra.mxu0 0.0
    %3902 = vmatprep.subr.mxu0 0.0
    %3903 = vmatpush2.msra.mxu0 0.0
    %3904 = vmatprep.mubr.f32.mxu0 0.0
    %3905 = vmatmul.mubr.f32.gmra.mxu0 %v3767
    %v3906 = vpop.f32.mrf.mxu0
    %v3907 = vadd.f32 %v3756, %v3906
    %v3908 = vpop.f32.mrf.mxu0
    %v3909 = vadd.f32 %v3760, %v3908
    %3910 = vdwg.mxu0
    %v3912 = vcombine.high %v3907, %v3907
    %v3914 = vunpack.c.l.s4 1966171168
    %v3915 = vunpack.c.0.s8 %v3914
    %v3916 = vlaneseq
    %v3917 = vshrl.u32 %v3916, 7
    %v3918 = vsub.s32 %v3915, %v3917
    %v3919 = vrot.slane %v3907, %v3918
    %v3921 = vunpack.c.l.s4 1966171168
    %v3922 = vunpack.c.0.s8 %v3921
    %v3923 = vlaneseq
    %v3924 = vshrl.u32 %v3923, 7
    %v3925 = vsub.s32 %v3922, %v3924
    %v3926 = vrot.slane %v3912, %v3925
    %v3927 = vcombine.high %v3919, %v3919
    %v3928 = vcombine.high %v3926, %v3926
    %v3930 = vunpack.c.l.s4 1966171168
    %v3931 = vunpack.c.0.s8 %v3930
    %v3932 = vlaneseq
    %v3933 = vshrl.u32 %v3932, 7
    %v3934 = vsub.s32 %v3931, %v3933
    %v3935 = vrot.slane %v3919, %v3934
    %v3937 = vunpack.c.l.s4 1966171168
    %v3938 = vunpack.c.0.s8 %v3937
    %v3939 = vlaneseq
    %v3940 = vshrl.u32 %v3939, 7
    %v3941 = vsub.s32 %v3938, %v3940
    %v3942 = vrot.slane %v3926, %v3941
    %v3944 = vunpack.c.l.s4 1966171168
    %v3945 = vunpack.c.0.s8 %v3944
    %v3946 = vlaneseq
    %v3947 = vshrl.u32 %v3946, 7
    %v3948 = vsub.s32 %v3945, %v3947
    %v3949 = vrot.slane %v3927, %v3948
    %v3951 = vunpack.c.l.s4 1966171168
    %v3952 = vunpack.c.0.s8 %v3951
    %v3953 = vlaneseq
    %v3954 = vshrl.u32 %v3953, 7
    %v3955 = vsub.s32 %v3952, %v3954
    %v3956 = vrot.slane %v3928, %v3955
    %v3957 = vcombine.high %v3935, %v3935
    %v3958 = vcombine.high %v3942, %v3942
    %v3959 = vcombine.high %v3949, %v3949
    %v3960 = vcombine.high %v3956, %v3956
    %v3961 = vlaneseq
    %v3962 = vshrl.u32 %v3961, 7
    %v3963 = vsub.s32 0, %v3962
    %v3964 = vrot.slane %v3935, %v3963
    %v3965 = vlaneseq
    %v3966 = vshrl.u32 %v3965, 7
    %v3967 = vsub.s32 0, %v3966
    %v3968 = vrot.slane %v3949, %v3967
    %v3969 = vlaneseq
    %v3970 = vshrl.u32 %v3969, 7
    %v3971 = vsub.s32 0, %v3970
    %v3972 = vrot.slane %v3957, %v3971
    %v3973 = vlaneseq
    %v3974 = vshrl.u32 %v3973, 7
    %v3975 = vsub.s32 0, %v3974
    %v3976 = vrot.slane %v3959, %v3975
    %v3977 = vlaneseq
    %v3978 = vshrl.u32 %v3977, 7
    %v3979 = vsub.s32 0, %v3978
    %v3980 = vrot.slane %v3942, %v3979
    %v3981 = vlaneseq
    %v3982 = vshrl.u32 %v3981, 7
    %v3983 = vsub.s32 0, %v3982
    %v3984 = vrot.slane %v3956, %v3983
    %v3985 = vlaneseq
    %v3986 = vshrl.u32 %v3985, 7
    %v3987 = vsub.s32 0, %v3986
    %v3988 = vrot.slane %v3958, %v3987
    %v3989 = vlaneseq
    %v3990 = vshrl.u32 %v3989, 7
    %v3991 = vsub.s32 0, %v3990
    %v3992 = vrot.slane %v3960, %v3991
    %v4001 = vadd.f32 %v3836, %v3964
    %v4002 = vadd.f32 %v3836, %v3968
    %v4003 = vadd.f32 %v3836, %v3972
    %v4004 = vadd.f32 %v3836, %v3976
    %v4005 = vadd.f32 %v3836, %v3980
    %v4006 = vadd.f32 %v3836, %v3984
    %v4007 = vadd.f32 %v3836, %v3988
    %v4008 = vadd.f32 %v3836, %v3992
    %vm4009 = vcmp.ge.f32.partialorder %v4001, 0.0
    %vm4010 = vcmp.ge.f32.partialorder %v4002, 0.0
    %vm4011 = vcmp.ge.f32.partialorder %v4003, 0.0
    %vm4012 = vcmp.ge.f32.partialorder %v4004, 0.0
    %vm4013 = vcmp.ge.f32.partialorder %v4005, 0.0
    %vm4014 = vcmp.ge.f32.partialorder %v4006, 0.0
    %vm4015 = vcmp.ge.f32.partialorder %v4007, 0.0
    %vm4016 = vcmp.ge.f32.partialorder %v4008, 0.0
    %v4017 = vmul.f32 %v4001, 0.2
    %v4018 = vmul.f32 %v4002, 0.2
    %v4019 = vmul.f32 %v4003, 0.2
    %v4020 = vmul.f32 %v4004, 0.2
    %v4021 = vmul.f32 %v4005, 0.2
    %v4022 = vmul.f32 %v4006, 0.2
    %v4023 = vmul.f32 %v4007, 0.2
    %v4024 = vmul.f32 %v4008, 0.2
    %v4025 = vsel %vm4009, %v4001, %v4017
    %v4026 = vsel %vm4010, %v4002, %v4018
    %v4027 = vsel %vm4011, %v4003, %v4019
    %v4028 = vsel %vm4012, %v4004, %v4020
    %v4029 = vsel %vm4013, %v4005, %v4021
    %v4030 = vsel %vm4014, %v4006, %v4022
    %v4031 = vsel %vm4015, %v4007, %v4023
    %v4032 = vsel %vm4016, %v4008, %v4024
    %v4033 = vlaneseq
    %v4034 = vshrl.u32 %v4033, 7
    %v4035 = vsub.s32 0, %v4034
    %v4036 = vrot.slane %v3743, %v4035
    %v4037 = vmul.f32 %v4025, %v4036
    %v4038 = vmul.f32 %v4026, %v4036
    %v4039 = vmul.f32 %v4027, %v4036
    %v4040 = vmul.f32 %v4028, %v4036
    %v4041 = vmul.f32 %v4029, %v4036
    %v4042 = vmul.f32 %v4030, %v4036
    %v4043 = vmul.f32 %v4031, %v4036
    %v4044 = vmul.f32 %v4032, %v4036
    %v4045 = vsel %vm2411, %v4037, 0.0
    %4046 = vadd.xlane.f32.xlu0 %v4045
    %v4047 = vpop.xlane.xlu0 %4046
    %v4048 = vsel %vm2411, %v4038, 0.0
    %4049 = vadd.xlane.f32.xlu0 %v4048
    %v4050 = vpop.xlane.xlu0 %4049
    %v4051 = vsel %vm2411, %v4039, 0.0
    %4052 = vadd.xlane.f32.xlu0 %v4051
    %v4053 = vpop.xlane.xlu0 %4052
    %v4054 = vsel %vm2411, %v4040, 0.0
    %4055 = vadd.xlane.f32.xlu0 %v4054
    %v4056 = vpop.xlane.xlu0 %4055
    %v4057 = vsel %vm2411, %v4041, 0.0
    %4058 = vadd.xlane.f32.xlu0 %v4057
    %v4059 = vpop.xlane.xlu0 %4058
    %v4060 = vsel %vm2411, %v4042, 0.0
    %4061 = vadd.xlane.f32.xlu0 %v4060
    %v4062 = vpop.xlane.xlu0 %4061
    %v4063 = vsel %vm2411, %v4043, 0.0
    %4064 = vadd.xlane.f32.xlu0 %v4063
    %v4065 = vpop.xlane.xlu0 %4064
    %v4066 = vsel %vm2411, %v4044, 0.0
    %4067 = vadd.xlane.f32.xlu0 %v4066
    %v4068 = vpop.xlane.xlu0 %4067
    %v4077 = vlaneseq
    %v4078 = vand.u32 %v4077, 127
    %v4079 = vlaneseq
    %v4080 = vshrl.u32 %v4079, 7
    %v4081 = vsub.s32 %v4078, %v4080
    %v4082 = vrot.slane %v4047, %v4081
    %v4083 = vlaneseq
    %v4084 = vshrl.u32 %v4083, 7
    %v4085 = vsub.s32 %v4078, %v4084
    %v4086 = vrot.slane %v4050, %v4085
    %v4087 = vlaneseq
    %v4088 = vshrl.u32 %v4087, 7
    %v4089 = vsub.s32 %v4078, %v4088
    %v4090 = vrot.slane %v4053, %v4089
    %v4091 = vlaneseq
    %v4092 = vshrl.u32 %v4091, 7
    %v4093 = vsub.s32 %v4078, %v4092
    %v4094 = vrot.slane %v4056, %v4093
    %v4095 = vlaneseq
    %v4096 = vshrl.u32 %v4095, 7
    %v4097 = vsub.s32 %v4078, %v4096
    %v4098 = vrot.slane %v4059, %v4097
    %v4099 = vlaneseq
    %v4100 = vshrl.u32 %v4099, 7
    %v4101 = vsub.s32 %v4078, %v4100
    %v4102 = vrot.slane %v4062, %v4101
    %v4103 = vlaneseq
    %v4104 = vshrl.u32 %v4103, 7
    %v4105 = vsub.s32 %v4078, %v4104
    %v4106 = vrot.slane %v4065, %v4105
    %v4107 = vlaneseq
    %v4108 = vshrl.u32 %v4107, 7
    %v4109 = vsub.s32 %v4078, %v4108
    %v4110 = vrot.slane %v4068, %v4109
    %v4111 = vsel %vm3513, %v4086, %v4082
    %v4112 = vsel %vm3515, %v4090, %v4111
    %v4113 = vsel %vm3517, %v4094, %v4112
    %v4114 = vsel %vm3519, %v4098, %v4113
    %v4115 = vsel %vm3521, %v4102, %v4114
    %v4116 = vsel %vm3523, %v4106, %v4115
    %v4117 = vsel %vm3525, %v4110, %v4116
    %v4119 = vsel %vm3725, %v4117, -1e+30
    %vm4120 = vcmask 64512
    %v4121 = vsel %vm4120, %v4119, -inf
    %4122 = vmax.xlane.f32.xlu0 %v4121
    %v4123 = vpop.xlane.xlu0 %4122
    %v4124 = vsub.f32 %v4119, %v4123
    %v4125 = vmul.f32 %v4124, 1.442695
    %v4126 = vpow.pop %v4125
    %v4127 = vsel %vm3725, %v4126, 0.0
    %v4128 = vsel %vm4120, %v4127, 0.0
    %4129 = vadd.xlane.f32.xlu0 %v4128
    %v4130 = vpop.xlane.xlu0 %4129
    %v4131 = vmax.f32 %v4130, 1e-20
    %v4132 = vrcp.pop %v4131
    %v4133 = vmul.f32 %v4127, %v4132
    %v4135 = vsel %vm4120, %v4133, 0
    %4137 = vmatprep.subr.mxu0 0.0
    %4138 = vmatpush1.msra.mxu0 0.0
    %4139 = vmatprep.subr.mxu0 0.0
    %4140 = vmatpush1.msra.mxu0 0.0
    %4141 = vmatprep.subr.mxu0 0.0
    %4142 = vmatpush1.msra.mxu0 0.0
    %4143 = vmatprep.subr.mxu0 0.0
    %4144 = vmatpush1.msra.mxu0 0.0
    %4145 = vmatprep.subr.mxu0 0.0
    %4146 = vmatpush1.msra.mxu0 0.0
    %4147 = vmatprep.subr.mxu0 0.0
    %4148 = vmatpush1.msra.mxu0 0.0
    %4149 = vmatprep.subr.mxu0 0.0
    %4150 = vmatpush1.msra.mxu0 0.0
    %4151 = vmatprep.subr.mxu0 0.0
    %4152 = vmatpush1.msra.mxu0 0.0
    %4153 = vmatprep.subr.mxu0 0.0
    %4154 = vmatpush1.msra.mxu0 0.0
    %4155 = vmatprep.subr.mxu0 0.0
    %4156 = vmatpush1.msra.mxu0 0.0
    %4157 = vmatprep.subr.mxu0 0.0
    %4158 = vmatpush1.msra.mxu0 0.0
    %4159 = vmatprep.subr.mxu0 0.0
    %4160 = vmatpush1.msra.mxu0 0.0
    %4161 = vmatprep.subr.mxu0 0.0
    %4162 = vmatpush1.msra.mxu0 0.0
    %4163 = vmatprep.subr.mxu0 0.0
    %4164 = vmatpush1.msra.mxu0 0.0
    %4165 = vmatprep.subr.mxu0 0.0
    %4166 = vmatpush1.msra.mxu0 0.0
    %4167 = vmatprep.subr.mxu0 0.0
    %4168 = vmatpush1.msra.mxu0 %v3836
    %4169 = vmatprep.subr.mxu0 0.0
    %4170 = vmatpush2.msra.mxu0 0.0
    %4171 = vmatprep.subr.mxu0 0.0
    %4172 = vmatpush2.msra.mxu0 0.0
    %4173 = vmatprep.subr.mxu0 0.0
    %4174 = vmatpush2.msra.mxu0 0.0
    %4175 = vmatprep.subr.mxu0 0.0
    %4176 = vmatpush2.msra.mxu0 0.0
    %4177 = vmatprep.subr.mxu0 0.0
    %4178 = vmatpush2.msra.mxu0 0.0
    %4179 = vmatprep.subr.mxu0 0.0
    %4180 = vmatpush2.msra.mxu0 0.0
    %4181 = vmatprep.subr.mxu0 0.0
    %4182 = vmatpush2.msra.mxu0 0.0
    %4183 = vmatprep.subr.mxu0 0.0
    %4184 = vmatpush2.msra.mxu0 0.0
    %4185 = vmatprep.subr.mxu0 0.0
    %4186 = vmatpush2.msra.mxu0 0.0
    %4187 = vmatprep.subr.mxu0 0.0
    %4188 = vmatpush2.msra.mxu0 0.0
    %4189 = vmatprep.subr.mxu0 0.0
    %4190 = vmatpush2.msra.mxu0 0.0
    %4191 = vmatprep.subr.mxu0 0.0
    %4192 = vmatpush2.msra.mxu0 0.0
    %4193 = vmatprep.subr.mxu0 0.0
    %4194 = vmatpush2.msra.mxu0 0.0
    %4195 = vmatprep.subr.mxu0 0.0
    %4196 = vmatpush2.msra.mxu0 0.0
    %4197 = vmatprep.subr.mxu0 0.0
    %4198 = vmatpush2.msra.mxu0 0.0
    %4199 = vmatprep.subr.mxu0 0.0
    %4200 = vmatpush2.msra.mxu0 0.0
    %4201 = vmatprep.mubr.f32.mxu0 0.0
    %4202 = vmatmul.mubr.f32.gmra.mxu0 %v4135
    %v4203 = vpop.f32.mrf.mxu0
    %v4204 = vadd.f32 0.0, %v4203
    %v4205 = vpop.f32.mrf.mxu0
    %4206 = vdwg.mxu0
    %v4207 = vlaneseq
    %v4208 = vshrl.u32 %v4207, 7
    %v4209 = vsub.s32 1, %v4208
    %v4210 = vrot.slane %v3743, %v4209
    %4212 = vrot.lane.b32.xlu0 %v4210, 64
    %v4213 = vpop.permute.xlu0 %4212
    %v4215 = vmul.f32 %v4025, %v4213
    %v4216 = vmul.f32 %v4026, %v4213
    %v4217 = vmul.f32 %v4027, %v4213
    %v4218 = vmul.f32 %v4028, %v4213
    %v4219 = vmul.f32 %v4029, %v4213
    %v4220 = vmul.f32 %v4030, %v4213
    %v4221 = vmul.f32 %v4031, %v4213
    %v4222 = vmul.f32 %v4032, %v4213
    %4231 = vrot.lane.b32.xlu0 %v4215, 64
    %v4232 = vpop.permute.xlu0 %4231
    %4233 = vrot.lane.b32.xlu0 %v4216, 64
    %v4234 = vpop.permute.xlu0 %4233
    %4235 = vrot.lane.b32.xlu0 %v4217, 64
    %v4236 = vpop.permute.xlu0 %4235
    %4237 = vrot.lane.b32.xlu0 %v4218, 64
    %v4238 = vpop.permute.xlu0 %4237
    %4239 = vrot.lane.b32.xlu0 %v4219, 64
    %v4240 = vpop.permute.xlu0 %4239
    %4241 = vrot.lane.b32.xlu0 %v4220, 64
    %v4242 = vpop.permute.xlu0 %4241
    %4243 = vrot.lane.b32.xlu0 %v4221, 64
    %v4244 = vpop.permute.xlu0 %4243
    %4245 = vrot.lane.b32.xlu0 %v4222, 64
    %v4246 = vpop.permute.xlu0 %4245
    %v4255 = vsel %vm2411, %v4232, 0.0
    %4256 = vadd.xlane.f32.xlu0 %v4255
    %v4257 = vpop.xlane.xlu0 %4256
    %v4258 = vsel %vm2411, %v4234, 0.0
    %4259 = vadd.xlane.f32.xlu0 %v4258
    %v4260 = vpop.xlane.xlu0 %4259
    %v4261 = vsel %vm2411, %v4236, 0.0
    %4262 = vadd.xlane.f32.xlu0 %v4261
    %v4263 = vpop.xlane.xlu0 %4262
    %v4264 = vsel %vm2411, %v4238, 0.0
    %4265 = vadd.xlane.f32.xlu0 %v4264
    %v4266 = vpop.xlane.xlu0 %4265
    %v4267 = vsel %vm2411, %v4240, 0.0
    %4268 = vadd.xlane.f32.xlu0 %v4267
    %v4269 = vpop.xlane.xlu0 %4268
    %v4270 = vsel %vm2411, %v4242, 0.0
    %4271 = vadd.xlane.f32.xlu0 %v4270
    %v4272 = vpop.xlane.xlu0 %4271
    %v4273 = vsel %vm2411, %v4244, 0.0
    %4274 = vadd.xlane.f32.xlu0 %v4273
    %v4275 = vpop.xlane.xlu0 %4274
    %v4276 = vsel %vm2411, %v4246, 0.0
    %4277 = vadd.xlane.f32.xlu0 %v4276
    %v4278 = vpop.xlane.xlu0 %4277
    %v4287 = vlaneseq
    %v4288 = vshrl.u32 %v4287, 7
    %v4289 = vsub.s32 %v4078, %v4288
    %v4290 = vrot.slane %v4257, %v4289
    %v4291 = vlaneseq
    %v4292 = vshrl.u32 %v4291, 7
    %v4293 = vsub.s32 %v4078, %v4292
    %v4294 = vrot.slane %v4260, %v4293
    %v4295 = vlaneseq
    %v4296 = vshrl.u32 %v4295, 7
    %v4297 = vsub.s32 %v4078, %v4296
    %v4298 = vrot.slane %v4263, %v4297
    %v4299 = vlaneseq
    %v4300 = vshrl.u32 %v4299, 7
    %v4301 = vsub.s32 %v4078, %v4300
    %v4302 = vrot.slane %v4266, %v4301
    %v4303 = vlaneseq
    %v4304 = vshrl.u32 %v4303, 7
    %v4305 = vsub.s32 %v4078, %v4304
    %v4306 = vrot.slane %v4269, %v4305
    %v4307 = vlaneseq
    %v4308 = vshrl.u32 %v4307, 7
    %v4309 = vsub.s32 %v4078, %v4308
    %v4310 = vrot.slane %v4272, %v4309
    %v4311 = vlaneseq
    %v4312 = vshrl.u32 %v4311, 7
    %v4313 = vsub.s32 %v4078, %v4312
    %v4314 = vrot.slane %v4275, %v4313
    %v4315 = vlaneseq
    %v4316 = vshrl.u32 %v4315, 7
    %v4317 = vsub.s32 %v4078, %v4316
    %v4318 = vrot.slane %v4278, %v4317
    %v4319 = vsel %vm3513, %v4294, %v4290
    %v4320 = vsel %vm3515, %v4298, %v4319
    %v4321 = vsel %vm3517, %v4302, %v4320
    %v4322 = vsel %vm3519, %v4306, %v4321
    %v4323 = vsel %vm3521, %v4310, %v4322
    %v4324 = vsel %vm3523, %v4314, %v4323
    %v4325 = vsel %vm3525, %v4318, %v4324
    %v4327 = vsel %vm3725, %v4325, -1e+30
    %v4328 = vsel %vm4120, %v4327, -inf
    %4329 = vmax.xlane.f32.xlu0 %v4328
    %v4330 = vpop.xlane.xlu0 %4329
    %v4331 = vsub.f32 %v4327, %v4330
    %v4332 = vmul.f32 %v4331, 1.442695
    %v4333 = vpow.pop %v4332
    %v4334 = vsel %vm3725, %v4333, 0.0
    %v4335 = vsel %vm4120, %v4334, 0.0
    %4336 = vadd.xlane.f32.xlu0 %v4335
    %v4337 = vpop.xlane.xlu0 %4336
    %v4338 = vmax.f32 %v4337, 1e-20
    %v4339 = vrcp.pop %v4338
    %v4340 = vmul.f32 %v4334, %v4339
    %4342 = vrot.lane.b32.xlu0 %v3836, 64
    %v4343 = vpop.permute.xlu0 %4342
    %v4346 = vsel %vm4120, %v4340, 0
    %4348 = vmatprep.subr.mxu0 0.0
    %4349 = vmatpush1.msra.mxu0 0.0
    %4350 = vmatprep.subr.mxu0 0.0
    %4351 = vmatpush1.msra.mxu0 0.0
    %4352 = vmatprep.subr.mxu0 0.0
    %4353 = vmatpush1.msra.mxu0 0.0
    %4354 = vmatprep.subr.mxu0 0.0
    %4355 = vmatpush1.msra.mxu0 0.0
    %4356 = vmatprep.subr.mxu0 0.0
    %4357 = vmatpush1.msra.mxu0 0.0
    %4358 = vmatprep.subr.mxu0 0.0
    %4359 = vmatpush1.msra.mxu0 0.0
    %4360 = vmatprep.subr.mxu0 0.0
    %4361 = vmatpush1.msra.mxu0 0.0
    %4362 = vmatprep.subr.mxu0 0.0
    %4363 = vmatpush1.msra.mxu0 0.0
    %4364 = vmatprep.subr.mxu0 0.0
    %4365 = vmatpush1.msra.mxu0 0.0
    %4366 = vmatprep.subr.mxu0 0.0
    %4367 = vmatpush1.msra.mxu0 0.0
    %4368 = vmatprep.subr.mxu0 0.0
    %4369 = vmatpush1.msra.mxu0 0.0
    %4370 = vmatprep.subr.mxu0 0.0
    %4371 = vmatpush1.msra.mxu0 0.0
    %4372 = vmatprep.subr.mxu0 0.0
    %4373 = vmatpush1.msra.mxu0 0.0
    %4374 = vmatprep.subr.mxu0 0.0
    %4375 = vmatpush1.msra.mxu0 0.0
    %4376 = vmatprep.subr.mxu0 0.0
    %4377 = vmatpush1.msra.mxu0 0.0
    %4378 = vmatprep.subr.mxu0 0.0
    %4379 = vmatpush1.msra.mxu0 %v4343
    %4380 = vmatprep.subr.mxu0 0.0
    %4381 = vmatpush2.msra.mxu0 0.0
    %4382 = vmatprep.subr.mxu0 0.0
    %4383 = vmatpush2.msra.mxu0 0.0
    %4384 = vmatprep.subr.mxu0 0.0
    %4385 = vmatpush2.msra.mxu0 0.0
    %4386 = vmatprep.subr.mxu0 0.0
    %4387 = vmatpush2.msra.mxu0 0.0
    %4388 = vmatprep.subr.mxu0 0.0
    %4389 = vmatpush2.msra.mxu0 0.0
    %4390 = vmatprep.subr.mxu0 0.0
    %4391 = vmatpush2.msra.mxu0 0.0
    %4392 = vmatprep.subr.mxu0 0.0
    %4393 = vmatpush2.msra.mxu0 0.0
    %4394 = vmatprep.subr.mxu0 0.0
    %4395 = vmatpush2.msra.mxu0 0.0
    %4396 = vmatprep.subr.mxu0 0.0
    %4397 = vmatpush2.msra.mxu0 0.0
    %4398 = vmatprep.subr.mxu0 0.0
    %4399 = vmatpush2.msra.mxu0 0.0
    %4400 = vmatprep.subr.mxu0 0.0
    %4401 = vmatpush2.msra.mxu0 0.0
    %4402 = vmatprep.subr.mxu0 0.0
    %4403 = vmatpush2.msra.mxu0 0.0
    %4404 = vmatprep.subr.mxu0 0.0
    %4405 = vmatpush2.msra.mxu0 0.0
    %4406 = vmatprep.subr.mxu0 0.0
    %4407 = vmatpush2.msra.mxu0 0.0
    %4408 = vmatprep.subr.mxu0 0.0
    %4409 = vmatpush2.msra.mxu0 0.0
    %4410 = vmatprep.subr.mxu0 0.0
    %4411 = vmatpush2.msra.mxu0 0.0
    %4412 = vmatprep.mubr.f32.mxu0 0.0
    %4413 = vmatmul.mubr.f32.gmra.mxu0 %v4346
    %v4414 = vpop.f32.mrf.mxu0
    %v4415 = vadd.f32 0.0, %v4414
    %v4416 = vpop.f32.mrf.mxu0
    %4417 = vdwg.mxu0
    %v4418 = vmax.f32 %v4204, %v4415
    %v4420 = vcombine.high %v3909, %v3909
    %v4422 = vunpack.c.l.s4 1966171168
    %v4423 = vunpack.c.0.s8 %v4422
    %v4424 = vlaneseq
    %v4425 = vshrl.u32 %v4424, 7
    %v4426 = vsub.s32 %v4423, %v4425
    %v4427 = vrot.slane %v3909, %v4426
    %v4429 = vunpack.c.l.s4 1966171168
    %v4430 = vunpack.c.0.s8 %v4429
    %v4431 = vlaneseq
    %v4432 = vshrl.u32 %v4431, 7
    %v4433 = vsub.s32 %v4430, %v4432
    %v4434 = vrot.slane %v4420, %v4433
    %v4435 = vcombine.high %v4427, %v4427
    %v4436 = vcombine.high %v4434, %v4434
    %v4438 = vunpack.c.l.s4 1966171168
    %v4439 = vunpack.c.0.s8 %v4438
    %v4440 = vlaneseq
    %v4441 = vshrl.u32 %v4440, 7
    %v4442 = vsub.s32 %v4439, %v4441
    %v4443 = vrot.slane %v4427, %v4442
    %v4445 = vunpack.c.l.s4 1966171168
    %v4446 = vunpack.c.0.s8 %v4445
    %v4447 = vlaneseq
    %v4448 = vshrl.u32 %v4447, 7
    %v4449 = vsub.s32 %v4446, %v4448
    %v4450 = vrot.slane %v4434, %v4449
    %v4452 = vunpack.c.l.s4 1966171168
    %v4453 = vunpack.c.0.s8 %v4452
    %v4454 = vlaneseq
    %v4455 = vshrl.u32 %v4454, 7
    %v4456 = vsub.s32 %v4453, %v4455
    %v4457 = vrot.slane %v4435, %v4456
    %v4459 = vunpack.c.l.s4 1966171168
    %v4460 = vunpack.c.0.s8 %v4459
    %v4461 = vlaneseq
    %v4462 = vshrl.u32 %v4461, 7
    %v4463 = vsub.s32 %v4460, %v4462
    %v4464 = vrot.slane %v4436, %v4463
    %v4465 = vcombine.high %v4443, %v4443
    %v4466 = vcombine.high %v4450, %v4450
    %v4467 = vcombine.high %v4457, %v4457
    %v4468 = vcombine.high %v4464, %v4464
    %v4469 = vlaneseq
    %v4470 = vshrl.u32 %v4469, 7
    %v4471 = vsub.s32 0, %v4470
    %v4472 = vrot.slane %v4443, %v4471
    %v4473 = vlaneseq
    %v4474 = vshrl.u32 %v4473, 7
    %v4475 = vsub.s32 0, %v4474
    %v4476 = vrot.slane %v4457, %v4475
    %v4477 = vlaneseq
    %v4478 = vshrl.u32 %v4477, 7
    %v4479 = vsub.s32 0, %v4478
    %v4480 = vrot.slane %v4465, %v4479
    %v4481 = vlaneseq
    %v4482 = vshrl.u32 %v4481, 7
    %v4483 = vsub.s32 0, %v4482
    %v4484 = vrot.slane %v4467, %v4483
    %v4485 = vlaneseq
    %v4486 = vshrl.u32 %v4485, 7
    %v4487 = vsub.s32 0, %v4486
    %v4488 = vrot.slane %v4450, %v4487
    %v4489 = vlaneseq
    %v4490 = vshrl.u32 %v4489, 7
    %v4491 = vsub.s32 0, %v4490
    %v4492 = vrot.slane %v4464, %v4491
    %v4493 = vlaneseq
    %v4494 = vshrl.u32 %v4493, 7
    %v4495 = vsub.s32 0, %v4494
    %v4496 = vrot.slane %v4466, %v4495
    %v4497 = vlaneseq
    %v4498 = vshrl.u32 %v4497, 7
    %v4499 = vsub.s32 0, %v4498
    %v4500 = vrot.slane %v4468, %v4499
    %v4509 = vadd.f32 %v3838, %v4472
    %v4510 = vadd.f32 %v3838, %v4476
    %v4511 = vadd.f32 %v3838, %v4480
    %v4512 = vadd.f32 %v3838, %v4484
    %v4513 = vadd.f32 %v3838, %v4488
    %v4514 = vadd.f32 %v3838, %v4492
    %v4515 = vadd.f32 %v3838, %v4496
    %v4516 = vadd.f32 %v3838, %v4500
    %vm4517 = vcmp.ge.f32.partialorder %v4509, 0.0
    %vm4518 = vcmp.ge.f32.partialorder %v4510, 0.0
    %vm4519 = vcmp.ge.f32.partialorder %v4511, 0.0
    %vm4520 = vcmp.ge.f32.partialorder %v4512, 0.0
    %vm4521 = vcmp.ge.f32.partialorder %v4513, 0.0
    %vm4522 = vcmp.ge.f32.partialorder %v4514, 0.0
    %vm4523 = vcmp.ge.f32.partialorder %v4515, 0.0
    %vm4524 = vcmp.ge.f32.partialorder %v4516, 0.0
    %v4525 = vmul.f32 %v4509, 0.2
    %v4526 = vmul.f32 %v4510, 0.2
    %v4527 = vmul.f32 %v4511, 0.2
    %v4528 = vmul.f32 %v4512, 0.2
    %v4529 = vmul.f32 %v4513, 0.2
    %v4530 = vmul.f32 %v4514, 0.2
    %v4531 = vmul.f32 %v4515, 0.2
    %v4532 = vmul.f32 %v4516, 0.2
    %v4533 = vsel %vm4517, %v4509, %v4525
    %v4534 = vsel %vm4518, %v4510, %v4526
    %v4535 = vsel %vm4519, %v4511, %v4527
    %v4536 = vsel %vm4520, %v4512, %v4528
    %v4537 = vsel %vm4521, %v4513, %v4529
    %v4538 = vsel %vm4522, %v4514, %v4530
    %v4539 = vsel %vm4523, %v4515, %v4531
    %v4540 = vsel %vm4524, %v4516, %v4532
    %v4541 = vlaneseq
    %v4542 = vshrl.u32 %v4541, 7
    %v4543 = vsub.s32 2, %v4542
    %v4544 = vrot.slane %v3743, %v4543
    %v4545 = vmul.f32 %v4533, %v4544
    %v4546 = vmul.f32 %v4534, %v4544
    %v4547 = vmul.f32 %v4535, %v4544
    %v4548 = vmul.f32 %v4536, %v4544
    %v4549 = vmul.f32 %v4537, %v4544
    %v4550 = vmul.f32 %v4538, %v4544
    %v4551 = vmul.f32 %v4539, %v4544
    %v4552 = vmul.f32 %v4540, %v4544
    %v4553 = vsel %vm2411, %v4545, 0.0
    %4554 = vadd.xlane.f32.xlu0 %v4553
    %v4555 = vpop.xlane.xlu0 %4554
    %v4556 = vsel %vm2411, %v4546, 0.0
    %4557 = vadd.xlane.f32.xlu0 %v4556
    %v4558 = vpop.xlane.xlu0 %4557
    %v4559 = vsel %vm2411, %v4547, 0.0
    %4560 = vadd.xlane.f32.xlu0 %v4559
    %v4561 = vpop.xlane.xlu0 %4560
    %v4562 = vsel %vm2411, %v4548, 0.0
    %4563 = vadd.xlane.f32.xlu0 %v4562
    %v4564 = vpop.xlane.xlu0 %4563
    %v4565 = vsel %vm2411, %v4549, 0.0
    %4566 = vadd.xlane.f32.xlu0 %v4565
    %v4567 = vpop.xlane.xlu0 %4566
    %v4568 = vsel %vm2411, %v4550, 0.0
    %4569 = vadd.xlane.f32.xlu0 %v4568
    %v4570 = vpop.xlane.xlu0 %4569
    %v4571 = vsel %vm2411, %v4551, 0.0
    %4572 = vadd.xlane.f32.xlu0 %v4571
    %v4573 = vpop.xlane.xlu0 %4572
    %v4574 = vsel %vm2411, %v4552, 0.0
    %4575 = vadd.xlane.f32.xlu0 %v4574
    %v4576 = vpop.xlane.xlu0 %4575
    %v4585 = vlaneseq
    %v4586 = vshrl.u32 %v4585, 7
    %v4587 = vsub.s32 %v4078, %v4586
    %v4588 = vrot.slane %v4555, %v4587
    %v4589 = vlaneseq
    %v4590 = vshrl.u32 %v4589, 7
    %v4591 = vsub.s32 %v4078, %v4590
    %v4592 = vrot.slane %v4558, %v4591
    %v4593 = vlaneseq
    %v4594 = vshrl.u32 %v4593, 7
    %v4595 = vsub.s32 %v4078, %v4594
    %v4596 = vrot.slane %v4561, %v4595
    %v4597 = vlaneseq
    %v4598 = vshrl.u32 %v4597, 7
    %v4599 = vsub.s32 %v4078, %v4598
    %v4600 = vrot.slane %v4564, %v4599
    %v4601 = vlaneseq
    %v4602 = vshrl.u32 %v4601, 7
    %v4603 = vsub.s32 %v4078, %v4602
    %v4604 = vrot.slane %v4567, %v4603
    %v4605 = vlaneseq
    %v4606 = vshrl.u32 %v4605, 7
    %v4607 = vsub.s32 %v4078, %v4606
    %v4608 = vrot.slane %v4570, %v4607
    %v4609 = vlaneseq
    %v4610 = vshrl.u32 %v4609, 7
    %v4611 = vsub.s32 %v4078, %v4610
    %v4612 = vrot.slane %v4573, %v4611
    %v4613 = vlaneseq
    %v4614 = vshrl.u32 %v4613, 7
    %v4615 = vsub.s32 %v4078, %v4614
    %v4616 = vrot.slane %v4576, %v4615
    %v4617 = vsel %vm3513, %v4592, %v4588
    %v4618 = vsel %vm3515, %v4596, %v4617
    %v4619 = vsel %vm3517, %v4600, %v4618
    %v4620 = vsel %vm3519, %v4604, %v4619
    %v4621 = vsel %vm3521, %v4608, %v4620
    %v4622 = vsel %vm3523, %v4612, %v4621
    %v4623 = vsel %vm3525, %v4616, %v4622
    %v4625 = vsel %vm3725, %v4623, -1e+30
    %v4626 = vsel %vm4120, %v4625, -inf
    %4627 = vmax.xlane.f32.xlu0 %v4626
    %v4628 = vpop.xlane.xlu0 %4627
    %v4629 = vsub.f32 %v4625, %v4628
    %v4630 = vmul.f32 %v4629, 1.442695
    %v4631 = vpow.pop %v4630
    %v4632 = vsel %vm3725, %v4631, 0.0
    %v4633 = vsel %vm4120, %v4632, 0.0
    %4634 = vadd.xlane.f32.xlu0 %v4633
    %v4635 = vpop.xlane.xlu0 %4634
    %v4636 = vmax.f32 %v4635, 1e-20
    %v4637 = vrcp.pop %v4636
    %v4638 = vmul.f32 %v4632, %v4637
    %v4640 = vsel %vm4120, %v4638, 0
    %4642 = vmatprep.subr.mxu0 0.0
    %4643 = vmatpush1.msra.mxu0 0.0
    %4644 = vmatprep.subr.mxu0 0.0
    %4645 = vmatpush1.msra.mxu0 0.0
    %4646 = vmatprep.subr.mxu0 0.0
    %4647 = vmatpush1.msra.mxu0 0.0
    %4648 = vmatprep.subr.mxu0 0.0
    %4649 = vmatpush1.msra.mxu0 0.0
    %4650 = vmatprep.subr.mxu0 0.0
    %4651 = vmatpush1.msra.mxu0 0.0
    %4652 = vmatprep.subr.mxu0 0.0
    %4653 = vmatpush1.msra.mxu0 0.0
    %4654 = vmatprep.subr.mxu0 0.0
    %4655 = vmatpush1.msra.mxu0 0.0
    %4656 = vmatprep.subr.mxu0 0.0
    %4657 = vmatpush1.msra.mxu0 0.0
    %4658 = vmatprep.subr.mxu0 0.0
    %4659 = vmatpush1.msra.mxu0 0.0
    %4660 = vmatprep.subr.mxu0 0.0
    %4661 = vmatpush1.msra.mxu0 0.0
    %4662 = vmatprep.subr.mxu0 0.0
    %4663 = vmatpush1.msra.mxu0 0.0
    %4664 = vmatprep.subr.mxu0 0.0
    %4665 = vmatpush1.msra.mxu0 0.0
    %4666 = vmatprep.subr.mxu0 0.0
    %4667 = vmatpush1.msra.mxu0 0.0
    %4668 = vmatprep.subr.mxu0 0.0
    %4669 = vmatpush1.msra.mxu0 0.0
    %4670 = vmatprep.subr.mxu0 0.0
    %4671 = vmatpush1.msra.mxu0 0.0
    %4672 = vmatprep.subr.mxu0 0.0
    %4673 = vmatpush1.msra.mxu0 %v3838
    %4674 = vmatprep.subr.mxu0 0.0
    %4675 = vmatpush2.msra.mxu0 0.0
    %4676 = vmatprep.subr.mxu0 0.0
    %4677 = vmatpush2.msra.mxu0 0.0
    %4678 = vmatprep.subr.mxu0 0.0
    %4679 = vmatpush2.msra.mxu0 0.0
    %4680 = vmatprep.subr.mxu0 0.0
    %4681 = vmatpush2.msra.mxu0 0.0
    %4682 = vmatprep.subr.mxu0 0.0
    %4683 = vmatpush2.msra.mxu0 0.0
    %4684 = vmatprep.subr.mxu0 0.0
    %4685 = vmatpush2.msra.mxu0 0.0
    %4686 = vmatprep.subr.mxu0 0.0
    %4687 = vmatpush2.msra.mxu0 0.0
    %4688 = vmatprep.subr.mxu0 0.0
    %4689 = vmatpush2.msra.mxu0 0.0
    %4690 = vmatprep.subr.mxu0 0.0
    %4691 = vmatpush2.msra.mxu0 0.0
    %4692 = vmatprep.subr.mxu0 0.0
    %4693 = vmatpush2.msra.mxu0 0.0
    %4694 = vmatprep.subr.mxu0 0.0
    %4695 = vmatpush2.msra.mxu0 0.0
    %4696 = vmatprep.subr.mxu0 0.0
    %4697 = vmatpush2.msra.mxu0 0.0
    %4698 = vmatprep.subr.mxu0 0.0
    %4699 = vmatpush2.msra.mxu0 0.0
    %4700 = vmatprep.subr.mxu0 0.0
    %4701 = vmatpush2.msra.mxu0 0.0
    %4702 = vmatprep.subr.mxu0 0.0
    %4703 = vmatpush2.msra.mxu0 0.0
    %4704 = vmatprep.subr.mxu0 0.0
    %4705 = vmatpush2.msra.mxu0 0.0
    %4706 = vmatprep.mubr.f32.mxu0 0.0
    %4707 = vmatmul.mubr.f32.gmra.mxu0 %v4640
    %v4708 = vpop.f32.mrf.mxu0
    %v4709 = vadd.f32 0.0, %v4708
    %v4710 = vpop.f32.mrf.mxu0
    %4711 = vdwg.mxu0
    %v4712 = vmax.f32 %v4418, %v4709
    %v4713 = vlaneseq
    %v4714 = vshrl.u32 %v4713, 7
    %v4715 = vsub.s32 3, %v4714
    %v4716 = vrot.slane %v3743, %v4715
    %4718 = vrot.lane.b32.xlu0 %v4716, 64
    %v4719 = vpop.permute.xlu0 %4718
    %v4721 = vmul.f32 %v4533, %v4719
    %v4722 = vmul.f32 %v4534, %v4719
    %v4723 = vmul.f32 %v4535, %v4719
    %v4724 = vmul.f32 %v4536, %v4719
    %v4725 = vmul.f32 %v4537, %v4719
    %v4726 = vmul.f32 %v4538, %v4719
    %v4727 = vmul.f32 %v4539, %v4719
    %v4728 = vmul.f32 %v4540, %v4719
    %4737 = vrot.lane.b32.xlu0 %v4721, 64
    %v4738 = vpop.permute.xlu0 %4737
    %4739 = vrot.lane.b32.xlu0 %v4722, 64
    %v4740 = vpop.permute.xlu0 %4739
    %4741 = vrot.lane.b32.xlu0 %v4723, 64
    %v4742 = vpop.permute.xlu0 %4741
    %4743 = vrot.lane.b32.xlu0 %v4724, 64
    %v4744 = vpop.permute.xlu0 %4743
    %4745 = vrot.lane.b32.xlu0 %v4725, 64
    %v4746 = vpop.permute.xlu0 %4745
    %4747 = vrot.lane.b32.xlu0 %v4726, 64
    %v4748 = vpop.permute.xlu0 %4747
    %4749 = vrot.lane.b32.xlu0 %v4727, 64
    %v4750 = vpop.permute.xlu0 %4749
    %4751 = vrot.lane.b32.xlu0 %v4728, 64
    %v4752 = vpop.permute.xlu0 %4751
    %v4761 = vsel %vm2411, %v4738, 0.0
    %4762 = vadd.xlane.f32.xlu0 %v4761
    %v4763 = vpop.xlane.xlu0 %4762
    %v4764 = vsel %vm2411, %v4740, 0.0
    %4765 = vadd.xlane.f32.xlu0 %v4764
    %v4766 = vpop.xlane.xlu0 %4765
    %v4767 = vsel %vm2411, %v4742, 0.0
    %4768 = vadd.xlane.f32.xlu0 %v4767
    %v4769 = vpop.xlane.xlu0 %4768
    %v4770 = vsel %vm2411, %v4744, 0.0
    %4771 = vadd.xlane.f32.xlu0 %v4770
    %v4772 = vpop.xlane.xlu0 %4771
    %v4773 = vsel %vm2411, %v4746, 0.0
    %4774 = vadd.xlane.f32.xlu0 %v4773
    %v4775 = vpop.xlane.xlu0 %4774
    %v4776 = vsel %vm2411, %v4748, 0.0
    %4777 = vadd.xlane.f32.xlu0 %v4776
    %v4778 = vpop.xlane.xlu0 %4777
    %v4779 = vsel %vm2411, %v4750, 0.0
    %4780 = vadd.xlane.f32.xlu0 %v4779
    %v4781 = vpop.xlane.xlu0 %4780
    %v4782 = vsel %vm2411, %v4752, 0.0
    %4783 = vadd.xlane.f32.xlu0 %v4782
    %v4784 = vpop.xlane.xlu0 %4783
    %v4793 = vlaneseq
    %v4794 = vshrl.u32 %v4793, 7
    %v4795 = vsub.s32 %v4078, %v4794
    %v4796 = vrot.slane %v4763, %v4795
    %v4797 = vlaneseq
    %v4798 = vshrl.u32 %v4797, 7
    %v4799 = vsub.s32 %v4078, %v4798
    %v4800 = vrot.slane %v4766, %v4799
    %v4801 = vlaneseq
    %v4802 = vshrl.u32 %v4801, 7
    %v4803 = vsub.s32 %v4078, %v4802
    %v4804 = vrot.slane %v4769, %v4803
    %v4805 = vlaneseq
    %v4806 = vshrl.u32 %v4805, 7
    %v4807 = vsub.s32 %v4078, %v4806
    %v4808 = vrot.slane %v4772, %v4807
    %v4809 = vlaneseq
    %v4810 = vshrl.u32 %v4809, 7
    %v4811 = vsub.s32 %v4078, %v4810
    %v4812 = vrot.slane %v4775, %v4811
    %v4813 = vlaneseq
    %v4814 = vshrl.u32 %v4813, 7
    %v4815 = vsub.s32 %v4078, %v4814
    %v4816 = vrot.slane %v4778, %v4815
    %v4817 = vlaneseq
    %v4818 = vshrl.u32 %v4817, 7
    %v4819 = vsub.s32 %v4078, %v4818
    %v4820 = vrot.slane %v4781, %v4819
    %v4821 = vlaneseq
    %v4822 = vshrl.u32 %v4821, 7
    %v4823 = vsub.s32 %v4078, %v4822
    %v4824 = vrot.slane %v4784, %v4823
    %v4825 = vsel %vm3513, %v4800, %v4796
    %v4826 = vsel %vm3515, %v4804, %v4825
    %v4827 = vsel %vm3517, %v4808, %v4826
    %v4828 = vsel %vm3519, %v4812, %v4827
    %v4829 = vsel %vm3521, %v4816, %v4828
    %v4830 = vsel %vm3523, %v4820, %v4829
    %v4831 = vsel %vm3525, %v4824, %v4830
    %v4833 = vsel %vm3725, %v4831, -1e+30
    %v4834 = vsel %vm4120, %v4833, -inf
    %4835 = vmax.xlane.f32.xlu0 %v4834
    %v4836 = vpop.xlane.xlu0 %4835
    %v4837 = vsub.f32 %v4833, %v4836
    %v4838 = vmul.f32 %v4837, 1.442695
    %v4839 = vpow.pop %v4838
    %v4840 = vsel %vm3725, %v4839, 0.0
    %v4841 = vsel %vm4120, %v4840, 0.0
    %4842 = vadd.xlane.f32.xlu0 %v4841
    %v4843 = vpop.xlane.xlu0 %4842
    %v4844 = vmax.f32 %v4843, 1e-20
    %v4845 = vrcp.pop %v4844
    %v4846 = vmul.f32 %v4840, %v4845
    %4848 = vrot.lane.b32.xlu0 %v3838, 64
    %v4849 = vpop.permute.xlu0 %4848
    %v4852 = vsel %vm4120, %v4846, 0
    %4854 = vmatprep.subr.mxu0 0.0
    %4855 = vmatpush1.msra.mxu0 0.0
    %4856 = vmatprep.subr.mxu0 0.0
    %4857 = vmatpush1.msra.mxu0 0.0
    %4858 = vmatprep.subr.mxu0 0.0
    %4859 = vmatpush1.msra.mxu0 0.0
    %4860 = vmatprep.subr.mxu0 0.0
    %4861 = vmatpush1.msra.mxu0 0.0
    %4862 = vmatprep.subr.mxu0 0.0
    %4863 = vmatpush1.msra.mxu0 0.0
    %4864 = vmatprep.subr.mxu0 0.0
    %4865 = vmatpush1.msra.mxu0 0.0
    %4866 = vmatprep.subr.mxu0 0.0
    %4867 = vmatpush1.msra.mxu0 0.0
    %4868 = vmatprep.subr.mxu0 0.0
    %4869 = vmatpush1.msra.mxu0 0.0
    %4870 = vmatprep.subr.mxu0 0.0
    %4871 = vmatpush1.msra.mxu0 0.0
    %4872 = vmatprep.subr.mxu0 0.0
    %4873 = vmatpush1.msra.mxu0 0.0
    %4874 = vmatprep.subr.mxu0 0.0
    %4875 = vmatpush1.msra.mxu0 0.0
    %4876 = vmatprep.subr.mxu0 0.0
    %4877 = vmatpush1.msra.mxu0 0.0
    %4878 = vmatprep.subr.mxu0 0.0
    %4879 = vmatpush1.msra.mxu0 0.0
    %4880 = vmatprep.subr.mxu0 0.0
    %4881 = vmatpush1.msra.mxu0 0.0
    %4882 = vmatprep.subr.mxu0 0.0
    %4883 = vmatpush1.msra.mxu0 0.0
    %4884 = vmatprep.subr.mxu0 0.0
    %4885 = vmatpush1.msra.mxu0 %v4849
    %4886 = vmatprep.subr.mxu0 0.0
    %4887 = vmatpush2.msra.mxu0 0.0
    %4888 = vmatprep.subr.mxu0 0.0
    %4889 = vmatpush2.msra.mxu0 0.0
    %4890 = vmatprep.subr.mxu0 0.0
    %4891 = vmatpush2.msra.mxu0 0.0
    %4892 = vmatprep.subr.mxu0 0.0
    %4893 = vmatpush2.msra.mxu0 0.0
    %4894 = vmatprep.subr.mxu0 0.0
    %4895 = vmatpush2.msra.mxu0 0.0
    %4896 = vmatprep.subr.mxu0 0.0
    %4897 = vmatpush2.msra.mxu0 0.0
    %4898 = vmatprep.subr.mxu0 0.0
    %4899 = vmatpush2.msra.mxu0 0.0
    %4900 = vmatprep.subr.mxu0 0.0
    %4901 = vmatpush2.msra.mxu0 0.0
    %4902 = vmatprep.subr.mxu0 0.0
    %4903 = vmatpush2.msra.mxu0 0.0
    %4904 = vmatprep.subr.mxu0 0.0
    %4905 = vmatpush2.msra.mxu0 0.0
    %4906 = vmatprep.subr.mxu0 0.0
    %4907 = vmatpush2.msra.mxu0 0.0
    %4908 = vmatprep.subr.mxu0 0.0
    %4909 = vmatpush2.msra.mxu0 0.0
    %4910 = vmatprep.subr.mxu0 0.0
    %4911 = vmatpush2.msra.mxu0 0.0
    %4912 = vmatprep.subr.mxu0 0.0
    %4913 = vmatpush2.msra.mxu0 0.0
    %4914 = vmatprep.subr.mxu0 0.0
    %4915 = vmatpush2.msra.mxu0 0.0
    %4916 = vmatprep.subr.mxu0 0.0
    %4917 = vmatpush2.msra.mxu0 0.0
    %4918 = vmatprep.mubr.f32.mxu0 0.0
    %4919 = vmatmul.mubr.f32.gmra.mxu0 %v4852
    %v4920 = vpop.f32.mrf.mxu0
    %v4921 = vadd.f32 0.0, %v4920
    %v4922 = vpop.f32.mrf.mxu0
    %4923 = vdwg.mxu0
    %v4924 = vmax.f32 %v4712, %v4921
    %v4925 = vld [vmem:[%s43] sm:$0xff]
    %v4926 = vld [vmem:[%s43 + $0x8] sm:$0xff]
    %v4927 = vld [vmem:[%s43 + $0x10] sm:$0xff]
    %v4928 = vld [vmem:[%s43 + $0x18] sm:$0xff]
    %v4929 = vld [vmem:[%s43 + $0x20] sm:$0xff]
    %v4930 = vld [vmem:[%s43 + $0x28] sm:$0xff]
    %v4931 = vld [vmem:[%s43 + $0x30] sm:$0xff]
    %v4932 = vld [vmem:[%s43 + $0x38] sm:$0xff]
    %v4933 = vld [vmem:[%s43 + $0x40] sm:$0xff]
    %v4934 = vld [vmem:[%s43 + $0x48] sm:$0xff]
    %v4935 = vld [vmem:[%s43 + $0x50] sm:$0xff]
    %v4936 = vld [vmem:[%s43 + $0x58] sm:$0xff]
    %v4937 = vld [vmem:[%s43 + $0x60] sm:$0xff]
    %v4938 = vld [vmem:[%s43 + $0x68] sm:$0xff]
    %v4939 = vld [vmem:[%s43 + $0x70] sm:$0xff]
    %v4940 = vld [vmem:[%s43 + $0x78] sm:$0xff]
    %v4941 = vld [vmem:[%s43 + $0x80] sm:$0xff]
    %v4942 = vld [vmem:[%s43 + $0x88] sm:$0xff]
    %v4943 = vld [vmem:[%s43 + $0x90] sm:$0xff]
    %v4944 = vld [vmem:[%s43 + $0x98] sm:$0xff]
    %v4945 = vld [vmem:[%s43 + $0xa0] sm:$0xff]
    %v4946 = vld [vmem:[%s43 + $0xa8] sm:$0xff]
    %v4947 = vld [vmem:[%s43 + $0xb0] sm:$0xff]
    %v4948 = vld [vmem:[%s43 + $0xb8] sm:$0xff]
    %v4949 = vld [vmem:[%s43 + $0xc0] sm:$0xff]
    %v4950 = vld [vmem:[%s43 + $0xc8] sm:$0xff]
    %v4951 = vld [vmem:[%s43 + $0xd0] sm:$0xff]
    %v4952 = vld [vmem:[%s43 + $0xd8] sm:$0xff]
    %v4953 = vld [vmem:[%s43 + $0xe0] sm:$0xff]
    %v4954 = vld [vmem:[%s43 + $0xe8] sm:$0xff]
    %v4955 = vld [vmem:[%s43 + $0xf0] sm:$0xff]
    %v4956 = vld [vmem:[%s43 + $0xf8] sm:$0xff]
    %v4957 = vld [vmem:[%s43 + $0x100] sm:$0xff]
    %v4958 = vld [vmem:[%s43 + $0x108] sm:$0xff]
    %v4959 = vld [vmem:[%s43 + $0x110] sm:$0xff]
    %v4960 = vld [vmem:[%s43 + $0x118] sm:$0xff]
    %v4961 = vld [vmem:[%s43 + $0x120] sm:$0xff]
    %v4962 = vld [vmem:[%s43 + $0x128] sm:$0xff]
    %v4963 = vld [vmem:[%s43 + $0x130] sm:$0xff]
    %v4964 = vld [vmem:[%s43 + $0x138] sm:$0xff]
    %v4965 = vld [vmem:[%s43 + $0x140] sm:$0xff]
    %v4966 = vld [vmem:[%s43 + $0x148] sm:$0xff]
    %v4967 = vld [vmem:[%s43 + $0x150] sm:$0xff]
    %v4968 = vld [vmem:[%s43 + $0x158] sm:$0xff]
    %v4969 = vld [vmem:[%s43 + $0x160] sm:$0xff]
    %v4970 = vld [vmem:[%s43 + $0x168] sm:$0xff]
    %v4971 = vld [vmem:[%s43 + $0x170] sm:$0xff]
    %v4972 = vld [vmem:[%s43 + $0x178] sm:$0xff]
    %v4973 = vld [vmem:[%s43 + $0x180] sm:$0xff]
    %v4974 = vld [vmem:[%s43 + $0x188] sm:$0xff]
    %v4975 = vld [vmem:[%s43 + $0x190] sm:$0xff]
    %v4976 = vld [vmem:[%s43 + $0x198] sm:$0xff]
    %v4977 = vld [vmem:[%s43 + $0x1a0] sm:$0xff]
    %v4978 = vld [vmem:[%s43 + $0x1a8] sm:$0xff]
    %v4979 = vld [vmem:[%s43 + $0x1b0] sm:$0xff]
    %v4980 = vld [vmem:[%s43 + $0x1b8] sm:$0xff]
    %v4981 = vld [vmem:[%s43 + $0x1c0] sm:$0xff]
    %v4982 = vld [vmem:[%s43 + $0x1c8] sm:$0xff]
    %v4983 = vld [vmem:[%s43 + $0x1d0] sm:$0xff]
    %v4984 = vld [vmem:[%s43 + $0x1d8] sm:$0xff]
    %v4985 = vld [vmem:[%s43 + $0x1e0] sm:$0xff]
    %v4986 = vld [vmem:[%s43 + $0x1e8] sm:$0xff]
    %v4987 = vld [vmem:[%s43 + $0x1f0] sm:$0xff]
    %v4988 = vld [vmem:[%s43 + $0x1f8] sm:$0xff]
    %v4989 = vld [vmem:[#allocation26] sm:$0xff]
    %v4990 = vld [vmem:[#allocation28] sm:$0xf]
    %v4992 = vlaneseq
    %v4993 = vshrl.u32 %v4992, 7
    %v4994 = vsub.s32 0, %v4993
    %v4995 = vrot.slane %v4989, %v4994
    %v4996 = vlaneseq
    %v4997 = vshrl.u32 %v4996, 7
    %v4998 = vsub.s32 1, %v4997
    %v4999 = vrot.slane %v4989, %v4998
    %v5000 = vlaneseq
    %v5001 = vshrl.u32 %v5000, 7
    %v5002 = vsub.s32 2, %v5001
    %v5003 = vrot.slane %v4989, %v5002
    %v5004 = vlaneseq
    %v5005 = vshrl.u32 %v5004, 7
    %v5006 = vsub.s32 3, %v5005
    %v5007 = vrot.slane %v4989, %v5006
    %v5008 = vlaneseq
    %v5009 = vshrl.u32 %v5008, 7
    %v5010 = vsub.s32 4, %v5009
    %v5011 = vrot.slane %v4989, %v5010
    %v5012 = vlaneseq
    %v5013 = vshrl.u32 %v5012, 7
    %v5014 = vsub.s32 5, %v5013
    %v5015 = vrot.slane %v4989, %v5014
    %v5016 = vlaneseq
    %v5017 = vshrl.u32 %v5016, 7
    %v5018 = vsub.s32 6, %v5017
    %v5019 = vrot.slane %v4989, %v5018
    %v5020 = vlaneseq
    %v5021 = vshrl.u32 %v5020, 7
    %v5022 = vsub.s32 7, %v5021
    %v5023 = vrot.slane %v4989, %v5022
    %v5033 = vsel %vm2411, %v4924, 0
    %5035 = vmatprep.subr.mxu0 0.0
    %5036 = vmatpush1.msra.mxu0 0.0
    %5037 = vmatprep.subr.mxu0 0.0
    %5038 = vmatpush1.msra.mxu0 0.0
    %5039 = vmatprep.subr.mxu0 0.0
    %5040 = vmatpush1.msra.mxu0 0.0
    %5041 = vmatprep.subr.mxu0 0.0
    %5042 = vmatpush1.msra.mxu0 0.0
    %5043 = vmatprep.subr.mxu0 0.0
    %5044 = vmatpush1.msra.mxu0 0.0
    %5045 = vmatprep.subr.mxu0 0.0
    %5046 = vmatpush1.msra.mxu0 0.0
    %5047 = vmatprep.subr.mxu0 0.0
    %5048 = vmatpush1.msra.mxu0 0.0
    %5049 = vmatprep.subr.mxu0 0.0
    %5050 = vmatpush1.msra.mxu0 0.0
    %5051 = vmatprep.subr.mxu0 %v4982
    %5052 = vmatpush1.msra.mxu0 %v4981
    %5053 = vmatprep.subr.mxu0 %v4974
    %5054 = vmatpush1.msra.mxu0 %v4973
    %5055 = vmatprep.subr.mxu0 %v4966
    %5056 = vmatpush1.msra.mxu0 %v4965
    %5057 = vmatprep.subr.mxu0 %v4958
    %5058 = vmatpush1.msra.mxu0 %v4957
    %5059 = vmatprep.subr.mxu0 %v4950
    %5060 = vmatpush1.msra.mxu0 %v4949
    %5061 = vmatprep.subr.mxu0 %v4942
    %5062 = vmatpush1.msra.mxu0 %v4941
    %5063 = vmatprep.subr.mxu0 %v4934
    %5064 = vmatpush1.msra.mxu0 %v4933
    %5065 = vmatprep.subr.mxu0 %v4926
    %5066 = vmatpush1.msra.mxu0 %v4925
    %5067 = vmatprep.subr.mxu0 0.0
    %5068 = vmatpush2.msra.mxu0 0.0
    %5069 = vmatprep.subr.mxu0 0.0
    %5070 = vmatpush2.msra.mxu0 0.0
    %5071 = vmatprep.subr.mxu0 0.0
    %5072 = vmatpush2.msra.mxu0 0.0
    %5073 = vmatprep.subr.mxu0 0.0
    %5074 = vmatpush2.msra.mxu0 0.0
    %5075 = vmatprep.subr.mxu0 0.0
    %5076 = vmatpush2.msra.mxu0 0.0
    %5077 = vmatprep.subr.mxu0 0.0
    %5078 = vmatpush2.msra.mxu0 0.0
    %5079 = vmatprep.subr.mxu0 0.0
    %5080 = vmatpush2.msra.mxu0 0.0
    %5081 = vmatprep.subr.mxu0 0.0
    %5082 = vmatpush2.msra.mxu0 0.0
    %5083 = vmatprep.subr.mxu0 0.0
    %5084 = vmatpush2.msra.mxu0 0.0
    %5085 = vmatprep.subr.mxu0 0.0
    %5086 = vmatpush2.msra.mxu0 0.0
    %5087 = vmatprep.subr.mxu0 0.0
    %5088 = vmatpush2.msra.mxu0 0.0
    %5089 = vmatprep.subr.mxu0 0.0
    %5090 = vmatpush2.msra.mxu0 0.0
    %5091 = vmatprep.subr.mxu0 0.0
    %5092 = vmatpush2.msra.mxu0 0.0
    %5093 = vmatprep.subr.mxu0 0.0
    %5094 = vmatpush2.msra.mxu0 0.0
    %5095 = vmatprep.subr.mxu0 0.0
    %5096 = vmatpush2.msra.mxu0 0.0
    %5097 = vmatprep.subr.mxu0 0.0
    %5098 = vmatpush2.msra.mxu0 0.0
    %5099 = vmatprep.mubr.f32.mxu0 0.0
    %5100 = vmatmul.mubr.f32.gmra.mxu0 %v5033
    %v5101 = vpop.f32.mrf.mxu0
    %v5102 = vadd.f32 %v4995, %v5101
    %v5103 = vpop.f32.mrf.mxu0
    %v5104 = vadd.f32 %v4999, %v5103
    %5105 = vdwg.mxu0
    %5106 = vmatprep.subr.mxu0 0.0
    %5107 = vmatpush1.msra.mxu0 0.0
    %5108 = vmatprep.subr.mxu0 0.0
    %5109 = vmatpush1.msra.mxu0 0.0
    %5110 = vmatprep.subr.mxu0 0.0
    %5111 = vmatpush1.msra.mxu0 0.0
    %5112 = vmatprep.subr.mxu0 0.0
    %5113 = vmatpush1.msra.mxu0 0.0
    %5114 = vmatprep.subr.mxu0 0.0
    %5115 = vmatpush1.msra.mxu0 0.0
    %5116 = vmatprep.subr.mxu0 0.0
    %5117 = vmatpush1.msra.mxu0 0.0
    %5118 = vmatprep.subr.mxu0 0.0
    %5119 = vmatpush1.msra.mxu0 0.0
    %5120 = vmatprep.subr.mxu0 0.0
    %5121 = vmatpush1.msra.mxu0 0.0
    %5122 = vmatprep.subr.mxu0 %v4984
    %5123 = vmatpush1.msra.mxu0 %v4983
    %5124 = vmatprep.subr.mxu0 %v4976
    %5125 = vmatpush1.msra.mxu0 %v4975
    %5126 = vmatprep.subr.mxu0 %v4968
    %5127 = vmatpush1.msra.mxu0 %v4967
    %5128 = vmatprep.subr.mxu0 %v4960
    %5129 = vmatpush1.msra.mxu0 %v4959
    %5130 = vmatprep.subr.mxu0 %v4952
    %5131 = vmatpush1.msra.mxu0 %v4951
    %5132 = vmatprep.subr.mxu0 %v4944
    %5133 = vmatpush1.msra.mxu0 %v4943
    %5134 = vmatprep.subr.mxu0 %v4936
    %5135 = vmatpush1.msra.mxu0 %v4935
    %5136 = vmatprep.subr.mxu0 %v4928
    %5137 = vmatpush1.msra.mxu0 %v4927
    %5138 = vmatprep.subr.mxu0 0.0
    %5139 = vmatpush2.msra.mxu0 0.0
    %5140 = vmatprep.subr.mxu0 0.0
    %5141 = vmatpush2.msra.mxu0 0.0
    %5142 = vmatprep.subr.mxu0 0.0
    %5143 = vmatpush2.msra.mxu0 0.0
    %5144 = vmatprep.subr.mxu0 0.0
    %5145 = vmatpush2.msra.mxu0 0.0
    %5146 = vmatprep.subr.mxu0 0.0
    %5147 = vmatpush2.msra.mxu0 0.0
    %5148 = vmatprep.subr.mxu0 0.0
    %5149 = vmatpush2.msra.mxu0 0.0
    %5150 = vmatprep.subr.mxu0 0.0
    %5151 = vmatpush2.msra.mxu0 0.0
    %5152 = vmatprep.subr.mxu0 0.0
    %5153 = vmatpush2.msra.mxu0 0.0
    %5154 = vmatprep.subr.mxu0 0.0
    %5155 = vmatpush2.msra.mxu0 0.0
    %5156 = vmatprep.subr.mxu0 0.0
    %5157 = vmatpush2.msra.mxu0 0.0
    %5158 = vmatprep.subr.mxu0 0.0
    %5159 = vmatpush2.msra.mxu0 0.0
    %5160 = vmatprep.subr.mxu0 0.0
    %5161 = vmatpush2.msra.mxu0 0.0
    %5162 = vmatprep.subr.mxu0 0.0
    %5163 = vmatpush2.msra.mxu0 0.0
    %5164 = vmatprep.subr.mxu0 0.0
    %5165 = vmatpush2.msra.mxu0 0.0
    %5166 = vmatprep.subr.mxu0 0.0
    %5167 = vmatpush2.msra.mxu0 0.0
    %5168 = vmatprep.subr.mxu0 0.0
    %5169 = vmatpush2.msra.mxu0 0.0
    %5170 = vmatprep.mubr.f32.mxu0 0.0
    %5171 = vmatmul.mubr.f32.gmra.mxu0 %v5033
    %v5172 = vpop.f32.mrf.mxu0
    %v5173 = vadd.f32 %v5003, %v5172
    %v5174 = vpop.f32.mrf.mxu0
    %v5175 = vadd.f32 %v5007, %v5174
    %5176 = vdwg.mxu0
    %5177 = vmatprep.subr.mxu0 0.0
    %5178 = vmatpush1.msra.mxu0 0.0
    %5179 = vmatprep.subr.mxu0 0.0
    %5180 = vmatpush1.msra.mxu0 0.0
    %5181 = vmatprep.subr.mxu0 0.0
    %5182 = vmatpush1.msra.mxu0 0.0
    %5183 = vmatprep.subr.mxu0 0.0
    %5184 = vmatpush1.msra.mxu0 0.0
    %5185 = vmatprep.subr.mxu0 0.0
    %5186 = vmatpush1.msra.mxu0 0.0
    %5187 = vmatprep.subr.mxu0 0.0
    %5188 = vmatpush1.msra.mxu0 0.0
    %5189 = vmatprep.subr.mxu0 0.0
    %5190 = vmatpush1.msra.mxu0 0.0
    %5191 = vmatprep.subr.mxu0 0.0
    %5192 = vmatpush1.msra.mxu0 0.0
    %5193 = vmatprep.subr.mxu0 %v4986
    %5194 = vmatpush1.msra.mxu0 %v4985
    %5195 = vmatprep.subr.mxu0 %v4978
    %5196 = vmatpush1.msra.mxu0 %v4977
    %5197 = vmatprep.subr.mxu0 %v4970
    %5198 = vmatpush1.msra.mxu0 %v4969
    %5199 = vmatprep.subr.mxu0 %v4962
    %5200 = vmatpush1.msra.mxu0 %v4961
    %5201 = vmatprep.subr.mxu0 %v4954
    %5202 = vmatpush1.msra.mxu0 %v4953
    %5203 = vmatprep.subr.mxu0 %v4946
    %5204 = vmatpush1.msra.mxu0 %v4945
    %5205 = vmatprep.subr.mxu0 %v4938
    %5206 = vmatpush1.msra.mxu0 %v4937
    %5207 = vmatprep.subr.mxu0 %v4930
    %5208 = vmatpush1.msra.mxu0 %v4929
    %5209 = vmatprep.subr.mxu0 0.0
    %5210 = vmatpush2.msra.mxu0 0.0
    %5211 = vmatprep.subr.mxu0 0.0
    %5212 = vmatpush2.msra.mxu0 0.0
    %5213 = vmatprep.subr.mxu0 0.0
    %5214 = vmatpush2.msra.mxu0 0.0
    %5215 = vmatprep.subr.mxu0 0.0
    %5216 = vmatpush2.msra.mxu0 0.0
    %5217 = vmatprep.subr.mxu0 0.0
    %5218 = vmatpush2.msra.mxu0 0.0
    %5219 = vmatprep.subr.mxu0 0.0
    %5220 = vmatpush2.msra.mxu0 0.0
    %5221 = vmatprep.subr.mxu0 0.0
    %5222 = vmatpush2.msra.mxu0 0.0
    %5223 = vmatprep.subr.mxu0 0.0
    %5224 = vmatpush2.msra.mxu0 0.0
    %5225 = vmatprep.subr.mxu0 0.0
    %5226 = vmatpush2.msra.mxu0 0.0
    %5227 = vmatprep.subr.mxu0 0.0
    %5228 = vmatpush2.msra.mxu0 0.0
    %5229 = vmatprep.subr.mxu0 0.0
    %5230 = vmatpush2.msra.mxu0 0.0
    %5231 = vmatprep.subr.mxu0 0.0
    %5232 = vmatpush2.msra.mxu0 0.0
    %5233 = vmatprep.subr.mxu0 0.0
    %5234 = vmatpush2.msra.mxu0 0.0
    %5235 = vmatprep.subr.mxu0 0.0
    %5236 = vmatpush2.msra.mxu0 0.0
    %5237 = vmatprep.subr.mxu0 0.0
    %5238 = vmatpush2.msra.mxu0 0.0
    %5239 = vmatprep.subr.mxu0 0.0
    %5240 = vmatpush2.msra.mxu0 0.0
    %5241 = vmatprep.mubr.f32.mxu0 0.0
    %5242 = vmatmul.mubr.f32.gmra.mxu0 %v5033
    %v5243 = vpop.f32.mrf.mxu0
    %v5244 = vadd.f32 %v5011, %v5243
    %v5245 = vpop.f32.mrf.mxu0
    %v5246 = vadd.f32 %v5015, %v5245
    %5247 = vdwg.mxu0
    %5248 = vmatprep.subr.mxu0 0.0
    %5249 = vmatpush1.msra.mxu0 0.0
    %5250 = vmatprep.subr.mxu0 0.0
    %5251 = vmatpush1.msra.mxu0 0.0
    %5252 = vmatprep.subr.mxu0 0.0
    %5253 = vmatpush1.msra.mxu0 0.0
    %5254 = vmatprep.subr.mxu0 0.0
    %5255 = vmatpush1.msra.mxu0 0.0
    %5256 = vmatprep.subr.mxu0 0.0
    %5257 = vmatpush1.msra.mxu0 0.0
    %5258 = vmatprep.subr.mxu0 0.0
    %5259 = vmatpush1.msra.mxu0 0.0
    %5260 = vmatprep.subr.mxu0 0.0
    %5261 = vmatpush1.msra.mxu0 0.0
    %5262 = vmatprep.subr.mxu0 0.0
    %5263 = vmatpush1.msra.mxu0 0.0
    %5264 = vmatprep.subr.mxu0 %v4988
    %5265 = vmatpush1.msra.mxu0 %v4987
    %5266 = vmatprep.subr.mxu0 %v4980
    %5267 = vmatpush1.msra.mxu0 %v4979
    %5268 = vmatprep.subr.mxu0 %v4972
    %5269 = vmatpush1.msra.mxu0 %v4971
    %5270 = vmatprep.subr.mxu0 %v4964
    %5271 = vmatpush1.msra.mxu0 %v4963
    %5272 = vmatprep.subr.mxu0 %v4956
    %5273 = vmatpush1.msra.mxu0 %v4955
    %5274 = vmatprep.subr.mxu0 %v4948
    %5275 = vmatpush1.msra.mxu0 %v4947
    %5276 = vmatprep.subr.mxu0 %v4940
    %5277 = vmatpush1.msra.mxu0 %v4939
    %5278 = vmatprep.subr.mxu0 %v4932
    %5279 = vmatpush1.msra.mxu0 %v4931
    %5280 = vmatprep.subr.mxu0 0.0
    %5281 = vmatpush2.msra.mxu0 0.0
    %5282 = vmatprep.subr.mxu0 0.0
    %5283 = vmatpush2.msra.mxu0 0.0
    %5284 = vmatprep.subr.mxu0 0.0
    %5285 = vmatpush2.msra.mxu0 0.0
    %5286 = vmatprep.subr.mxu0 0.0
    %5287 = vmatpush2.msra.mxu0 0.0
    %5288 = vmatprep.subr.mxu0 0.0
    %5289 = vmatpush2.msra.mxu0 0.0
    %5290 = vmatprep.subr.mxu0 0.0
    %5291 = vmatpush2.msra.mxu0 0.0
    %5292 = vmatprep.subr.mxu0 0.0
    %5293 = vmatpush2.msra.mxu0 0.0
    %5294 = vmatprep.subr.mxu0 0.0
    %5295 = vmatpush2.msra.mxu0 0.0
    %5296 = vmatprep.subr.mxu0 0.0
    %5297 = vmatpush2.msra.mxu0 0.0
    %5298 = vmatprep.subr.mxu0 0.0
    %5299 = vmatpush2.msra.mxu0 0.0
    %5300 = vmatprep.subr.mxu0 0.0
    %5301 = vmatpush2.msra.mxu0 0.0
    %5302 = vmatprep.subr.mxu0 0.0
    %5303 = vmatpush2.msra.mxu0 0.0
    %5304 = vmatprep.subr.mxu0 0.0
    %5305 = vmatpush2.msra.mxu0 0.0
    %5306 = vmatprep.subr.mxu0 0.0
    %5307 = vmatpush2.msra.mxu0 0.0
    %5308 = vmatprep.subr.mxu0 0.0
    %5309 = vmatpush2.msra.mxu0 0.0
    %5310 = vmatprep.subr.mxu0 0.0
    %5311 = vmatpush2.msra.mxu0 0.0
    %5312 = vmatprep.mubr.f32.mxu0 0.0
    %5313 = vmatmul.mubr.f32.gmra.mxu0 %v5033
    %v5314 = vpop.f32.mrf.mxu0
    %v5315 = vadd.f32 %v5019, %v5314
    %v5316 = vpop.f32.mrf.mxu0
    %v5317 = vadd.f32 %v5023, %v5316
    %5318 = vdwg.mxu0
    %v5320 = vcombine.high %v5244, %v5244
    %v5322 = vunpack.c.l.s4 1966171168
    %v5323 = vunpack.c.0.s8 %v5322
    %v5324 = vlaneseq
    %v5325 = vshrl.u32 %v5324, 7
    %v5326 = vsub.s32 %v5323, %v5325
    %v5327 = vrot.slane %v5244, %v5326
    %v5329 = vunpack.c.l.s4 1966171168
    %v5330 = vunpack.c.0.s8 %v5329
    %v5331 = vlaneseq
    %v5332 = vshrl.u32 %v5331, 7
    %v5333 = vsub.s32 %v5330, %v5332
    %v5334 = vrot.slane %v5320, %v5333
    %v5335 = vcombine.high %v5327, %v5327
    %v5336 = vcombine.high %v5334, %v5334
    %v5338 = vunpack.c.l.s4 1966171168
    %v5339 = vunpack.c.0.s8 %v5338
    %v5340 = vlaneseq
    %v5341 = vshrl.u32 %v5340, 7
    %v5342 = vsub.s32 %v5339, %v5341
    %v5343 = vrot.slane %v5327, %v5342
    %v5345 = vunpack.c.l.s4 1966171168
    %v5346 = vunpack.c.0.s8 %v5345
    %v5347 = vlaneseq
    %v5348 = vshrl.u32 %v5347, 7
    %v5349 = vsub.s32 %v5346, %v5348
    %v5350 = vrot.slane %v5334, %v5349
    %v5352 = vunpack.c.l.s4 1966171168
    %v5353 = vunpack.c.0.s8 %v5352
    %v5354 = vlaneseq
    %v5355 = vshrl.u32 %v5354, 7
    %v5356 = vsub.s32 %v5353, %v5355
    %v5357 = vrot.slane %v5335, %v5356
    %v5359 = vunpack.c.l.s4 1966171168
    %v5360 = vunpack.c.0.s8 %v5359
    %v5361 = vlaneseq
    %v5362 = vshrl.u32 %v5361, 7
    %v5363 = vsub.s32 %v5360, %v5362
    %v5364 = vrot.slane %v5336, %v5363
    %v5365 = vcombine.high %v5343, %v5343
    %v5366 = vcombine.high %v5350, %v5350
    %v5367 = vcombine.high %v5357, %v5357
    %v5368 = vcombine.high %v5364, %v5364
    %v5369 = vlaneseq
    %v5370 = vshrl.u32 %v5369, 7
    %v5371 = vsub.s32 0, %v5370
    %v5372 = vrot.slane %v5343, %v5371
    %v5373 = vlaneseq
    %v5374 = vshrl.u32 %v5373, 7
    %v5375 = vsub.s32 0, %v5374
    %v5376 = vrot.slane %v5357, %v5375
    %v5377 = vlaneseq
    %v5378 = vshrl.u32 %v5377, 7
    %v5379 = vsub.s32 0, %v5378
    %v5380 = vrot.slane %v5365, %v5379
    %v5381 = vlaneseq
    %v5382 = vshrl.u32 %v5381, 7
    %v5383 = vsub.s32 0, %v5382
    %v5384 = vrot.slane %v5367, %v5383
    %v5385 = vlaneseq
    %v5386 = vshrl.u32 %v5385, 7
    %v5387 = vsub.s32 0, %v5386
    %v5388 = vrot.slane %v5350, %v5387
    %v5389 = vlaneseq
    %v5390 = vshrl.u32 %v5389, 7
    %v5391 = vsub.s32 0, %v5390
    %v5392 = vrot.slane %v5364, %v5391
    %v5393 = vlaneseq
    %v5394 = vshrl.u32 %v5393, 7
    %v5395 = vsub.s32 0, %v5394
    %v5396 = vrot.slane %v5366, %v5395
    %v5397 = vlaneseq
    %v5398 = vshrl.u32 %v5397, 7
    %v5399 = vsub.s32 0, %v5398
    %v5400 = vrot.slane %v5368, %v5399
    %v5409 = vadd.f32 %v5102, %v5372
    %v5410 = vadd.f32 %v5102, %v5376
    %v5411 = vadd.f32 %v5102, %v5380
    %v5412 = vadd.f32 %v5102, %v5384
    %v5413 = vadd.f32 %v5102, %v5388
    %v5414 = vadd.f32 %v5102, %v5392
    %v5415 = vadd.f32 %v5102, %v5396
    %v5416 = vadd.f32 %v5102, %v5400
    %vm5417 = vcmp.ge.f32.partialorder %v5409, 0.0
    %vm5418 = vcmp.ge.f32.partialorder %v5410, 0.0
    %vm5419 = vcmp.ge.f32.partialorder %v5411, 0.0
    %vm5420 = vcmp.ge.f32.partialorder %v5412, 0.0
    %vm5421 = vcmp.ge.f32.partialorder %v5413, 0.0
    %vm5422 = vcmp.ge.f32.partialorder %v5414, 0.0
    %vm5423 = vcmp.ge.f32.partialorder %v5415, 0.0
    %vm5424 = vcmp.ge.f32.partialorder %v5416, 0.0
    %v5425 = vmul.f32 %v5409, 0.2
    %v5426 = vmul.f32 %v5410, 0.2
    %v5427 = vmul.f32 %v5411, 0.2
    %v5428 = vmul.f32 %v5412, 0.2
    %v5429 = vmul.f32 %v5413, 0.2
    %v5430 = vmul.f32 %v5414, 0.2
    %v5431 = vmul.f32 %v5415, 0.2
    %v5432 = vmul.f32 %v5416, 0.2
    %v5433 = vsel %vm5417, %v5409, %v5425
    %v5434 = vsel %vm5418, %v5410, %v5426
    %v5435 = vsel %vm5419, %v5411, %v5427
    %v5436 = vsel %vm5420, %v5412, %v5428
    %v5437 = vsel %vm5421, %v5413, %v5429
    %v5438 = vsel %vm5422, %v5414, %v5430
    %v5439 = vsel %vm5423, %v5415, %v5431
    %v5440 = vsel %vm5424, %v5416, %v5432
    %v5441 = vlaneseq
    %v5442 = vshrl.u32 %v5441, 7
    %v5443 = vsub.s32 0, %v5442
    %v5444 = vrot.slane %v4990, %v5443
    %v5445 = vmul.f32 %v5433, %v5444
    %v5446 = vmul.f32 %v5434, %v5444
    %v5447 = vmul.f32 %v5435, %v5444
    %v5448 = vmul.f32 %v5436, %v5444
    %v5449 = vmul.f32 %v5437, %v5444
    %v5450 = vmul.f32 %v5438, %v5444
    %v5451 = vmul.f32 %v5439, %v5444
    %v5452 = vmul.f32 %v5440, %v5444
    %5453 = vadd.xlane.f32.xlu0 %v5445
    %v5454 = vpop.xlane.xlu0 %5453
    %5455 = vadd.xlane.f32.xlu0 %v5446
    %v5456 = vpop.xlane.xlu0 %5455
    %5457 = vadd.xlane.f32.xlu0 %v5447
    %v5458 = vpop.xlane.xlu0 %5457
    %5459 = vadd.xlane.f32.xlu0 %v5448
    %v5460 = vpop.xlane.xlu0 %5459
    %5461 = vadd.xlane.f32.xlu0 %v5449
    %v5462 = vpop.xlane.xlu0 %5461
    %5463 = vadd.xlane.f32.xlu0 %v5450
    %v5464 = vpop.xlane.xlu0 %5463
    %5465 = vadd.xlane.f32.xlu0 %v5451
    %v5466 = vpop.xlane.xlu0 %5465
    %5467 = vadd.xlane.f32.xlu0 %v5452
    %v5468 = vpop.xlane.xlu0 %5467
    %v5477 = vlaneseq
    %v5478 = vshrl.u32 %v5477, 7
    %v5479 = vsub.s32 %v4078, %v5478
    %v5480 = vrot.slane %v5454, %v5479
    %v5481 = vlaneseq
    %v5482 = vshrl.u32 %v5481, 7
    %v5483 = vsub.s32 %v4078, %v5482
    %v5484 = vrot.slane %v5456, %v5483
    %v5485 = vlaneseq
    %v5486 = vshrl.u32 %v5485, 7
    %v5487 = vsub.s32 %v4078, %v5486
    %v5488 = vrot.slane %v5458, %v5487
    %v5489 = vlaneseq
    %v5490 = vshrl.u32 %v5489, 7
    %v5491 = vsub.s32 %v4078, %v5490
    %v5492 = vrot.slane %v5460, %v5491
    %v5493 = vlaneseq
    %v5494 = vshrl.u32 %v5493, 7
    %v5495 = vsub.s32 %v4078, %v5494
    %v5496 = vrot.slane %v5462, %v5495
    %v5497 = vlaneseq
    %v5498 = vshrl.u32 %v5497, 7
    %v5499 = vsub.s32 %v4078, %v5498
    %v5500 = vrot.slane %v5464, %v5499
    %v5501 = vlaneseq
    %v5502 = vshrl.u32 %v5501, 7
    %v5503 = vsub.s32 %v4078, %v5502
    %v5504 = vrot.slane %v5466, %v5503
    %v5505 = vlaneseq
    %v5506 = vshrl.u32 %v5505, 7
    %v5507 = vsub.s32 %v4078, %v5506
    %v5508 = vrot.slane %v5468, %v5507
    %v5509 = vsel %vm3513, %v5484, %v5480
    %v5510 = vsel %vm3515, %v5488, %v5509
    %v5511 = vsel %vm3517, %v5492, %v5510
    %v5512 = vsel %vm3519, %v5496, %v5511
    %v5513 = vsel %vm3521, %v5500, %v5512
    %v5514 = vsel %vm3523, %v5504, %v5513
    %v5515 = vsel %vm3525, %v5508, %v5514
    %v5517 = vsel %vm3725, %v5515, -1e+30
    %v5518 = vsel %vm4120, %v5517, -inf
    %5519 = vmax.xlane.f32.xlu0 %v5518
    %v5520 = vpop.xlane.xlu0 %5519
    %v5521 = vsub.f32 %v5517, %v5520
    %v5522 = vmul.f32 %v5521, 1.442695
    %v5523 = vpow.pop %v5522
    %v5524 = vsel %vm3725, %v5523, 0.0
    %v5525 = vsel %vm4120, %v5524, 0.0
    %5526 = vadd.xlane.f32.xlu0 %v5525
    %v5527 = vpop.xlane.xlu0 %5526
    %v5528 = vmax.f32 %v5527, 1e-20
    %v5529 = vrcp.pop %v5528
    %v5530 = vmul.f32 %v5524, %v5529
    %v5532 = vsel %vm4120, %v5530, 0
    %5534 = vmatprep.subr.mxu0 0.0
    %5535 = vmatpush1.msra.mxu0 0.0
    %5536 = vmatprep.subr.mxu0 0.0
    %5537 = vmatpush1.msra.mxu0 0.0
    %5538 = vmatprep.subr.mxu0 0.0
    %5539 = vmatpush1.msra.mxu0 0.0
    %5540 = vmatprep.subr.mxu0 0.0
    %5541 = vmatpush1.msra.mxu0 0.0
    %5542 = vmatprep.subr.mxu0 0.0
    %5543 = vmatpush1.msra.mxu0 0.0
    %5544 = vmatprep.subr.mxu0 0.0
    %5545 = vmatpush1.msra.mxu0 0.0
    %5546 = vmatprep.subr.mxu0 0.0
    %5547 = vmatpush1.msra.mxu0 0.0
    %5548 = vmatprep.subr.mxu0 0.0
    %5549 = vmatpush1.msra.mxu0 0.0
    %5550 = vmatprep.subr.mxu0 0.0
    %5551 = vmatpush1.msra.mxu0 0.0
    %5552 = vmatprep.subr.mxu0 0.0
    %5553 = vmatpush1.msra.mxu0 0.0
    %5554 = vmatprep.subr.mxu0 0.0
    %5555 = vmatpush1.msra.mxu0 0.0
    %5556 = vmatprep.subr.mxu0 0.0
    %5557 = vmatpush1.msra.mxu0 0.0
    %5558 = vmatprep.subr.mxu0 0.0
    %5559 = vmatpush1.msra.mxu0 0.0
    %5560 = vmatprep.subr.mxu0 0.0
    %5561 = vmatpush1.msra.mxu0 0.0
    %5562 = vmatprep.subr.mxu0 0.0
    %5563 = vmatpush1.msra.mxu0 0.0
    %5564 = vmatprep.subr.mxu0 0.0
    %5565 = vmatpush1.msra.mxu0 %v5102
    %5566 = vmatprep.subr.mxu0 0.0
    %5567 = vmatpush2.msra.mxu0 0.0
    %5568 = vmatprep.subr.mxu0 0.0
    %5569 = vmatpush2.msra.mxu0 0.0
    %5570 = vmatprep.subr.mxu0 0.0
    %5571 = vmatpush2.msra.mxu0 0.0
    %5572 = vmatprep.subr.mxu0 0.0
    %5573 = vmatpush2.msra.mxu0 0.0
    %5574 = vmatprep.subr.mxu0 0.0
    %5575 = vmatpush2.msra.mxu0 0.0
    %5576 = vmatprep.subr.mxu0 0.0
    %5577 = vmatpush2.msra.mxu0 0.0
    %5578 = vmatprep.subr.mxu0 0.0
    %5579 = vmatpush2.msra.mxu0 0.0
    %5580 = vmatprep.subr.mxu0 0.0
    %5581 = vmatpush2.msra.mxu0 0.0
    %5582 = vmatprep.subr.mxu0 0.0
    %5583 = vmatpush2.msra.mxu0 0.0
    %5584 = vmatprep.subr.mxu0 0.0
    %5585 = vmatpush2.msra.mxu0 0.0
    %5586 = vmatprep.subr.mxu0 0.0
    %5587 = vmatpush2.msra.mxu0 0.0
    %5588 = vmatprep.subr.mxu0 0.0
    %5589 = vmatpush2.msra.mxu0 0.0
    %5590 = vmatprep.subr.mxu0 0.0
    %5591 = vmatpush2.msra.mxu0 0.0
    %5592 = vmatprep.subr.mxu0 0.0
    %5593 = vmatpush2.msra.mxu0 0.0
    %5594 = vmatprep.subr.mxu0 0.0
    %5595 = vmatpush2.msra.mxu0 0.0
    %5596 = vmatprep.subr.mxu0 0.0
    %5597 = vmatpush2.msra.mxu0 0.0
    %5598 = vmatprep.mubr.f32.mxu0 0.0
    %5599 = vmatmul.mubr.f32.gmra.mxu0 %v5532
    %v5600 = vpop.f32.mrf.mxu0
    %v5601 = vadd.f32 0.0, %v5600
    %v5602 = vpop.f32.mrf.mxu0
    %5603 = vdwg.mxu0
    %v5605 = vcombine.high %v5246, %v5246
    %v5607 = vunpack.c.l.s4 1966171168
    %v5608 = vunpack.c.0.s8 %v5607
    %v5609 = vlaneseq
    %v5610 = vshrl.u32 %v5609, 7
    %v5611 = vsub.s32 %v5608, %v5610
    %v5612 = vrot.slane %v5246, %v5611
    %v5614 = vunpack.c.l.s4 1966171168
    %v5615 = vunpack.c.0.s8 %v5614
    %v5616 = vlaneseq
    %v5617 = vshrl.u32 %v5616, 7
    %v5618 = vsub.s32 %v5615, %v5617
    %v5619 = vrot.slane %v5605, %v5618
    %v5620 = vcombine.high %v5612, %v5612
    %v5621 = vcombine.high %v5619, %v5619
    %v5623 = vunpack.c.l.s4 1966171168
    %v5624 = vunpack.c.0.s8 %v5623
    %v5625 = vlaneseq
    %v5626 = vshrl.u32 %v5625, 7
    %v5627 = vsub.s32 %v5624, %v5626
    %v5628 = vrot.slane %v5612, %v5627
    %v5630 = vunpack.c.l.s4 1966171168
    %v5631 = vunpack.c.0.s8 %v5630
    %v5632 = vlaneseq
    %v5633 = vshrl.u32 %v5632, 7
    %v5634 = vsub.s32 %v5631, %v5633
    %v5635 = vrot.slane %v5619, %v5634
    %v5637 = vunpack.c.l.s4 1966171168
    %v5638 = vunpack.c.0.s8 %v5637
    %v5639 = vlaneseq
    %v5640 = vshrl.u32 %v5639, 7
    %v5641 = vsub.s32 %v5638, %v5640
    %v5642 = vrot.slane %v5620, %v5641
    %v5644 = vunpack.c.l.s4 1966171168
    %v5645 = vunpack.c.0.s8 %v5644
    %v5646 = vlaneseq
    %v5647 = vshrl.u32 %v5646, 7
    %v5648 = vsub.s32 %v5645, %v5647
    %v5649 = vrot.slane %v5621, %v5648
    %v5650 = vcombine.high %v5628, %v5628
    %v5651 = vcombine.high %v5635, %v5635
    %v5652 = vcombine.high %v5642, %v5642
    %v5653 = vcombine.high %v5649, %v5649
    %v5654 = vlaneseq
    %v5655 = vshrl.u32 %v5654, 7
    %v5656 = vsub.s32 0, %v5655
    %v5657 = vrot.slane %v5628, %v5656
    %v5658 = vlaneseq
    %v5659 = vshrl.u32 %v5658, 7
    %v5660 = vsub.s32 0, %v5659
    %v5661 = vrot.slane %v5642, %v5660
    %v5662 = vlaneseq
    %v5663 = vshrl.u32 %v5662, 7
    %v5664 = vsub.s32 0, %v5663
    %v5665 = vrot.slane %v5650, %v5664
    %v5666 = vlaneseq
    %v5667 = vshrl.u32 %v5666, 7
    %v5668 = vsub.s32 0, %v5667
    %v5669 = vrot.slane %v5652, %v5668
    %v5670 = vlaneseq
    %v5671 = vshrl.u32 %v5670, 7
    %v5672 = vsub.s32 0, %v5671
    %v5673 = vrot.slane %v5635, %v5672
    %v5674 = vlaneseq
    %v5675 = vshrl.u32 %v5674, 7
    %v5676 = vsub.s32 0, %v5675
    %v5677 = vrot.slane %v5649, %v5676
    %v5678 = vlaneseq
    %v5679 = vshrl.u32 %v5678, 7
    %v5680 = vsub.s32 0, %v5679
    %v5681 = vrot.slane %v5651, %v5680
    %v5682 = vlaneseq
    %v5683 = vshrl.u32 %v5682, 7
    %v5684 = vsub.s32 0, %v5683
    %v5685 = vrot.slane %v5653, %v5684
    %v5694 = vadd.f32 %v5104, %v5657
    %v5695 = vadd.f32 %v5104, %v5661
    %v5696 = vadd.f32 %v5104, %v5665
    %v5697 = vadd.f32 %v5104, %v5669
    %v5698 = vadd.f32 %v5104, %v5673
    %v5699 = vadd.f32 %v5104, %v5677
    %v5700 = vadd.f32 %v5104, %v5681
    %v5701 = vadd.f32 %v5104, %v5685
    %vm5702 = vcmp.ge.f32.partialorder %v5694, 0.0
    %vm5703 = vcmp.ge.f32.partialorder %v5695, 0.0
    %vm5704 = vcmp.ge.f32.partialorder %v5696, 0.0
    %vm5705 = vcmp.ge.f32.partialorder %v5697, 0.0
    %vm5706 = vcmp.ge.f32.partialorder %v5698, 0.0
    %vm5707 = vcmp.ge.f32.partialorder %v5699, 0.0
    %vm5708 = vcmp.ge.f32.partialorder %v5700, 0.0
    %vm5709 = vcmp.ge.f32.partialorder %v5701, 0.0
    %v5710 = vmul.f32 %v5694, 0.2
    %v5711 = vmul.f32 %v5695, 0.2
    %v5712 = vmul.f32 %v5696, 0.2
    %v5713 = vmul.f32 %v5697, 0.2
    %v5714 = vmul.f32 %v5698, 0.2
    %v5715 = vmul.f32 %v5699, 0.2
    %v5716 = vmul.f32 %v5700, 0.2
    %v5717 = vmul.f32 %v5701, 0.2
    %v5718 = vsel %vm5702, %v5694, %v5710
    %v5719 = vsel %vm5703, %v5695, %v5711
    %v5720 = vsel %vm5704, %v5696, %v5712
    %v5721 = vsel %vm5705, %v5697, %v5713
    %v5722 = vsel %vm5706, %v5698, %v5714
    %v5723 = vsel %vm5707, %v5699, %v5715
    %v5724 = vsel %vm5708, %v5700, %v5716
    %v5725 = vsel %vm5709, %v5701, %v5717
    %v5726 = vlaneseq
    %v5727 = vshrl.u32 %v5726, 7
    %v5728 = vsub.s32 1, %v5727
    %v5729 = vrot.slane %v4990, %v5728
    %v5730 = vmul.f32 %v5718, %v5729
    %v5731 = vmul.f32 %v5719, %v5729
    %v5732 = vmul.f32 %v5720, %v5729
    %v5733 = vmul.f32 %v5721, %v5729
    %v5734 = vmul.f32 %v5722, %v5729
    %v5735 = vmul.f32 %v5723, %v5729
    %v5736 = vmul.f32 %v5724, %v5729
    %v5737 = vmul.f32 %v5725, %v5729
    %5738 = vadd.xlane.f32.xlu0 %v5730
    %v5739 = vpop.xlane.xlu0 %5738
    %5740 = vadd.xlane.f32.xlu0 %v5731
    %v5741 = vpop.xlane.xlu0 %5740
    %5742 = vadd.xlane.f32.xlu0 %v5732
    %v5743 = vpop.xlane.xlu0 %5742
    %5744 = vadd.xlane.f32.xlu0 %v5733
    %v5745 = vpop.xlane.xlu0 %5744
    %5746 = vadd.xlane.f32.xlu0 %v5734
    %v5747 = vpop.xlane.xlu0 %5746
    %5748 = vadd.xlane.f32.xlu0 %v5735
    %v5749 = vpop.xlane.xlu0 %5748
    %5750 = vadd.xlane.f32.xlu0 %v5736
    %v5751 = vpop.xlane.xlu0 %5750
    %5752 = vadd.xlane.f32.xlu0 %v5737
    %v5753 = vpop.xlane.xlu0 %5752
    %v5762 = vlaneseq
    %v5763 = vshrl.u32 %v5762, 7
    %v5764 = vsub.s32 %v4078, %v5763
    %v5765 = vrot.slane %v5739, %v5764
    %v5766 = vlaneseq
    %v5767 = vshrl.u32 %v5766, 7
    %v5768 = vsub.s32 %v4078, %v5767
    %v5769 = vrot.slane %v5741, %v5768
    %v5770 = vlaneseq
    %v5771 = vshrl.u32 %v5770, 7
    %v5772 = vsub.s32 %v4078, %v5771
    %v5773 = vrot.slane %v5743, %v5772
    %v5774 = vlaneseq
    %v5775 = vshrl.u32 %v5774, 7
    %v5776 = vsub.s32 %v4078, %v5775
    %v5777 = vrot.slane %v5745, %v5776
    %v5778 = vlaneseq
    %v5779 = vshrl.u32 %v5778, 7
    %v5780 = vsub.s32 %v4078, %v5779
    %v5781 = vrot.slane %v5747, %v5780
    %v5782 = vlaneseq
    %v5783 = vshrl.u32 %v5782, 7
    %v5784 = vsub.s32 %v4078, %v5783
    %v5785 = vrot.slane %v5749, %v5784
    %v5786 = vlaneseq
    %v5787 = vshrl.u32 %v5786, 7
    %v5788 = vsub.s32 %v4078, %v5787
    %v5789 = vrot.slane %v5751, %v5788
    %v5790 = vlaneseq
    %v5791 = vshrl.u32 %v5790, 7
    %v5792 = vsub.s32 %v4078, %v5791
    %v5793 = vrot.slane %v5753, %v5792
    %v5794 = vsel %vm3513, %v5769, %v5765
    %v5795 = vsel %vm3515, %v5773, %v5794
    %v5796 = vsel %vm3517, %v5777, %v5795
    %v5797 = vsel %vm3519, %v5781, %v5796
    %v5798 = vsel %vm3521, %v5785, %v5797
    %v5799 = vsel %vm3523, %v5789, %v5798
    %v5800 = vsel %vm3525, %v5793, %v5799
    %v5802 = vsel %vm3725, %v5800, -1e+30
    %v5803 = vsel %vm4120, %v5802, -inf
    %5804 = vmax.xlane.f32.xlu0 %v5803
    %v5805 = vpop.xlane.xlu0 %5804
    %v5806 = vsub.f32 %v5802, %v5805
    %v5807 = vmul.f32 %v5806, 1.442695
    %v5808 = vpow.pop %v5807
    %v5809 = vsel %vm3725, %v5808, 0.0
    %v5810 = vsel %vm4120, %v5809, 0.0
    %5811 = vadd.xlane.f32.xlu0 %v5810
    %v5812 = vpop.xlane.xlu0 %5811
    %v5813 = vmax.f32 %v5812, 1e-20
    %v5814 = vrcp.pop %v5813
    %v5815 = vmul.f32 %v5809, %v5814
    %v5817 = vsel %vm4120, %v5815, 0
    %5819 = vmatprep.subr.mxu0 0.0
    %5820 = vmatpush1.msra.mxu0 0.0
    %5821 = vmatprep.subr.mxu0 0.0
    %5822 = vmatpush1.msra.mxu0 0.0
    %5823 = vmatprep.subr.mxu0 0.0
    %5824 = vmatpush1.msra.mxu0 0.0
    %5825 = vmatprep.subr.mxu0 0.0
    %5826 = vmatpush1.msra.mxu0 0.0
    %5827 = vmatprep.subr.mxu0 0.0
    %5828 = vmatpush1.msra.mxu0 0.0
    %5829 = vmatprep.subr.mxu0 0.0
    %5830 = vmatpush1.msra.mxu0 0.0
    %5831 = vmatprep.subr.mxu0 0.0
    %5832 = vmatpush1.msra.mxu0 0.0
    %5833 = vmatprep.subr.mxu0 0.0
    %5834 = vmatpush1.msra.mxu0 0.0
    %5835 = vmatprep.subr.mxu0 0.0
    %5836 = vmatpush1.msra.mxu0 0.0
    %5837 = vmatprep.subr.mxu0 0.0
    %5838 = vmatpush1.msra.mxu0 0.0
    %5839 = vmatprep.subr.mxu0 0.0
    %5840 = vmatpush1.msra.mxu0 0.0
    %5841 = vmatprep.subr.mxu0 0.0
    %5842 = vmatpush1.msra.mxu0 0.0
    %5843 = vmatprep.subr.mxu0 0.0
    %5844 = vmatpush1.msra.mxu0 0.0
    %5845 = vmatprep.subr.mxu0 0.0
    %5846 = vmatpush1.msra.mxu0 0.0
    %5847 = vmatprep.subr.mxu0 0.0
    %5848 = vmatpush1.msra.mxu0 0.0
    %5849 = vmatprep.subr.mxu0 0.0
    %5850 = vmatpush1.msra.mxu0 %v5104
    %5851 = vmatprep.subr.mxu0 0.0
    %5852 = vmatpush2.msra.mxu0 0.0
    %5853 = vmatprep.subr.mxu0 0.0
    %5854 = vmatpush2.msra.mxu0 0.0
    %5855 = vmatprep.subr.mxu0 0.0
    %5856 = vmatpush2.msra.mxu0 0.0
    %5857 = vmatprep.subr.mxu0 0.0
    %5858 = vmatpush2.msra.mxu0 0.0
    %5859 = vmatprep.subr.mxu0 0.0
    %5860 = vmatpush2.msra.mxu0 0.0
    %5861 = vmatprep.subr.mxu0 0.0
    %5862 = vmatpush2.msra.mxu0 0.0
    %5863 = vmatprep.subr.mxu0 0.0
    %5864 = vmatpush2.msra.mxu0 0.0
    %5865 = vmatprep.subr.mxu0 0.0
    %5866 = vmatpush2.msra.mxu0 0.0
    %5867 = vmatprep.subr.mxu0 0.0
    %5868 = vmatpush2.msra.mxu0 0.0
    %5869 = vmatprep.subr.mxu0 0.0
    %5870 = vmatpush2.msra.mxu0 0.0
    %5871 = vmatprep.subr.mxu0 0.0
    %5872 = vmatpush2.msra.mxu0 0.0
    %5873 = vmatprep.subr.mxu0 0.0
    %5874 = vmatpush2.msra.mxu0 0.0
    %5875 = vmatprep.subr.mxu0 0.0
    %5876 = vmatpush2.msra.mxu0 0.0
    %5877 = vmatprep.subr.mxu0 0.0
    %5878 = vmatpush2.msra.mxu0 0.0
    %5879 = vmatprep.subr.mxu0 0.0
    %5880 = vmatpush2.msra.mxu0 0.0
    %5881 = vmatprep.subr.mxu0 0.0
    %5882 = vmatpush2.msra.mxu0 0.0
    %5883 = vmatprep.mubr.f32.mxu0 0.0
    %5884 = vmatmul.mubr.f32.gmra.mxu0 %v5817
    %v5885 = vpop.f32.mrf.mxu0
    %v5886 = vadd.f32 0.0, %v5885
    %v5887 = vpop.f32.mrf.mxu0
    %5888 = vdwg.mxu0
    %v5889 = vmax.f32 %v5601, %v5886
    %v5891 = vcombine.high %v5315, %v5315
    %v5893 = vunpack.c.l.s4 1966171168
    %v5894 = vunpack.c.0.s8 %v5893
    %v5895 = vlaneseq
    %v5896 = vshrl.u32 %v5895, 7
    %v5897 = vsub.s32 %v5894, %v5896
    %v5898 = vrot.slane %v5315, %v5897
    %v5900 = vunpack.c.l.s4 1966171168
    %v5901 = vunpack.c.0.s8 %v5900
    %v5902 = vlaneseq
    %v5903 = vshrl.u32 %v5902, 7
    %v5904 = vsub.s32 %v5901, %v5903
    %v5905 = vrot.slane %v5891, %v5904
    %v5906 = vcombine.high %v5898, %v5898
    %v5907 = vcombine.high %v5905, %v5905
    %v5909 = vunpack.c.l.s4 1966171168
    %v5910 = vunpack.c.0.s8 %v5909
    %v5911 = vlaneseq
    %v5912 = vshrl.u32 %v5911, 7
    %v5913 = vsub.s32 %v5910, %v5912
    %v5914 = vrot.slane %v5898, %v5913
    %v5916 = vunpack.c.l.s4 1966171168
    %v5917 = vunpack.c.0.s8 %v5916
    %v5918 = vlaneseq
    %v5919 = vshrl.u32 %v5918, 7
    %v5920 = vsub.s32 %v5917, %v5919
    %v5921 = vrot.slane %v5905, %v5920
    %v5923 = vunpack.c.l.s4 1966171168
    %v5924 = vunpack.c.0.s8 %v5923
    %v5925 = vlaneseq
    %v5926 = vshrl.u32 %v5925, 7
    %v5927 = vsub.s32 %v5924, %v5926
    %v5928 = vrot.slane %v5906, %v5927
    %v5930 = vunpack.c.l.s4 1966171168
    %v5931 = vunpack.c.0.s8 %v5930
    %v5932 = vlaneseq
    %v5933 = vshrl.u32 %v5932, 7
    %v5934 = vsub.s32 %v5931, %v5933
    %v5935 = vrot.slane %v5907, %v5934
    %v5936 = vcombine.high %v5914, %v5914
    %v5937 = vcombine.high %v5921, %v5921
    %v5938 = vcombine.high %v5928, %v5928
    %v5939 = vcombine.high %v5935, %v5935
    %v5940 = vlaneseq
    %v5941 = vshrl.u32 %v5940, 7
    %v5942 = vsub.s32 0, %v5941
    %v5943 = vrot.slane %v5914, %v5942
    %v5944 = vlaneseq
    %v5945 = vshrl.u32 %v5944, 7
    %v5946 = vsub.s32 0, %v5945
    %v5947 = vrot.slane %v5928, %v5946
    %v5948 = vlaneseq
    %v5949 = vshrl.u32 %v5948, 7
    %v5950 = vsub.s32 0, %v5949
    %v5951 = vrot.slane %v5936, %v5950
    %v5952 = vlaneseq
    %v5953 = vshrl.u32 %v5952, 7
    %v5954 = vsub.s32 0, %v5953
    %v5955 = vrot.slane %v5938, %v5954
    %v5956 = vlaneseq
    %v5957 = vshrl.u32 %v5956, 7
    %v5958 = vsub.s32 0, %v5957
    %v5959 = vrot.slane %v5921, %v5958
    %v5960 = vlaneseq
    %v5961 = vshrl.u32 %v5960, 7
    %v5962 = vsub.s32 0, %v5961
    %v5963 = vrot.slane %v5935, %v5962
    %v5964 = vlaneseq
    %v5965 = vshrl.u32 %v5964, 7
    %v5966 = vsub.s32 0, %v5965
    %v5967 = vrot.slane %v5937, %v5966
    %v5968 = vlaneseq
    %v5969 = vshrl.u32 %v5968, 7
    %v5970 = vsub.s32 0, %v5969
    %v5971 = vrot.slane %v5939, %v5970
    %v5980 = vadd.f32 %v5173, %v5943
    %v5981 = vadd.f32 %v5173, %v5947
    %v5982 = vadd.f32 %v5173, %v5951
    %v5983 = vadd.f32 %v5173, %v5955
    %v5984 = vadd.f32 %v5173, %v5959
    %v5985 = vadd.f32 %v5173, %v5963
    %v5986 = vadd.f32 %v5173, %v5967
    %v5987 = vadd.f32 %v5173, %v5971
    %vm5988 = vcmp.ge.f32.partialorder %v5980, 0.0
    %vm5989 = vcmp.ge.f32.partialorder %v5981, 0.0
    %vm5990 = vcmp.ge.f32.partialorder %v5982, 0.0
    %vm5991 = vcmp.ge.f32.partialorder %v5983, 0.0
    %vm5992 = vcmp.ge.f32.partialorder %v5984, 0.0
    %vm5993 = vcmp.ge.f32.partialorder %v5985, 0.0
    %vm5994 = vcmp.ge.f32.partialorder %v5986, 0.0
    %vm5995 = vcmp.ge.f32.partialorder %v5987, 0.0
    %v5996 = vmul.f32 %v5980, 0.2
    %v5997 = vmul.f32 %v5981, 0.2
    %v5998 = vmul.f32 %v5982, 0.2
    %v5999 = vmul.f32 %v5983, 0.2
    %v6000 = vmul.f32 %v5984, 0.2
    %v6001 = vmul.f32 %v5985, 0.2
    %v6002 = vmul.f32 %v5986, 0.2
    %v6003 = vmul.f32 %v5987, 0.2
    %v6004 = vsel %vm5988, %v5980, %v5996
    %v6005 = vsel %vm5989, %v5981, %v5997
    %v6006 = vsel %vm5990, %v5982, %v5998
    %v6007 = vsel %vm5991, %v5983, %v5999
    %v6008 = vsel %vm5992, %v5984, %v6000
    %v6009 = vsel %vm5993, %v5985, %v6001
    %v6010 = vsel %vm5994, %v5986, %v6002
    %v6011 = vsel %vm5995, %v5987, %v6003
    %v6012 = vlaneseq
    %v6013 = vshrl.u32 %v6012, 7
    %v6014 = vsub.s32 2, %v6013
    %v6015 = vrot.slane %v4990, %v6014
    %v6016 = vmul.f32 %v6004, %v6015
    %v6017 = vmul.f32 %v6005, %v6015
    %v6018 = vmul.f32 %v6006, %v6015
    %v6019 = vmul.f32 %v6007, %v6015
    %v6020 = vmul.f32 %v6008, %v6015
    %v6021 = vmul.f32 %v6009, %v6015
    %v6022 = vmul.f32 %v6010, %v6015
    %v6023 = vmul.f32 %v6011, %v6015
    %6024 = vadd.xlane.f32.xlu0 %v6016
    %v6025 = vpop.xlane.xlu0 %6024
    %6026 = vadd.xlane.f32.xlu0 %v6017
    %v6027 = vpop.xlane.xlu0 %6026
    %6028 = vadd.xlane.f32.xlu0 %v6018
    %v6029 = vpop.xlane.xlu0 %6028
    %6030 = vadd.xlane.f32.xlu0 %v6019
    %v6031 = vpop.xlane.xlu0 %6030
    %6032 = vadd.xlane.f32.xlu0 %v6020
    %v6033 = vpop.xlane.xlu0 %6032
    %6034 = vadd.xlane.f32.xlu0 %v6021
    %v6035 = vpop.xlane.xlu0 %6034
    %6036 = vadd.xlane.f32.xlu0 %v6022
    %v6037 = vpop.xlane.xlu0 %6036
    %6038 = vadd.xlane.f32.xlu0 %v6023
    %v6039 = vpop.xlane.xlu0 %6038
    %v6048 = vlaneseq
    %v6049 = vshrl.u32 %v6048, 7
    %v6050 = vsub.s32 %v4078, %v6049
    %v6051 = vrot.slane %v6025, %v6050
    %v6052 = vlaneseq
    %v6053 = vshrl.u32 %v6052, 7
    %v6054 = vsub.s32 %v4078, %v6053
    %v6055 = vrot.slane %v6027, %v6054
    %v6056 = vlaneseq
    %v6057 = vshrl.u32 %v6056, 7
    %v6058 = vsub.s32 %v4078, %v6057
    %v6059 = vrot.slane %v6029, %v6058
    %v6060 = vlaneseq
    %v6061 = vshrl.u32 %v6060, 7
    %v6062 = vsub.s32 %v4078, %v6061
    %v6063 = vrot.slane %v6031, %v6062
    %v6064 = vlaneseq
    %v6065 = vshrl.u32 %v6064, 7
    %v6066 = vsub.s32 %v4078, %v6065
    %v6067 = vrot.slane %v6033, %v6066
    %v6068 = vlaneseq
    %v6069 = vshrl.u32 %v6068, 7
    %v6070 = vsub.s32 %v4078, %v6069
    %v6071 = vrot.slane %v6035, %v6070
    %v6072 = vlaneseq
    %v6073 = vshrl.u32 %v6072, 7
    %v6074 = vsub.s32 %v4078, %v6073
    %v6075 = vrot.slane %v6037, %v6074
    %v6076 = vlaneseq
    %v6077 = vshrl.u32 %v6076, 7
    %v6078 = vsub.s32 %v4078, %v6077
    %v6079 = vrot.slane %v6039, %v6078
    %v6080 = vsel %vm3513, %v6055, %v6051
    %v6081 = vsel %vm3515, %v6059, %v6080
    %v6082 = vsel %vm3517, %v6063, %v6081
    %v6083 = vsel %vm3519, %v6067, %v6082
    %v6084 = vsel %vm3521, %v6071, %v6083
    %v6085 = vsel %vm3523, %v6075, %v6084
    %v6086 = vsel %vm3525, %v6079, %v6085
    %v6088 = vsel %vm3725, %v6086, -1e+30
    %v6089 = vsel %vm4120, %v6088, -inf
    %6090 = vmax.xlane.f32.xlu0 %v6089
    %v6091 = vpop.xlane.xlu0 %6090
    %v6092 = vsub.f32 %v6088, %v6091
    %v6093 = vmul.f32 %v6092, 1.442695
    %v6094 = vpow.pop %v6093
    %v6095 = vsel %vm3725, %v6094, 0.0
    %v6096 = vsel %vm4120, %v6095, 0.0
    %6097 = vadd.xlane.f32.xlu0 %v6096
    %v6098 = vpop.xlane.xlu0 %6097
    %v6099 = vmax.f32 %v6098, 1e-20
    %v6100 = vrcp.pop %v6099
    %v6101 = vmul.f32 %v6095, %v6100
    %v6103 = vsel %vm4120, %v6101, 0
    %6105 = vmatprep.subr.mxu0 0.0
    %6106 = vmatpush1.msra.mxu0 0.0
    %6107 = vmatprep.subr.mxu0 0.0
    %6108 = vmatpush1.msra.mxu0 0.0
    %6109 = vmatprep.subr.mxu0 0.0
    %6110 = vmatpush1.msra.mxu0 0.0
    %6111 = vmatprep.subr.mxu0 0.0
    %6112 = vmatpush1.msra.mxu0 0.0
    %6113 = vmatprep.subr.mxu0 0.0
    %6114 = vmatpush1.msra.mxu0 0.0
    %6115 = vmatprep.subr.mxu0 0.0
    %6116 = vmatpush1.msra.mxu0 0.0
    %6117 = vmatprep.subr.mxu0 0.0
    %6118 = vmatpush1.msra.mxu0 0.0
    %6119 = vmatprep.subr.mxu0 0.0
    %6120 = vmatpush1.msra.mxu0 0.0
    %6121 = vmatprep.subr.mxu0 0.0
    %6122 = vmatpush1.msra.mxu0 0.0
    %6123 = vmatprep.subr.mxu0 0.0
    %6124 = vmatpush1.msra.mxu0 0.0
    %6125 = vmatprep.subr.mxu0 0.0
    %6126 = vmatpush1.msra.mxu0 0.0
    %6127 = vmatprep.subr.mxu0 0.0
    %6128 = vmatpush1.msra.mxu0 0.0
    %6129 = vmatprep.subr.mxu0 0.0
    %6130 = vmatpush1.msra.mxu0 0.0
    %6131 = vmatprep.subr.mxu0 0.0
    %6132 = vmatpush1.msra.mxu0 0.0
    %6133 = vmatprep.subr.mxu0 0.0
    %6134 = vmatpush1.msra.mxu0 0.0
    %6135 = vmatprep.subr.mxu0 0.0
    %6136 = vmatpush1.msra.mxu0 %v5173
    %6137 = vmatprep.subr.mxu0 0.0
    %6138 = vmatpush2.msra.mxu0 0.0
    %6139 = vmatprep.subr.mxu0 0.0
    %6140 = vmatpush2.msra.mxu0 0.0
    %6141 = vmatprep.subr.mxu0 0.0
    %6142 = vmatpush2.msra.mxu0 0.0
    %6143 = vmatprep.subr.mxu0 0.0
    %6144 = vmatpush2.msra.mxu0 0.0
    %6145 = vmatprep.subr.mxu0 0.0
    %6146 = vmatpush2.msra.mxu0 0.0
    %6147 = vmatprep.subr.mxu0 0.0
    %6148 = vmatpush2.msra.mxu0 0.0
    %6149 = vmatprep.subr.mxu0 0.0
    %6150 = vmatpush2.msra.mxu0 0.0
    %6151 = vmatprep.subr.mxu0 0.0
    %6152 = vmatpush2.msra.mxu0 0.0
    %6153 = vmatprep.subr.mxu0 0.0
    %6154 = vmatpush2.msra.mxu0 0.0
    %6155 = vmatprep.subr.mxu0 0.0
    %6156 = vmatpush2.msra.mxu0 0.0
    %6157 = vmatprep.subr.mxu0 0.0
    %6158 = vmatpush2.msra.mxu0 0.0
    %6159 = vmatprep.subr.mxu0 0.0
    %6160 = vmatpush2.msra.mxu0 0.0
    %6161 = vmatprep.subr.mxu0 0.0
    %6162 = vmatpush2.msra.mxu0 0.0
    %6163 = vmatprep.subr.mxu0 0.0
    %6164 = vmatpush2.msra.mxu0 0.0
    %6165 = vmatprep.subr.mxu0 0.0
    %6166 = vmatpush2.msra.mxu0 0.0
    %6167 = vmatprep.subr.mxu0 0.0
    %6168 = vmatpush2.msra.mxu0 0.0
    %6169 = vmatprep.mubr.f32.mxu0 0.0
    %6170 = vmatmul.mubr.f32.gmra.mxu0 %v6103
    %v6171 = vpop.f32.mrf.mxu0
    %v6172 = vadd.f32 0.0, %v6171
    %v6173 = vpop.f32.mrf.mxu0
    %6174 = vdwg.mxu0
    %v6175 = vmax.f32 %v5889, %v6172
    %v6177 = vcombine.high %v5317, %v5317
    %v6179 = vunpack.c.l.s4 1966171168
    %v6180 = vunpack.c.0.s8 %v6179
    %v6181 = vlaneseq
    %v6182 = vshrl.u32 %v6181, 7
    %v6183 = vsub.s32 %v6180, %v6182
    %v6184 = vrot.slane %v5317, %v6183
    %v6186 = vunpack.c.l.s4 1966171168
    %v6187 = vunpack.c.0.s8 %v6186
    %v6188 = vlaneseq
    %v6189 = vshrl.u32 %v6188, 7
    %v6190 = vsub.s32 %v6187, %v6189
    %v6191 = vrot.slane %v6177, %v6190
    %v6192 = vcombine.high %v6184, %v6184
    %v6193 = vcombine.high %v6191, %v6191
    %v6195 = vunpack.c.l.s4 1966171168
    %v6196 = vunpack.c.0.s8 %v6195
    %v6197 = vlaneseq
    %v6198 = vshrl.u32 %v6197, 7
    %v6199 = vsub.s32 %v6196, %v6198
    %v6200 = vrot.slane %v6184, %v6199
    %v6202 = vunpack.c.l.s4 1966171168
    %v6203 = vunpack.c.0.s8 %v6202
    %v6204 = vlaneseq
    %v6205 = vshrl.u32 %v6204, 7
    %v6206 = vsub.s32 %v6203, %v6205
    %v6207 = vrot.slane %v6191, %v6206
    %v6209 = vunpack.c.l.s4 1966171168
    %v6210 = vunpack.c.0.s8 %v6209
    %v6211 = vlaneseq
    %v6212 = vshrl.u32 %v6211, 7
    %v6213 = vsub.s32 %v6210, %v6212
    %v6214 = vrot.slane %v6192, %v6213
    %v6216 = vunpack.c.l.s4 1966171168
    %v6217 = vunpack.c.0.s8 %v6216
    %v6218 = vlaneseq
    %v6219 = vshrl.u32 %v6218, 7
    %v6220 = vsub.s32 %v6217, %v6219
    %v6221 = vrot.slane %v6193, %v6220
    %v6222 = vcombine.high %v6200, %v6200
    %v6223 = vcombine.high %v6207, %v6207
    %v6224 = vcombine.high %v6214, %v6214
    %v6225 = vcombine.high %v6221, %v6221
    %v6226 = vlaneseq
    %v6227 = vshrl.u32 %v6226, 7
    %v6228 = vsub.s32 0, %v6227
    %v6229 = vrot.slane %v6200, %v6228
    %v6230 = vlaneseq
    %v6231 = vshrl.u32 %v6230, 7
    %v6232 = vsub.s32 0, %v6231
    %v6233 = vrot.slane %v6214, %v6232
    %v6234 = vlaneseq
    %v6235 = vshrl.u32 %v6234, 7
    %v6236 = vsub.s32 0, %v6235
    %v6237 = vrot.slane %v6222, %v6236
    %v6238 = vlaneseq
    %v6239 = vshrl.u32 %v6238, 7
    %v6240 = vsub.s32 0, %v6239
    %v6241 = vrot.slane %v6224, %v6240
    %v6242 = vlaneseq
    %v6243 = vshrl.u32 %v6242, 7
    %v6244 = vsub.s32 0, %v6243
    %v6245 = vrot.slane %v6207, %v6244
    %v6246 = vlaneseq
    %v6247 = vshrl.u32 %v6246, 7
    %v6248 = vsub.s32 0, %v6247
    %v6249 = vrot.slane %v6221, %v6248
    %v6250 = vlaneseq
    %v6251 = vshrl.u32 %v6250, 7
    %v6252 = vsub.s32 0, %v6251
    %v6253 = vrot.slane %v6223, %v6252
    %v6254 = vlaneseq
    %v6255 = vshrl.u32 %v6254, 7
    %v6256 = vsub.s32 0, %v6255
    %v6257 = vrot.slane %v6225, %v6256
    %v6266 = vadd.f32 %v5175, %v6229
    %v6267 = vadd.f32 %v5175, %v6233
    %v6268 = vadd.f32 %v5175, %v6237
    %v6269 = vadd.f32 %v5175, %v6241
    %v6270 = vadd.f32 %v5175, %v6245
    %v6271 = vadd.f32 %v5175, %v6249
    %v6272 = vadd.f32 %v5175, %v6253
    %v6273 = vadd.f32 %v5175, %v6257
    %vm6274 = vcmp.ge.f32.partialorder %v6266, 0.0
    %vm6275 = vcmp.ge.f32.partialorder %v6267, 0.0
    %vm6276 = vcmp.ge.f32.partialorder %v6268, 0.0
    %vm6277 = vcmp.ge.f32.partialorder %v6269, 0.0
    %vm6278 = vcmp.ge.f32.partialorder %v6270, 0.0
    %vm6279 = vcmp.ge.f32.partialorder %v6271, 0.0
    %vm6280 = vcmp.ge.f32.partialorder %v6272, 0.0
    %vm6281 = vcmp.ge.f32.partialorder %v6273, 0.0
    %v6282 = vmul.f32 %v6266, 0.2
    %v6283 = vmul.f32 %v6267, 0.2
    %v6284 = vmul.f32 %v6268, 0.2
    %v6285 = vmul.f32 %v6269, 0.2
    %v6286 = vmul.f32 %v6270, 0.2
    %v6287 = vmul.f32 %v6271, 0.2
    %v6288 = vmul.f32 %v6272, 0.2
    %v6289 = vmul.f32 %v6273, 0.2
    %v6290 = vsel %vm6274, %v6266, %v6282
    %v6291 = vsel %vm6275, %v6267, %v6283
    %v6292 = vsel %vm6276, %v6268, %v6284
    %v6293 = vsel %vm6277, %v6269, %v6285
    %v6294 = vsel %vm6278, %v6270, %v6286
    %v6295 = vsel %vm6279, %v6271, %v6287
    %v6296 = vsel %vm6280, %v6272, %v6288
    %v6297 = vsel %vm6281, %v6273, %v6289
    %v6298 = vlaneseq
    %v6299 = vshrl.u32 %v6298, 7
    %v6300 = vsub.s32 3, %v6299
    %v6301 = vrot.slane %v4990, %v6300
    %v6302 = vmul.f32 %v6290, %v6301
    %v6303 = vmul.f32 %v6291, %v6301
    %v6304 = vmul.f32 %v6292, %v6301
    %v6305 = vmul.f32 %v6293, %v6301
    %v6306 = vmul.f32 %v6294, %v6301
    %v6307 = vmul.f32 %v6295, %v6301
    %v6308 = vmul.f32 %v6296, %v6301
    %v6309 = vmul.f32 %v6297, %v6301
    %6310 = vadd.xlane.f32.xlu0 %v6302
    %v6311 = vpop.xlane.xlu0 %6310
    %6312 = vadd.xlane.f32.xlu0 %v6303
    %v6313 = vpop.xlane.xlu0 %6312
    %6314 = vadd.xlane.f32.xlu0 %v6304
    %v6315 = vpop.xlane.xlu0 %6314
    %6316 = vadd.xlane.f32.xlu0 %v6305
    %v6317 = vpop.xlane.xlu0 %6316
    %6318 = vadd.xlane.f32.xlu0 %v6306
    %v6319 = vpop.xlane.xlu0 %6318
    %6320 = vadd.xlane.f32.xlu0 %v6307
    %v6321 = vpop.xlane.xlu0 %6320
    %6322 = vadd.xlane.f32.xlu0 %v6308
    %v6323 = vpop.xlane.xlu0 %6322
    %6324 = vadd.xlane.f32.xlu0 %v6309
    %v6325 = vpop.xlane.xlu0 %6324
    %v6334 = vlaneseq
    %v6335 = vshrl.u32 %v6334, 7
    %v6336 = vsub.s32 %v4078, %v6335
    %v6337 = vrot.slane %v6311, %v6336
    %v6338 = vlaneseq
    %v6339 = vshrl.u32 %v6338, 7
    %v6340 = vsub.s32 %v4078, %v6339
    %v6341 = vrot.slane %v6313, %v6340
    %v6342 = vlaneseq
    %v6343 = vshrl.u32 %v6342, 7
    %v6344 = vsub.s32 %v4078, %v6343
    %v6345 = vrot.slane %v6315, %v6344
    %v6346 = vlaneseq
    %v6347 = vshrl.u32 %v6346, 7
    %v6348 = vsub.s32 %v4078, %v6347
    %v6349 = vrot.slane %v6317, %v6348
    %v6350 = vlaneseq
    %v6351 = vshrl.u32 %v6350, 7
    %v6352 = vsub.s32 %v4078, %v6351
    %v6353 = vrot.slane %v6319, %v6352
    %v6354 = vlaneseq
    %v6355 = vshrl.u32 %v6354, 7
    %v6356 = vsub.s32 %v4078, %v6355
    %v6357 = vrot.slane %v6321, %v6356
    %v6358 = vlaneseq
    %v6359 = vshrl.u32 %v6358, 7
    %v6360 = vsub.s32 %v4078, %v6359
    %v6361 = vrot.slane %v6323, %v6360
    %v6362 = vlaneseq
    %v6363 = vshrl.u32 %v6362, 7
    %v6364 = vsub.s32 %v4078, %v6363
    %v6365 = vrot.slane %v6325, %v6364
    %v6366 = vsel %vm3513, %v6341, %v6337
    %v6367 = vsel %vm3515, %v6345, %v6366
    %v6368 = vsel %vm3517, %v6349, %v6367
    %v6369 = vsel %vm3519, %v6353, %v6368
    %v6370 = vsel %vm3521, %v6357, %v6369
    %v6371 = vsel %vm3523, %v6361, %v6370
    %v6372 = vsel %vm3525, %v6365, %v6371
    %v6374 = vsel %vm3725, %v6372, -1e+30
    %v6375 = vsel %vm4120, %v6374, -inf
    %6376 = vmax.xlane.f32.xlu0 %v6375
    %v6377 = vpop.xlane.xlu0 %6376
    %v6378 = vsub.f32 %v6374, %v6377
    %v6379 = vmul.f32 %v6378, 1.442695
    %v6380 = vpow.pop %v6379
    %v6381 = vsel %vm3725, %v6380, 0.0
    %v6382 = vsel %vm4120, %v6381, 0.0
    %6383 = vadd.xlane.f32.xlu0 %v6382
    %v6384 = vpop.xlane.xlu0 %6383
    %v6385 = vmax.f32 %v6384, 1e-20
    %v6386 = vrcp.pop %v6385
    %v6387 = vmul.f32 %v6381, %v6386
    %v6389 = vsel %vm4120, %v6387, 0
    %6391 = vmatprep.subr.mxu0 0.0
    %6392 = vmatpush1.msra.mxu0 0.0
    %6393 = vmatprep.subr.mxu0 0.0
    %6394 = vmatpush1.msra.mxu0 0.0
    %6395 = vmatprep.subr.mxu0 0.0
    %6396 = vmatpush1.msra.mxu0 0.0
    %6397 = vmatprep.subr.mxu0 0.0
    %6398 = vmatpush1.msra.mxu0 0.0
    %6399 = vmatprep.subr.mxu0 0.0
    %6400 = vmatpush1.msra.mxu0 0.0
    %6401 = vmatprep.subr.mxu0 0.0
    %6402 = vmatpush1.msra.mxu0 0.0
    %6403 = vmatprep.subr.mxu0 0.0
    %6404 = vmatpush1.msra.mxu0 0.0
    %6405 = vmatprep.subr.mxu0 0.0
    %6406 = vmatpush1.msra.mxu0 0.0
    %6407 = vmatprep.subr.mxu0 0.0
    %6408 = vmatpush1.msra.mxu0 0.0
    %6409 = vmatprep.subr.mxu0 0.0
    %6410 = vmatpush1.msra.mxu0 0.0
    %6411 = vmatprep.subr.mxu0 0.0
    %6412 = vmatpush1.msra.mxu0 0.0
    %6413 = vmatprep.subr.mxu0 0.0
    %6414 = vmatpush1.msra.mxu0 0.0
    %6415 = vmatprep.subr.mxu0 0.0
    %6416 = vmatpush1.msra.mxu0 0.0
    %6417 = vmatprep.subr.mxu0 0.0
    %6418 = vmatpush1.msra.mxu0 0.0
    %6419 = vmatprep.subr.mxu0 0.0
    %6420 = vmatpush1.msra.mxu0 0.0
    %6421 = vmatprep.subr.mxu0 0.0
    %6422 = vmatpush1.msra.mxu0 %v5175
    %6423 = vmatprep.subr.mxu0 0.0
    %6424 = vmatpush2.msra.mxu0 0.0
    %6425 = vmatprep.subr.mxu0 0.0
    %6426 = vmatpush2.msra.mxu0 0.0
    %6427 = vmatprep.subr.mxu0 0.0
    %6428 = vmatpush2.msra.mxu0 0.0
    %6429 = vmatprep.subr.mxu0 0.0
    %6430 = vmatpush2.msra.mxu0 0.0
    %6431 = vmatprep.subr.mxu0 0.0
    %6432 = vmatpush2.msra.mxu0 0.0
    %6433 = vmatprep.subr.mxu0 0.0
    %6434 = vmatpush2.msra.mxu0 0.0
    %6435 = vmatprep.subr.mxu0 0.0
    %6436 = vmatpush2.msra.mxu0 0.0
    %6437 = vmatprep.subr.mxu0 0.0
    %6438 = vmatpush2.msra.mxu0 0.0
    %6439 = vmatprep.subr.mxu0 0.0
    %6440 = vmatpush2.msra.mxu0 0.0
    %6441 = vmatprep.subr.mxu0 0.0
    %6442 = vmatpush2.msra.mxu0 0.0
    %6443 = vmatprep.subr.mxu0 0.0
    %6444 = vmatpush2.msra.mxu0 0.0
    %6445 = vmatprep.subr.mxu0 0.0
    %6446 = vmatpush2.msra.mxu0 0.0
    %6447 = vmatprep.subr.mxu0 0.0
    %6448 = vmatpush2.msra.mxu0 0.0
    %6449 = vmatprep.subr.mxu0 0.0
    %6450 = vmatpush2.msra.mxu0 0.0
    %6451 = vmatprep.subr.mxu0 0.0
    %6452 = vmatpush2.msra.mxu0 0.0
    %6453 = vmatprep.subr.mxu0 0.0
    %6454 = vmatpush2.msra.mxu0 0.0
    %6455 = vmatprep.mubr.f32.mxu0 0.0
    %6456 = vmatmul.mubr.f32.gmra.mxu0 %v6389
    %v6457 = vpop.f32.mrf.mxu0
    %v6458 = vadd.f32 0.0, %v6457
    %v6459 = vpop.f32.mrf.mxu0
    %6460 = vdwg.mxu0
    %v6461 = vmax.f32 %v6175, %v6458
    %v6462 = vld [vmem:[#allocation29] sm:$0x1]
    %v6463 = vld [vmem:[#allocation2] sm:$0x1]
    %v6464 = vld [vmem:[#allocation31] sm:$0xff]
    %v6465 = vld [vmem:[#allocation31 + $0x8] sm:$0xff]
    %v6466 = vld [vmem:[#allocation31 + $0x10] sm:$0xff]
    %v6467 = vld [vmem:[#allocation31 + $0x18] sm:$0xff]
    %v6468 = vld [vmem:[#allocation31 + $0x20] sm:$0xff]
    %v6469 = vld [vmem:[#allocation31 + $0x28] sm:$0xff]
    %v6470 = vld [vmem:[#allocation31 + $0x30] sm:$0xff]
    %v6471 = vld [vmem:[#allocation31 + $0x38] sm:$0xff]
    %v6472 = vld [vmem:[#allocation31 + $0x40] sm:$0xff]
    %v6473 = vld [vmem:[#allocation31 + $0x48] sm:$0xff]
    %v6474 = vld [vmem:[#allocation31 + $0x50] sm:$0xff]
    %v6475 = vld [vmem:[#allocation31 + $0x58] sm:$0xff]
    %v6476 = vld [vmem:[#allocation31 + $0x60] sm:$0xff]
    %v6477 = vld [vmem:[#allocation31 + $0x68] sm:$0xff]
    %v6478 = vld [vmem:[#allocation31 + $0x70] sm:$0xff]
    %v6479 = vld [vmem:[#allocation31 + $0x78] sm:$0xff]
    %v6480 = vld [vmem:[#allocation32] sm:$0x1]
    %v6481 = vld [vmem:[#allocation34] sm:$0xff]
    %v6482 = vld [vmem:[#allocation34 + $0x8] sm:$0xff]
    %v6483 = vld [vmem:[#allocation34 + $0x10] sm:$0xff]
    %v6484 = vld [vmem:[#allocation34 + $0x18] sm:$0xff]
    %v6485 = vld [vmem:[#allocation34 + $0x20] sm:$0xff]
    %v6486 = vld [vmem:[#allocation34 + $0x28] sm:$0xff]
    %v6487 = vld [vmem:[#allocation34 + $0x30] sm:$0xff]
    %v6488 = vld [vmem:[#allocation34 + $0x38] sm:$0xff]
    %v6489 = vld [vmem:[#allocation34 + $0x40] sm:$0xff]
    %v6490 = vld [vmem:[#allocation34 + $0x48] sm:$0xff]
    %v6491 = vld [vmem:[#allocation34 + $0x50] sm:$0xff]
    %v6492 = vld [vmem:[#allocation34 + $0x58] sm:$0xff]
    %v6493 = vld [vmem:[#allocation34 + $0x60] sm:$0xff]
    %v6494 = vld [vmem:[#allocation34 + $0x68] sm:$0xff]
    %v6495 = vld [vmem:[#allocation34 + $0x70] sm:$0xff]
    %v6496 = vld [vmem:[#allocation34 + $0x78] sm:$0xff]
    %v6497 = vld [vmem:[#allocation35] sm:$0x1]
    %v6499 = vlaneseq
    %v6500 = vshrl.u32 %v6499, 7
    %v6501 = vsub.s32 0, %v6500
    %v6502 = vrot.slane %v6462, %v6501
    %v6504 = vmul.f32 %v6461, %v6502
    %v6505 = vsel %vm921, %v6504, 0.0
    %6506 = vadd.xlane.f32.xlu0 %v6505
    %v6507 = vpop.xlane.xlu0 %6506
    %v6509 = vlaneseq
    %v6510 = vshrl.u32 %v6509, 7
    %v6511 = vsub.s32 0, %v6510
    %v6512 = vrot.slane %v6463, %v6511
    %v6514 = vadd.f32 %v6507, %v6512
    %vm6515 = vcmask 3072
    %v6516 = vsel %vm6515, %v6514, -inf
    %v6517 = vrot.slane %v6516, 4
    %v6518 = vmax.f32 %v6516, %v6517
    %v6519 = vrot.slane %v6518, 2
    %v6520 = vmax.f32 %v6518, %v6519
    %v6521 = vrot.slane %v6520, 1
    %v6522 = vmax.f32 %v6520, %v6521
    %v6523 = vsub.f32 %v6514, %v6522
    %v6524 = vmul.f32 %v6523, 1.442695
    %v6525 = vpow.pop %v6524
    %v6526 = vsel %vm6515, %v6525, 0.0
    %v6527 = vrot.slane %v6526, 4
    %v6528 = vadd.f32 %v6526, %v6527
    %v6529 = vrot.slane %v6528, 2
    %v6530 = vadd.f32 %v6528, %v6529
    %v6531 = vrot.slane %v6530, 1
    %v6532 = vadd.f32 %v6530, %v6531
    %v6533 = vrcp.pop %v6532
    %v6534 = vmul.f32 %v6525, %v6533
    %6536 = vset.pattern.permute.xlu0 0
    %6537 = vperm.xlu0 %6536, %v6534
    %v6538 = vpop.permute.xlu0 %6537
    %v6540 = vmul.f32 %v6538, %v6461
    %v6541 = vsel %vm921, %v6540, 0.0
    %v6542 = vrot.slane %v6541, 4
    %v6543 = vadd.f32 %v6541, %v6542
    %v6544 = vrot.slane %v6543, 2
    %v6545 = vadd.f32 %v6543, %v6544
    %v6546 = vrot.slane %v6545, 1
    %v6547 = vadd.f32 %v6545, %v6546
    %6548 = vmatprep.subr.mxu0 0.0
    %6549 = vmatpush1.msra.mxu0 %v6479
    %6550 = vmatprep.subr.mxu0 0.0
    %6551 = vmatpush1.msra.mxu0 %v6478
    %6552 = vmatprep.subr.mxu0 0.0
    %6553 = vmatpush1.msra.mxu0 %v6477
    %6554 = vmatprep.subr.mxu0 0.0
    %6555 = vmatpush1.msra.mxu0 %v6476
    %6556 = vmatprep.subr.mxu0 0.0
    %6557 = vmatpush1.msra.mxu0 %v6475
    %6558 = vmatprep.subr.mxu0 0.0
    %6559 = vmatpush1.msra.mxu0 %v6474
    %6560 = vmatprep.subr.mxu0 0.0
    %6561 = vmatpush1.msra.mxu0 %v6473
    %6562 = vmatprep.subr.mxu0 0.0
    %6563 = vmatpush1.msra.mxu0 %v6472
    %6564 = vmatprep.subr.mxu0 0.0
    %6565 = vmatpush1.msra.mxu0 %v6471
    %6566 = vmatprep.subr.mxu0 0.0
    %6567 = vmatpush1.msra.mxu0 %v6470
    %6568 = vmatprep.subr.mxu0 0.0
    %6569 = vmatpush1.msra.mxu0 %v6469
    %6570 = vmatprep.subr.mxu0 0.0
    %6571 = vmatpush1.msra.mxu0 %v6468
    %6572 = vmatprep.subr.mxu0 0.0
    %6573 = vmatpush1.msra.mxu0 %v6467
    %6574 = vmatprep.subr.mxu0 0.0
    %6575 = vmatpush1.msra.mxu0 %v6466
    %6576 = vmatprep.subr.mxu0 0.0
    %6577 = vmatpush1.msra.mxu0 %v6465
    %6578 = vmatprep.subr.mxu0 0.0
    %6579 = vmatpush1.msra.mxu0 %v6464
    %6580 = vmatprep.subr.mxu0 0.0
    %6581 = vmatpush2.msra.mxu0 0.0
    %6582 = vmatprep.subr.mxu0 0.0
    %6583 = vmatpush2.msra.mxu0 0.0
    %6584 = vmatprep.subr.mxu0 0.0
    %6585 = vmatpush2.msra.mxu0 0.0
    %6586 = vmatprep.subr.mxu0 0.0
    %6587 = vmatpush2.msra.mxu0 0.0
    %6588 = vmatprep.subr.mxu0 0.0
    %6589 = vmatpush2.msra.mxu0 0.0
    %6590 = vmatprep.subr.mxu0 0.0
    %6591 = vmatpush2.msra.mxu0 0.0
    %6592 = vmatprep.subr.mxu0 0.0
    %6593 = vmatpush2.msra.mxu0 0.0
    %6594 = vmatprep.subr.mxu0 0.0
    %6595 = vmatpush2.msra.mxu0 0.0
    %6596 = vmatprep.subr.mxu0 0.0
    %6597 = vmatpush2.msra.mxu0 0.0
    %6598 = vmatprep.subr.mxu0 0.0
    %6599 = vmatpush2.msra.mxu0 0.0
    %6600 = vmatprep.subr.mxu0 0.0
    %6601 = vmatpush2.msra.mxu0 0.0
    %6602 = vmatprep.subr.mxu0 0.0
    %6603 = vmatpush2.msra.mxu0 0.0
    %6604 = vmatprep.subr.mxu0 0.0
    %6605 = vmatpush2.msra.mxu0 0.0
    %6606 = vmatprep.subr.mxu0 0.0
    %6607 = vmatpush2.msra.mxu0 0.0
    %6608 = vmatprep.subr.mxu0 0.0
    %6609 = vmatpush2.msra.mxu0 0.0
    %6610 = vmatprep.subr.mxu0 0.0
    %6611 = vmatpush2.msra.mxu0 0.0
    %6612 = vmatprep.mubr.f32.mxu0 0.0
    %6613 = vmatmul.mubr.f32.gmra.mxu0 %v6547
    %v6614 = vpop.f32.mrf.mxu0
    %v6615 = vadd.f32 %v6480, %v6614
    %v6616 = vpop.f32.mrf.mxu0
    %6617 = vdwg.mxu0
    %v6618 = vmax.f32 %v6615, 0.0
    %6619 = vmatprep.subr.mxu0 0.0
    %6620 = vmatpush1.msra.mxu0 %v6496
    %6621 = vmatprep.subr.mxu0 0.0
    %6622 = vmatpush1.msra.mxu0 %v6495
    %6623 = vmatprep.subr.mxu0 0.0
    %6624 = vmatpush1.msra.mxu0 %v6494
    %6625 = vmatprep.subr.mxu0 0.0
    %6626 = vmatpush1.msra.mxu0 %v6493
    %6627 = vmatprep.subr.mxu0 0.0
    %6628 = vmatpush1.msra.mxu0 %v6492
    %6629 = vmatprep.subr.mxu0 0.0
    %6630 = vmatpush1.msra.mxu0 %v6491
    %6631 = vmatprep.subr.mxu0 0.0
    %6632 = vmatpush1.msra.mxu0 %v6490
    %6633 = vmatprep.subr.mxu0 0.0
    %6634 = vmatpush1.msra.mxu0 %v6489
    %6635 = vmatprep.subr.mxu0 0.0
    %6636 = vmatpush1.msra.mxu0 %v6488
    %6637 = vmatprep.subr.mxu0 0.0
    %6638 = vmatpush1.msra.mxu0 %v6487
    %6639 = vmatprep.subr.mxu0 0.0
    %6640 = vmatpush1.msra.mxu0 %v6486
    %6641 = vmatprep.subr.mxu0 0.0
    %6642 = vmatpush1.msra.mxu0 %v6485
    %6643 = vmatprep.subr.mxu0 0.0
    %6644 = vmatpush1.msra.mxu0 %v6484
    %6645 = vmatprep.subr.mxu0 0.0
    %6646 = vmatpush1.msra.mxu0 %v6483
    %6647 = vmatprep.subr.mxu0 0.0
    %6648 = vmatpush1.msra.mxu0 %v6482
    %6649 = vmatprep.subr.mxu0 0.0
    %6650 = vmatpush1.msra.mxu0 %v6481
    %6651 = vmatprep.subr.mxu0 0.0
    %6652 = vmatpush2.msra.mxu0 0.0
    %6653 = vmatprep.subr.mxu0 0.0
    %6654 = vmatpush2.msra.mxu0 0.0
    %6655 = vmatprep.subr.mxu0 0.0
    %6656 = vmatpush2.msra.mxu0 0.0
    %6657 = vmatprep.subr.mxu0 0.0
    %6658 = vmatpush2.msra.mxu0 0.0
    %6659 = vmatprep.subr.mxu0 0.0
    %6660 = vmatpush2.msra.mxu0 0.0
    %6661 = vmatprep.subr.mxu0 0.0
    %6662 = vmatpush2.msra.mxu0 0.0
    %6663 = vmatprep.subr.mxu0 0.0
    %6664 = vmatpush2.msra.mxu0 0.0
    %6665 = vmatprep.subr.mxu0 0.0
    %6666 = vmatpush2.msra.mxu0 0.0
    %6667 = vmatprep.subr.mxu0 0.0
    %6668 = vmatpush2.msra.mxu0 0.0
    %6669 = vmatprep.subr.mxu0 0.0
    %6670 = vmatpush2.msra.mxu0 0.0
    %6671 = vmatprep.subr.mxu0 0.0
    %6672 = vmatpush2.msra.mxu0 0.0
    %6673 = vmatprep.subr.mxu0 0.0
    %6674 = vmatpush2.msra.mxu0 0.0
    %6675 = vmatprep.subr.mxu0 0.0
    %6676 = vmatpush2.msra.mxu0 0.0
    %6677 = vmatprep.subr.mxu0 0.0
    %6678 = vmatpush2.msra.mxu0 0.0
    %6679 = vmatprep.subr.mxu0 0.0
    %6680 = vmatpush2.msra.mxu0 0.0
    %6681 = vmatprep.subr.mxu0 0.0
    %6682 = vmatpush2.msra.mxu0 0.0
    %6683 = vmatprep.mubr.f32.mxu0 0.0
    %6684 = vmatmul.mubr.f32.gmra.mxu0 %v6618
    %v6685 = vpop.f32.mrf.mxu0
    %v6686 = vadd.f32 %v6497, %v6685
    %v6687 = vpop.f32.mrf.mxu0
    %6688 = vdwg.mxu0
    %6689 = vst [vmem:[%s61] sm:$0x1] %v6686
    %vm6690 = vcmask 1047556
    %v6691 = vsel %vm6690, %v6504, 0.0
    %6692 = vadd.xlane.f32.xlu0 %v6691
    %v6693 = vpop.xlane.xlu0 %6692
    %v6694 = vadd.f32 %v6693, %v6512
    %vm6695 = vcmask 7172
    %v6696 = vsel %vm6695, %v6694, -inf
    %v6697 = vrot.slane %v6696, 4
    %v6698 = vmax.f32 %v6696, %v6697
    %v6699 = vrot.slane %v6698, 2
    %v6700 = vmax.f32 %v6698, %v6699
    %v6701 = vrot.slane %v6700, 1
    %v6702 = vmax.f32 %v6700, %v6701
    %v6703 = vsub.f32 %v6694, %v6702
    %v6704 = vmul.f32 %v6703, 1.442695
    %v6705 = vpow.pop %v6704
    %v6707 = vrot.slane %v6705, 4
    %v6709 = vsel %vm6515, %v6707, 0.0
    %v6710 = vrot.slane %v6709, 4
    %v6711 = vadd.f32 %v6709, %v6710
    %v6712 = vrot.slane %v6711, 2
    %v6713 = vadd.f32 %v6711, %v6712
    %v6714 = vrot.slane %v6713, 1
    %v6715 = vadd.f32 %v6713, %v6714
    %v6716 = vrcp.pop %v6715
    %v6717 = vmul.f32 %v6705, %v6716
    %6719 = vset.pattern.permute.xlu0 0
    %6720 = vperm.xlu0 %6719, %v6717
    %v6721 = vpop.permute.xlu0 %6720
    %v6723 = vmul.f32 %v6721, %v6461
    %v6725 = vrot.slane %v6723, 4
    %v6727 = vsel %vm921, %v6725, 0.0
    %v6728 = vrot.slane %v6727, 4
    %v6729 = vadd.f32 %v6727, %v6728
    %v6730 = vrot.slane %v6729, 2
    %v6731 = vadd.f32 %v6729, %v6730
    %v6732 = vrot.slane %v6731, 1
    %v6733 = vadd.f32 %v6731, %v6732
    %6734 = vmatprep.subr.mxu0 0.0
    %6735 = vmatpush1.msra.mxu0 %v6479
    %6736 = vmatprep.subr.mxu0 0.0
    %6737 = vmatpush1.msra.mxu0 %v6478
    %6738 = vmatprep.subr.mxu0 0.0
    %6739 = vmatpush1.msra.mxu0 %v6477
    %6740 = vmatprep.subr.mxu0 0.0
    %6741 = vmatpush1.msra.mxu0 %v6476
    %6742 = vmatprep.subr.mxu0 0.0
    %6743 = vmatpush1.msra.mxu0 %v6475
    %6744 = vmatprep.subr.mxu0 0.0
    %6745 = vmatpush1.msra.mxu0 %v6474
    %6746 = vmatprep.subr.mxu0 0.0
    %6747 = vmatpush1.msra.mxu0 %v6473
    %6748 = vmatprep.subr.mxu0 0.0
    %6749 = vmatpush1.msra.mxu0 %v6472
    %6750 = vmatprep.subr.mxu0 0.0
    %6751 = vmatpush1.msra.mxu0 %v6471
    %6752 = vmatprep.subr.mxu0 0.0
    %6753 = vmatpush1.msra.mxu0 %v6470
    %6754 = vmatprep.subr.mxu0 0.0
    %6755 = vmatpush1.msra.mxu0 %v6469
    %6756 = vmatprep.subr.mxu0 0.0
    %6757 = vmatpush1.msra.mxu0 %v6468
    %6758 = vmatprep.subr.mxu0 0.0
    %6759 = vmatpush1.msra.mxu0 %v6467
    %6760 = vmatprep.subr.mxu0 0.0
    %6761 = vmatpush1.msra.mxu0 %v6466
    %6762 = vmatprep.subr.mxu0 0.0
    %6763 = vmatpush1.msra.mxu0 %v6465
    %6764 = vmatprep.subr.mxu0 0.0
    %6765 = vmatpush1.msra.mxu0 %v6464
    %6766 = vmatprep.subr.mxu0 0.0
    %6767 = vmatpush2.msra.mxu0 0.0
    %6768 = vmatprep.subr.mxu0 0.0
    %6769 = vmatpush2.msra.mxu0 0.0
    %6770 = vmatprep.subr.mxu0 0.0
    %6771 = vmatpush2.msra.mxu0 0.0
    %6772 = vmatprep.subr.mxu0 0.0
    %6773 = vmatpush2.msra.mxu0 0.0
    %6774 = vmatprep.subr.mxu0 0.0
    %6775 = vmatpush2.msra.mxu0 0.0
    %6776 = vmatprep.subr.mxu0 0.0
    %6777 = vmatpush2.msra.mxu0 0.0
    %6778 = vmatprep.subr.mxu0 0.0
    %6779 = vmatpush2.msra.mxu0 0.0
    %6780 = vmatprep.subr.mxu0 0.0
    %6781 = vmatpush2.msra.mxu0 0.0
    %6782 = vmatprep.subr.mxu0 0.0
    %6783 = vmatpush2.msra.mxu0 0.0
    %6784 = vmatprep.subr.mxu0 0.0
    %6785 = vmatpush2.msra.mxu0 0.0
    %6786 = vmatprep.subr.mxu0 0.0
    %6787 = vmatpush2.msra.mxu0 0.0
    %6788 = vmatprep.subr.mxu0 0.0
    %6789 = vmatpush2.msra.mxu0 0.0
    %6790 = vmatprep.subr.mxu0 0.0
    %6791 = vmatpush2.msra.mxu0 0.0
    %6792 = vmatprep.subr.mxu0 0.0
    %6793 = vmatpush2.msra.mxu0 0.0
    %6794 = vmatprep.subr.mxu0 0.0
    %6795 = vmatpush2.msra.mxu0 0.0
    %6796 = vmatprep.subr.mxu0 0.0
    %6797 = vmatpush2.msra.mxu0 0.0
    %6798 = vmatprep.mubr.f32.mxu0 0.0
    %6799 = vmatmul.mubr.f32.gmra.mxu0 %v6733
    %v6800 = vpop.f32.mrf.mxu0
    %v6801 = vadd.f32 %v6480, %v6800
    %v6802 = vpop.f32.mrf.mxu0
    %6803 = vdwg.mxu0
    %v6804 = vmax.f32 %v6801, 0.0
    %6805 = vmatprep.subr.mxu0 0.0
    %6806 = vmatpush1.msra.mxu0 %v6496
    %6807 = vmatprep.subr.mxu0 0.0
    %6808 = vmatpush1.msra.mxu0 %v6495
    %6809 = vmatprep.subr.mxu0 0.0
    %6810 = vmatpush1.msra.mxu0 %v6494
    %6811 = vmatprep.subr.mxu0 0.0
    %6812 = vmatpush1.msra.mxu0 %v6493
    %6813 = vmatprep.subr.mxu0 0.0
    %6814 = vmatpush1.msra.mxu0 %v6492
    %6815 = vmatprep.subr.mxu0 0.0
    %6816 = vmatpush1.msra.mxu0 %v6491
    %6817 = vmatprep.subr.mxu0 0.0
    %6818 = vmatpush1.msra.mxu0 %v6490
    %6819 = vmatprep.subr.mxu0 0.0
    %6820 = vmatpush1.msra.mxu0 %v6489
    %6821 = vmatprep.subr.mxu0 0.0
    %6822 = vmatpush1.msra.mxu0 %v6488
    %6823 = vmatprep.subr.mxu0 0.0
    %6824 = vmatpush1.msra.mxu0 %v6487
    %6825 = vmatprep.subr.mxu0 0.0
    %6826 = vmatpush1.msra.mxu0 %v6486
    %6827 = vmatprep.subr.mxu0 0.0
    %6828 = vmatpush1.msra.mxu0 %v6485
    %6829 = vmatprep.subr.mxu0 0.0
    %6830 = vmatpush1.msra.mxu0 %v6484
    %6831 = vmatprep.subr.mxu0 0.0
    %6832 = vmatpush1.msra.mxu0 %v6483
    %6833 = vmatprep.subr.mxu0 0.0
    %6834 = vmatpush1.msra.mxu0 %v6482
    %6835 = vmatprep.subr.mxu0 0.0
    %6836 = vmatpush1.msra.mxu0 %v6481
    %6837 = vmatprep.subr.mxu0 0.0
    %6838 = vmatpush2.msra.mxu0 0.0
    %6839 = vmatprep.subr.mxu0 0.0
    %6840 = vmatpush2.msra.mxu0 0.0
    %6841 = vmatprep.subr.mxu0 0.0
    %6842 = vmatpush2.msra.mxu0 0.0
    %6843 = vmatprep.subr.mxu0 0.0
    %6844 = vmatpush2.msra.mxu0 0.0
    %6845 = vmatprep.subr.mxu0 0.0
    %6846 = vmatpush2.msra.mxu0 0.0
    %6847 = vmatprep.subr.mxu0 0.0
    %6848 = vmatpush2.msra.mxu0 0.0
    %6849 = vmatprep.subr.mxu0 0.0
    %6850 = vmatpush2.msra.mxu0 0.0
    %6851 = vmatprep.subr.mxu0 0.0
    %6852 = vmatpush2.msra.mxu0 0.0
    %6853 = vmatprep.subr.mxu0 0.0
    %6854 = vmatpush2.msra.mxu0 0.0
    %6855 = vmatprep.subr.mxu0 0.0
    %6856 = vmatpush2.msra.mxu0 0.0
    %6857 = vmatprep.subr.mxu0 0.0
    %6858 = vmatpush2.msra.mxu0 0.0
    %6859 = vmatprep.subr.mxu0 0.0
    %6860 = vmatpush2.msra.mxu0 0.0
    %6861 = vmatprep.subr.mxu0 0.0
    %6862 = vmatpush2.msra.mxu0 0.0
    %6863 = vmatprep.subr.mxu0 0.0
    %6864 = vmatpush2.msra.mxu0 0.0
    %6865 = vmatprep.subr.mxu0 0.0
    %6866 = vmatpush2.msra.mxu0 0.0
    %6867 = vmatprep.subr.mxu0 0.0
    %6868 = vmatpush2.msra.mxu0 0.0
    %6869 = vmatprep.mubr.f32.mxu0 0.0
    %6870 = vmatmul.mubr.f32.gmra.mxu0 %v6804
    %v6871 = vpop.f32.mrf.mxu0
    %v6872 = vadd.f32 %v6497, %v6871
    %v6873 = vpop.f32.mrf.mxu0
    %6874 = vdwg.mxu0
    %6875 = vst [vmem:[%s61 + $0x1] sm:$0x1] %v6872
    // Predicated region
    $region210: #{forward_device.1} parent=1 // pred_check
      _
    $region211: #{forward_device.1} parent=1 // pred_check_branch
      %6877 = sbr.rel (0) target = $region213
    $region212: #{forward_device.1} parent=1 // pred_region
      _
    $region213: #{forward_device.1} parent=1 // pred_fallthru
      _
    // Predicated region
    $region214: #{forward_device.1} parent=1 // pred_check
      _
    $region215: #{forward_device.1} parent=1 // pred_check_branch
      %6879 = sbr.rel (0) target = $region217
    $region216: #{forward_device.1} parent=1 // pred_region
      _
    $region217: #{forward_device.1} parent=1 // pred_fallthru
      _
    %6880 = vsyncpa [#allocation4], 1
    %6881 = vsyncpa [#allocation6], 1
    %6882 = vsyncpa [#allocation9], 1
    %6883 = vsyncpa [#allocation12], 1
    %6884 = vsyncpa [#allocation15], 1
    %6885 = vsyncpa [#allocation18], 1
    %6886 = vsyncpa [#allocation21], 1
    %6887 = vsyncpa [#allocation24], 1
    %6888 = vsyncpa [#allocation27], 1
    %6889 = vsyncpa [#allocation30], 1
    %6890 = vsyncpa [#allocation33], 1
    %6891 = vsyncpa [#allocation36], 1

</llo_original>
